<compile_context>
chip_gen: v6e
topology: v6e:2x2x1
jax: 0.10.0
libtpu: 0.0.40
codegen_flags: <defaults>
</compile_context>

<pallas_src>
import numpy as np
import jax
import jax.numpy as jnp
from jax.experimental import pallas as pl
from jax.experimental.pallas import tpu as pltpu


# ----------------------------------------------------------------------------
# Scaled-down synthetic configuration (same structure as YAMNet front end)
# ----------------------------------------------------------------------------
class CommonParams:
    PATCH_WINDOW_IN_SECONDS = 0.96  # used by the hourly-segment split


SR = 16                          # synthetic sample rate
STFT_WIN = 64                    # STFT window length (samples)
STFT_HOP = 32                    # STFT hop = WIN / 2 (half-window hop)
N_FFT_BINS = STFT_WIN // 2 + 1   # 33 rfft bins
N_MELS = 16                      # mel bands
PATCH_FRAMES = 8                 # frames per model patch
NUM_CLASSES = 10
HIDDEN = 32
TT_CHUNK_SIZE = 2                # API parity only; chunking is subsumed by the grid

P_BLK = 256                      # patches per grid block (M for the MLP dots)
DFT_LANES = 128                  # combined real|imag DFT width (lane-dense)
HALF_LANES = DFT_LANES // 2      # 64: real bins in [0,64), imag bins in [64,128)
C_PAD = 128                      # classifier output padded to a full lane width
LOG_OFFSET = 1e-3
D_IN = PATCH_FRAMES * N_MELS     # 128: flattened model input per patch

# Static layout invariants the kernel relies on (see correctness review).
assert STFT_WIN == 2 * STFT_HOP
assert N_FFT_BINS <= HALF_LANES
assert DFT_LANES == 2 * HALF_LANES
assert NUM_CLASSES <= C_PAD
assert P_BLK % 8 == 0 and ((PATCH_FRAMES + 1) * P_BLK) % 16 == 0   # bf16 sublane tiles


# ----------------------------------------------------------------------------
# The single fused kernel.  grid = (patch_blocks,).  One step processes all
# PATCH_FRAMES STFT frames of P_BLK patches:
#   halves block : ((PATCH_FRAMES+1)*P_BLK, 32) bf16, row f*P_BLK + p = half f of patch p
#   frames       = [halves[0:8*P] | halves[P:9*P]]          (M=2048, 64) bf16
#   spec         = frames @ comb  (Hann folded, real|imag)   (M, 128) f32 on MXU
#   mag          = sqrt(re^2 + im^2)                         (M, 64)
#   logmel       = log(mag @ mel + 1e-3)                     (M, 16)
#   x            = lane-concat of the 8 per-frame slices     (P_BLK, 128)
#   out          = sigmoid(relu(x@W1 + b1) @ W2_pad + b2_pad) (P_BLK, 128) bf16
# ----------------------------------------------------------------------------
def _fused_audio_kernel(halves_ref, comb_ref, melw_ref, w1_ref, b1_ref,
                        w2_ref, b2_ref, out_ref):
    halves = halves_ref[...]                                   # (9*P_BLK, 32) bf16
    lo = halves[: PATCH_FRAMES * P_BLK]                        # half-window f   of patch p
    hi = halves[P_BLK:]                                        # half-window f+1 of patch p
    frames = jnp.concatenate([lo, hi], axis=-1)                # (8*P_BLK, 64) bf16

    # Combined real|imag Hann-folded DFT: one MXU dot, f32 accumulation.
    spec = jnp.dot(frames, comb_ref[...],
                   preferred_element_type=jnp.float32)         # (8*P_BLK, 128) f32

    # |X| per bin: real bins in lanes [0,64), imag bins in lanes [64,128).
    re = spec[:, :HALF_LANES]
    im = spec[:, HALF_LANES:]
    mag = jnp.sqrt(re * re + im * im)                          # (8*P_BLK, 64) f32

    # Mel projection (+ log); mel rows >= N_FFT_BINS are zero.
    mel = jnp.dot(mag.astype(jnp.bfloat16), melw_ref[...],
                  preferred_element_type=jnp.float32)          # (8*P_BLK, N_MELS)
    logmel = jnp.log(mel + LOG_OFFSET)

    # Assemble x[p, f*N_MELS + m] = logmel[f*P_BLK + p, m]  ==  flatten(patch p).
    x = jnp.concatenate(
        [logmel[f * P_BLK:(f + 1) * P_BLK] for f in range(PATCH_FRAMES)],
        axis=-1)                                               # (P_BLK, 128) f32

    # MLP: one dot per layer, biases / ReLU / sigmoid in f32.
    hid = jnp.maximum(
        jnp.dot(x.astype(jnp.bfloat16), w1_ref[...],
                preferred_element_type=jnp.float32) + b1_ref[...], 0.0)
    logits = jnp.dot(hid.astype(jnp.bfloat16), w2_ref[...],
                     preferred_element_type=jnp.float32) + b2_ref[...]
    # NOTE: padded lanes [NUM_CLASSES, 128) hold sigmoid(0)=0.5; host slices them off.
    out_ref[...] = jax.nn.sigmoid(logits).astype(out_ref.dtype)  # (P_BLK, 128) bf16


def fused_forward(halves_t, params):
    """halves_t: (num_blocks, (PATCH_FRAMES+1)*P_BLK, HOP) bf16 -> (num_blocks*P_BLK, C_PAD) bf16."""
    num_blocks = halves_t.shape[0]
    assert halves_t.shape[1:] == ((PATCH_FRAMES + 1) * P_BLK, STFT_HOP)

    return pl.pallas_call(
        _fused_audio_kernel,
        out_shape=jax.ShapeDtypeStruct((num_blocks * P_BLK, C_PAD), jnp.bfloat16),
        grid_spec=pltpu.PrefetchScalarGridSpec(
            num_scalar_prefetch=0,
            grid=(num_blocks,),
            in_specs=[
                # audio half-windows for this patch block (leading dim squeezed);
                # default double-buffering is ample: compute per block >> its ~144 KiB DMA.
                pl.BlockSpec((None, (PATCH_FRAMES + 1) * P_BLK, STFT_HOP),
                             lambda b: (b, 0, 0)),
                # VMEM-resident parameters (constant index maps -> fetched once)
                pl.BlockSpec((STFT_WIN, DFT_LANES), lambda b: (0, 0)),
                pl.BlockSpec((HALF_LANES, N_MELS), lambda b: (0, 0)),
                pl.BlockSpec((D_IN, HIDDEN), lambda b: (0, 0)),
                pl.BlockSpec((1, HIDDEN), lambda b: (0, 0)),
                pl.BlockSpec((HIDDEN, C_PAD), lambda b: (0, 0)),
                pl.BlockSpec((1, C_PAD), lambda b: (0, 0)),
            ],
            out_specs=pl.BlockSpec((P_BLK, C_PAD), lambda b: (b, 0)),
        ),
        compiler_params=pltpu.CompilerParams(
            dimension_semantics=("parallel",)),
    )(halves_t, params["comb"], params["melw"], params["w1"],
      params["b1"], params["w2p"], params["b2p"])


# ----------------------------------------------------------------------------
# Deterministic parameter construction
# ----------------------------------------------------------------------------
def make_filterbank(n_bins, n_mels):
    # TODO(synk): true mel-scale warping omitted; deterministic triangular
    # filters on a linear frequency axis are used instead.
    centers = np.linspace(0.0, n_bins - 1.0, n_mels + 2)
    bins = np.arange(n_bins, dtype=np.float32)
    fb = np.zeros((n_bins, n_mels), dtype=np.float32)
    for m in range(n_mels):
        l, c, r = centers[m], centers[m + 1], centers[m + 2]
        up = (bins - l) / max(c - l, 1e-6)
        down = (r - bins) / max(r - c, 1e-6)
        fb[:, m] = np.maximum(0.0, np.minimum(up, down))
    return fb


def make_params():
    k1, k2 = jax.random.split(jax.random.PRNGKey(0))

    hann = (0.5 - 0.5 * np.cos(2.0 * np.pi * np.arange(STFT_WIN) / STFT_WIN)
            ).astype(np.float64)
    n = np.arange(STFT_WIN)[:, None]
    k = np.arange(N_FFT_BINS)[None, :]
    ang = 2.0 * np.pi * n * k / STFT_WIN
    # Combined real|imag DFT, Hann folded in, padded lane-dense to 128 columns.
    comb = np.zeros((STFT_WIN, DFT_LANES), dtype=np.float64)
    comb[:, :N_FFT_BINS] = np.cos(ang)
    comb[:, HALF_LANES:HALF_LANES + N_FFT_BINS] = -np.sin(ang)
    comb *= hann[:, None]

    melw = np.zeros((HALF_LANES, N_MELS), dtype=np.float64)
    melw[:N_FFT_BINS] = make_filterbank(N_FFT_BINS, N_MELS)

    w1 = jax.random.normal(k1, (D_IN, HIDDEN), jnp.float32) * 0.05
    w2 = jax.random.normal(k2, (HIDDEN, NUM_CLASSES), jnp.float32) * 0.05
    b1 = jnp.zeros((1, HIDDEN), jnp.float32)
    b2 = jnp.zeros((1, NUM_CLASSES), jnp.float32)
    w2p = jnp.zeros((HIDDEN, C_PAD), jnp.float32).at[:, :NUM_CLASSES].set(w2)
    b2p = jnp.zeros((1, C_PAD), jnp.float32).at[:, :NUM_CLASSES].set(b2)

    return {
        # bf16 MXU operands
        "comb": jnp.asarray(comb, jnp.bfloat16),
        "melw": jnp.asarray(melw, jnp.bfloat16),
        "w1": w1.astype(jnp.bfloat16),
        "w2p": w2p.astype(jnp.bfloat16),
        # f32 bias / elementwise params
        "b1": b1,
        "b2p": b2p,
        # raw f32 copies (only used by the numpy reference check)
        "w1_f32": w1, "b1_f32": b1, "w2_f32": w2, "b2_f32": b2,
    }


# ----------------------------------------------------------------------------
# Host-side bookkeeping: WaveformToInput framing prep + AudioLabeler.forward
# ----------------------------------------------------------------------------
def build_patch_halves(segment):
    """(channels, n) segment -> (num_patches, PATCH_FRAMES+1, HOP) half-window tensor.

    Row (q, j) holds mono[(q*PATCH_FRAMES + j) * HOP : ... + HOP].  This is a
    ~1.125x relayout of the audio (no 2x overlapping-frame expansion); the
    actual framing (window overlap) happens inside the kernel.
    """
    mono = jnp.mean(segment.astype(jnp.float32), axis=0)
    n = mono.shape[0]
    if n < STFT_WIN:
        return None
    num_frames = 1 + (n - STFT_WIN) // STFT_HOP
    num_patches = num_frames // PATCH_FRAMES
    if num_patches == 0:
        return None
    nh = num_patches * PATCH_FRAMES
    halves = mono[: (nh + 1) * STFT_HOP].reshape(nh + 1, STFT_HOP)
    idx = (jnp.arange(num_patches)[:, None] * PATCH_FRAMES
           + jnp.arange(PATCH_FRAMES + 1)[None, :])          # (num_patches, 9)
    return halves[idx]                                        # (num_patches, 9, 32)


def audio_labeler_forward(inputs, tt_chunk_size, params):
    # tt_chunk_size only controlled inference batching in the original module;
    # the fused grid subsumes it (identical outputs), so it is accepted but unused.
    del tt_chunk_size
    assert len(inputs) == 1
    overall_preds = []
    for payload in inputs:
        data, sr = payload["data"], payload["sr"]
        num_samples_per_segment = int(3600 * CommonParams.PATCH_WINDOW_IN_SECONDS * sr)
        n_samples = data.shape[1]

        # torch.split(data, ..., dim=1) + the per-chunk model loop are pure host
        # bookkeeping here: framing never crosses a segment boundary, but all
        # patches of all segments are batched into ONE fused pallas_call.
        seg_patches = []
        for start in range(0, n_samples, num_samples_per_segment):
            ph = build_patch_halves(data[:, start:start + num_samples_per_segment])
            if ph is not None:
                seg_patches.append(ph)
        assert seg_patches, "no segment long enough to produce a patch"
        per_patch = jnp.concatenate(seg_patches, axis=0)      # (num_patches, 9, 32)
        num_patches = per_patch.shape[0]

        num_blocks = -(-num_patches // P_BLK)
        pad = num_blocks * P_BLK - num_patches
        if pad:
            per_patch = jnp.pad(per_patch, ((0, pad), (0, 0), (0, 0)))

        # Relayout to (num_blocks, 9*P_BLK, 32) with row f*P_BLK + p inside a block,
        # so the kernel needs no in-kernel reshape — only aligned sublane slices.
        halves_t = per_patch.reshape(num_blocks, P_BLK, PATCH_FRAMES + 1, STFT_HOP)
        halves_t = jnp.transpose(halves_t, (0, 2, 1, 3))
        halves_t = halves_t.reshape(num_blocks, (PATCH_FRAMES + 1) * P_BLK, STFT_HOP)
        halves_t = halves_t.astype(jnp.bfloat16)              # bf16 HBM-side audio

        out_pad = fused_forward(halves_t, params)             # (nb*P_BLK, C_PAD) bf16
        preds = out_pad[:num_patches, :NUM_CLASSES].astype(jnp.float32)
        overall_preds.append({"pred_tsr": preds})
    return overall_preds


# ----------------------------------------------------------------------------
# numpy reference of the original (unfused) semantics, for a correctness check
# ----------------------------------------------------------------------------
def reference_forward(data, sr, params):
    data = np.asarray(data, np.float64)
    hann = 0.5 - 0.5 * np.cos(2.0 * np.pi * np.arange(STFT_WIN) / STFT_WIN)
    n_ = np.arange(STFT_WIN)[:, None]
    k_ = np.arange(N_FFT_BINS)[None, :]
    ang = 2.0 * np.pi * n_ * k_ / STFT_WIN
    dftr, dfti = np.cos(ang), -np.sin(ang)
    fb = make_filterbank(N_FFT_BINS, N_MELS).astype(np.float64)
    w1 = np.asarray(params["w1_f32"], np.float64)
    b1 = np.asarray(params["b1_f32"], np.float64)
    w2 = np.asarray(params["w2_f32"], np.float64)
    b2 = np.asarray(params["b2_f32"], np.float64)

    seg_len = int(3600 * CommonParams.PATCH_WINDOW_IN_SECONDS * sr)
    outs = []
    for s in range(0, data.shape[1], seg_len):
        mono = data[:, s:s + seg_len].mean(axis=0)
        n = mono.shape[0]
        if n < STFT_WIN:
            continue
        nf = 1 + (n - STFT_WIN) // STFT_HOP
        npch = nf // PATCH_FRAMES
        if npch == 0:
            continue
        idx = np.arange(nf)[:, None] * STFT_HOP + np.arange(STFT_WIN)[None, :]
        frames = mono[idx] * hann
        re, im = frames @ dftr, frames @ dfti
        logmel = np.log(np.sqrt(re * re + im * im) @ fb + LOG_OFFSET)
        x = logmel[:npch * PATCH_FRAMES].reshape(npch, PATCH_FRAMES * N_MELS)
        h = np.maximum(x @ w1 + b1, 0.0)
        outs.append(1.0 / (1.0 + np.exp(-(h @ w2 + b2))))
    return np.concatenate(outs, axis=0)


if __name__ == "__main__":
    params = make_params()
    key = jax.random.PRNGKey(0)
    # synthetic waveform: 1 channel, 1024 samples @ SR=16 (one "hourly" segment)
    data = jax.random.normal(key, (1, 1024), dtype=jnp.float32)
    inputs = [{"data": data, "sr": SR}]

    preds = audio_labeler_forward(inputs, TT_CHUNK_SIZE, params)
    out = preds[0]["pred_tsr"]
    jax.block_until_ready(out)

    assert out.shape == (3, NUM_CLASSES), out.shape
    assert bool(jnp.all(jnp.isfinite(out)))
    assert bool(jnp.all((out >= 0.0) & (out <= 1.0)))

    ref = reference_forward(np.asarray(data), SR, params)
    err = float(np.max(np.abs(np.asarray(out, np.float64) - ref)))
    assert err < 0.08, f"mismatch vs reference: {err}"

    print("KERNEL_OK")
</pallas_src>

<mosaic_0001>
module attributes {stable_mosaic.version = 11 : i64} {
  func.func @_fused_audio_kernel(%arg0: i32, %arg1: memref<1x2304x32xbf16, #tpu.memory_space<vmem>>, %arg2: memref<64x128xbf16, #tpu.memory_space<vmem>>, %arg3: memref<64x16xbf16, #tpu.memory_space<vmem>>, %arg4: memref<128x32xbf16, #tpu.memory_space<vmem>>, %arg5: memref<1x32xf32, #tpu.memory_space<vmem>>, %arg6: memref<32x128xbf16, #tpu.memory_space<vmem>>, %arg7: memref<1x128xf32, #tpu.memory_space<vmem>>, %arg8: memref<256x128xbf16, #tpu.memory_space<vmem>>) attributes {dimension_semantics = [#tpu.dimension_semantics<parallel>], iteration_bounds = array<i64: 1>, scalar_prefetch = 0 : i64, scratch_operands = 0 : i64, tpu.core_type = #tpu.core_type<tc>, window_params = [{transform_indices = @transform_0, window_bounds = array<i64: 1, 2304, 32>}, {pipeline_mode = #tpu.pipeline_mode<synchronous>, transform_indices = @transform_1, window_bounds = array<i64: 64, 128>}, {pipeline_mode = #tpu.pipeline_mode<synchronous>, transform_indices = @transform_2, window_bounds = array<i64: 64, 16>}, {pipeline_mode = #tpu.pipeline_mode<synchronous>, transform_indices = @transform_3, window_bounds = array<i64: 128, 32>}, {pipeline_mode = #tpu.pipeline_mode<synchronous>, transform_indices = @transform_4, window_bounds = array<i64: 1, 32>}, {pipeline_mode = #tpu.pipeline_mode<synchronous>, transform_indices = @transform_5, window_bounds = array<i64: 32, 128>}, {pipeline_mode = #tpu.pipeline_mode<synchronous>, transform_indices = @transform_6, window_bounds = array<i64: 1, 128>}, {transform_indices = @transform_7, window_bounds = array<i64: 256, 128>}]} {
    %c0 = arith.constant 0 : index
    %c0_0 = arith.constant 0 : index
    %c0_1 = arith.constant 0 : index
    %0 = vector.load %arg1[%c0, %c0_0, %c0_1] : memref<1x2304x32xbf16, #tpu.memory_space<vmem>>, vector<1x2304x32xbf16>
    %1 = vector.shape_cast %0 : vector<1x2304x32xbf16> to vector<2304x32xbf16>
    %2 = vector.extract_strided_slice %1 {offsets = [0, 0], sizes = [2048, 32], strides = [1, 1]} : vector<2304x32xbf16> to vector<2048x32xbf16>
    %3 = vector.extract_strided_slice %1 {offsets = [256, 0], sizes = [2048, 32], strides = [1, 1]} : vector<2304x32xbf16> to vector<2048x32xbf16>
    %4 = tpu.concatenate %2, %3 in 1 : vector<2048x32xbf16>, vector<2048x32xbf16> -> vector<2048x64xbf16>
    %c0_2 = arith.constant 0 : index
    %c0_3 = arith.constant 0 : index
    %5 = vector.load %arg2[%c0_2, %c0_3] : memref<64x128xbf16, #tpu.memory_space<vmem>>, vector<64x128xbf16>
    %cst = arith.constant dense<0.000000e+00> : vector<2048x128xf32>
    %6 = tpu.matmul %4, %5, %cst {dimension_numbers = #tpu.dot_dimension_numbers<[1], [0], [0], [1], [0, 0, 1, 1], [], []>} : vector<2048x64xbf16>, vector<64x128xbf16>, vector<2048x128xf32> -> vector<2048x128xf32>
    %7 = vector.extract_strided_slice %6 {offsets = [0, 0], sizes = [2048, 64], strides = [1, 1]} : vector<2048x128xf32> to vector<2048x64xf32>
    %8 = vector.extract_strided_slice %6 {offsets = [0, 64], sizes = [2048, 64], strides = [1, 1]} : vector<2048x128xf32> to vector<2048x64xf32>
    %9 = arith.mulf %7, %7 : vector<2048x64xf32>
    %10 = arith.mulf %8, %8 : vector<2048x64xf32>
    %11 = arith.addf %9, %10 : vector<2048x64xf32>
    %12 = math.sqrt %11 : vector<2048x64xf32>
    %13 = arith.truncf %12 : vector<2048x64xf32> to vector<2048x64xbf16>
    %c0_4 = arith.constant 0 : index
    %c0_5 = arith.constant 0 : index
    %14 = vector.load %arg3[%c0_4, %c0_5] : memref<64x16xbf16, #tpu.memory_space<vmem>>, vector<64x16xbf16>
    %cst_6 = arith.constant dense<0.000000e+00> : vector<2048x16xf32>
    %15 = tpu.matmul %13, %14, %cst_6 {dimension_numbers = #tpu.dot_dimension_numbers<[1], [0], [0], [1], [0, 0, 1, 1], [], []>} : vector<2048x64xbf16>, vector<64x16xbf16>, vector<2048x16xf32> -> vector<2048x16xf32>
    %cst_7 = arith.constant 1.000000e-03 : f32
    %16 = vector.broadcast %cst_7 : f32 to vector<2048x16xf32>
    %17 = arith.addf %15, %16 : vector<2048x16xf32>
    %18 = math.log %17 : vector<2048x16xf32>
    %19 = vector.extract_strided_slice %18 {offsets = [0, 0], sizes = [256, 16], strides = [1, 1]} : vector<2048x16xf32> to vector<256x16xf32>
    %20 = vector.extract_strided_slice %18 {offsets = [256, 0], sizes = [256, 16], strides = [1, 1]} : vector<2048x16xf32> to vector<256x16xf32>
    %21 = vector.extract_strided_slice %18 {offsets = [512, 0], sizes = [256, 16], strides = [1, 1]} : vector<2048x16xf32> to vector<256x16xf32>
    %22 = vector.extract_strided_slice %18 {offsets = [768, 0], sizes = [256, 16], strides = [1, 1]} : vector<2048x16xf32> to vector<256x16xf32>
    %23 = vector.extract_strided_slice %18 {offsets = [1024, 0], sizes = [256, 16], strides = [1, 1]} : vector<2048x16xf32> to vector<256x16xf32>
    %24 = vector.extract_strided_slice %18 {offsets = [1280, 0], sizes = [256, 16], strides = [1, 1]} : vector<2048x16xf32> to vector<256x16xf32>
    %25 = vector.extract_strided_slice %18 {offsets = [1536, 0], sizes = [256, 16], strides = [1, 1]} : vector<2048x16xf32> to vector<256x16xf32>
    %26 = vector.extract_strided_slice %18 {offsets = [1792, 0], sizes = [256, 16], strides = [1, 1]} : vector<2048x16xf32> to vector<256x16xf32>
    %27 = tpu.concatenate %19, %20, %21, %22, %23, %24, %25, %26 in 1 : vector<256x16xf32>, vector<256x16xf32>, vector<256x16xf32>, vector<256x16xf32>, vector<256x16xf32>, vector<256x16xf32>, vector<256x16xf32>, vector<256x16xf32> -> vector<256x128xf32>
    %28 = arith.truncf %27 : vector<256x128xf32> to vector<256x128xbf16>
    %c0_8 = arith.constant 0 : index
    %c0_9 = arith.constant 0 : index
    %29 = vector.load %arg4[%c0_8, %c0_9] : memref<128x32xbf16, #tpu.memory_space<vmem>>, vector<128x32xbf16>
    %cst_10 = arith.constant dense<0.000000e+00> : vector<256x32xf32>
    %30 = tpu.matmul %28, %29, %cst_10 {dimension_numbers = #tpu.dot_dimension_numbers<[1], [0], [0], [1], [0, 0, 1, 1], [], []>} : vector<256x128xbf16>, vector<128x32xbf16>, vector<256x32xf32> -> vector<256x32xf32>
    %c0_11 = arith.constant 0 : index
    %c0_12 = arith.constant 0 : index
    %31 = vector.load %arg5[%c0_11, %c0_12] : memref<1x32xf32, #tpu.memory_space<vmem>>, vector<1x32xf32>
    %32 = vector.broadcast %31 : vector<1x32xf32> to vector<256x32xf32>
    %33 = arith.addf %30, %32 : vector<256x32xf32>
    %cst_13 = arith.constant 0.000000e+00 : f32
    %34 = vector.broadcast %cst_13 : f32 to vector<256x32xf32>
    %35 = arith.maximumf %33, %34 : vector<256x32xf32>
    %36 = arith.truncf %35 : vector<256x32xf32> to vector<256x32xbf16>
    %c0_14 = arith.constant 0 : index
    %c0_15 = arith.constant 0 : index
    %37 = vector.load %arg6[%c0_14, %c0_15] : memref<32x128xbf16, #tpu.memory_space<vmem>>, vector<32x128xbf16>
    %cst_16 = arith.constant dense<0.000000e+00> : vector<256x128xf32>
    %38 = tpu.matmul %36, %37, %cst_16 {dimension_numbers = #tpu.dot_dimension_numbers<[1], [0], [0], [1], [0, 0, 1, 1], [], []>} : vector<256x32xbf16>, vector<32x128xbf16>, vector<256x128xf32> -> vector<256x128xf32>
    %c0_17 = arith.constant 0 : index
    %c0_18 = arith.constant 0 : index
    %39 = vector.load %arg7[%c0_17, %c0_18] : memref<1x128xf32, #tpu.memory_space<vmem>>, vector<1x128xf32>
    %40 = vector.broadcast %39 : vector<1x128xf32> to vector<256x128xf32>
    %41 = arith.addf %38, %40 : vector<256x128xf32>
    %42 = arith.negf %41 : vector<256x128xf32>
    %43 = math.exp %42 : vector<256x128xf32>
    %cst_19 = arith.constant 1.000000e+00 : f32
    %44 = vector.broadcast %cst_19 : f32 to vector<256x128xf32>
    %45 = arith.addf %44, %43 : vector<256x128xf32>
    %46 = arith.divf %44, %45 : vector<256x128xf32>
    %47 = arith.truncf %46 : vector<256x128xf32> to vector<256x128xbf16>
    %c0_20 = arith.constant 0 : index
    %c0_21 = arith.constant 0 : index
    %48 = vector.load %arg8[%c0_20, %c0_21] : memref<256x128xbf16, #tpu.memory_space<vmem>>, vector<256x128xbf16>
    tpu.vector_store %arg8[%c0_20, %c0_21], %47 {strides = array<i32>} : memref<256x128xbf16, #tpu.memory_space<vmem>>, vector<256x128xbf16>,
    return
  }
  func.func @transform_0(%arg0: i32) -> (i32, i32, i32) {
    %c0_i32 = arith.constant 0 : i32
    %c0_i32_0 = arith.constant 0 : i32
    %c0_i32_1 = arith.constant 0 : i32
    return %arg0, %c0_i32, %c0_i32_0 : i32, i32, i32
  }
  func.func @transform_1(%arg0: i32) -> (i32, i32) {
    %c0_i32 = arith.constant 0 : i32
    %c0_i32_0 = arith.constant 0 : i32
    %c0_i32_1 = arith.constant 0 : i32
    return %c0_i32, %c0_i32_0 : i32, i32
  }
  func.func @transform_2(%arg0: i32) -> (i32, i32) {
    %c0_i32 = arith.constant 0 : i32
    %c0_i32_0 = arith.constant 0 : i32
    %c0_i32_1 = arith.constant 0 : i32
    return %c0_i32, %c0_i32_0 : i32, i32
  }
  func.func @transform_3(%arg0: i32) -> (i32, i32) {
    %c0_i32 = arith.constant 0 : i32
    %c0_i32_0 = arith.constant 0 : i32
    %c0_i32_1 = arith.constant 0 : i32
    return %c0_i32, %c0_i32_0 : i32, i32
  }
  func.func @transform_4(%arg0: i32) -> (i32, i32) {
    %c0_i32 = arith.constant 0 : i32
    %c0_i32_0 = arith.constant 0 : i32
    %c0_i32_1 = arith.constant 0 : i32
    return %c0_i32, %c0_i32_0 : i32, i32
  }
  func.func @transform_5(%arg0: i32) -> (i32, i32) {
    %c0_i32 = arith.constant 0 : i32
    %c0_i32_0 = arith.constant 0 : i32
    %c0_i32_1 = arith.constant 0 : i32
    return %c0_i32, %c0_i32_0 : i32, i32
  }
  func.func @transform_6(%arg0: i32) -> (i32, i32) {
    %c0_i32 = arith.constant 0 : i32
    %c0_i32_0 = arith.constant 0 : i32
    %c0_i32_1 = arith.constant 0 : i32
    return %c0_i32, %c0_i32_0 : i32, i32
  }
  func.func @transform_7(%arg0: i32) -> (i32, i32) {
    %c0_i32 = arith.constant 0 : i32
    %c0_i32_0 = arith.constant 0 : i32
    return %arg0, %c0_i32 : i32, i32
  }
}

</mosaic_0001>

<llo_original>
// kernel: tpu_custom_call.1
$region0: #{tpu_custom_call.1}
  #allocation0 [shape = 'u32[]', space=smem, size = 0x4, offset = 0x4, fixed_abs, tag = 'smem constant byte address 0x4 - core index']
  #allocation1 [shape = 'u32[144,128]{1,0:T(1,128)}', space=vmem, size = 0x12000, scoped, tag = 'internal scratch']
  %s0 = inlined_call_operand.vmem [shape: bf16[1,2304,32], index: 0, kind: input, shape index: {}]
  %s1 = inlined_call_operand.vmem [shape: bf16[64,128], index: 1, kind: input, shape index: {}]
  %s2 = inlined_call_operand.vmem [shape: bf16[64,16], index: 2, kind: input, shape index: {}]
  %s3 = inlined_call_operand.vmem [shape: bf16[128,32], index: 3, kind: input, shape index: {}]
  %s4 = inlined_call_operand.vmem [shape: f32[1,32], index: 4, kind: input, shape index: {}]
  %s5 = inlined_call_operand.vmem [shape: bf16[32,128], index: 5, kind: input, shape index: {}]
  %s6 = inlined_call_operand.vmem [shape: f32[1,128], index: 6, kind: input, shape index: {}]
  %s7 = inlined_call_operand.hbm [shape: bf16[256,128], index: 7, kind: output, shape index: {}]
  %s8 = sld [smem:[#allocation0]]
  $region38: #{tpu_custom_call.1} parent=0
    _
  %s10 = ssub.s32 1, %s8
  %s11 = scalar_select 0, %s10, %s8
  $region1: #{tpu_custom_call.1} parent=0
    #allocation2 [shape = 'u8[65536]{0}', space=vmem, size = 0x10000, scoped, tag = 'output window, operand 0, single buffered']
    #allocation3 [shape = 's32[1]{0}', space=sflag, size = 0x4, scoped, tag = 'scoped memory for tpu_custom_call.1']
    %12 = vsyncpa [#allocation3], 0
    // Predicated region
    $region2: #{tpu_custom_call.1} parent=1 // pred_check
      _
    $region3: #{tpu_custom_call.1} parent=1 // pred_check_branch
      %14 = sbr.rel (0) target = $region5
    $region4: #{tpu_custom_call.1} parent=1 // pred_region
      _
    $region5: #{tpu_custom_call.1} parent=1 // pred_fallthru
      _
    // Predicated region
    $region6: #{tpu_custom_call.1} parent=1 // pred_check
      _
    $region7: #{tpu_custom_call.1} parent=1 // pred_check_branch
      %16 = sbr.rel (0) target = $region9
    $region8: #{tpu_custom_call.1} parent=1 // pred_region
      _
    $region9: #{tpu_custom_call.1} parent=1 // pred_fallthru
      _
    // Predicated region
    $region10: #{tpu_custom_call.1} parent=1 // pred_check
      _
    $region11: #{tpu_custom_call.1} parent=1 // pred_check_branch
      %18 = sbr.rel (0) target = $region13
    $region12: #{tpu_custom_call.1} parent=1 // pred_region
      _
    $region13: #{tpu_custom_call.1} parent=1 // pred_fallthru
      _
    // Predicated region
    $region14: #{tpu_custom_call.1} parent=1 // pred_check
      _
    $region15: #{tpu_custom_call.1} parent=1 // pred_check_branch
      %20 = sbr.rel (0) target = $region17
    $region16: #{tpu_custom_call.1} parent=1 // pred_region
      _
    $region17: #{tpu_custom_call.1} parent=1 // pred_fallthru
      _
    // Predicated region
    $region18: #{tpu_custom_call.1} parent=1 // pred_check
      _
    $region19: #{tpu_custom_call.1} parent=1 // pred_check_branch
      %22 = sbr.rel (0) target = $region21
    $region20: #{tpu_custom_call.1} parent=1 // pred_region
      _
    $region21: #{tpu_custom_call.1} parent=1 // pred_fallthru
      _
    // Predicated region
    $region22: #{tpu_custom_call.1} parent=1 // pred_check
      _
    $region23: #{tpu_custom_call.1} parent=1 // pred_check_branch
      %24 = sbr.rel (0) target = $region25
    $region24: #{tpu_custom_call.1} parent=1 // pred_region
      _
    $region25: #{tpu_custom_call.1} parent=1 // pred_fallthru
      _
    // Predicated region
    $region26: #{tpu_custom_call.1} parent=1 // pred_check
      _
    $region27: #{tpu_custom_call.1} parent=1 // pred_check_branch
      %26 = sbr.rel (0) target = $region29
    $region28: #{tpu_custom_call.1} parent=1 // pred_region
      _
    $region29: #{tpu_custom_call.1} parent=1 // pred_fallthru
      _
    %v28 = vld [vmem:[%s0] sm:$0xf]
    %v29 = vld [vmem:[%s0 + $0x4] sm:$0xf]
    %v30 = vld [vmem:[%s0 + $0x8] sm:$0xf]
    %v31 = vld [vmem:[%s0 + $0xc] sm:$0xf]
    %v32 = vld [vmem:[%s0 + $0x10] sm:$0xf]
    %v33 = vld [vmem:[%s0 + $0x14] sm:$0xf]
    %v34 = vld [vmem:[%s0 + $0x18] sm:$0xf]
    %v35 = vld [vmem:[%s0 + $0x1c] sm:$0xf]
    %v36 = vld [vmem:[%s0 + $0x20] sm:$0xf]
    %v37 = vld [vmem:[%s0 + $0x24] sm:$0xf]
    %v38 = vld [vmem:[%s0 + $0x28] sm:$0xf]
    %v39 = vld [vmem:[%s0 + $0x2c] sm:$0xf]
    %v40 = vld [vmem:[%s0 + $0x30] sm:$0xf]
    %v41 = vld [vmem:[%s0 + $0x34] sm:$0xf]
    %v42 = vld [vmem:[%s0 + $0x38] sm:$0xf]
    %v43 = vld [vmem:[%s0 + $0x3c] sm:$0xf]
    %v44 = vld [vmem:[%s0 + $0x40] sm:$0xf]
    %v45 = vld [vmem:[%s0 + $0x44] sm:$0xf]
    %v46 = vld [vmem:[%s0 + $0x48] sm:$0xf]
    %v47 = vld [vmem:[%s0 + $0x4c] sm:$0xf]
    %v48 = vld [vmem:[%s0 + $0x50] sm:$0xf]
    %v49 = vld [vmem:[%s0 + $0x54] sm:$0xf]
    %v50 = vld [vmem:[%s0 + $0x58] sm:$0xf]
    %v51 = vld [vmem:[%s0 + $0x5c] sm:$0xf]
    %v52 = vld [vmem:[%s0 + $0x60] sm:$0xf]
    %v53 = vld [vmem:[%s0 + $0x64] sm:$0xf]
    %v54 = vld [vmem:[%s0 + $0x68] sm:$0xf]
    %v55 = vld [vmem:[%s0 + $0x6c] sm:$0xf]
    %v56 = vld [vmem:[%s0 + $0x70] sm:$0xf]
    %v57 = vld [vmem:[%s0 + $0x74] sm:$0xf]
    %v58 = vld [vmem:[%s0 + $0x78] sm:$0xf]
    %v59 = vld [vmem:[%s0 + $0x7c] sm:$0xf]
    %v60 = vld [vmem:[%s0 + $0x80] sm:$0xf]
    %v61 = vld [vmem:[%s0 + $0x84] sm:$0xf]
    %v62 = vld [vmem:[%s0 + $0x88] sm:$0xf]
    %v63 = vld [vmem:[%s0 + $0x8c] sm:$0xf]
    %v64 = vld [vmem:[%s0 + $0x90] sm:$0xf]
    %v65 = vld [vmem:[%s0 + $0x94] sm:$0xf]
    %v66 = vld [vmem:[%s0 + $0x98] sm:$0xf]
    %v67 = vld [vmem:[%s0 + $0x9c] sm:$0xf]
    %v68 = vld [vmem:[%s0 + $0xa0] sm:$0xf]
    %v69 = vld [vmem:[%s0 + $0xa4] sm:$0xf]
    %v70 = vld [vmem:[%s0 + $0xa8] sm:$0xf]
    %v71 = vld [vmem:[%s0 + $0xac] sm:$0xf]
    %v72 = vld [vmem:[%s0 + $0xb0] sm:$0xf]
    %v73 = vld [vmem:[%s0 + $0xb4] sm:$0xf]
    %v74 = vld [vmem:[%s0 + $0xb8] sm:$0xf]
    %v75 = vld [vmem:[%s0 + $0xbc] sm:$0xf]
    %v76 = vld [vmem:[%s0 + $0xc0] sm:$0xf]
    %v77 = vld [vmem:[%s0 + $0xc4] sm:$0xf]
    %v78 = vld [vmem:[%s0 + $0xc8] sm:$0xf]
    %v79 = vld [vmem:[%s0 + $0xcc] sm:$0xf]
    %v80 = vld [vmem:[%s0 + $0xd0] sm:$0xf]
    %v81 = vld [vmem:[%s0 + $0xd4] sm:$0xf]
    %v82 = vld [vmem:[%s0 + $0xd8] sm:$0xf]
    %v83 = vld [vmem:[%s0 + $0xdc] sm:$0xf]
    %v84 = vld [vmem:[%s0 + $0xe0] sm:$0xf]
    %v85 = vld [vmem:[%s0 + $0xe4] sm:$0xf]
    %v86 = vld [vmem:[%s0 + $0xe8] sm:$0xf]
    %v87 = vld [vmem:[%s0 + $0xec] sm:$0xf]
    %v88 = vld [vmem:[%s0 + $0xf0] sm:$0xf]
    %v89 = vld [vmem:[%s0 + $0xf4] sm:$0xf]
    %v90 = vld [vmem:[%s0 + $0xf8] sm:$0xf]
    %v91 = vld [vmem:[%s0 + $0xfc] sm:$0xf]
    %v92 = vld [vmem:[%s0 + $0x100] sm:$0xf]
    %v93 = vld [vmem:[%s0 + $0x104] sm:$0xf]
    %v94 = vld [vmem:[%s0 + $0x108] sm:$0xf]
    %v95 = vld [vmem:[%s0 + $0x10c] sm:$0xf]
    %v96 = vld [vmem:[%s0 + $0x110] sm:$0xf]
    %v97 = vld [vmem:[%s0 + $0x114] sm:$0xf]
    %v98 = vld [vmem:[%s0 + $0x118] sm:$0xf]
    %v99 = vld [vmem:[%s0 + $0x11c] sm:$0xf]
    %v100 = vld [vmem:[%s0 + $0x120] sm:$0xf]
    %v101 = vld [vmem:[%s0 + $0x124] sm:$0xf]
    %v102 = vld [vmem:[%s0 + $0x128] sm:$0xf]
    %v103 = vld [vmem:[%s0 + $0x12c] sm:$0xf]
    %v104 = vld [vmem:[%s0 + $0x130] sm:$0xf]
    %v105 = vld [vmem:[%s0 + $0x134] sm:$0xf]
    %v106 = vld [vmem:[%s0 + $0x138] sm:$0xf]
    %v107 = vld [vmem:[%s0 + $0x13c] sm:$0xf]
    %v108 = vld [vmem:[%s0 + $0x140] sm:$0xf]
    %v109 = vld [vmem:[%s0 + $0x144] sm:$0xf]
    %v110 = vld [vmem:[%s0 + $0x148] sm:$0xf]
    %v111 = vld [vmem:[%s0 + $0x14c] sm:$0xf]
    %v112 = vld [vmem:[%s0 + $0x150] sm:$0xf]
    %v113 = vld [vmem:[%s0 + $0x154] sm:$0xf]
    %v114 = vld [vmem:[%s0 + $0x158] sm:$0xf]
    %v115 = vld [vmem:[%s0 + $0x15c] sm:$0xf]
    %v116 = vld [vmem:[%s0 + $0x160] sm:$0xf]
    %v117 = vld [vmem:[%s0 + $0x164] sm:$0xf]
    %v118 = vld [vmem:[%s0 + $0x168] sm:$0xf]
    %v119 = vld [vmem:[%s0 + $0x16c] sm:$0xf]
    %v120 = vld [vmem:[%s0 + $0x170] sm:$0xf]
    %v121 = vld [vmem:[%s0 + $0x174] sm:$0xf]
    %v122 = vld [vmem:[%s0 + $0x178] sm:$0xf]
    %v123 = vld [vmem:[%s0 + $0x17c] sm:$0xf]
    %v124 = vld [vmem:[%s0 + $0x180] sm:$0xf]
    %v125 = vld [vmem:[%s0 + $0x184] sm:$0xf]
    %v126 = vld [vmem:[%s0 + $0x188] sm:$0xf]
    %v127 = vld [vmem:[%s0 + $0x18c] sm:$0xf]
    %v128 = vld [vmem:[%s0 + $0x190] sm:$0xf]
    %v129 = vld [vmem:[%s0 + $0x194] sm:$0xf]
    %v130 = vld [vmem:[%s0 + $0x198] sm:$0xf]
    %v131 = vld [vmem:[%s0 + $0x19c] sm:$0xf]
    %v132 = vld [vmem:[%s0 + $0x1a0] sm:$0xf]
    %v133 = vld [vmem:[%s0 + $0x1a4] sm:$0xf]
    %v134 = vld [vmem:[%s0 + $0x1a8] sm:$0xf]
    %v135 = vld [vmem:[%s0 + $0x1ac] sm:$0xf]
    %v136 = vld [vmem:[%s0 + $0x1b0] sm:$0xf]
    %v137 = vld [vmem:[%s0 + $0x1b4] sm:$0xf]
    %v138 = vld [vmem:[%s0 + $0x1b8] sm:$0xf]
    %v139 = vld [vmem:[%s0 + $0x1bc] sm:$0xf]
    %v140 = vld [vmem:[%s0 + $0x1c0] sm:$0xf]
    %v141 = vld [vmem:[%s0 + $0x1c4] sm:$0xf]
    %v142 = vld [vmem:[%s0 + $0x1c8] sm:$0xf]
    %v143 = vld [vmem:[%s0 + $0x1cc] sm:$0xf]
    %v144 = vld [vmem:[%s0 + $0x1d0] sm:$0xf]
    %v145 = vld [vmem:[%s0 + $0x1d4] sm:$0xf]
    %v146 = vld [vmem:[%s0 + $0x1d8] sm:$0xf]
    %v147 = vld [vmem:[%s0 + $0x1dc] sm:$0xf]
    %v148 = vld [vmem:[%s0 + $0x1e0] sm:$0xf]
    %v149 = vld [vmem:[%s0 + $0x1e4] sm:$0xf]
    %v150 = vld [vmem:[%s0 + $0x1e8] sm:$0xf]
    %v151 = vld [vmem:[%s0 + $0x1ec] sm:$0xf]
    %v152 = vld [vmem:[%s0 + $0x1f0] sm:$0xf]
    %v153 = vld [vmem:[%s0 + $0x1f4] sm:$0xf]
    %v154 = vld [vmem:[%s0 + $0x1f8] sm:$0xf]
    %v155 = vld [vmem:[%s0 + $0x1fc] sm:$0xf]
    %v156 = vld [vmem:[%s0 + $0x200] sm:$0xf]
    %v157 = vld [vmem:[%s0 + $0x204] sm:$0xf]
    %v158 = vld [vmem:[%s0 + $0x208] sm:$0xf]
    %v159 = vld [vmem:[%s0 + $0x20c] sm:$0xf]
    %v160 = vld [vmem:[%s0 + $0x210] sm:$0xf]
    %v161 = vld [vmem:[%s0 + $0x214] sm:$0xf]
    %v162 = vld [vmem:[%s0 + $0x218] sm:$0xf]
    %v163 = vld [vmem:[%s0 + $0x21c] sm:$0xf]
    %v164 = vld [vmem:[%s0 + $0x220] sm:$0xf]
    %v165 = vld [vmem:[%s0 + $0x224] sm:$0xf]
    %v166 = vld [vmem:[%s0 + $0x228] sm:$0xf]
    %v167 = vld [vmem:[%s0 + $0x22c] sm:$0xf]
    %v168 = vld [vmem:[%s0 + $0x230] sm:$0xf]
    %v169 = vld [vmem:[%s0 + $0x234] sm:$0xf]
    %v170 = vld [vmem:[%s0 + $0x238] sm:$0xf]
    %v171 = vld [vmem:[%s0 + $0x23c] sm:$0xf]
    %v172 = vld [vmem:[%s0 + $0x240] sm:$0xf]
    %v173 = vld [vmem:[%s0 + $0x244] sm:$0xf]
    %v174 = vld [vmem:[%s0 + $0x248] sm:$0xf]
    %v175 = vld [vmem:[%s0 + $0x24c] sm:$0xf]
    %v176 = vld [vmem:[%s0 + $0x250] sm:$0xf]
    %v177 = vld [vmem:[%s0 + $0x254] sm:$0xf]
    %v178 = vld [vmem:[%s0 + $0x258] sm:$0xf]
    %v179 = vld [vmem:[%s0 + $0x25c] sm:$0xf]
    %v180 = vld [vmem:[%s0 + $0x260] sm:$0xf]
    %v181 = vld [vmem:[%s0 + $0x264] sm:$0xf]
    %v182 = vld [vmem:[%s0 + $0x268] sm:$0xf]
    %v183 = vld [vmem:[%s0 + $0x26c] sm:$0xf]
    %v184 = vld [vmem:[%s0 + $0x270] sm:$0xf]
    %v185 = vld [vmem:[%s0 + $0x274] sm:$0xf]
    %v186 = vld [vmem:[%s0 + $0x278] sm:$0xf]
    %v187 = vld [vmem:[%s0 + $0x27c] sm:$0xf]
    %v188 = vld [vmem:[%s0 + $0x280] sm:$0xf]
    %v189 = vld [vmem:[%s0 + $0x284] sm:$0xf]
    %v190 = vld [vmem:[%s0 + $0x288] sm:$0xf]
    %v191 = vld [vmem:[%s0 + $0x28c] sm:$0xf]
    %v192 = vld [vmem:[%s0 + $0x290] sm:$0xf]
    %v193 = vld [vmem:[%s0 + $0x294] sm:$0xf]
    %v194 = vld [vmem:[%s0 + $0x298] sm:$0xf]
    %v195 = vld [vmem:[%s0 + $0x29c] sm:$0xf]
    %v196 = vld [vmem:[%s0 + $0x2a0] sm:$0xf]
    %v197 = vld [vmem:[%s0 + $0x2a4] sm:$0xf]
    %v198 = vld [vmem:[%s0 + $0x2a8] sm:$0xf]
    %v199 = vld [vmem:[%s0 + $0x2ac] sm:$0xf]
    %v200 = vld [vmem:[%s0 + $0x2b0] sm:$0xf]
    %v201 = vld [vmem:[%s0 + $0x2b4] sm:$0xf]
    %v202 = vld [vmem:[%s0 + $0x2b8] sm:$0xf]
    %v203 = vld [vmem:[%s0 + $0x2bc] sm:$0xf]
    %v204 = vld [vmem:[%s0 + $0x2c0] sm:$0xf]
    %v205 = vld [vmem:[%s0 + $0x2c4] sm:$0xf]
    %v206 = vld [vmem:[%s0 + $0x2c8] sm:$0xf]
    %v207 = vld [vmem:[%s0 + $0x2cc] sm:$0xf]
    %v208 = vld [vmem:[%s0 + $0x2d0] sm:$0xf]
    %v209 = vld [vmem:[%s0 + $0x2d4] sm:$0xf]
    %v210 = vld [vmem:[%s0 + $0x2d8] sm:$0xf]
    %v211 = vld [vmem:[%s0 + $0x2dc] sm:$0xf]
    %v212 = vld [vmem:[%s0 + $0x2e0] sm:$0xf]
    %v213 = vld [vmem:[%s0 + $0x2e4] sm:$0xf]
    %v214 = vld [vmem:[%s0 + $0x2e8] sm:$0xf]
    %v215 = vld [vmem:[%s0 + $0x2ec] sm:$0xf]
    %v216 = vld [vmem:[%s0 + $0x2f0] sm:$0xf]
    %v217 = vld [vmem:[%s0 + $0x2f4] sm:$0xf]
    %v218 = vld [vmem:[%s0 + $0x2f8] sm:$0xf]
    %v219 = vld [vmem:[%s0 + $0x2fc] sm:$0xf]
    %v220 = vld [vmem:[%s0 + $0x300] sm:$0xf]
    %v221 = vld [vmem:[%s0 + $0x304] sm:$0xf]
    %v222 = vld [vmem:[%s0 + $0x308] sm:$0xf]
    %v223 = vld [vmem:[%s0 + $0x30c] sm:$0xf]
    %v224 = vld [vmem:[%s0 + $0x310] sm:$0xf]
    %v225 = vld [vmem:[%s0 + $0x314] sm:$0xf]
    %v226 = vld [vmem:[%s0 + $0x318] sm:$0xf]
    %v227 = vld [vmem:[%s0 + $0x31c] sm:$0xf]
    %v228 = vld [vmem:[%s0 + $0x320] sm:$0xf]
    %v229 = vld [vmem:[%s0 + $0x324] sm:$0xf]
    %v230 = vld [vmem:[%s0 + $0x328] sm:$0xf]
    %v231 = vld [vmem:[%s0 + $0x32c] sm:$0xf]
    %v232 = vld [vmem:[%s0 + $0x330] sm:$0xf]
    %v233 = vld [vmem:[%s0 + $0x334] sm:$0xf]
    %v234 = vld [vmem:[%s0 + $0x338] sm:$0xf]
    %v235 = vld [vmem:[%s0 + $0x33c] sm:$0xf]
    %v236 = vld [vmem:[%s0 + $0x340] sm:$0xf]
    %v237 = vld [vmem:[%s0 + $0x344] sm:$0xf]
    %v238 = vld [vmem:[%s0 + $0x348] sm:$0xf]
    %v239 = vld [vmem:[%s0 + $0x34c] sm:$0xf]
    %v240 = vld [vmem:[%s0 + $0x350] sm:$0xf]
    %v241 = vld [vmem:[%s0 + $0x354] sm:$0xf]
    %v242 = vld [vmem:[%s0 + $0x358] sm:$0xf]
    %v243 = vld [vmem:[%s0 + $0x35c] sm:$0xf]
    %v244 = vld [vmem:[%s0 + $0x360] sm:$0xf]
    %v245 = vld [vmem:[%s0 + $0x364] sm:$0xf]
    %v246 = vld [vmem:[%s0 + $0x368] sm:$0xf]
    %v247 = vld [vmem:[%s0 + $0x36c] sm:$0xf]
    %v248 = vld [vmem:[%s0 + $0x370] sm:$0xf]
    %v249 = vld [vmem:[%s0 + $0x374] sm:$0xf]
    %v250 = vld [vmem:[%s0 + $0x378] sm:$0xf]
    %v251 = vld [vmem:[%s0 + $0x37c] sm:$0xf]
    %v252 = vld [vmem:[%s0 + $0x380] sm:$0xf]
    %v253 = vld [vmem:[%s0 + $0x384] sm:$0xf]
    %v254 = vld [vmem:[%s0 + $0x388] sm:$0xf]
    %v255 = vld [vmem:[%s0 + $0x38c] sm:$0xf]
    %v256 = vld [vmem:[%s0 + $0x390] sm:$0xf]
    %v257 = vld [vmem:[%s0 + $0x394] sm:$0xf]
    %v258 = vld [vmem:[%s0 + $0x398] sm:$0xf]
    %v259 = vld [vmem:[%s0 + $0x39c] sm:$0xf]
    %v260 = vld [vmem:[%s0 + $0x3a0] sm:$0xf]
    %v261 = vld [vmem:[%s0 + $0x3a4] sm:$0xf]
    %v262 = vld [vmem:[%s0 + $0x3a8] sm:$0xf]
    %v263 = vld [vmem:[%s0 + $0x3ac] sm:$0xf]
    %v264 = vld [vmem:[%s0 + $0x3b0] sm:$0xf]
    %v265 = vld [vmem:[%s0 + $0x3b4] sm:$0xf]
    %v266 = vld [vmem:[%s0 + $0x3b8] sm:$0xf]
    %v267 = vld [vmem:[%s0 + $0x3bc] sm:$0xf]
    %v268 = vld [vmem:[%s0 + $0x3c0] sm:$0xf]
    %v269 = vld [vmem:[%s0 + $0x3c4] sm:$0xf]
    %v270 = vld [vmem:[%s0 + $0x3c8] sm:$0xf]
    %v271 = vld [vmem:[%s0 + $0x3cc] sm:$0xf]
    %v272 = vld [vmem:[%s0 + $0x3d0] sm:$0xf]
    %v273 = vld [vmem:[%s0 + $0x3d4] sm:$0xf]
    %v274 = vld [vmem:[%s0 + $0x3d8] sm:$0xf]
    %v275 = vld [vmem:[%s0 + $0x3dc] sm:$0xf]
    %v276 = vld [vmem:[%s0 + $0x3e0] sm:$0xf]
    %v277 = vld [vmem:[%s0 + $0x3e4] sm:$0xf]
    %v278 = vld [vmem:[%s0 + $0x3e8] sm:$0xf]
    %v279 = vld [vmem:[%s0 + $0x3ec] sm:$0xf]
    %v280 = vld [vmem:[%s0 + $0x3f0] sm:$0xf]
    %v281 = vld [vmem:[%s0 + $0x3f4] sm:$0xf]
    %v282 = vld [vmem:[%s0 + $0x3f8] sm:$0xf]
    %v283 = vld [vmem:[%s0 + $0x3fc] sm:$0xf]
    %v284 = vld [vmem:[%s0 + $0x400] sm:$0xf]
    %v285 = vld [vmem:[%s0 + $0x404] sm:$0xf]
    %v286 = vld [vmem:[%s0 + $0x408] sm:$0xf]
    %v287 = vld [vmem:[%s0 + $0x40c] sm:$0xf]
    %v288 = vld [vmem:[%s0 + $0x410] sm:$0xf]
    %v289 = vld [vmem:[%s0 + $0x414] sm:$0xf]
    %v290 = vld [vmem:[%s0 + $0x418] sm:$0xf]
    %v291 = vld [vmem:[%s0 + $0x41c] sm:$0xf]
    %v292 = vld [vmem:[%s0 + $0x420] sm:$0xf]
    %v293 = vld [vmem:[%s0 + $0x424] sm:$0xf]
    %v294 = vld [vmem:[%s0 + $0x428] sm:$0xf]
    %v295 = vld [vmem:[%s0 + $0x42c] sm:$0xf]
    %v296 = vld [vmem:[%s0 + $0x430] sm:$0xf]
    %v297 = vld [vmem:[%s0 + $0x434] sm:$0xf]
    %v298 = vld [vmem:[%s0 + $0x438] sm:$0xf]
    %v299 = vld [vmem:[%s0 + $0x43c] sm:$0xf]
    %v300 = vld [vmem:[%s0 + $0x440] sm:$0xf]
    %v301 = vld [vmem:[%s0 + $0x444] sm:$0xf]
    %v302 = vld [vmem:[%s0 + $0x448] sm:$0xf]
    %v303 = vld [vmem:[%s0 + $0x44c] sm:$0xf]
    %v304 = vld [vmem:[%s0 + $0x450] sm:$0xf]
    %v305 = vld [vmem:[%s0 + $0x454] sm:$0xf]
    %v306 = vld [vmem:[%s0 + $0x458] sm:$0xf]
    %v307 = vld [vmem:[%s0 + $0x45c] sm:$0xf]
    %v308 = vld [vmem:[%s0 + $0x460] sm:$0xf]
    %v309 = vld [vmem:[%s0 + $0x464] sm:$0xf]
    %v310 = vld [vmem:[%s0 + $0x468] sm:$0xf]
    %v311 = vld [vmem:[%s0 + $0x46c] sm:$0xf]
    %v312 = vld [vmem:[%s0 + $0x470] sm:$0xf]
    %v313 = vld [vmem:[%s0 + $0x474] sm:$0xf]
    %v314 = vld [vmem:[%s0 + $0x478] sm:$0xf]
    %v315 = vld [vmem:[%s0 + $0x47c] sm:$0xf]
    %v572 = vunpack.c.l.b16 %v28
    %v573 = vunpack.c.l.b16 %v29
    %v574 = vunpack.c.l.b16 %v30
    %v575 = vunpack.c.l.b16 %v31
    %v576 = vunpack.c.l.b16 %v32
    %v577 = vunpack.c.l.b16 %v33
    %v578 = vunpack.c.l.b16 %v34
    %v579 = vunpack.c.l.b16 %v35
    %v580 = vunpack.c.l.b16 %v36
    %v581 = vunpack.c.l.b16 %v37
    %v582 = vunpack.c.l.b16 %v38
    %v583 = vunpack.c.l.b16 %v39
    %v584 = vunpack.c.l.b16 %v40
    %v585 = vunpack.c.l.b16 %v41
    %v586 = vunpack.c.l.b16 %v42
    %v587 = vunpack.c.l.b16 %v43
    %v588 = vunpack.c.l.b16 %v44
    %v589 = vunpack.c.l.b16 %v45
    %v590 = vunpack.c.l.b16 %v46
    %v591 = vunpack.c.l.b16 %v47
    %v592 = vunpack.c.l.b16 %v48
    %v593 = vunpack.c.l.b16 %v49
    %v594 = vunpack.c.l.b16 %v50
    %v595 = vunpack.c.l.b16 %v51
    %v596 = vunpack.c.l.b16 %v52
    %v597 = vunpack.c.l.b16 %v53
    %v598 = vunpack.c.l.b16 %v54
    %v599 = vunpack.c.l.b16 %v55
    %v600 = vunpack.c.l.b16 %v56
    %v601 = vunpack.c.l.b16 %v57
    %v602 = vunpack.c.l.b16 %v58
    %v603 = vunpack.c.l.b16 %v59
    %v604 = vunpack.c.l.b16 %v60
    %v605 = vunpack.c.l.b16 %v61
    %v606 = vunpack.c.l.b16 %v62
    %v607 = vunpack.c.l.b16 %v63
    %v608 = vunpack.c.l.b16 %v64
    %v609 = vunpack.c.l.b16 %v65
    %v610 = vunpack.c.l.b16 %v66
    %v611 = vunpack.c.l.b16 %v67
    %v612 = vunpack.c.l.b16 %v68
    %v613 = vunpack.c.l.b16 %v69
    %v614 = vunpack.c.l.b16 %v70
    %v615 = vunpack.c.l.b16 %v71
    %v616 = vunpack.c.l.b16 %v72
    %v617 = vunpack.c.l.b16 %v73
    %v618 = vunpack.c.l.b16 %v74
    %v619 = vunpack.c.l.b16 %v75
    %v620 = vunpack.c.l.b16 %v76
    %v621 = vunpack.c.l.b16 %v77
    %v622 = vunpack.c.l.b16 %v78
    %v623 = vunpack.c.l.b16 %v79
    %v624 = vunpack.c.l.b16 %v80
    %v625 = vunpack.c.l.b16 %v81
    %v626 = vunpack.c.l.b16 %v82
    %v627 = vunpack.c.l.b16 %v83
    %v628 = vunpack.c.l.b16 %v84
    %v629 = vunpack.c.l.b16 %v85
    %v630 = vunpack.c.l.b16 %v86
    %v631 = vunpack.c.l.b16 %v87
    %v632 = vunpack.c.l.b16 %v88
    %v633 = vunpack.c.l.b16 %v89
    %v634 = vunpack.c.l.b16 %v90
    %v635 = vunpack.c.l.b16 %v91
    %v636 = vunpack.c.l.b16 %v92
    %v637 = vunpack.c.l.b16 %v93
    %v638 = vunpack.c.l.b16 %v94
    %v639 = vunpack.c.l.b16 %v95
    %v640 = vunpack.c.l.b16 %v96
    %v641 = vunpack.c.l.b16 %v97
    %v642 = vunpack.c.l.b16 %v98
    %v643 = vunpack.c.l.b16 %v99
    %v644 = vunpack.c.l.b16 %v100
    %v645 = vunpack.c.l.b16 %v101
    %v646 = vunpack.c.l.b16 %v102
    %v647 = vunpack.c.l.b16 %v103
    %v648 = vunpack.c.l.b16 %v104
    %v649 = vunpack.c.l.b16 %v105
    %v650 = vunpack.c.l.b16 %v106
    %v651 = vunpack.c.l.b16 %v107
    %v652 = vunpack.c.l.b16 %v108
    %v653 = vunpack.c.l.b16 %v109
    %v654 = vunpack.c.l.b16 %v110
    %v655 = vunpack.c.l.b16 %v111
    %v656 = vunpack.c.l.b16 %v112
    %v657 = vunpack.c.l.b16 %v113
    %v658 = vunpack.c.l.b16 %v114
    %v659 = vunpack.c.l.b16 %v115
    %v660 = vunpack.c.l.b16 %v116
    %v661 = vunpack.c.l.b16 %v117
    %v662 = vunpack.c.l.b16 %v118
    %v663 = vunpack.c.l.b16 %v119
    %v664 = vunpack.c.l.b16 %v120
    %v665 = vunpack.c.l.b16 %v121
    %v666 = vunpack.c.l.b16 %v122
    %v667 = vunpack.c.l.b16 %v123
    %v668 = vunpack.c.l.b16 %v124
    %v669 = vunpack.c.l.b16 %v125
    %v670 = vunpack.c.l.b16 %v126
    %v671 = vunpack.c.l.b16 %v127
    %v672 = vunpack.c.l.b16 %v128
    %v673 = vunpack.c.l.b16 %v129
    %v674 = vunpack.c.l.b16 %v130
    %v675 = vunpack.c.l.b16 %v131
    %v676 = vunpack.c.l.b16 %v132
    %v677 = vunpack.c.l.b16 %v133
    %v678 = vunpack.c.l.b16 %v134
    %v679 = vunpack.c.l.b16 %v135
    %v680 = vunpack.c.l.b16 %v136
    %v681 = vunpack.c.l.b16 %v137
    %v682 = vunpack.c.l.b16 %v138
    %v683 = vunpack.c.l.b16 %v139
    %v684 = vunpack.c.l.b16 %v140
    %v685 = vunpack.c.l.b16 %v141
    %v686 = vunpack.c.l.b16 %v142
    %v687 = vunpack.c.l.b16 %v143
    %v688 = vunpack.c.l.b16 %v144
    %v689 = vunpack.c.l.b16 %v145
    %v690 = vunpack.c.l.b16 %v146
    %v691 = vunpack.c.l.b16 %v147
    %v692 = vunpack.c.l.b16 %v148
    %v693 = vunpack.c.l.b16 %v149
    %v694 = vunpack.c.l.b16 %v150
    %v695 = vunpack.c.l.b16 %v151
    %v696 = vunpack.c.l.b16 %v152
    %v697 = vunpack.c.l.b16 %v153
    %v698 = vunpack.c.l.b16 %v154
    %v699 = vunpack.c.l.b16 %v155
    %v700 = vunpack.c.l.b16 %v156
    %v701 = vunpack.c.l.b16 %v157
    %v702 = vunpack.c.l.b16 %v158
    %v703 = vunpack.c.l.b16 %v159
    %v704 = vunpack.c.l.b16 %v160
    %v705 = vunpack.c.l.b16 %v161
    %v706 = vunpack.c.l.b16 %v162
    %v707 = vunpack.c.l.b16 %v163
    %v708 = vunpack.c.l.b16 %v164
    %v709 = vunpack.c.l.b16 %v165
    %v710 = vunpack.c.l.b16 %v166
    %v711 = vunpack.c.l.b16 %v167
    %v712 = vunpack.c.l.b16 %v168
    %v713 = vunpack.c.l.b16 %v169
    %v714 = vunpack.c.l.b16 %v170
    %v715 = vunpack.c.l.b16 %v171
    %v716 = vunpack.c.l.b16 %v172
    %v717 = vunpack.c.l.b16 %v173
    %v718 = vunpack.c.l.b16 %v174
    %v719 = vunpack.c.l.b16 %v175
    %v720 = vunpack.c.l.b16 %v176
    %v721 = vunpack.c.l.b16 %v177
    %v722 = vunpack.c.l.b16 %v178
    %v723 = vunpack.c.l.b16 %v179
    %v724 = vunpack.c.l.b16 %v180
    %v725 = vunpack.c.l.b16 %v181
    %v726 = vunpack.c.l.b16 %v182
    %v727 = vunpack.c.l.b16 %v183
    %v728 = vunpack.c.l.b16 %v184
    %v729 = vunpack.c.l.b16 %v185
    %v730 = vunpack.c.l.b16 %v186
    %v731 = vunpack.c.l.b16 %v187
    %v732 = vunpack.c.l.b16 %v188
    %v733 = vunpack.c.l.b16 %v189
    %v734 = vunpack.c.l.b16 %v190
    %v735 = vunpack.c.l.b16 %v191
    %v736 = vunpack.c.l.b16 %v192
    %v737 = vunpack.c.l.b16 %v193
    %v738 = vunpack.c.l.b16 %v194
    %v739 = vunpack.c.l.b16 %v195
    %v740 = vunpack.c.l.b16 %v196
    %v741 = vunpack.c.l.b16 %v197
    %v742 = vunpack.c.l.b16 %v198
    %v743 = vunpack.c.l.b16 %v199
    %v744 = vunpack.c.l.b16 %v200
    %v745 = vunpack.c.l.b16 %v201
    %v746 = vunpack.c.l.b16 %v202
    %v747 = vunpack.c.l.b16 %v203
    %v748 = vunpack.c.l.b16 %v204
    %v749 = vunpack.c.l.b16 %v205
    %v750 = vunpack.c.l.b16 %v206
    %v751 = vunpack.c.l.b16 %v207
    %v752 = vunpack.c.l.b16 %v208
    %v753 = vunpack.c.l.b16 %v209
    %v754 = vunpack.c.l.b16 %v210
    %v755 = vunpack.c.l.b16 %v211
    %v756 = vunpack.c.l.b16 %v212
    %v757 = vunpack.c.l.b16 %v213
    %v758 = vunpack.c.l.b16 %v214
    %v759 = vunpack.c.l.b16 %v215
    %v760 = vunpack.c.l.b16 %v216
    %v761 = vunpack.c.l.b16 %v217
    %v762 = vunpack.c.l.b16 %v218
    %v763 = vunpack.c.l.b16 %v219
    %v764 = vunpack.c.l.b16 %v220
    %v765 = vunpack.c.l.b16 %v221
    %v766 = vunpack.c.l.b16 %v222
    %v767 = vunpack.c.l.b16 %v223
    %v768 = vunpack.c.l.b16 %v224
    %v769 = vunpack.c.l.b16 %v225
    %v770 = vunpack.c.l.b16 %v226
    %v771 = vunpack.c.l.b16 %v227
    %v772 = vunpack.c.l.b16 %v228
    %v773 = vunpack.c.l.b16 %v229
    %v774 = vunpack.c.l.b16 %v230
    %v775 = vunpack.c.l.b16 %v231
    %v776 = vunpack.c.l.b16 %v232
    %v777 = vunpack.c.l.b16 %v233
    %v778 = vunpack.c.l.b16 %v234
    %v779 = vunpack.c.l.b16 %v235
    %v780 = vunpack.c.l.b16 %v236
    %v781 = vunpack.c.l.b16 %v237
    %v782 = vunpack.c.l.b16 %v238
    %v783 = vunpack.c.l.b16 %v239
    %v784 = vunpack.c.l.b16 %v240
    %v785 = vunpack.c.l.b16 %v241
    %v786 = vunpack.c.l.b16 %v242
    %v787 = vunpack.c.l.b16 %v243
    %v788 = vunpack.c.l.b16 %v244
    %v789 = vunpack.c.l.b16 %v245
    %v790 = vunpack.c.l.b16 %v246
    %v791 = vunpack.c.l.b16 %v247
    %v792 = vunpack.c.l.b16 %v248
    %v793 = vunpack.c.l.b16 %v249
    %v794 = vunpack.c.l.b16 %v250
    %v795 = vunpack.c.l.b16 %v251
    %v796 = vunpack.c.l.b16 %v252
    %v797 = vunpack.c.l.b16 %v253
    %v798 = vunpack.c.l.b16 %v254
    %v799 = vunpack.c.l.b16 %v255
    %v800 = vunpack.c.l.b16 %v256
    %v801 = vunpack.c.l.b16 %v257
    %v802 = vunpack.c.l.b16 %v258
    %v803 = vunpack.c.l.b16 %v259
    %v804 = vunpack.c.l.b16 %v260
    %v805 = vunpack.c.l.b16 %v261
    %v806 = vunpack.c.l.b16 %v262
    %v807 = vunpack.c.l.b16 %v263
    %v808 = vunpack.c.l.b16 %v264
    %v809 = vunpack.c.l.b16 %v265
    %v810 = vunpack.c.l.b16 %v266
    %v811 = vunpack.c.l.b16 %v267
    %v812 = vunpack.c.l.b16 %v268
    %v813 = vunpack.c.l.b16 %v269
    %v814 = vunpack.c.l.b16 %v270
    %v815 = vunpack.c.l.b16 %v271
    %v816 = vunpack.c.l.b16 %v272
    %v817 = vunpack.c.l.b16 %v273
    %v818 = vunpack.c.l.b16 %v274
    %v819 = vunpack.c.l.b16 %v275
    %v820 = vunpack.c.l.b16 %v276
    %v821 = vunpack.c.l.b16 %v277
    %v822 = vunpack.c.l.b16 %v278
    %v823 = vunpack.c.l.b16 %v279
    %v824 = vunpack.c.l.b16 %v280
    %v825 = vunpack.c.l.b16 %v281
    %v826 = vunpack.c.l.b16 %v282
    %v827 = vunpack.c.l.b16 %v283
    %v828 = vpack.c.b16 %v573, %v572
    %v829 = vpack.c.b16 %v575, %v574
    %v830 = vpack.c.b16 %v577, %v576
    %v831 = vpack.c.b16 %v579, %v578
    %v832 = vpack.c.b16 %v581, %v580
    %v833 = vpack.c.b16 %v583, %v582
    %v834 = vpack.c.b16 %v585, %v584
    %v835 = vpack.c.b16 %v587, %v586
    %v836 = vpack.c.b16 %v589, %v588
    %v837 = vpack.c.b16 %v591, %v590
    %v838 = vpack.c.b16 %v593, %v592
    %v839 = vpack.c.b16 %v595, %v594
    %v840 = vpack.c.b16 %v597, %v596
    %v841 = vpack.c.b16 %v599, %v598
    %v842 = vpack.c.b16 %v601, %v600
    %v843 = vpack.c.b16 %v603, %v602
    %v844 = vpack.c.b16 %v605, %v604
    %v845 = vpack.c.b16 %v607, %v606
    %v846 = vpack.c.b16 %v609, %v608
    %v847 = vpack.c.b16 %v611, %v610
    %v848 = vpack.c.b16 %v613, %v612
    %v849 = vpack.c.b16 %v615, %v614
    %v850 = vpack.c.b16 %v617, %v616
    %v851 = vpack.c.b16 %v619, %v618
    %v852 = vpack.c.b16 %v621, %v620
    %v853 = vpack.c.b16 %v623, %v622
    %v854 = vpack.c.b16 %v625, %v624
    %v855 = vpack.c.b16 %v627, %v626
    %v856 = vpack.c.b16 %v629, %v628
    %v857 = vpack.c.b16 %v631, %v630
    %v858 = vpack.c.b16 %v633, %v632
    %v859 = vpack.c.b16 %v635, %v634
    %v860 = vpack.c.b16 %v637, %v636
    %v861 = vpack.c.b16 %v639, %v638
    %v862 = vpack.c.b16 %v641, %v640
    %v863 = vpack.c.b16 %v643, %v642
    %v864 = vpack.c.b16 %v645, %v644
    %v865 = vpack.c.b16 %v647, %v646
    %v866 = vpack.c.b16 %v649, %v648
    %v867 = vpack.c.b16 %v651, %v650
    %v868 = vpack.c.b16 %v653, %v652
    %v869 = vpack.c.b16 %v655, %v654
    %v870 = vpack.c.b16 %v657, %v656
    %v871 = vpack.c.b16 %v659, %v658
    %v872 = vpack.c.b16 %v661, %v660
    %v873 = vpack.c.b16 %v663, %v662
    %v874 = vpack.c.b16 %v665, %v664
    %v875 = vpack.c.b16 %v667, %v666
    %v876 = vpack.c.b16 %v669, %v668
    %v877 = vpack.c.b16 %v671, %v670
    %v878 = vpack.c.b16 %v673, %v672
    %v879 = vpack.c.b16 %v675, %v674
    %v880 = vpack.c.b16 %v677, %v676
    %v881 = vpack.c.b16 %v679, %v678
    %v882 = vpack.c.b16 %v681, %v680
    %v883 = vpack.c.b16 %v683, %v682
    %v884 = vpack.c.b16 %v685, %v684
    %v885 = vpack.c.b16 %v687, %v686
    %v886 = vpack.c.b16 %v689, %v688
    %v887 = vpack.c.b16 %v691, %v690
    %v888 = vpack.c.b16 %v693, %v692
    %v889 = vpack.c.b16 %v695, %v694
    %v890 = vpack.c.b16 %v697, %v696
    %v891 = vpack.c.b16 %v699, %v698
    %v892 = vpack.c.b16 %v701, %v700
    %v893 = vpack.c.b16 %v703, %v702
    %v894 = vpack.c.b16 %v705, %v704
    %v895 = vpack.c.b16 %v707, %v706
    %v896 = vpack.c.b16 %v709, %v708
    %v897 = vpack.c.b16 %v711, %v710
    %v898 = vpack.c.b16 %v713, %v712
    %v899 = vpack.c.b16 %v715, %v714
    %v900 = vpack.c.b16 %v717, %v716
    %v901 = vpack.c.b16 %v719, %v718
    %v902 = vpack.c.b16 %v721, %v720
    %v903 = vpack.c.b16 %v723, %v722
    %v904 = vpack.c.b16 %v725, %v724
    %v905 = vpack.c.b16 %v727, %v726
    %v906 = vpack.c.b16 %v729, %v728
    %v907 = vpack.c.b16 %v731, %v730
    %v908 = vpack.c.b16 %v733, %v732
    %v909 = vpack.c.b16 %v735, %v734
    %v910 = vpack.c.b16 %v737, %v736
    %v911 = vpack.c.b16 %v739, %v738
    %v912 = vpack.c.b16 %v741, %v740
    %v913 = vpack.c.b16 %v743, %v742
    %v914 = vpack.c.b16 %v745, %v744
    %v915 = vpack.c.b16 %v747, %v746
    %v916 = vpack.c.b16 %v749, %v748
    %v917 = vpack.c.b16 %v751, %v750
    %v918 = vpack.c.b16 %v753, %v752
    %v919 = vpack.c.b16 %v755, %v754
    %v920 = vpack.c.b16 %v757, %v756
    %v921 = vpack.c.b16 %v759, %v758
    %v922 = vpack.c.b16 %v761, %v760
    %v923 = vpack.c.b16 %v763, %v762
    %v924 = vpack.c.b16 %v765, %v764
    %v925 = vpack.c.b16 %v767, %v766
    %v926 = vpack.c.b16 %v769, %v768
    %v927 = vpack.c.b16 %v771, %v770
    %v928 = vpack.c.b16 %v773, %v772
    %v929 = vpack.c.b16 %v775, %v774
    %v930 = vpack.c.b16 %v777, %v776
    %v931 = vpack.c.b16 %v779, %v778
    %v932 = vpack.c.b16 %v781, %v780
    %v933 = vpack.c.b16 %v783, %v782
    %v934 = vpack.c.b16 %v785, %v784
    %v935 = vpack.c.b16 %v787, %v786
    %v936 = vpack.c.b16 %v789, %v788
    %v937 = vpack.c.b16 %v791, %v790
    %v938 = vpack.c.b16 %v793, %v792
    %v939 = vpack.c.b16 %v795, %v794
    %v940 = vpack.c.b16 %v797, %v796
    %v941 = vpack.c.b16 %v799, %v798
    %v942 = vpack.c.b16 %v801, %v800
    %v943 = vpack.c.b16 %v803, %v802
    %v944 = vpack.c.b16 %v805, %v804
    %v945 = vpack.c.b16 %v807, %v806
    %v946 = vpack.c.b16 %v809, %v808
    %v947 = vpack.c.b16 %v811, %v810
    %v948 = vpack.c.b16 %v813, %v812
    %v949 = vpack.c.b16 %v815, %v814
    %v950 = vpack.c.b16 %v817, %v816
    %v951 = vpack.c.b16 %v819, %v818
    %v952 = vpack.c.b16 %v821, %v820
    %v953 = vpack.c.b16 %v823, %v822
    %v954 = vpack.c.b16 %v825, %v824
    %v955 = vpack.c.b16 %v827, %v826
    %v988 = vunpack.c.l.b16 %v284
    %v989 = vunpack.c.l.b16 %v285
    %v990 = vunpack.c.l.b16 %v286
    %v991 = vunpack.c.l.b16 %v287
    %v992 = vunpack.c.l.b16 %v288
    %v993 = vunpack.c.l.b16 %v289
    %v994 = vunpack.c.l.b16 %v290
    %v995 = vunpack.c.l.b16 %v291
    %v996 = vunpack.c.l.b16 %v292
    %v997 = vunpack.c.l.b16 %v293
    %v998 = vunpack.c.l.b16 %v294
    %v999 = vunpack.c.l.b16 %v295
    %v1000 = vunpack.c.l.b16 %v296
    %v1001 = vunpack.c.l.b16 %v297
    %v1002 = vunpack.c.l.b16 %v298
    %v1003 = vunpack.c.l.b16 %v299
    %v1004 = vunpack.c.l.b16 %v300
    %v1005 = vunpack.c.l.b16 %v301
    %v1006 = vunpack.c.l.b16 %v302
    %v1007 = vunpack.c.l.b16 %v303
    %v1008 = vunpack.c.l.b16 %v304
    %v1009 = vunpack.c.l.b16 %v305
    %v1010 = vunpack.c.l.b16 %v306
    %v1011 = vunpack.c.l.b16 %v307
    %v1012 = vunpack.c.l.b16 %v308
    %v1013 = vunpack.c.l.b16 %v309
    %v1014 = vunpack.c.l.b16 %v310
    %v1015 = vunpack.c.l.b16 %v311
    %v1016 = vunpack.c.l.b16 %v312
    %v1017 = vunpack.c.l.b16 %v313
    %v1018 = vunpack.c.l.b16 %v314
    %v1019 = vunpack.c.l.b16 %v315
    %v1020 = vpack.c.b16 %v989, %v988
    %v1021 = vpack.c.b16 %v991, %v990
    %v1022 = vpack.c.b16 %v993, %v992
    %v1023 = vpack.c.b16 %v995, %v994
    %v1024 = vpack.c.b16 %v997, %v996
    %v1025 = vpack.c.b16 %v999, %v998
    %v1026 = vpack.c.b16 %v1001, %v1000
    %v1027 = vpack.c.b16 %v1003, %v1002
    %v1028 = vpack.c.b16 %v1005, %v1004
    %v1029 = vpack.c.b16 %v1007, %v1006
    %v1030 = vpack.c.b16 %v1009, %v1008
    %v1031 = vpack.c.b16 %v1011, %v1010
    %v1032 = vpack.c.b16 %v1013, %v1012
    %v1033 = vpack.c.b16 %v1015, %v1014
    %v1034 = vpack.c.b16 %v1017, %v1016
    %v1035 = vpack.c.b16 %v1019, %v1018
    %1036 = vrot.lane.b32.xlu0 %v844, 32
    %v1037 = vpop.permute.xlu0 %1036
    %1038 = vrot.lane.b32.xlu0 %v845, 32
    %v1039 = vpop.permute.xlu0 %1038
    %1040 = vrot.lane.b32.xlu0 %v846, 32
    %v1041 = vpop.permute.xlu0 %1040
    %1042 = vrot.lane.b32.xlu0 %v847, 32
    %v1043 = vpop.permute.xlu0 %1042
    %1044 = vrot.lane.b32.xlu0 %v848, 32
    %v1045 = vpop.permute.xlu0 %1044
    %1046 = vrot.lane.b32.xlu0 %v849, 32
    %v1047 = vpop.permute.xlu0 %1046
    %1048 = vrot.lane.b32.xlu0 %v850, 32
    %v1049 = vpop.permute.xlu0 %1048
    %1050 = vrot.lane.b32.xlu0 %v851, 32
    %v1051 = vpop.permute.xlu0 %1050
    %1052 = vrot.lane.b32.xlu0 %v852, 32
    %v1053 = vpop.permute.xlu0 %1052
    %1054 = vrot.lane.b32.xlu0 %v853, 32
    %v1055 = vpop.permute.xlu0 %1054
    %1056 = vrot.lane.b32.xlu0 %v854, 32
    %v1057 = vpop.permute.xlu0 %1056
    %1058 = vrot.lane.b32.xlu0 %v855, 32
    %v1059 = vpop.permute.xlu0 %1058
    %1060 = vrot.lane.b32.xlu0 %v856, 32
    %v1061 = vpop.permute.xlu0 %1060
    %1062 = vrot.lane.b32.xlu0 %v857, 32
    %v1063 = vpop.permute.xlu0 %1062
    %1064 = vrot.lane.b32.xlu0 %v858, 32
    %v1065 = vpop.permute.xlu0 %1064
    %1066 = vrot.lane.b32.xlu0 %v859, 32
    %v1067 = vpop.permute.xlu0 %1066
    %1068 = vrot.lane.b32.xlu0 %v860, 32
    %v1069 = vpop.permute.xlu0 %1068
    %1070 = vrot.lane.b32.xlu0 %v861, 32
    %v1071 = vpop.permute.xlu0 %1070
    %1072 = vrot.lane.b32.xlu0 %v862, 32
    %v1073 = vpop.permute.xlu0 %1072
    %1074 = vrot.lane.b32.xlu0 %v863, 32
    %v1075 = vpop.permute.xlu0 %1074
    %1076 = vrot.lane.b32.xlu0 %v864, 32
    %v1077 = vpop.permute.xlu0 %1076
    %1078 = vrot.lane.b32.xlu0 %v865, 32
    %v1079 = vpop.permute.xlu0 %1078
    %1080 = vrot.lane.b32.xlu0 %v866, 32
    %v1081 = vpop.permute.xlu0 %1080
    %1082 = vrot.lane.b32.xlu0 %v867, 32
    %v1083 = vpop.permute.xlu0 %1082
    %1084 = vrot.lane.b32.xlu0 %v868, 32
    %v1085 = vpop.permute.xlu0 %1084
    %1086 = vrot.lane.b32.xlu0 %v869, 32
    %v1087 = vpop.permute.xlu0 %1086
    %1088 = vrot.lane.b32.xlu0 %v870, 32
    %v1089 = vpop.permute.xlu0 %1088
    %1090 = vrot.lane.b32.xlu0 %v871, 32
    %v1091 = vpop.permute.xlu0 %1090
    %1092 = vrot.lane.b32.xlu0 %v872, 32
    %v1093 = vpop.permute.xlu0 %1092
    %1094 = vrot.lane.b32.xlu0 %v873, 32
    %v1095 = vpop.permute.xlu0 %1094
    %1096 = vrot.lane.b32.xlu0 %v874, 32
    %v1097 = vpop.permute.xlu0 %1096
    %1098 = vrot.lane.b32.xlu0 %v875, 32
    %v1099 = vpop.permute.xlu0 %1098
    %1100 = vrot.lane.b32.xlu0 %v876, 32
    %v1101 = vpop.permute.xlu0 %1100
    %1102 = vrot.lane.b32.xlu0 %v877, 32
    %v1103 = vpop.permute.xlu0 %1102
    %1104 = vrot.lane.b32.xlu0 %v878, 32
    %v1105 = vpop.permute.xlu0 %1104
    %1106 = vrot.lane.b32.xlu0 %v879, 32
    %v1107 = vpop.permute.xlu0 %1106
    %1108 = vrot.lane.b32.xlu0 %v880, 32
    %v1109 = vpop.permute.xlu0 %1108
    %1110 = vrot.lane.b32.xlu0 %v881, 32
    %v1111 = vpop.permute.xlu0 %1110
    %1112 = vrot.lane.b32.xlu0 %v882, 32
    %v1113 = vpop.permute.xlu0 %1112
    %1114 = vrot.lane.b32.xlu0 %v883, 32
    %v1115 = vpop.permute.xlu0 %1114
    %1116 = vrot.lane.b32.xlu0 %v884, 32
    %v1117 = vpop.permute.xlu0 %1116
    %1118 = vrot.lane.b32.xlu0 %v885, 32
    %v1119 = vpop.permute.xlu0 %1118
    %1120 = vrot.lane.b32.xlu0 %v886, 32
    %v1121 = vpop.permute.xlu0 %1120
    %1122 = vrot.lane.b32.xlu0 %v887, 32
    %v1123 = vpop.permute.xlu0 %1122
    %1124 = vrot.lane.b32.xlu0 %v888, 32
    %v1125 = vpop.permute.xlu0 %1124
    %1126 = vrot.lane.b32.xlu0 %v889, 32
    %v1127 = vpop.permute.xlu0 %1126
    %1128 = vrot.lane.b32.xlu0 %v890, 32
    %v1129 = vpop.permute.xlu0 %1128
    %1130 = vrot.lane.b32.xlu0 %v891, 32
    %v1131 = vpop.permute.xlu0 %1130
    %1132 = vrot.lane.b32.xlu0 %v892, 32
    %v1133 = vpop.permute.xlu0 %1132
    %1134 = vrot.lane.b32.xlu0 %v893, 32
    %v1135 = vpop.permute.xlu0 %1134
    %1136 = vrot.lane.b32.xlu0 %v894, 32
    %v1137 = vpop.permute.xlu0 %1136
    %1138 = vrot.lane.b32.xlu0 %v895, 32
    %v1139 = vpop.permute.xlu0 %1138
    %1140 = vrot.lane.b32.xlu0 %v896, 32
    %v1141 = vpop.permute.xlu0 %1140
    %1142 = vrot.lane.b32.xlu0 %v897, 32
    %v1143 = vpop.permute.xlu0 %1142
    %1144 = vrot.lane.b32.xlu0 %v898, 32
    %v1145 = vpop.permute.xlu0 %1144
    %1146 = vrot.lane.b32.xlu0 %v899, 32
    %v1147 = vpop.permute.xlu0 %1146
    %1148 = vrot.lane.b32.xlu0 %v900, 32
    %v1149 = vpop.permute.xlu0 %1148
    %1150 = vrot.lane.b32.xlu0 %v901, 32
    %v1151 = vpop.permute.xlu0 %1150
    %1152 = vrot.lane.b32.xlu0 %v902, 32
    %v1153 = vpop.permute.xlu0 %1152
    %1154 = vrot.lane.b32.xlu0 %v903, 32
    %v1155 = vpop.permute.xlu0 %1154
    %1156 = vrot.lane.b32.xlu0 %v904, 32
    %v1157 = vpop.permute.xlu0 %1156
    %1158 = vrot.lane.b32.xlu0 %v905, 32
    %v1159 = vpop.permute.xlu0 %1158
    %1160 = vrot.lane.b32.xlu0 %v906, 32
    %v1161 = vpop.permute.xlu0 %1160
    %1162 = vrot.lane.b32.xlu0 %v907, 32
    %v1163 = vpop.permute.xlu0 %1162
    %1164 = vrot.lane.b32.xlu0 %v908, 32
    %v1165 = vpop.permute.xlu0 %1164
    %1166 = vrot.lane.b32.xlu0 %v909, 32
    %v1167 = vpop.permute.xlu0 %1166
    %1168 = vrot.lane.b32.xlu0 %v910, 32
    %v1169 = vpop.permute.xlu0 %1168
    %1170 = vrot.lane.b32.xlu0 %v911, 32
    %v1171 = vpop.permute.xlu0 %1170
    %1172 = vrot.lane.b32.xlu0 %v912, 32
    %v1173 = vpop.permute.xlu0 %1172
    %1174 = vrot.lane.b32.xlu0 %v913, 32
    %v1175 = vpop.permute.xlu0 %1174
    %1176 = vrot.lane.b32.xlu0 %v914, 32
    %v1177 = vpop.permute.xlu0 %1176
    %1178 = vrot.lane.b32.xlu0 %v915, 32
    %v1179 = vpop.permute.xlu0 %1178
    %1180 = vrot.lane.b32.xlu0 %v916, 32
    %v1181 = vpop.permute.xlu0 %1180
    %1182 = vrot.lane.b32.xlu0 %v917, 32
    %v1183 = vpop.permute.xlu0 %1182
    %1184 = vrot.lane.b32.xlu0 %v918, 32
    %v1185 = vpop.permute.xlu0 %1184
    %1186 = vrot.lane.b32.xlu0 %v919, 32
    %v1187 = vpop.permute.xlu0 %1186
    %1188 = vrot.lane.b32.xlu0 %v920, 32
    %v1189 = vpop.permute.xlu0 %1188
    %1190 = vrot.lane.b32.xlu0 %v921, 32
    %v1191 = vpop.permute.xlu0 %1190
    %1192 = vrot.lane.b32.xlu0 %v922, 32
    %v1193 = vpop.permute.xlu0 %1192
    %1194 = vrot.lane.b32.xlu0 %v923, 32
    %v1195 = vpop.permute.xlu0 %1194
    %1196 = vrot.lane.b32.xlu0 %v924, 32
    %v1197 = vpop.permute.xlu0 %1196
    %1198 = vrot.lane.b32.xlu0 %v925, 32
    %v1199 = vpop.permute.xlu0 %1198
    %1200 = vrot.lane.b32.xlu0 %v926, 32
    %v1201 = vpop.permute.xlu0 %1200
    %1202 = vrot.lane.b32.xlu0 %v927, 32
    %v1203 = vpop.permute.xlu0 %1202
    %1204 = vrot.lane.b32.xlu0 %v928, 32
    %v1205 = vpop.permute.xlu0 %1204
    %1206 = vrot.lane.b32.xlu0 %v929, 32
    %v1207 = vpop.permute.xlu0 %1206
    %1208 = vrot.lane.b32.xlu0 %v930, 32
    %v1209 = vpop.permute.xlu0 %1208
    %1210 = vrot.lane.b32.xlu0 %v931, 32
    %v1211 = vpop.permute.xlu0 %1210
    %1212 = vrot.lane.b32.xlu0 %v932, 32
    %v1213 = vpop.permute.xlu0 %1212
    %1214 = vrot.lane.b32.xlu0 %v933, 32
    %v1215 = vpop.permute.xlu0 %1214
    %1216 = vrot.lane.b32.xlu0 %v934, 32
    %v1217 = vpop.permute.xlu0 %1216
    %1218 = vrot.lane.b32.xlu0 %v935, 32
    %v1219 = vpop.permute.xlu0 %1218
    %1220 = vrot.lane.b32.xlu0 %v936, 32
    %v1221 = vpop.permute.xlu0 %1220
    %1222 = vrot.lane.b32.xlu0 %v937, 32
    %v1223 = vpop.permute.xlu0 %1222
    %1224 = vrot.lane.b32.xlu0 %v938, 32
    %v1225 = vpop.permute.xlu0 %1224
    %1226 = vrot.lane.b32.xlu0 %v939, 32
    %v1227 = vpop.permute.xlu0 %1226
    %1228 = vrot.lane.b32.xlu0 %v940, 32
    %v1229 = vpop.permute.xlu0 %1228
    %1230 = vrot.lane.b32.xlu0 %v941, 32
    %v1231 = vpop.permute.xlu0 %1230
    %1232 = vrot.lane.b32.xlu0 %v942, 32
    %v1233 = vpop.permute.xlu0 %1232
    %1234 = vrot.lane.b32.xlu0 %v943, 32
    %v1235 = vpop.permute.xlu0 %1234
    %1236 = vrot.lane.b32.xlu0 %v944, 32
    %v1237 = vpop.permute.xlu0 %1236
    %1238 = vrot.lane.b32.xlu0 %v945, 32
    %v1239 = vpop.permute.xlu0 %1238
    %1240 = vrot.lane.b32.xlu0 %v946, 32
    %v1241 = vpop.permute.xlu0 %1240
    %1242 = vrot.lane.b32.xlu0 %v947, 32
    %v1243 = vpop.permute.xlu0 %1242
    %1244 = vrot.lane.b32.xlu0 %v948, 32
    %v1245 = vpop.permute.xlu0 %1244
    %1246 = vrot.lane.b32.xlu0 %v949, 32
    %v1247 = vpop.permute.xlu0 %1246
    %1248 = vrot.lane.b32.xlu0 %v950, 32
    %v1249 = vpop.permute.xlu0 %1248
    %1250 = vrot.lane.b32.xlu0 %v951, 32
    %v1251 = vpop.permute.xlu0 %1250
    %1252 = vrot.lane.b32.xlu0 %v952, 32
    %v1253 = vpop.permute.xlu0 %1252
    %1254 = vrot.lane.b32.xlu0 %v953, 32
    %v1255 = vpop.permute.xlu0 %1254
    %1256 = vrot.lane.b32.xlu0 %v954, 32
    %v1257 = vpop.permute.xlu0 %1256
    %1258 = vrot.lane.b32.xlu0 %v955, 32
    %v1259 = vpop.permute.xlu0 %1258
    %1260 = vrot.lane.b32.xlu0 %v1020, 32
    %v1261 = vpop.permute.xlu0 %1260
    %1262 = vrot.lane.b32.xlu0 %v1021, 32
    %v1263 = vpop.permute.xlu0 %1262
    %1264 = vrot.lane.b32.xlu0 %v1022, 32
    %v1265 = vpop.permute.xlu0 %1264
    %1266 = vrot.lane.b32.xlu0 %v1023, 32
    %v1267 = vpop.permute.xlu0 %1266
    %1268 = vrot.lane.b32.xlu0 %v1024, 32
    %v1269 = vpop.permute.xlu0 %1268
    %1270 = vrot.lane.b32.xlu0 %v1025, 32
    %v1271 = vpop.permute.xlu0 %1270
    %1272 = vrot.lane.b32.xlu0 %v1026, 32
    %v1273 = vpop.permute.xlu0 %1272
    %1274 = vrot.lane.b32.xlu0 %v1027, 32
    %v1275 = vpop.permute.xlu0 %1274
    %1276 = vrot.lane.b32.xlu0 %v1028, 32
    %v1277 = vpop.permute.xlu0 %1276
    %1278 = vrot.lane.b32.xlu0 %v1029, 32
    %v1279 = vpop.permute.xlu0 %1278
    %1280 = vrot.lane.b32.xlu0 %v1030, 32
    %v1281 = vpop.permute.xlu0 %1280
    %1282 = vrot.lane.b32.xlu0 %v1031, 32
    %v1283 = vpop.permute.xlu0 %1282
    %1284 = vrot.lane.b32.xlu0 %v1032, 32
    %v1285 = vpop.permute.xlu0 %1284
    %1286 = vrot.lane.b32.xlu0 %v1033, 32
    %v1287 = vpop.permute.xlu0 %1286
    %1288 = vrot.lane.b32.xlu0 %v1034, 32
    %v1289 = vpop.permute.xlu0 %1288
    %1290 = vrot.lane.b32.xlu0 %v1035, 32
    %v1291 = vpop.permute.xlu0 %1290
    %vm1292 = vcmask 261120
    %v1295 = vsel %vm1292, %v828, %v1037
    %v1298 = vsel %vm1292, %v829, %v1039
    %v1301 = vsel %vm1292, %v830, %v1041
    %v1304 = vsel %vm1292, %v831, %v1043
    %v1307 = vsel %vm1292, %v832, %v1045
    %v1310 = vsel %vm1292, %v833, %v1047
    %v1313 = vsel %vm1292, %v834, %v1049
    %v1316 = vsel %vm1292, %v835, %v1051
    %v1319 = vsel %vm1292, %v836, %v1053
    %v1322 = vsel %vm1292, %v837, %v1055
    %v1325 = vsel %vm1292, %v838, %v1057
    %v1328 = vsel %vm1292, %v839, %v1059
    %v1331 = vsel %vm1292, %v840, %v1061
    %v1334 = vsel %vm1292, %v841, %v1063
    %v1337 = vsel %vm1292, %v842, %v1065
    %v1340 = vsel %vm1292, %v843, %v1067
    %v1343 = vsel %vm1292, %v844, %v1069
    %v1346 = vsel %vm1292, %v845, %v1071
    %v1349 = vsel %vm1292, %v846, %v1073
    %v1352 = vsel %vm1292, %v847, %v1075
    %v1355 = vsel %vm1292, %v848, %v1077
    %v1358 = vsel %vm1292, %v849, %v1079
    %v1361 = vsel %vm1292, %v850, %v1081
    %v1364 = vsel %vm1292, %v851, %v1083
    %v1367 = vsel %vm1292, %v852, %v1085
    %v1370 = vsel %vm1292, %v853, %v1087
    %v1373 = vsel %vm1292, %v854, %v1089
    %v1376 = vsel %vm1292, %v855, %v1091
    %v1379 = vsel %vm1292, %v856, %v1093
    %v1382 = vsel %vm1292, %v857, %v1095
    %v1385 = vsel %vm1292, %v858, %v1097
    %v1388 = vsel %vm1292, %v859, %v1099
    %v1391 = vsel %vm1292, %v860, %v1101
    %v1394 = vsel %vm1292, %v861, %v1103
    %v1397 = vsel %vm1292, %v862, %v1105
    %v1400 = vsel %vm1292, %v863, %v1107
    %v1403 = vsel %vm1292, %v864, %v1109
    %v1406 = vsel %vm1292, %v865, %v1111
    %v1409 = vsel %vm1292, %v866, %v1113
    %v1412 = vsel %vm1292, %v867, %v1115
    %v1415 = vsel %vm1292, %v868, %v1117
    %v1418 = vsel %vm1292, %v869, %v1119
    %v1421 = vsel %vm1292, %v870, %v1121
    %v1424 = vsel %vm1292, %v871, %v1123
    %v1427 = vsel %vm1292, %v872, %v1125
    %v1430 = vsel %vm1292, %v873, %v1127
    %v1433 = vsel %vm1292, %v874, %v1129
    %v1436 = vsel %vm1292, %v875, %v1131
    %v1439 = vsel %vm1292, %v876, %v1133
    %v1442 = vsel %vm1292, %v877, %v1135
    %v1445 = vsel %vm1292, %v878, %v1137
    %v1448 = vsel %vm1292, %v879, %v1139
    %v1451 = vsel %vm1292, %v880, %v1141
    %v1454 = vsel %vm1292, %v881, %v1143
    %v1457 = vsel %vm1292, %v882, %v1145
    %v1460 = vsel %vm1292, %v883, %v1147
    %v1463 = vsel %vm1292, %v884, %v1149
    %v1466 = vsel %vm1292, %v885, %v1151
    %v1469 = vsel %vm1292, %v886, %v1153
    %v1472 = vsel %vm1292, %v887, %v1155
    %v1475 = vsel %vm1292, %v888, %v1157
    %v1478 = vsel %vm1292, %v889, %v1159
    %v1481 = vsel %vm1292, %v890, %v1161
    %v1484 = vsel %vm1292, %v891, %v1163
    %v1487 = vsel %vm1292, %v892, %v1165
    %v1490 = vsel %vm1292, %v893, %v1167
    %v1493 = vsel %vm1292, %v894, %v1169
    %v1496 = vsel %vm1292, %v895, %v1171
    %v1499 = vsel %vm1292, %v896, %v1173
    %v1502 = vsel %vm1292, %v897, %v1175
    %v1505 = vsel %vm1292, %v898, %v1177
    %v1508 = vsel %vm1292, %v899, %v1179
    %v1511 = vsel %vm1292, %v900, %v1181
    %v1514 = vsel %vm1292, %v901, %v1183
    %v1517 = vsel %vm1292, %v902, %v1185
    %v1520 = vsel %vm1292, %v903, %v1187
    %v1523 = vsel %vm1292, %v904, %v1189
    %v1526 = vsel %vm1292, %v905, %v1191
    %v1529 = vsel %vm1292, %v906, %v1193
    %v1532 = vsel %vm1292, %v907, %v1195
    %v1535 = vsel %vm1292, %v908, %v1197
    %v1538 = vsel %vm1292, %v909, %v1199
    %v1541 = vsel %vm1292, %v910, %v1201
    %v1544 = vsel %vm1292, %v911, %v1203
    %v1547 = vsel %vm1292, %v912, %v1205
    %v1550 = vsel %vm1292, %v913, %v1207
    %v1553 = vsel %vm1292, %v914, %v1209
    %v1556 = vsel %vm1292, %v915, %v1211
    %v1559 = vsel %vm1292, %v916, %v1213
    %v1562 = vsel %vm1292, %v917, %v1215
    %v1565 = vsel %vm1292, %v918, %v1217
    %v1568 = vsel %vm1292, %v919, %v1219
    %v1571 = vsel %vm1292, %v920, %v1221
    %v1574 = vsel %vm1292, %v921, %v1223
    %v1577 = vsel %vm1292, %v922, %v1225
    %v1580 = vsel %vm1292, %v923, %v1227
    %v1583 = vsel %vm1292, %v924, %v1229
    %v1586 = vsel %vm1292, %v925, %v1231
    %v1589 = vsel %vm1292, %v926, %v1233
    %v1592 = vsel %vm1292, %v927, %v1235
    %v1595 = vsel %vm1292, %v928, %v1237
    %v1598 = vsel %vm1292, %v929, %v1239
    %v1601 = vsel %vm1292, %v930, %v1241
    %v1604 = vsel %vm1292, %v931, %v1243
    %v1607 = vsel %vm1292, %v932, %v1245
    %v1610 = vsel %vm1292, %v933, %v1247
    %v1613 = vsel %vm1292, %v934, %v1249
    %v1616 = vsel %vm1292, %v935, %v1251
    %v1619 = vsel %vm1292, %v936, %v1253
    %v1622 = vsel %vm1292, %v937, %v1255
    %v1625 = vsel %vm1292, %v938, %v1257
    %v1628 = vsel %vm1292, %v939, %v1259
    %v1631 = vsel %vm1292, %v940, %v1261
    %v1634 = vsel %vm1292, %v941, %v1263
    %v1637 = vsel %vm1292, %v942, %v1265
    %v1640 = vsel %vm1292, %v943, %v1267
    %v1643 = vsel %vm1292, %v944, %v1269
    %v1646 = vsel %vm1292, %v945, %v1271
    %v1649 = vsel %vm1292, %v946, %v1273
    %v1652 = vsel %vm1292, %v947, %v1275
    %v1655 = vsel %vm1292, %v948, %v1277
    %v1658 = vsel %vm1292, %v949, %v1279
    %v1661 = vsel %vm1292, %v950, %v1281
    %v1664 = vsel %vm1292, %v951, %v1283
    %v1667 = vsel %vm1292, %v952, %v1285
    %v1670 = vsel %vm1292, %v953, %v1287
    %v1673 = vsel %vm1292, %v954, %v1289
    %v1676 = vsel %vm1292, %v955, %v1291
    %v1677 = vld [vmem:[%s1] sm:$0xf]
    %v1678 = vld [vmem:[%s1 + $0x4] sm:$0xf]
    %v1679 = vld [vmem:[%s1 + $0x8] sm:$0xf]
    %v1680 = vld [vmem:[%s1 + $0xc] sm:$0xf]
    %v1681 = vld [vmem:[%s1 + $0x10] sm:$0xf]
    %v1682 = vld [vmem:[%s1 + $0x14] sm:$0xf]
    %v1683 = vld [vmem:[%s1 + $0x18] sm:$0xf]
    %v1684 = vld [vmem:[%s1 + $0x1c] sm:$0xf]
    %v1693 = vunpack.c.l.b16 %v1677
    %v1694 = vunpack.c.l.b16 %v1678
    %v1695 = vunpack.c.l.b16 %v1679
    %v1696 = vunpack.c.l.b16 %v1680
    %v1697 = vunpack.c.l.b16 %v1681
    %v1698 = vunpack.c.l.b16 %v1682
    %v1699 = vunpack.c.l.b16 %v1683
    %v1700 = vunpack.c.l.b16 %v1684
    %v1701 = vpack.c.b16 %v1694, %v1693
    %v1702 = vpack.c.b16 %v1696, %v1695
    %v1703 = vpack.c.b16 %v1698, %v1697
    %v1704 = vpack.c.b16 %v1700, %v1699
    %vm1709 = vcmask 523264
    %v1710 = vsel %vm1709, %v1295, 0
    %v1712 = vsel %vm1709, %v1298, 0
    %v1714 = vsel %vm1709, %v1301, 0
    %v1716 = vsel %vm1709, %v1304, 0
    %v1718 = vsel %vm1709, %v1307, 0
    %v1720 = vsel %vm1709, %v1310, 0
    %v1722 = vsel %vm1709, %v1313, 0
    %v1724 = vsel %vm1709, %v1316, 0
    %v1726 = vsel %vm1709, %v1319, 0
    %v1728 = vsel %vm1709, %v1322, 0
    %v1730 = vsel %vm1709, %v1325, 0
    %v1732 = vsel %vm1709, %v1328, 0
    %v1734 = vsel %vm1709, %v1331, 0
    %v1736 = vsel %vm1709, %v1334, 0
    %v1738 = vsel %vm1709, %v1337, 0
    %v1740 = vsel %vm1709, %v1340, 0
    %v1742 = vsel %vm1709, %v1343, 0
    %v1744 = vsel %vm1709, %v1346, 0
    %v1746 = vsel %vm1709, %v1349, 0
    %v1748 = vsel %vm1709, %v1352, 0
    %v1750 = vsel %vm1709, %v1355, 0
    %v1752 = vsel %vm1709, %v1358, 0
    %v1754 = vsel %vm1709, %v1361, 0
    %v1756 = vsel %vm1709, %v1364, 0
    %v1758 = vsel %vm1709, %v1367, 0
    %v1760 = vsel %vm1709, %v1370, 0
    %v1762 = vsel %vm1709, %v1373, 0
    %v1764 = vsel %vm1709, %v1376, 0
    %v1766 = vsel %vm1709, %v1379, 0
    %v1768 = vsel %vm1709, %v1382, 0
    %v1770 = vsel %vm1709, %v1385, 0
    %v1772 = vsel %vm1709, %v1388, 0
    %v1774 = vsel %vm1709, %v1391, 0
    %v1776 = vsel %vm1709, %v1394, 0
    %v1778 = vsel %vm1709, %v1397, 0
    %v1780 = vsel %vm1709, %v1400, 0
    %v1782 = vsel %vm1709, %v1403, 0
    %v1784 = vsel %vm1709, %v1406, 0
    %v1786 = vsel %vm1709, %v1409, 0
    %v1788 = vsel %vm1709, %v1412, 0
    %v1790 = vsel %vm1709, %v1415, 0
    %v1792 = vsel %vm1709, %v1418, 0
    %v1794 = vsel %vm1709, %v1421, 0
    %v1796 = vsel %vm1709, %v1424, 0
    %v1798 = vsel %vm1709, %v1427, 0
    %v1800 = vsel %vm1709, %v1430, 0
    %v1802 = vsel %vm1709, %v1433, 0
    %v1804 = vsel %vm1709, %v1436, 0
    %v1806 = vsel %vm1709, %v1439, 0
    %v1808 = vsel %vm1709, %v1442, 0
    %v1810 = vsel %vm1709, %v1445, 0
    %v1812 = vsel %vm1709, %v1448, 0
    %v1814 = vsel %vm1709, %v1451, 0
    %v1816 = vsel %vm1709, %v1454, 0
    %v1818 = vsel %vm1709, %v1457, 0
    %v1820 = vsel %vm1709, %v1460, 0
    %v1822 = vsel %vm1709, %v1463, 0
    %v1824 = vsel %vm1709, %v1466, 0
    %v1826 = vsel %vm1709, %v1469, 0
    %v1828 = vsel %vm1709, %v1472, 0
    %v1830 = vsel %vm1709, %v1475, 0
    %v1832 = vsel %vm1709, %v1478, 0
    %v1834 = vsel %vm1709, %v1481, 0
    %v1836 = vsel %vm1709, %v1484, 0
    %v1838 = vsel %vm1709, %v1487, 0
    %v1840 = vsel %vm1709, %v1490, 0
    %v1842 = vsel %vm1709, %v1493, 0
    %v1844 = vsel %vm1709, %v1496, 0
    %v1846 = vsel %vm1709, %v1499, 0
    %v1848 = vsel %vm1709, %v1502, 0
    %v1850 = vsel %vm1709, %v1505, 0
    %v1852 = vsel %vm1709, %v1508, 0
    %v1854 = vsel %vm1709, %v1511, 0
    %v1856 = vsel %vm1709, %v1514, 0
    %v1858 = vsel %vm1709, %v1517, 0
    %v1860 = vsel %vm1709, %v1520, 0
    %v1862 = vsel %vm1709, %v1523, 0
    %v1864 = vsel %vm1709, %v1526, 0
    %v1866 = vsel %vm1709, %v1529, 0
    %v1868 = vsel %vm1709, %v1532, 0
    %v1870 = vsel %vm1709, %v1535, 0
    %v1872 = vsel %vm1709, %v1538, 0
    %v1874 = vsel %vm1709, %v1541, 0
    %v1876 = vsel %vm1709, %v1544, 0
    %v1878 = vsel %vm1709, %v1547, 0
    %v1880 = vsel %vm1709, %v1550, 0
    %v1882 = vsel %vm1709, %v1553, 0
    %v1884 = vsel %vm1709, %v1556, 0
    %v1886 = vsel %vm1709, %v1559, 0
    %v1888 = vsel %vm1709, %v1562, 0
    %v1890 = vsel %vm1709, %v1565, 0
    %v1892 = vsel %vm1709, %v1568, 0
    %v1894 = vsel %vm1709, %v1571, 0
    %v1896 = vsel %vm1709, %v1574, 0
    %v1898 = vsel %vm1709, %v1577, 0
    %v1900 = vsel %vm1709, %v1580, 0
    %v1902 = vsel %vm1709, %v1583, 0
    %v1904 = vsel %vm1709, %v1586, 0
    %v1906 = vsel %vm1709, %v1589, 0
    %v1908 = vsel %vm1709, %v1592, 0
    %v1910 = vsel %vm1709, %v1595, 0
    %v1912 = vsel %vm1709, %v1598, 0
    %v1914 = vsel %vm1709, %v1601, 0
    %v1916 = vsel %vm1709, %v1604, 0
    %v1918 = vsel %vm1709, %v1607, 0
    %v1920 = vsel %vm1709, %v1610, 0
    %v1922 = vsel %vm1709, %v1613, 0
    %v1924 = vsel %vm1709, %v1616, 0
    %v1926 = vsel %vm1709, %v1619, 0
    %v1928 = vsel %vm1709, %v1622, 0
    %v1930 = vsel %vm1709, %v1625, 0
    %v1932 = vsel %vm1709, %v1628, 0
    %v1934 = vsel %vm1709, %v1631, 0
    %v1936 = vsel %vm1709, %v1634, 0
    %v1938 = vsel %vm1709, %v1637, 0
    %v1940 = vsel %vm1709, %v1640, 0
    %v1942 = vsel %vm1709, %v1643, 0
    %v1944 = vsel %vm1709, %v1646, 0
    %v1946 = vsel %vm1709, %v1649, 0
    %v1948 = vsel %vm1709, %v1652, 0
    %v1950 = vsel %vm1709, %v1655, 0
    %v1952 = vsel %vm1709, %v1658, 0
    %v1954 = vsel %vm1709, %v1661, 0
    %v1956 = vsel %vm1709, %v1664, 0
    %v1958 = vsel %vm1709, %v1667, 0
    %v1960 = vsel %vm1709, %v1670, 0
    %v1962 = vsel %vm1709, %v1673, 0
    %v1964 = vsel %vm1709, %v1676, 0
    %1966 = vmatprep.subr.bf16.mxu0 0
    %1967 = vmatpush1.bf16.msra.mxu0 0
    %1968 = vmatprep.subr.bf16.mxu0 0
    %1969 = vmatpush1.bf16.msra.mxu0 0
    %1970 = vmatprep.subr.bf16.mxu0 0
    %1971 = vmatpush1.bf16.msra.mxu0 0
    %1972 = vmatprep.subr.bf16.mxu0 0
    %1973 = vmatpush1.bf16.msra.mxu0 0
    %1974 = vmatprep.subr.bf16.mxu0 0
    %1975 = vmatpush1.bf16.msra.mxu0 %v1704
    %1976 = vmatprep.subr.bf16.mxu0 0
    %1977 = vmatpush1.bf16.msra.mxu0 %v1703
    %1978 = vmatprep.subr.bf16.mxu0 0
    %1979 = vmatpush1.bf16.msra.mxu0 %v1702
    %1980 = vmatprep.subr.bf16.mxu0 0
    %1981 = vmatpush1.bf16.msra.mxu0 %v1701
    %1982 = vmatprep.subr.bf16.mxu0 0
    %1983 = vmatpush2.bf16.msra.mxu0 0
    %1984 = vmatprep.subr.bf16.mxu0 0
    %1985 = vmatpush2.bf16.msra.mxu0 0
    %1986 = vmatprep.subr.bf16.mxu0 0
    %1987 = vmatpush2.bf16.msra.mxu0 0
    %1988 = vmatprep.subr.bf16.mxu0 0
    %1989 = vmatpush2.bf16.msra.mxu0 0
    %1990 = vmatprep.subr.bf16.mxu0 0
    %1991 = vmatpush2.bf16.msra.mxu0 0
    %1992 = vmatprep.subr.bf16.mxu0 0
    %1993 = vmatpush2.bf16.msra.mxu0 0
    %1994 = vmatprep.subr.bf16.mxu0 0
    %1995 = vmatpush2.bf16.msra.mxu0 0
    %1996 = vmatprep.subr.bf16.mxu0 0
    %1997 = vmatpush2.bf16.msra.mxu0 0
    %1998 = vmatprep.mubr.bf16.mxu0 0
    %1999 = vmatmul.mubr.bf16.gmra.mxu0 %v1710
    %v2000 = vpop.f32.mrf.mxu0
    %v2001 = vadd.f32 0.0, %v2000
    %v2002 = vpop.f32.mrf.mxu0
    %v2003 = vpop.f32.mrf.mxu0
    %v2004 = vadd.f32 0.0, %v2003
    %v2005 = vpop.f32.mrf.mxu0
    %2006 = vmatprep.mubr.bf16.mxu0 0
    %2007 = vmatmul.mubr.bf16.gmra.mxu0 %v1712
    %v2008 = vpop.f32.mrf.mxu0
    %v2009 = vadd.f32 0.0, %v2008
    %v2010 = vpop.f32.mrf.mxu0
    %v2011 = vpop.f32.mrf.mxu0
    %v2012 = vadd.f32 0.0, %v2011
    %v2013 = vpop.f32.mrf.mxu0
    %2014 = vmatprep.mubr.bf16.mxu0 0
    %2015 = vmatmul.mubr.bf16.gmra.mxu0 %v1714
    %v2016 = vpop.f32.mrf.mxu0
    %v2017 = vadd.f32 0.0, %v2016
    %v2018 = vpop.f32.mrf.mxu0
    %v2019 = vpop.f32.mrf.mxu0
    %v2020 = vadd.f32 0.0, %v2019
    %v2021 = vpop.f32.mrf.mxu0
    %2022 = vmatprep.mubr.bf16.mxu0 0
    %2023 = vmatmul.mubr.bf16.gmra.mxu0 %v1716
    %v2024 = vpop.f32.mrf.mxu0
    %v2025 = vadd.f32 0.0, %v2024
    %v2026 = vpop.f32.mrf.mxu0
    %v2027 = vpop.f32.mrf.mxu0
    %v2028 = vadd.f32 0.0, %v2027
    %v2029 = vpop.f32.mrf.mxu0
    %2030 = vmatprep.mubr.bf16.mxu0 0
    %2031 = vmatmul.mubr.bf16.gmra.mxu0 %v1718
    %v2032 = vpop.f32.mrf.mxu0
    %v2033 = vadd.f32 0.0, %v2032
    %v2034 = vpop.f32.mrf.mxu0
    %v2035 = vpop.f32.mrf.mxu0
    %v2036 = vadd.f32 0.0, %v2035
    %v2037 = vpop.f32.mrf.mxu0
    %2038 = vmatprep.mubr.bf16.mxu0 0
    %2039 = vmatmul.mubr.bf16.gmra.mxu0 %v1720
    %v2040 = vpop.f32.mrf.mxu0
    %v2041 = vadd.f32 0.0, %v2040
    %v2042 = vpop.f32.mrf.mxu0
    %v2043 = vpop.f32.mrf.mxu0
    %v2044 = vadd.f32 0.0, %v2043
    %v2045 = vpop.f32.mrf.mxu0
    %2046 = vmatprep.mubr.bf16.mxu0 0
    %2047 = vmatmul.mubr.bf16.gmra.mxu0 %v1722
    %v2048 = vpop.f32.mrf.mxu0
    %v2049 = vadd.f32 0.0, %v2048
    %v2050 = vpop.f32.mrf.mxu0
    %v2051 = vpop.f32.mrf.mxu0
    %v2052 = vadd.f32 0.0, %v2051
    %v2053 = vpop.f32.mrf.mxu0
    %2054 = vmatprep.mubr.bf16.mxu0 0
    %2055 = vmatmul.mubr.bf16.gmra.mxu0 %v1724
    %v2056 = vpop.f32.mrf.mxu0
    %v2057 = vadd.f32 0.0, %v2056
    %v2058 = vpop.f32.mrf.mxu0
    %v2059 = vpop.f32.mrf.mxu0
    %v2060 = vadd.f32 0.0, %v2059
    %v2061 = vpop.f32.mrf.mxu0
    %2062 = vmatprep.mubr.bf16.mxu0 0
    %2063 = vmatmul.mubr.bf16.gmra.mxu0 %v1726
    %v2064 = vpop.f32.mrf.mxu0
    %v2065 = vadd.f32 0.0, %v2064
    %v2066 = vpop.f32.mrf.mxu0
    %v2067 = vpop.f32.mrf.mxu0
    %v2068 = vadd.f32 0.0, %v2067
    %v2069 = vpop.f32.mrf.mxu0
    %2070 = vmatprep.mubr.bf16.mxu0 0
    %2071 = vmatmul.mubr.bf16.gmra.mxu0 %v1728
    %v2072 = vpop.f32.mrf.mxu0
    %v2073 = vadd.f32 0.0, %v2072
    %v2074 = vpop.f32.mrf.mxu0
    %v2075 = vpop.f32.mrf.mxu0
    %v2076 = vadd.f32 0.0, %v2075
    %v2077 = vpop.f32.mrf.mxu0
    %2078 = vmatprep.mubr.bf16.mxu0 0
    %2079 = vmatmul.mubr.bf16.gmra.mxu0 %v1730
    %v2080 = vpop.f32.mrf.mxu0
    %v2081 = vadd.f32 0.0, %v2080
    %v2082 = vpop.f32.mrf.mxu0
    %v2083 = vpop.f32.mrf.mxu0
    %v2084 = vadd.f32 0.0, %v2083
    %v2085 = vpop.f32.mrf.mxu0
    %2086 = vmatprep.mubr.bf16.mxu0 0
    %2087 = vmatmul.mubr.bf16.gmra.mxu0 %v1732
    %v2088 = vpop.f32.mrf.mxu0
    %v2089 = vadd.f32 0.0, %v2088
    %v2090 = vpop.f32.mrf.mxu0
    %v2091 = vpop.f32.mrf.mxu0
    %v2092 = vadd.f32 0.0, %v2091
    %v2093 = vpop.f32.mrf.mxu0
    %2094 = vmatprep.mubr.bf16.mxu0 0
    %2095 = vmatmul.mubr.bf16.gmra.mxu0 %v1734
    %v2096 = vpop.f32.mrf.mxu0
    %v2097 = vadd.f32 0.0, %v2096
    %v2098 = vpop.f32.mrf.mxu0
    %v2099 = vpop.f32.mrf.mxu0
    %v2100 = vadd.f32 0.0, %v2099
    %v2101 = vpop.f32.mrf.mxu0
    %2102 = vmatprep.mubr.bf16.mxu0 0
    %2103 = vmatmul.mubr.bf16.gmra.mxu0 %v1736
    %v2104 = vpop.f32.mrf.mxu0
    %v2105 = vadd.f32 0.0, %v2104
    %v2106 = vpop.f32.mrf.mxu0
    %v2107 = vpop.f32.mrf.mxu0
    %v2108 = vadd.f32 0.0, %v2107
    %v2109 = vpop.f32.mrf.mxu0
    %2110 = vmatprep.mubr.bf16.mxu0 0
    %2111 = vmatmul.mubr.bf16.gmra.mxu0 %v1738
    %v2112 = vpop.f32.mrf.mxu0
    %v2113 = vadd.f32 0.0, %v2112
    %v2114 = vpop.f32.mrf.mxu0
    %v2115 = vpop.f32.mrf.mxu0
    %v2116 = vadd.f32 0.0, %v2115
    %v2117 = vpop.f32.mrf.mxu0
    %2118 = vmatprep.mubr.bf16.mxu0 0
    %2119 = vmatmul.mubr.bf16.gmra.mxu0 %v1740
    %v2120 = vpop.f32.mrf.mxu0
    %v2121 = vadd.f32 0.0, %v2120
    %v2122 = vpop.f32.mrf.mxu0
    %v2123 = vpop.f32.mrf.mxu0
    %v2124 = vadd.f32 0.0, %v2123
    %v2125 = vpop.f32.mrf.mxu0
    %2126 = vmatprep.mubr.bf16.mxu0 0
    %2127 = vmatmul.mubr.bf16.gmra.mxu0 %v1742
    %v2128 = vpop.f32.mrf.mxu0
    %v2129 = vadd.f32 0.0, %v2128
    %v2130 = vpop.f32.mrf.mxu0
    %v2131 = vpop.f32.mrf.mxu0
    %v2132 = vadd.f32 0.0, %v2131
    %v2133 = vpop.f32.mrf.mxu0
    %2134 = vmatprep.mubr.bf16.mxu0 0
    %2135 = vmatmul.mubr.bf16.gmra.mxu0 %v1744
    %v2136 = vpop.f32.mrf.mxu0
    %v2137 = vadd.f32 0.0, %v2136
    %v2138 = vpop.f32.mrf.mxu0
    %v2139 = vpop.f32.mrf.mxu0
    %v2140 = vadd.f32 0.0, %v2139
    %v2141 = vpop.f32.mrf.mxu0
    %2142 = vmatprep.mubr.bf16.mxu0 0
    %2143 = vmatmul.mubr.bf16.gmra.mxu0 %v1746
    %v2144 = vpop.f32.mrf.mxu0
    %v2145 = vadd.f32 0.0, %v2144
    %v2146 = vpop.f32.mrf.mxu0
    %v2147 = vpop.f32.mrf.mxu0
    %v2148 = vadd.f32 0.0, %v2147
    %v2149 = vpop.f32.mrf.mxu0
    %2150 = vmatprep.mubr.bf16.mxu0 0
    %2151 = vmatmul.mubr.bf16.gmra.mxu0 %v1748
    %v2152 = vpop.f32.mrf.mxu0
    %v2153 = vadd.f32 0.0, %v2152
    %v2154 = vpop.f32.mrf.mxu0
    %v2155 = vpop.f32.mrf.mxu0
    %v2156 = vadd.f32 0.0, %v2155
    %v2157 = vpop.f32.mrf.mxu0
    %2158 = vmatprep.mubr.bf16.mxu0 0
    %2159 = vmatmul.mubr.bf16.gmra.mxu0 %v1750
    %v2160 = vpop.f32.mrf.mxu0
    %v2161 = vadd.f32 0.0, %v2160
    %v2162 = vpop.f32.mrf.mxu0
    %v2163 = vpop.f32.mrf.mxu0
    %v2164 = vadd.f32 0.0, %v2163
    %v2165 = vpop.f32.mrf.mxu0
    %2166 = vmatprep.mubr.bf16.mxu0 0
    %2167 = vmatmul.mubr.bf16.gmra.mxu0 %v1752
    %v2168 = vpop.f32.mrf.mxu0
    %v2169 = vadd.f32 0.0, %v2168
    %v2170 = vpop.f32.mrf.mxu0
    %v2171 = vpop.f32.mrf.mxu0
    %v2172 = vadd.f32 0.0, %v2171
    %v2173 = vpop.f32.mrf.mxu0
    %2174 = vmatprep.mubr.bf16.mxu0 0
    %2175 = vmatmul.mubr.bf16.gmra.mxu0 %v1754
    %v2176 = vpop.f32.mrf.mxu0
    %v2177 = vadd.f32 0.0, %v2176
    %v2178 = vpop.f32.mrf.mxu0
    %v2179 = vpop.f32.mrf.mxu0
    %v2180 = vadd.f32 0.0, %v2179
    %v2181 = vpop.f32.mrf.mxu0
    %2182 = vmatprep.mubr.bf16.mxu0 0
    %2183 = vmatmul.mubr.bf16.gmra.mxu0 %v1756
    %v2184 = vpop.f32.mrf.mxu0
    %v2185 = vadd.f32 0.0, %v2184
    %v2186 = vpop.f32.mrf.mxu0
    %v2187 = vpop.f32.mrf.mxu0
    %v2188 = vadd.f32 0.0, %v2187
    %v2189 = vpop.f32.mrf.mxu0
    %2190 = vmatprep.mubr.bf16.mxu0 0
    %2191 = vmatmul.mubr.bf16.gmra.mxu0 %v1758
    %v2192 = vpop.f32.mrf.mxu0
    %v2193 = vadd.f32 0.0, %v2192
    %v2194 = vpop.f32.mrf.mxu0
    %v2195 = vpop.f32.mrf.mxu0
    %v2196 = vadd.f32 0.0, %v2195
    %v2197 = vpop.f32.mrf.mxu0
    %2198 = vmatprep.mubr.bf16.mxu0 0
    %2199 = vmatmul.mubr.bf16.gmra.mxu0 %v1760
    %v2200 = vpop.f32.mrf.mxu0
    %v2201 = vadd.f32 0.0, %v2200
    %v2202 = vpop.f32.mrf.mxu0
    %v2203 = vpop.f32.mrf.mxu0
    %v2204 = vadd.f32 0.0, %v2203
    %v2205 = vpop.f32.mrf.mxu0
    %2206 = vmatprep.mubr.bf16.mxu0 0
    %2207 = vmatmul.mubr.bf16.gmra.mxu0 %v1762
    %v2208 = vpop.f32.mrf.mxu0
    %v2209 = vadd.f32 0.0, %v2208
    %v2210 = vpop.f32.mrf.mxu0
    %v2211 = vpop.f32.mrf.mxu0
    %v2212 = vadd.f32 0.0, %v2211
    %v2213 = vpop.f32.mrf.mxu0
    %2214 = vmatprep.mubr.bf16.mxu0 0
    %2215 = vmatmul.mubr.bf16.gmra.mxu0 %v1764
    %v2216 = vpop.f32.mrf.mxu0
    %v2217 = vadd.f32 0.0, %v2216
    %v2218 = vpop.f32.mrf.mxu0
    %v2219 = vpop.f32.mrf.mxu0
    %v2220 = vadd.f32 0.0, %v2219
    %v2221 = vpop.f32.mrf.mxu0
    %2222 = vmatprep.mubr.bf16.mxu0 0
    %2223 = vmatmul.mubr.bf16.gmra.mxu0 %v1766
    %v2224 = vpop.f32.mrf.mxu0
    %v2225 = vadd.f32 0.0, %v2224
    %v2226 = vpop.f32.mrf.mxu0
    %v2227 = vpop.f32.mrf.mxu0
    %v2228 = vadd.f32 0.0, %v2227
    %v2229 = vpop.f32.mrf.mxu0
    %2230 = vmatprep.mubr.bf16.mxu0 0
    %2231 = vmatmul.mubr.bf16.gmra.mxu0 %v1768
    %v2232 = vpop.f32.mrf.mxu0
    %v2233 = vadd.f32 0.0, %v2232
    %v2234 = vpop.f32.mrf.mxu0
    %v2235 = vpop.f32.mrf.mxu0
    %v2236 = vadd.f32 0.0, %v2235
    %v2237 = vpop.f32.mrf.mxu0
    %2238 = vmatprep.mubr.bf16.mxu0 0
    %2239 = vmatmul.mubr.bf16.gmra.mxu0 %v1770
    %v2240 = vpop.f32.mrf.mxu0
    %v2241 = vadd.f32 0.0, %v2240
    %v2242 = vpop.f32.mrf.mxu0
    %v2243 = vpop.f32.mrf.mxu0
    %v2244 = vadd.f32 0.0, %v2243
    %v2245 = vpop.f32.mrf.mxu0
    %2246 = vmatprep.mubr.bf16.mxu0 0
    %2247 = vmatmul.mubr.bf16.gmra.mxu0 %v1772
    %v2248 = vpop.f32.mrf.mxu0
    %v2249 = vadd.f32 0.0, %v2248
    %v2250 = vpop.f32.mrf.mxu0
    %v2251 = vpop.f32.mrf.mxu0
    %v2252 = vadd.f32 0.0, %v2251
    %v2253 = vpop.f32.mrf.mxu0
    %2254 = vmatprep.mubr.bf16.mxu0 0
    %2255 = vmatmul.mubr.bf16.gmra.mxu0 %v1774
    %v2256 = vpop.f32.mrf.mxu0
    %v2257 = vadd.f32 0.0, %v2256
    %v2258 = vpop.f32.mrf.mxu0
    %v2259 = vpop.f32.mrf.mxu0
    %v2260 = vadd.f32 0.0, %v2259
    %v2261 = vpop.f32.mrf.mxu0
    %2262 = vmatprep.mubr.bf16.mxu0 0
    %2263 = vmatmul.mubr.bf16.gmra.mxu0 %v1776
    %v2264 = vpop.f32.mrf.mxu0
    %v2265 = vadd.f32 0.0, %v2264
    %v2266 = vpop.f32.mrf.mxu0
    %v2267 = vpop.f32.mrf.mxu0
    %v2268 = vadd.f32 0.0, %v2267
    %v2269 = vpop.f32.mrf.mxu0
    %2270 = vmatprep.mubr.bf16.mxu0 0
    %2271 = vmatmul.mubr.bf16.gmra.mxu0 %v1778
    %v2272 = vpop.f32.mrf.mxu0
    %v2273 = vadd.f32 0.0, %v2272
    %v2274 = vpop.f32.mrf.mxu0
    %v2275 = vpop.f32.mrf.mxu0
    %v2276 = vadd.f32 0.0, %v2275
    %v2277 = vpop.f32.mrf.mxu0
    %2278 = vmatprep.mubr.bf16.mxu0 0
    %2279 = vmatmul.mubr.bf16.gmra.mxu0 %v1780
    %v2280 = vpop.f32.mrf.mxu0
    %v2281 = vadd.f32 0.0, %v2280
    %v2282 = vpop.f32.mrf.mxu0
    %v2283 = vpop.f32.mrf.mxu0
    %v2284 = vadd.f32 0.0, %v2283
    %v2285 = vpop.f32.mrf.mxu0
    %2286 = vmatprep.mubr.bf16.mxu0 0
    %2287 = vmatmul.mubr.bf16.gmra.mxu0 %v1782
    %v2288 = vpop.f32.mrf.mxu0
    %v2289 = vadd.f32 0.0, %v2288
    %v2290 = vpop.f32.mrf.mxu0
    %v2291 = vpop.f32.mrf.mxu0
    %v2292 = vadd.f32 0.0, %v2291
    %v2293 = vpop.f32.mrf.mxu0
    %2294 = vmatprep.mubr.bf16.mxu0 0
    %2295 = vmatmul.mubr.bf16.gmra.mxu0 %v1784
    %v2296 = vpop.f32.mrf.mxu0
    %v2297 = vadd.f32 0.0, %v2296
    %v2298 = vpop.f32.mrf.mxu0
    %v2299 = vpop.f32.mrf.mxu0
    %v2300 = vadd.f32 0.0, %v2299
    %v2301 = vpop.f32.mrf.mxu0
    %2302 = vmatprep.mubr.bf16.mxu0 0
    %2303 = vmatmul.mubr.bf16.gmra.mxu0 %v1786
    %v2304 = vpop.f32.mrf.mxu0
    %v2305 = vadd.f32 0.0, %v2304
    %v2306 = vpop.f32.mrf.mxu0
    %v2307 = vpop.f32.mrf.mxu0
    %v2308 = vadd.f32 0.0, %v2307
    %v2309 = vpop.f32.mrf.mxu0
    %2310 = vmatprep.mubr.bf16.mxu0 0
    %2311 = vmatmul.mubr.bf16.gmra.mxu0 %v1788
    %v2312 = vpop.f32.mrf.mxu0
    %v2313 = vadd.f32 0.0, %v2312
    %v2314 = vpop.f32.mrf.mxu0
    %v2315 = vpop.f32.mrf.mxu0
    %v2316 = vadd.f32 0.0, %v2315
    %v2317 = vpop.f32.mrf.mxu0
    %2318 = vmatprep.mubr.bf16.mxu0 0
    %2319 = vmatmul.mubr.bf16.gmra.mxu0 %v1790
    %v2320 = vpop.f32.mrf.mxu0
    %v2321 = vadd.f32 0.0, %v2320
    %v2322 = vpop.f32.mrf.mxu0
    %v2323 = vpop.f32.mrf.mxu0
    %v2324 = vadd.f32 0.0, %v2323
    %v2325 = vpop.f32.mrf.mxu0
    %2326 = vmatprep.mubr.bf16.mxu0 0
    %2327 = vmatmul.mubr.bf16.gmra.mxu0 %v1792
    %v2328 = vpop.f32.mrf.mxu0
    %v2329 = vadd.f32 0.0, %v2328
    %v2330 = vpop.f32.mrf.mxu0
    %v2331 = vpop.f32.mrf.mxu0
    %v2332 = vadd.f32 0.0, %v2331
    %v2333 = vpop.f32.mrf.mxu0
    %2334 = vmatprep.mubr.bf16.mxu0 0
    %2335 = vmatmul.mubr.bf16.gmra.mxu0 %v1794
    %v2336 = vpop.f32.mrf.mxu0
    %v2337 = vadd.f32 0.0, %v2336
    %v2338 = vpop.f32.mrf.mxu0
    %v2339 = vpop.f32.mrf.mxu0
    %v2340 = vadd.f32 0.0, %v2339
    %v2341 = vpop.f32.mrf.mxu0
    %2342 = vmatprep.mubr.bf16.mxu0 0
    %2343 = vmatmul.mubr.bf16.gmra.mxu0 %v1796
    %v2344 = vpop.f32.mrf.mxu0
    %v2345 = vadd.f32 0.0, %v2344
    %v2346 = vpop.f32.mrf.mxu0
    %v2347 = vpop.f32.mrf.mxu0
    %v2348 = vadd.f32 0.0, %v2347
    %v2349 = vpop.f32.mrf.mxu0
    %2350 = vmatprep.mubr.bf16.mxu0 0
    %2351 = vmatmul.mubr.bf16.gmra.mxu0 %v1798
    %v2352 = vpop.f32.mrf.mxu0
    %v2353 = vadd.f32 0.0, %v2352
    %v2354 = vpop.f32.mrf.mxu0
    %v2355 = vpop.f32.mrf.mxu0
    %v2356 = vadd.f32 0.0, %v2355
    %v2357 = vpop.f32.mrf.mxu0
    %2358 = vmatprep.mubr.bf16.mxu0 0
    %2359 = vmatmul.mubr.bf16.gmra.mxu0 %v1800
    %v2360 = vpop.f32.mrf.mxu0
    %v2361 = vadd.f32 0.0, %v2360
    %v2362 = vpop.f32.mrf.mxu0
    %v2363 = vpop.f32.mrf.mxu0
    %v2364 = vadd.f32 0.0, %v2363
    %v2365 = vpop.f32.mrf.mxu0
    %2366 = vmatprep.mubr.bf16.mxu0 0
    %2367 = vmatmul.mubr.bf16.gmra.mxu0 %v1802
    %v2368 = vpop.f32.mrf.mxu0
    %v2369 = vadd.f32 0.0, %v2368
    %v2370 = vpop.f32.mrf.mxu0
    %v2371 = vpop.f32.mrf.mxu0
    %v2372 = vadd.f32 0.0, %v2371
    %v2373 = vpop.f32.mrf.mxu0
    %2374 = vmatprep.mubr.bf16.mxu0 0
    %2375 = vmatmul.mubr.bf16.gmra.mxu0 %v1804
    %v2376 = vpop.f32.mrf.mxu0
    %v2377 = vadd.f32 0.0, %v2376
    %v2378 = vpop.f32.mrf.mxu0
    %v2379 = vpop.f32.mrf.mxu0
    %v2380 = vadd.f32 0.0, %v2379
    %v2381 = vpop.f32.mrf.mxu0
    %2382 = vmatprep.mubr.bf16.mxu0 0
    %2383 = vmatmul.mubr.bf16.gmra.mxu0 %v1806
    %v2384 = vpop.f32.mrf.mxu0
    %v2385 = vadd.f32 0.0, %v2384
    %v2386 = vpop.f32.mrf.mxu0
    %v2387 = vpop.f32.mrf.mxu0
    %v2388 = vadd.f32 0.0, %v2387
    %v2389 = vpop.f32.mrf.mxu0
    %2390 = vmatprep.mubr.bf16.mxu0 0
    %2391 = vmatmul.mubr.bf16.gmra.mxu0 %v1808
    %v2392 = vpop.f32.mrf.mxu0
    %v2393 = vadd.f32 0.0, %v2392
    %v2394 = vpop.f32.mrf.mxu0
    %v2395 = vpop.f32.mrf.mxu0
    %v2396 = vadd.f32 0.0, %v2395
    %v2397 = vpop.f32.mrf.mxu0
    %2398 = vmatprep.mubr.bf16.mxu0 0
    %2399 = vmatmul.mubr.bf16.gmra.mxu0 %v1810
    %v2400 = vpop.f32.mrf.mxu0
    %v2401 = vadd.f32 0.0, %v2400
    %v2402 = vpop.f32.mrf.mxu0
    %v2403 = vpop.f32.mrf.mxu0
    %v2404 = vadd.f32 0.0, %v2403
    %v2405 = vpop.f32.mrf.mxu0
    %2406 = vmatprep.mubr.bf16.mxu0 0
    %2407 = vmatmul.mubr.bf16.gmra.mxu0 %v1812
    %v2408 = vpop.f32.mrf.mxu0
    %v2409 = vadd.f32 0.0, %v2408
    %v2410 = vpop.f32.mrf.mxu0
    %v2411 = vpop.f32.mrf.mxu0
    %v2412 = vadd.f32 0.0, %v2411
    %v2413 = vpop.f32.mrf.mxu0
    %2414 = vmatprep.mubr.bf16.mxu0 0
    %2415 = vmatmul.mubr.bf16.gmra.mxu0 %v1814
    %v2416 = vpop.f32.mrf.mxu0
    %v2417 = vadd.f32 0.0, %v2416
    %v2418 = vpop.f32.mrf.mxu0
    %v2419 = vpop.f32.mrf.mxu0
    %v2420 = vadd.f32 0.0, %v2419
    %v2421 = vpop.f32.mrf.mxu0
    %2422 = vmatprep.mubr.bf16.mxu0 0
    %2423 = vmatmul.mubr.bf16.gmra.mxu0 %v1816
    %v2424 = vpop.f32.mrf.mxu0
    %v2425 = vadd.f32 0.0, %v2424
    %v2426 = vpop.f32.mrf.mxu0
    %v2427 = vpop.f32.mrf.mxu0
    %v2428 = vadd.f32 0.0, %v2427
    %v2429 = vpop.f32.mrf.mxu0
    %2430 = vmatprep.mubr.bf16.mxu0 0
    %2431 = vmatmul.mubr.bf16.gmra.mxu0 %v1818
    %v2432 = vpop.f32.mrf.mxu0
    %v2433 = vadd.f32 0.0, %v2432
    %v2434 = vpop.f32.mrf.mxu0
    %v2435 = vpop.f32.mrf.mxu0
    %v2436 = vadd.f32 0.0, %v2435
    %v2437 = vpop.f32.mrf.mxu0
    %2438 = vmatprep.mubr.bf16.mxu0 0
    %2439 = vmatmul.mubr.bf16.gmra.mxu0 %v1820
    %v2440 = vpop.f32.mrf.mxu0
    %v2441 = vadd.f32 0.0, %v2440
    %v2442 = vpop.f32.mrf.mxu0
    %v2443 = vpop.f32.mrf.mxu0
    %v2444 = vadd.f32 0.0, %v2443
    %v2445 = vpop.f32.mrf.mxu0
    %2446 = vmatprep.mubr.bf16.mxu0 0
    %2447 = vmatmul.mubr.bf16.gmra.mxu0 %v1822
    %v2448 = vpop.f32.mrf.mxu0
    %v2449 = vadd.f32 0.0, %v2448
    %v2450 = vpop.f32.mrf.mxu0
    %v2451 = vpop.f32.mrf.mxu0
    %v2452 = vadd.f32 0.0, %v2451
    %v2453 = vpop.f32.mrf.mxu0
    %2454 = vmatprep.mubr.bf16.mxu0 0
    %2455 = vmatmul.mubr.bf16.gmra.mxu0 %v1824
    %v2456 = vpop.f32.mrf.mxu0
    %v2457 = vadd.f32 0.0, %v2456
    %v2458 = vpop.f32.mrf.mxu0
    %v2459 = vpop.f32.mrf.mxu0
    %v2460 = vadd.f32 0.0, %v2459
    %v2461 = vpop.f32.mrf.mxu0
    %2462 = vmatprep.mubr.bf16.mxu0 0
    %2463 = vmatmul.mubr.bf16.gmra.mxu0 %v1826
    %v2464 = vpop.f32.mrf.mxu0
    %v2465 = vadd.f32 0.0, %v2464
    %v2466 = vpop.f32.mrf.mxu0
    %v2467 = vpop.f32.mrf.mxu0
    %v2468 = vadd.f32 0.0, %v2467
    %v2469 = vpop.f32.mrf.mxu0
    %2470 = vmatprep.mubr.bf16.mxu0 0
    %2471 = vmatmul.mubr.bf16.gmra.mxu0 %v1828
    %v2472 = vpop.f32.mrf.mxu0
    %v2473 = vadd.f32 0.0, %v2472
    %v2474 = vpop.f32.mrf.mxu0
    %v2475 = vpop.f32.mrf.mxu0
    %v2476 = vadd.f32 0.0, %v2475
    %v2477 = vpop.f32.mrf.mxu0
    %2478 = vmatprep.mubr.bf16.mxu0 0
    %2479 = vmatmul.mubr.bf16.gmra.mxu0 %v1830
    %v2480 = vpop.f32.mrf.mxu0
    %v2481 = vadd.f32 0.0, %v2480
    %v2482 = vpop.f32.mrf.mxu0
    %v2483 = vpop.f32.mrf.mxu0
    %v2484 = vadd.f32 0.0, %v2483
    %v2485 = vpop.f32.mrf.mxu0
    %2486 = vmatprep.mubr.bf16.mxu0 0
    %2487 = vmatmul.mubr.bf16.gmra.mxu0 %v1832
    %v2488 = vpop.f32.mrf.mxu0
    %v2489 = vadd.f32 0.0, %v2488
    %v2490 = vpop.f32.mrf.mxu0
    %v2491 = vpop.f32.mrf.mxu0
    %v2492 = vadd.f32 0.0, %v2491
    %v2493 = vpop.f32.mrf.mxu0
    %2494 = vmatprep.mubr.bf16.mxu0 0
    %2495 = vmatmul.mubr.bf16.gmra.mxu0 %v1834
    %v2496 = vpop.f32.mrf.mxu0
    %v2497 = vadd.f32 0.0, %v2496
    %v2498 = vpop.f32.mrf.mxu0
    %v2499 = vpop.f32.mrf.mxu0
    %v2500 = vadd.f32 0.0, %v2499
    %v2501 = vpop.f32.mrf.mxu0
    %2502 = vmatprep.mubr.bf16.mxu0 0
    %2503 = vmatmul.mubr.bf16.gmra.mxu0 %v1836
    %v2504 = vpop.f32.mrf.mxu0
    %v2505 = vadd.f32 0.0, %v2504
    %v2506 = vpop.f32.mrf.mxu0
    %v2507 = vpop.f32.mrf.mxu0
    %v2508 = vadd.f32 0.0, %v2507
    %v2509 = vpop.f32.mrf.mxu0
    %2510 = vmatprep.mubr.bf16.mxu0 0
    %2511 = vmatmul.mubr.bf16.gmra.mxu0 %v1838
    %v2512 = vpop.f32.mrf.mxu0
    %v2513 = vadd.f32 0.0, %v2512
    %v2514 = vpop.f32.mrf.mxu0
    %v2515 = vpop.f32.mrf.mxu0
    %v2516 = vadd.f32 0.0, %v2515
    %v2517 = vpop.f32.mrf.mxu0
    %2518 = vmatprep.mubr.bf16.mxu0 0
    %2519 = vmatmul.mubr.bf16.gmra.mxu0 %v1840
    %v2520 = vpop.f32.mrf.mxu0
    %v2521 = vadd.f32 0.0, %v2520
    %v2522 = vpop.f32.mrf.mxu0
    %v2523 = vpop.f32.mrf.mxu0
    %v2524 = vadd.f32 0.0, %v2523
    %v2525 = vpop.f32.mrf.mxu0
    %2526 = vmatprep.mubr.bf16.mxu0 0
    %2527 = vmatmul.mubr.bf16.gmra.mxu0 %v1842
    %v2528 = vpop.f32.mrf.mxu0
    %v2529 = vadd.f32 0.0, %v2528
    %v2530 = vpop.f32.mrf.mxu0
    %v2531 = vpop.f32.mrf.mxu0
    %v2532 = vadd.f32 0.0, %v2531
    %v2533 = vpop.f32.mrf.mxu0
    %2534 = vmatprep.mubr.bf16.mxu0 0
    %2535 = vmatmul.mubr.bf16.gmra.mxu0 %v1844
    %v2536 = vpop.f32.mrf.mxu0
    %v2537 = vadd.f32 0.0, %v2536
    %v2538 = vpop.f32.mrf.mxu0
    %v2539 = vpop.f32.mrf.mxu0
    %v2540 = vadd.f32 0.0, %v2539
    %v2541 = vpop.f32.mrf.mxu0
    %2542 = vmatprep.mubr.bf16.mxu0 0
    %2543 = vmatmul.mubr.bf16.gmra.mxu0 %v1846
    %v2544 = vpop.f32.mrf.mxu0
    %v2545 = vadd.f32 0.0, %v2544
    %v2546 = vpop.f32.mrf.mxu0
    %v2547 = vpop.f32.mrf.mxu0
    %v2548 = vadd.f32 0.0, %v2547
    %v2549 = vpop.f32.mrf.mxu0
    %2550 = vmatprep.mubr.bf16.mxu0 0
    %2551 = vmatmul.mubr.bf16.gmra.mxu0 %v1848
    %v2552 = vpop.f32.mrf.mxu0
    %v2553 = vadd.f32 0.0, %v2552
    %v2554 = vpop.f32.mrf.mxu0
    %v2555 = vpop.f32.mrf.mxu0
    %v2556 = vadd.f32 0.0, %v2555
    %v2557 = vpop.f32.mrf.mxu0
    %2558 = vmatprep.mubr.bf16.mxu0 0
    %2559 = vmatmul.mubr.bf16.gmra.mxu0 %v1850
    %v2560 = vpop.f32.mrf.mxu0
    %v2561 = vadd.f32 0.0, %v2560
    %v2562 = vpop.f32.mrf.mxu0
    %v2563 = vpop.f32.mrf.mxu0
    %v2564 = vadd.f32 0.0, %v2563
    %v2565 = vpop.f32.mrf.mxu0
    %2566 = vmatprep.mubr.bf16.mxu0 0
    %2567 = vmatmul.mubr.bf16.gmra.mxu0 %v1852
    %v2568 = vpop.f32.mrf.mxu0
    %v2569 = vadd.f32 0.0, %v2568
    %v2570 = vpop.f32.mrf.mxu0
    %v2571 = vpop.f32.mrf.mxu0
    %v2572 = vadd.f32 0.0, %v2571
    %v2573 = vpop.f32.mrf.mxu0
    %2574 = vmatprep.mubr.bf16.mxu0 0
    %2575 = vmatmul.mubr.bf16.gmra.mxu0 %v1854
    %v2576 = vpop.f32.mrf.mxu0
    %v2577 = vadd.f32 0.0, %v2576
    %v2578 = vpop.f32.mrf.mxu0
    %v2579 = vpop.f32.mrf.mxu0
    %v2580 = vadd.f32 0.0, %v2579
    %v2581 = vpop.f32.mrf.mxu0
    %2582 = vmatprep.mubr.bf16.mxu0 0
    %2583 = vmatmul.mubr.bf16.gmra.mxu0 %v1856
    %v2584 = vpop.f32.mrf.mxu0
    %v2585 = vadd.f32 0.0, %v2584
    %v2586 = vpop.f32.mrf.mxu0
    %v2587 = vpop.f32.mrf.mxu0
    %v2588 = vadd.f32 0.0, %v2587
    %v2589 = vpop.f32.mrf.mxu0
    %2590 = vmatprep.mubr.bf16.mxu0 0
    %2591 = vmatmul.mubr.bf16.gmra.mxu0 %v1858
    %v2592 = vpop.f32.mrf.mxu0
    %v2593 = vadd.f32 0.0, %v2592
    %v2594 = vpop.f32.mrf.mxu0
    %v2595 = vpop.f32.mrf.mxu0
    %v2596 = vadd.f32 0.0, %v2595
    %v2597 = vpop.f32.mrf.mxu0
    %2598 = vmatprep.mubr.bf16.mxu0 0
    %2599 = vmatmul.mubr.bf16.gmra.mxu0 %v1860
    %v2600 = vpop.f32.mrf.mxu0
    %v2601 = vadd.f32 0.0, %v2600
    %v2602 = vpop.f32.mrf.mxu0
    %v2603 = vpop.f32.mrf.mxu0
    %v2604 = vadd.f32 0.0, %v2603
    %v2605 = vpop.f32.mrf.mxu0
    %2606 = vmatprep.mubr.bf16.mxu0 0
    %2607 = vmatmul.mubr.bf16.gmra.mxu0 %v1862
    %v2608 = vpop.f32.mrf.mxu0
    %v2609 = vadd.f32 0.0, %v2608
    %v2610 = vpop.f32.mrf.mxu0
    %v2611 = vpop.f32.mrf.mxu0
    %v2612 = vadd.f32 0.0, %v2611
    %v2613 = vpop.f32.mrf.mxu0
    %2614 = vmatprep.mubr.bf16.mxu0 0
    %2615 = vmatmul.mubr.bf16.gmra.mxu0 %v1864
    %v2616 = vpop.f32.mrf.mxu0
    %v2617 = vadd.f32 0.0, %v2616
    %v2618 = vpop.f32.mrf.mxu0
    %v2619 = vpop.f32.mrf.mxu0
    %v2620 = vadd.f32 0.0, %v2619
    %v2621 = vpop.f32.mrf.mxu0
    %2622 = vmatprep.mubr.bf16.mxu0 0
    %2623 = vmatmul.mubr.bf16.gmra.mxu0 %v1866
    %v2624 = vpop.f32.mrf.mxu0
    %v2625 = vadd.f32 0.0, %v2624
    %v2626 = vpop.f32.mrf.mxu0
    %v2627 = vpop.f32.mrf.mxu0
    %v2628 = vadd.f32 0.0, %v2627
    %v2629 = vpop.f32.mrf.mxu0
    %2630 = vmatprep.mubr.bf16.mxu0 0
    %2631 = vmatmul.mubr.bf16.gmra.mxu0 %v1868
    %v2632 = vpop.f32.mrf.mxu0
    %v2633 = vadd.f32 0.0, %v2632
    %v2634 = vpop.f32.mrf.mxu0
    %v2635 = vpop.f32.mrf.mxu0
    %v2636 = vadd.f32 0.0, %v2635
    %v2637 = vpop.f32.mrf.mxu0
    %2638 = vmatprep.mubr.bf16.mxu0 0
    %2639 = vmatmul.mubr.bf16.gmra.mxu0 %v1870
    %v2640 = vpop.f32.mrf.mxu0
    %v2641 = vadd.f32 0.0, %v2640
    %v2642 = vpop.f32.mrf.mxu0
    %v2643 = vpop.f32.mrf.mxu0
    %v2644 = vadd.f32 0.0, %v2643
    %v2645 = vpop.f32.mrf.mxu0
    %2646 = vmatprep.mubr.bf16.mxu0 0
    %2647 = vmatmul.mubr.bf16.gmra.mxu0 %v1872
    %v2648 = vpop.f32.mrf.mxu0
    %v2649 = vadd.f32 0.0, %v2648
    %v2650 = vpop.f32.mrf.mxu0
    %v2651 = vpop.f32.mrf.mxu0
    %v2652 = vadd.f32 0.0, %v2651
    %v2653 = vpop.f32.mrf.mxu0
    %2654 = vmatprep.mubr.bf16.mxu0 0
    %2655 = vmatmul.mubr.bf16.gmra.mxu0 %v1874
    %v2656 = vpop.f32.mrf.mxu0
    %v2657 = vadd.f32 0.0, %v2656
    %v2658 = vpop.f32.mrf.mxu0
    %v2659 = vpop.f32.mrf.mxu0
    %v2660 = vadd.f32 0.0, %v2659
    %v2661 = vpop.f32.mrf.mxu0
    %2662 = vmatprep.mubr.bf16.mxu0 0
    %2663 = vmatmul.mubr.bf16.gmra.mxu0 %v1876
    %v2664 = vpop.f32.mrf.mxu0
    %v2665 = vadd.f32 0.0, %v2664
    %v2666 = vpop.f32.mrf.mxu0
    %v2667 = vpop.f32.mrf.mxu0
    %v2668 = vadd.f32 0.0, %v2667
    %v2669 = vpop.f32.mrf.mxu0
    %2670 = vmatprep.mubr.bf16.mxu0 0
    %2671 = vmatmul.mubr.bf16.gmra.mxu0 %v1878
    %v2672 = vpop.f32.mrf.mxu0
    %v2673 = vadd.f32 0.0, %v2672
    %v2674 = vpop.f32.mrf.mxu0
    %v2675 = vpop.f32.mrf.mxu0
    %v2676 = vadd.f32 0.0, %v2675
    %v2677 = vpop.f32.mrf.mxu0
    %2678 = vmatprep.mubr.bf16.mxu0 0
    %2679 = vmatmul.mubr.bf16.gmra.mxu0 %v1880
    %v2680 = vpop.f32.mrf.mxu0
    %v2681 = vadd.f32 0.0, %v2680
    %v2682 = vpop.f32.mrf.mxu0
    %v2683 = vpop.f32.mrf.mxu0
    %v2684 = vadd.f32 0.0, %v2683
    %v2685 = vpop.f32.mrf.mxu0
    %2686 = vmatprep.mubr.bf16.mxu0 0
    %2687 = vmatmul.mubr.bf16.gmra.mxu0 %v1882
    %v2688 = vpop.f32.mrf.mxu0
    %v2689 = vadd.f32 0.0, %v2688
    %v2690 = vpop.f32.mrf.mxu0
    %v2691 = vpop.f32.mrf.mxu0
    %v2692 = vadd.f32 0.0, %v2691
    %v2693 = vpop.f32.mrf.mxu0
    %2694 = vmatprep.mubr.bf16.mxu0 0
    %2695 = vmatmul.mubr.bf16.gmra.mxu0 %v1884
    %v2696 = vpop.f32.mrf.mxu0
    %v2697 = vadd.f32 0.0, %v2696
    %v2698 = vpop.f32.mrf.mxu0
    %v2699 = vpop.f32.mrf.mxu0
    %v2700 = vadd.f32 0.0, %v2699
    %v2701 = vpop.f32.mrf.mxu0
    %2702 = vmatprep.mubr.bf16.mxu0 0
    %2703 = vmatmul.mubr.bf16.gmra.mxu0 %v1886
    %v2704 = vpop.f32.mrf.mxu0
    %v2705 = vadd.f32 0.0, %v2704
    %v2706 = vpop.f32.mrf.mxu0
    %v2707 = vpop.f32.mrf.mxu0
    %v2708 = vadd.f32 0.0, %v2707
    %v2709 = vpop.f32.mrf.mxu0
    %2710 = vmatprep.mubr.bf16.mxu0 0
    %2711 = vmatmul.mubr.bf16.gmra.mxu0 %v1888
    %v2712 = vpop.f32.mrf.mxu0
    %v2713 = vadd.f32 0.0, %v2712
    %v2714 = vpop.f32.mrf.mxu0
    %v2715 = vpop.f32.mrf.mxu0
    %v2716 = vadd.f32 0.0, %v2715
    %v2717 = vpop.f32.mrf.mxu0
    %2718 = vmatprep.mubr.bf16.mxu0 0
    %2719 = vmatmul.mubr.bf16.gmra.mxu0 %v1890
    %v2720 = vpop.f32.mrf.mxu0
    %v2721 = vadd.f32 0.0, %v2720
    %v2722 = vpop.f32.mrf.mxu0
    %v2723 = vpop.f32.mrf.mxu0
    %v2724 = vadd.f32 0.0, %v2723
    %v2725 = vpop.f32.mrf.mxu0
    %2726 = vmatprep.mubr.bf16.mxu0 0
    %2727 = vmatmul.mubr.bf16.gmra.mxu0 %v1892
    %v2728 = vpop.f32.mrf.mxu0
    %v2729 = vadd.f32 0.0, %v2728
    %v2730 = vpop.f32.mrf.mxu0
    %v2731 = vpop.f32.mrf.mxu0
    %v2732 = vadd.f32 0.0, %v2731
    %v2733 = vpop.f32.mrf.mxu0
    %2734 = vmatprep.mubr.bf16.mxu0 0
    %2735 = vmatmul.mubr.bf16.gmra.mxu0 %v1894
    %v2736 = vpop.f32.mrf.mxu0
    %v2737 = vadd.f32 0.0, %v2736
    %v2738 = vpop.f32.mrf.mxu0
    %v2739 = vpop.f32.mrf.mxu0
    %v2740 = vadd.f32 0.0, %v2739
    %v2741 = vpop.f32.mrf.mxu0
    %2742 = vmatprep.mubr.bf16.mxu0 0
    %2743 = vmatmul.mubr.bf16.gmra.mxu0 %v1896
    %v2744 = vpop.f32.mrf.mxu0
    %v2745 = vadd.f32 0.0, %v2744
    %v2746 = vpop.f32.mrf.mxu0
    %v2747 = vpop.f32.mrf.mxu0
    %v2748 = vadd.f32 0.0, %v2747
    %v2749 = vpop.f32.mrf.mxu0
    %2750 = vmatprep.mubr.bf16.mxu0 0
    %2751 = vmatmul.mubr.bf16.gmra.mxu0 %v1898
    %v2752 = vpop.f32.mrf.mxu0
    %v2753 = vadd.f32 0.0, %v2752
    %v2754 = vpop.f32.mrf.mxu0
    %v2755 = vpop.f32.mrf.mxu0
    %v2756 = vadd.f32 0.0, %v2755
    %v2757 = vpop.f32.mrf.mxu0
    %2758 = vmatprep.mubr.bf16.mxu0 0
    %2759 = vmatmul.mubr.bf16.gmra.mxu0 %v1900
    %v2760 = vpop.f32.mrf.mxu0
    %v2761 = vadd.f32 0.0, %v2760
    %v2762 = vpop.f32.mrf.mxu0
    %v2763 = vpop.f32.mrf.mxu0
    %v2764 = vadd.f32 0.0, %v2763
    %v2765 = vpop.f32.mrf.mxu0
    %2766 = vmatprep.mubr.bf16.mxu0 0
    %2767 = vmatmul.mubr.bf16.gmra.mxu0 %v1902
    %v2768 = vpop.f32.mrf.mxu0
    %v2769 = vadd.f32 0.0, %v2768
    %v2770 = vpop.f32.mrf.mxu0
    %v2771 = vpop.f32.mrf.mxu0
    %v2772 = vadd.f32 0.0, %v2771
    %v2773 = vpop.f32.mrf.mxu0
    %2774 = vmatprep.mubr.bf16.mxu0 0
    %2775 = vmatmul.mubr.bf16.gmra.mxu0 %v1904
    %v2776 = vpop.f32.mrf.mxu0
    %v2777 = vadd.f32 0.0, %v2776
    %v2778 = vpop.f32.mrf.mxu0
    %v2779 = vpop.f32.mrf.mxu0
    %v2780 = vadd.f32 0.0, %v2779
    %v2781 = vpop.f32.mrf.mxu0
    %2782 = vmatprep.mubr.bf16.mxu0 0
    %2783 = vmatmul.mubr.bf16.gmra.mxu0 %v1906
    %v2784 = vpop.f32.mrf.mxu0
    %v2785 = vadd.f32 0.0, %v2784
    %v2786 = vpop.f32.mrf.mxu0
    %v2787 = vpop.f32.mrf.mxu0
    %v2788 = vadd.f32 0.0, %v2787
    %v2789 = vpop.f32.mrf.mxu0
    %2790 = vmatprep.mubr.bf16.mxu0 0
    %2791 = vmatmul.mubr.bf16.gmra.mxu0 %v1908
    %v2792 = vpop.f32.mrf.mxu0
    %v2793 = vadd.f32 0.0, %v2792
    %v2794 = vpop.f32.mrf.mxu0
    %v2795 = vpop.f32.mrf.mxu0
    %v2796 = vadd.f32 0.0, %v2795
    %v2797 = vpop.f32.mrf.mxu0
    %2798 = vmatprep.mubr.bf16.mxu0 0
    %2799 = vmatmul.mubr.bf16.gmra.mxu0 %v1910
    %v2800 = vpop.f32.mrf.mxu0
    %v2801 = vadd.f32 0.0, %v2800
    %v2802 = vpop.f32.mrf.mxu0
    %v2803 = vpop.f32.mrf.mxu0
    %v2804 = vadd.f32 0.0, %v2803
    %v2805 = vpop.f32.mrf.mxu0
    %2806 = vmatprep.mubr.bf16.mxu0 0
    %2807 = vmatmul.mubr.bf16.gmra.mxu0 %v1912
    %v2808 = vpop.f32.mrf.mxu0
    %v2809 = vadd.f32 0.0, %v2808
    %v2810 = vpop.f32.mrf.mxu0
    %v2811 = vpop.f32.mrf.mxu0
    %v2812 = vadd.f32 0.0, %v2811
    %v2813 = vpop.f32.mrf.mxu0
    %2814 = vmatprep.mubr.bf16.mxu0 0
    %2815 = vmatmul.mubr.bf16.gmra.mxu0 %v1914
    %v2816 = vpop.f32.mrf.mxu0
    %v2817 = vadd.f32 0.0, %v2816
    %v2818 = vpop.f32.mrf.mxu0
    %v2819 = vpop.f32.mrf.mxu0
    %v2820 = vadd.f32 0.0, %v2819
    %v2821 = vpop.f32.mrf.mxu0
    %2822 = vmatprep.mubr.bf16.mxu0 0
    %2823 = vmatmul.mubr.bf16.gmra.mxu0 %v1916
    %v2824 = vpop.f32.mrf.mxu0
    %v2825 = vadd.f32 0.0, %v2824
    %v2826 = vpop.f32.mrf.mxu0
    %v2827 = vpop.f32.mrf.mxu0
    %v2828 = vadd.f32 0.0, %v2827
    %v2829 = vpop.f32.mrf.mxu0
    %2830 = vmatprep.mubr.bf16.mxu0 0
    %2831 = vmatmul.mubr.bf16.gmra.mxu0 %v1918
    %v2832 = vpop.f32.mrf.mxu0
    %v2833 = vadd.f32 0.0, %v2832
    %v2834 = vpop.f32.mrf.mxu0
    %v2835 = vpop.f32.mrf.mxu0
    %v2836 = vadd.f32 0.0, %v2835
    %v2837 = vpop.f32.mrf.mxu0
    %2838 = vmatprep.mubr.bf16.mxu0 0
    %2839 = vmatmul.mubr.bf16.gmra.mxu0 %v1920
    %v2840 = vpop.f32.mrf.mxu0
    %v2841 = vadd.f32 0.0, %v2840
    %v2842 = vpop.f32.mrf.mxu0
    %v2843 = vpop.f32.mrf.mxu0
    %v2844 = vadd.f32 0.0, %v2843
    %v2845 = vpop.f32.mrf.mxu0
    %2846 = vmatprep.mubr.bf16.mxu0 0
    %2847 = vmatmul.mubr.bf16.gmra.mxu0 %v1922
    %v2848 = vpop.f32.mrf.mxu0
    %v2849 = vadd.f32 0.0, %v2848
    %v2850 = vpop.f32.mrf.mxu0
    %v2851 = vpop.f32.mrf.mxu0
    %v2852 = vadd.f32 0.0, %v2851
    %v2853 = vpop.f32.mrf.mxu0
    %2854 = vmatprep.mubr.bf16.mxu0 0
    %2855 = vmatmul.mubr.bf16.gmra.mxu0 %v1924
    %v2856 = vpop.f32.mrf.mxu0
    %v2857 = vadd.f32 0.0, %v2856
    %v2858 = vpop.f32.mrf.mxu0
    %v2859 = vpop.f32.mrf.mxu0
    %v2860 = vadd.f32 0.0, %v2859
    %v2861 = vpop.f32.mrf.mxu0
    %2862 = vmatprep.mubr.bf16.mxu0 0
    %2863 = vmatmul.mubr.bf16.gmra.mxu0 %v1926
    %v2864 = vpop.f32.mrf.mxu0
    %v2865 = vadd.f32 0.0, %v2864
    %v2866 = vpop.f32.mrf.mxu0
    %v2867 = vpop.f32.mrf.mxu0
    %v2868 = vadd.f32 0.0, %v2867
    %v2869 = vpop.f32.mrf.mxu0
    %2870 = vmatprep.mubr.bf16.mxu0 0
    %2871 = vmatmul.mubr.bf16.gmra.mxu0 %v1928
    %v2872 = vpop.f32.mrf.mxu0
    %v2873 = vadd.f32 0.0, %v2872
    %v2874 = vpop.f32.mrf.mxu0
    %v2875 = vpop.f32.mrf.mxu0
    %v2876 = vadd.f32 0.0, %v2875
    %v2877 = vpop.f32.mrf.mxu0
    %2878 = vmatprep.mubr.bf16.mxu0 0
    %2879 = vmatmul.mubr.bf16.gmra.mxu0 %v1930
    %v2880 = vpop.f32.mrf.mxu0
    %v2881 = vadd.f32 0.0, %v2880
    %v2882 = vpop.f32.mrf.mxu0
    %v2883 = vpop.f32.mrf.mxu0
    %v2884 = vadd.f32 0.0, %v2883
    %v2885 = vpop.f32.mrf.mxu0
    %2886 = vmatprep.mubr.bf16.mxu0 0
    %2887 = vmatmul.mubr.bf16.gmra.mxu0 %v1932
    %v2888 = vpop.f32.mrf.mxu0
    %v2889 = vadd.f32 0.0, %v2888
    %v2890 = vpop.f32.mrf.mxu0
    %v2891 = vpop.f32.mrf.mxu0
    %v2892 = vadd.f32 0.0, %v2891
    %v2893 = vpop.f32.mrf.mxu0
    %2894 = vmatprep.mubr.bf16.mxu0 0
    %2895 = vmatmul.mubr.bf16.gmra.mxu0 %v1934
    %v2896 = vpop.f32.mrf.mxu0
    %v2897 = vadd.f32 0.0, %v2896
    %v2898 = vpop.f32.mrf.mxu0
    %v2899 = vpop.f32.mrf.mxu0
    %v2900 = vadd.f32 0.0, %v2899
    %v2901 = vpop.f32.mrf.mxu0
    %2902 = vmatprep.mubr.bf16.mxu0 0
    %2903 = vmatmul.mubr.bf16.gmra.mxu0 %v1936
    %v2904 = vpop.f32.mrf.mxu0
    %v2905 = vadd.f32 0.0, %v2904
    %v2906 = vpop.f32.mrf.mxu0
    %v2907 = vpop.f32.mrf.mxu0
    %v2908 = vadd.f32 0.0, %v2907
    %v2909 = vpop.f32.mrf.mxu0
    %2910 = vmatprep.mubr.bf16.mxu0 0
    %2911 = vmatmul.mubr.bf16.gmra.mxu0 %v1938
    %v2912 = vpop.f32.mrf.mxu0
    %v2913 = vadd.f32 0.0, %v2912
    %v2914 = vpop.f32.mrf.mxu0
    %v2915 = vpop.f32.mrf.mxu0
    %v2916 = vadd.f32 0.0, %v2915
    %v2917 = vpop.f32.mrf.mxu0
    %2918 = vmatprep.mubr.bf16.mxu0 0
    %2919 = vmatmul.mubr.bf16.gmra.mxu0 %v1940
    %v2920 = vpop.f32.mrf.mxu0
    %v2921 = vadd.f32 0.0, %v2920
    %v2922 = vpop.f32.mrf.mxu0
    %v2923 = vpop.f32.mrf.mxu0
    %v2924 = vadd.f32 0.0, %v2923
    %v2925 = vpop.f32.mrf.mxu0
    %2926 = vmatprep.mubr.bf16.mxu0 0
    %2927 = vmatmul.mubr.bf16.gmra.mxu0 %v1942
    %v2928 = vpop.f32.mrf.mxu0
    %v2929 = vadd.f32 0.0, %v2928
    %v2930 = vpop.f32.mrf.mxu0
    %v2931 = vpop.f32.mrf.mxu0
    %v2932 = vadd.f32 0.0, %v2931
    %v2933 = vpop.f32.mrf.mxu0
    %2934 = vmatprep.mubr.bf16.mxu0 0
    %2935 = vmatmul.mubr.bf16.gmra.mxu0 %v1944
    %v2936 = vpop.f32.mrf.mxu0
    %v2937 = vadd.f32 0.0, %v2936
    %v2938 = vpop.f32.mrf.mxu0
    %v2939 = vpop.f32.mrf.mxu0
    %v2940 = vadd.f32 0.0, %v2939
    %v2941 = vpop.f32.mrf.mxu0
    %2942 = vmatprep.mubr.bf16.mxu0 0
    %2943 = vmatmul.mubr.bf16.gmra.mxu0 %v1946
    %v2944 = vpop.f32.mrf.mxu0
    %v2945 = vadd.f32 0.0, %v2944
    %v2946 = vpop.f32.mrf.mxu0
    %v2947 = vpop.f32.mrf.mxu0
    %v2948 = vadd.f32 0.0, %v2947
    %v2949 = vpop.f32.mrf.mxu0
    %2950 = vmatprep.mubr.bf16.mxu0 0
    %2951 = vmatmul.mubr.bf16.gmra.mxu0 %v1948
    %v2952 = vpop.f32.mrf.mxu0
    %v2953 = vadd.f32 0.0, %v2952
    %v2954 = vpop.f32.mrf.mxu0
    %v2955 = vpop.f32.mrf.mxu0
    %v2956 = vadd.f32 0.0, %v2955
    %v2957 = vpop.f32.mrf.mxu0
    %2958 = vmatprep.mubr.bf16.mxu0 0
    %2959 = vmatmul.mubr.bf16.gmra.mxu0 %v1950
    %v2960 = vpop.f32.mrf.mxu0
    %v2961 = vadd.f32 0.0, %v2960
    %v2962 = vpop.f32.mrf.mxu0
    %v2963 = vpop.f32.mrf.mxu0
    %v2964 = vadd.f32 0.0, %v2963
    %v2965 = vpop.f32.mrf.mxu0
    %2966 = vmatprep.mubr.bf16.mxu0 0
    %2967 = vmatmul.mubr.bf16.gmra.mxu0 %v1952
    %v2968 = vpop.f32.mrf.mxu0
    %v2969 = vadd.f32 0.0, %v2968
    %v2970 = vpop.f32.mrf.mxu0
    %v2971 = vpop.f32.mrf.mxu0
    %v2972 = vadd.f32 0.0, %v2971
    %v2973 = vpop.f32.mrf.mxu0
    %2974 = vmatprep.mubr.bf16.mxu0 0
    %2975 = vmatmul.mubr.bf16.gmra.mxu0 %v1954
    %v2976 = vpop.f32.mrf.mxu0
    %v2977 = vadd.f32 0.0, %v2976
    %v2978 = vpop.f32.mrf.mxu0
    %v2979 = vpop.f32.mrf.mxu0
    %v2980 = vadd.f32 0.0, %v2979
    %v2981 = vpop.f32.mrf.mxu0
    %2982 = vmatprep.mubr.bf16.mxu0 0
    %2983 = vmatmul.mubr.bf16.gmra.mxu0 %v1956
    %v2984 = vpop.f32.mrf.mxu0
    %v2985 = vadd.f32 0.0, %v2984
    %v2986 = vpop.f32.mrf.mxu0
    %v2987 = vpop.f32.mrf.mxu0
    %v2988 = vadd.f32 0.0, %v2987
    %v2989 = vpop.f32.mrf.mxu0
    %2990 = vmatprep.mubr.bf16.mxu0 0
    %2991 = vmatmul.mubr.bf16.gmra.mxu0 %v1958
    %v2992 = vpop.f32.mrf.mxu0
    %v2993 = vadd.f32 0.0, %v2992
    %v2994 = vpop.f32.mrf.mxu0
    %v2995 = vpop.f32.mrf.mxu0
    %v2996 = vadd.f32 0.0, %v2995
    %v2997 = vpop.f32.mrf.mxu0
    %2998 = vmatprep.mubr.bf16.mxu0 0
    %2999 = vmatmul.mubr.bf16.gmra.mxu0 %v1960
    %v3000 = vpop.f32.mrf.mxu0
    %v3001 = vadd.f32 0.0, %v3000
    %v3002 = vpop.f32.mrf.mxu0
    %v3003 = vpop.f32.mrf.mxu0
    %v3004 = vadd.f32 0.0, %v3003
    %v3005 = vpop.f32.mrf.mxu0
    %3006 = vmatprep.mubr.bf16.mxu0 0
    %3007 = vmatmul.mubr.bf16.gmra.mxu0 %v1962
    %v3008 = vpop.f32.mrf.mxu0
    %v3009 = vadd.f32 0.0, %v3008
    %v3010 = vpop.f32.mrf.mxu0
    %v3011 = vpop.f32.mrf.mxu0
    %v3012 = vadd.f32 0.0, %v3011
    %v3013 = vpop.f32.mrf.mxu0
    %3014 = vmatprep.mubr.bf16.mxu0 0
    %3015 = vmatmul.mubr.bf16.gmra.mxu0 %v1964
    %v3016 = vpop.f32.mrf.mxu0
    %v3017 = vadd.f32 0.0, %v3016
    %v3018 = vpop.f32.mrf.mxu0
    %v3019 = vpop.f32.mrf.mxu0
    %v3020 = vadd.f32 0.0, %v3019
    %v3021 = vpop.f32.mrf.mxu0
    %3022 = vdwg.mxu0
    %v3023 = vmul.f32 %v2001, %v2001
    %v3024 = vmul.f32 %v2004, %v2004
    %v3025 = vmul.f32 %v2009, %v2009
    %v3026 = vmul.f32 %v2012, %v2012
    %v3027 = vmul.f32 %v2017, %v2017
    %v3028 = vmul.f32 %v2020, %v2020
    %v3029 = vmul.f32 %v2025, %v2025
    %v3030 = vmul.f32 %v2028, %v2028
    %v3031 = vmul.f32 %v2033, %v2033
    %v3032 = vmul.f32 %v2036, %v2036
    %v3033 = vmul.f32 %v2041, %v2041
    %v3034 = vmul.f32 %v2044, %v2044
    %v3035 = vmul.f32 %v2049, %v2049
    %v3036 = vmul.f32 %v2052, %v2052
    %v3037 = vmul.f32 %v2057, %v2057
    %v3038 = vmul.f32 %v2060, %v2060
    %v3039 = vmul.f32 %v2065, %v2065
    %v3040 = vmul.f32 %v2068, %v2068
    %v3041 = vmul.f32 %v2073, %v2073
    %v3042 = vmul.f32 %v2076, %v2076
    %v3043 = vmul.f32 %v2081, %v2081
    %v3044 = vmul.f32 %v2084, %v2084
    %v3045 = vmul.f32 %v2089, %v2089
    %v3046 = vmul.f32 %v2092, %v2092
    %v3047 = vmul.f32 %v2097, %v2097
    %v3048 = vmul.f32 %v2100, %v2100
    %v3049 = vmul.f32 %v2105, %v2105
    %v3050 = vmul.f32 %v2108, %v2108
    %v3051 = vmul.f32 %v2113, %v2113
    %v3052 = vmul.f32 %v2116, %v2116
    %v3053 = vmul.f32 %v2121, %v2121
    %v3054 = vmul.f32 %v2124, %v2124
    %v3055 = vmul.f32 %v2129, %v2129
    %v3056 = vmul.f32 %v2132, %v2132
    %v3057 = vmul.f32 %v2137, %v2137
    %v3058 = vmul.f32 %v2140, %v2140
    %v3059 = vmul.f32 %v2145, %v2145
    %v3060 = vmul.f32 %v2148, %v2148
    %v3061 = vmul.f32 %v2153, %v2153
    %v3062 = vmul.f32 %v2156, %v2156
    %v3063 = vmul.f32 %v2161, %v2161
    %v3064 = vmul.f32 %v2164, %v2164
    %v3065 = vmul.f32 %v2169, %v2169
    %v3066 = vmul.f32 %v2172, %v2172
    %v3067 = vmul.f32 %v2177, %v2177
    %v3068 = vmul.f32 %v2180, %v2180
    %v3069 = vmul.f32 %v2185, %v2185
    %v3070 = vmul.f32 %v2188, %v2188
    %v3071 = vmul.f32 %v2193, %v2193
    %v3072 = vmul.f32 %v2196, %v2196
    %v3073 = vmul.f32 %v2201, %v2201
    %v3074 = vmul.f32 %v2204, %v2204
    %v3075 = vmul.f32 %v2209, %v2209
    %v3076 = vmul.f32 %v2212, %v2212
    %v3077 = vmul.f32 %v2217, %v2217
    %v3078 = vmul.f32 %v2220, %v2220
    %v3079 = vmul.f32 %v2225, %v2225
    %v3080 = vmul.f32 %v2228, %v2228
    %v3081 = vmul.f32 %v2233, %v2233
    %v3082 = vmul.f32 %v2236, %v2236
    %v3083 = vmul.f32 %v2241, %v2241
    %v3084 = vmul.f32 %v2244, %v2244
    %v3085 = vmul.f32 %v2249, %v2249
    %v3086 = vmul.f32 %v2252, %v2252
    %v3087 = vmul.f32 %v2257, %v2257
    %v3088 = vmul.f32 %v2260, %v2260
    %v3089 = vmul.f32 %v2265, %v2265
    %v3090 = vmul.f32 %v2268, %v2268
    %v3091 = vmul.f32 %v2273, %v2273
    %v3092 = vmul.f32 %v2276, %v2276
    %v3093 = vmul.f32 %v2281, %v2281
    %v3094 = vmul.f32 %v2284, %v2284
    %v3095 = vmul.f32 %v2289, %v2289
    %v3096 = vmul.f32 %v2292, %v2292
    %v3097 = vmul.f32 %v2297, %v2297
    %v3098 = vmul.f32 %v2300, %v2300
    %v3099 = vmul.f32 %v2305, %v2305
    %v3100 = vmul.f32 %v2308, %v2308
    %v3101 = vmul.f32 %v2313, %v2313
    %v3102 = vmul.f32 %v2316, %v2316
    %v3103 = vmul.f32 %v2321, %v2321
    %v3104 = vmul.f32 %v2324, %v2324
    %v3105 = vmul.f32 %v2329, %v2329
    %v3106 = vmul.f32 %v2332, %v2332
    %v3107 = vmul.f32 %v2337, %v2337
    %v3108 = vmul.f32 %v2340, %v2340
    %v3109 = vmul.f32 %v2345, %v2345
    %v3110 = vmul.f32 %v2348, %v2348
    %v3111 = vmul.f32 %v2353, %v2353
    %v3112 = vmul.f32 %v2356, %v2356
    %v3113 = vmul.f32 %v2361, %v2361
    %v3114 = vmul.f32 %v2364, %v2364
    %v3115 = vmul.f32 %v2369, %v2369
    %v3116 = vmul.f32 %v2372, %v2372
    %v3117 = vmul.f32 %v2377, %v2377
    %v3118 = vmul.f32 %v2380, %v2380
    %v3119 = vmul.f32 %v2385, %v2385
    %v3120 = vmul.f32 %v2388, %v2388
    %v3121 = vmul.f32 %v2393, %v2393
    %v3122 = vmul.f32 %v2396, %v2396
    %v3123 = vmul.f32 %v2401, %v2401
    %v3124 = vmul.f32 %v2404, %v2404
    %v3125 = vmul.f32 %v2409, %v2409
    %v3126 = vmul.f32 %v2412, %v2412
    %v3127 = vmul.f32 %v2417, %v2417
    %v3128 = vmul.f32 %v2420, %v2420
    %v3129 = vmul.f32 %v2425, %v2425
    %v3130 = vmul.f32 %v2428, %v2428
    %v3131 = vmul.f32 %v2433, %v2433
    %v3132 = vmul.f32 %v2436, %v2436
    %v3133 = vmul.f32 %v2441, %v2441
    %v3134 = vmul.f32 %v2444, %v2444
    %v3135 = vmul.f32 %v2449, %v2449
    %v3136 = vmul.f32 %v2452, %v2452
    %v3137 = vmul.f32 %v2457, %v2457
    %v3138 = vmul.f32 %v2460, %v2460
    %v3139 = vmul.f32 %v2465, %v2465
    %v3140 = vmul.f32 %v2468, %v2468
    %v3141 = vmul.f32 %v2473, %v2473
    %v3142 = vmul.f32 %v2476, %v2476
    %v3143 = vmul.f32 %v2481, %v2481
    %v3144 = vmul.f32 %v2484, %v2484
    %v3145 = vmul.f32 %v2489, %v2489
    %v3146 = vmul.f32 %v2492, %v2492
    %v3147 = vmul.f32 %v2497, %v2497
    %v3148 = vmul.f32 %v2500, %v2500
    %v3149 = vmul.f32 %v2505, %v2505
    %v3150 = vmul.f32 %v2508, %v2508
    %v3151 = vmul.f32 %v2513, %v2513
    %v3152 = vmul.f32 %v2516, %v2516
    %v3153 = vmul.f32 %v2521, %v2521
    %v3154 = vmul.f32 %v2524, %v2524
    %v3155 = vmul.f32 %v2529, %v2529
    %v3156 = vmul.f32 %v2532, %v2532
    %v3157 = vmul.f32 %v2537, %v2537
    %v3158 = vmul.f32 %v2540, %v2540
    %v3159 = vmul.f32 %v2545, %v2545
    %v3160 = vmul.f32 %v2548, %v2548
    %v3161 = vmul.f32 %v2553, %v2553
    %v3162 = vmul.f32 %v2556, %v2556
    %v3163 = vmul.f32 %v2561, %v2561
    %v3164 = vmul.f32 %v2564, %v2564
    %v3165 = vmul.f32 %v2569, %v2569
    %v3166 = vmul.f32 %v2572, %v2572
    %v3167 = vmul.f32 %v2577, %v2577
    %v3168 = vmul.f32 %v2580, %v2580
    %v3169 = vmul.f32 %v2585, %v2585
    %v3170 = vmul.f32 %v2588, %v2588
    %v3171 = vmul.f32 %v2593, %v2593
    %v3172 = vmul.f32 %v2596, %v2596
    %v3173 = vmul.f32 %v2601, %v2601
    %v3174 = vmul.f32 %v2604, %v2604
    %v3175 = vmul.f32 %v2609, %v2609
    %v3176 = vmul.f32 %v2612, %v2612
    %v3177 = vmul.f32 %v2617, %v2617
    %v3178 = vmul.f32 %v2620, %v2620
    %v3179 = vmul.f32 %v2625, %v2625
    %v3180 = vmul.f32 %v2628, %v2628
    %v3181 = vmul.f32 %v2633, %v2633
    %v3182 = vmul.f32 %v2636, %v2636
    %v3183 = vmul.f32 %v2641, %v2641
    %v3184 = vmul.f32 %v2644, %v2644
    %v3185 = vmul.f32 %v2649, %v2649
    %v3186 = vmul.f32 %v2652, %v2652
    %v3187 = vmul.f32 %v2657, %v2657
    %v3188 = vmul.f32 %v2660, %v2660
    %v3189 = vmul.f32 %v2665, %v2665
    %v3190 = vmul.f32 %v2668, %v2668
    %v3191 = vmul.f32 %v2673, %v2673
    %v3192 = vmul.f32 %v2676, %v2676
    %v3193 = vmul.f32 %v2681, %v2681
    %v3194 = vmul.f32 %v2684, %v2684
    %v3195 = vmul.f32 %v2689, %v2689
    %v3196 = vmul.f32 %v2692, %v2692
    %v3197 = vmul.f32 %v2697, %v2697
    %v3198 = vmul.f32 %v2700, %v2700
    %v3199 = vmul.f32 %v2705, %v2705
    %v3200 = vmul.f32 %v2708, %v2708
    %v3201 = vmul.f32 %v2713, %v2713
    %v3202 = vmul.f32 %v2716, %v2716
    %v3203 = vmul.f32 %v2721, %v2721
    %v3204 = vmul.f32 %v2724, %v2724
    %v3205 = vmul.f32 %v2729, %v2729
    %v3206 = vmul.f32 %v2732, %v2732
    %v3207 = vmul.f32 %v2737, %v2737
    %v3208 = vmul.f32 %v2740, %v2740
    %v3209 = vmul.f32 %v2745, %v2745
    %v3210 = vmul.f32 %v2748, %v2748
    %v3211 = vmul.f32 %v2753, %v2753
    %v3212 = vmul.f32 %v2756, %v2756
    %v3213 = vmul.f32 %v2761, %v2761
    %v3214 = vmul.f32 %v2764, %v2764
    %v3215 = vmul.f32 %v2769, %v2769
    %v3216 = vmul.f32 %v2772, %v2772
    %v3217 = vmul.f32 %v2777, %v2777
    %v3218 = vmul.f32 %v2780, %v2780
    %v3219 = vmul.f32 %v2785, %v2785
    %v3220 = vmul.f32 %v2788, %v2788
    %v3221 = vmul.f32 %v2793, %v2793
    %v3222 = vmul.f32 %v2796, %v2796
    %v3223 = vmul.f32 %v2801, %v2801
    %v3224 = vmul.f32 %v2804, %v2804
    %v3225 = vmul.f32 %v2809, %v2809
    %v3226 = vmul.f32 %v2812, %v2812
    %v3227 = vmul.f32 %v2817, %v2817
    %v3228 = vmul.f32 %v2820, %v2820
    %v3229 = vmul.f32 %v2825, %v2825
    %v3230 = vmul.f32 %v2828, %v2828
    %v3231 = vmul.f32 %v2833, %v2833
    %v3232 = vmul.f32 %v2836, %v2836
    %v3233 = vmul.f32 %v2841, %v2841
    %v3234 = vmul.f32 %v2844, %v2844
    %v3235 = vmul.f32 %v2849, %v2849
    %v3236 = vmul.f32 %v2852, %v2852
    %v3237 = vmul.f32 %v2857, %v2857
    %v3238 = vmul.f32 %v2860, %v2860
    %v3239 = vmul.f32 %v2865, %v2865
    %v3240 = vmul.f32 %v2868, %v2868
    %v3241 = vmul.f32 %v2873, %v2873
    %v3242 = vmul.f32 %v2876, %v2876
    %v3243 = vmul.f32 %v2881, %v2881
    %v3244 = vmul.f32 %v2884, %v2884
    %v3245 = vmul.f32 %v2889, %v2889
    %v3246 = vmul.f32 %v2892, %v2892
    %v3247 = vmul.f32 %v2897, %v2897
    %v3248 = vmul.f32 %v2900, %v2900
    %v3249 = vmul.f32 %v2905, %v2905
    %v3250 = vmul.f32 %v2908, %v2908
    %v3251 = vmul.f32 %v2913, %v2913
    %v3252 = vmul.f32 %v2916, %v2916
    %v3253 = vmul.f32 %v2921, %v2921
    %v3254 = vmul.f32 %v2924, %v2924
    %v3255 = vmul.f32 %v2929, %v2929
    %v3256 = vmul.f32 %v2932, %v2932
    %v3257 = vmul.f32 %v2937, %v2937
    %v3258 = vmul.f32 %v2940, %v2940
    %v3259 = vmul.f32 %v2945, %v2945
    %v3260 = vmul.f32 %v2948, %v2948
    %v3261 = vmul.f32 %v2953, %v2953
    %v3262 = vmul.f32 %v2956, %v2956
    %v3263 = vmul.f32 %v2961, %v2961
    %v3264 = vmul.f32 %v2964, %v2964
    %v3265 = vmul.f32 %v2969, %v2969
    %v3266 = vmul.f32 %v2972, %v2972
    %v3267 = vmul.f32 %v2977, %v2977
    %v3268 = vmul.f32 %v2980, %v2980
    %v3269 = vmul.f32 %v2985, %v2985
    %v3270 = vmul.f32 %v2988, %v2988
    %v3271 = vmul.f32 %v2993, %v2993
    %v3272 = vmul.f32 %v2996, %v2996
    %v3273 = vmul.f32 %v3001, %v3001
    %v3274 = vmul.f32 %v3004, %v3004
    %v3275 = vmul.f32 %v3009, %v3009
    %v3276 = vmul.f32 %v3012, %v3012
    %v3277 = vmul.f32 %v3017, %v3017
    %v3278 = vmul.f32 %v3020, %v3020
    %3535 = vrot.lane.b32.xlu0 %v3023, 64
    %v3536 = vpop.permute.xlu0 %3535
    %3537 = vrot.lane.b32.xlu0 %v3024, 64
    %v3538 = vpop.permute.xlu0 %3537
    %3539 = vrot.lane.b32.xlu0 %v3025, 64
    %v3540 = vpop.permute.xlu0 %3539
    %3541 = vrot.lane.b32.xlu0 %v3026, 64
    %v3542 = vpop.permute.xlu0 %3541
    %3543 = vrot.lane.b32.xlu0 %v3027, 64
    %v3544 = vpop.permute.xlu0 %3543
    %3545 = vrot.lane.b32.xlu0 %v3028, 64
    %v3546 = vpop.permute.xlu0 %3545
    %3547 = vrot.lane.b32.xlu0 %v3029, 64
    %v3548 = vpop.permute.xlu0 %3547
    %3549 = vrot.lane.b32.xlu0 %v3030, 64
    %v3550 = vpop.permute.xlu0 %3549
    %3551 = vrot.lane.b32.xlu0 %v3031, 64
    %v3552 = vpop.permute.xlu0 %3551
    %3553 = vrot.lane.b32.xlu0 %v3032, 64
    %v3554 = vpop.permute.xlu0 %3553
    %3555 = vrot.lane.b32.xlu0 %v3033, 64
    %v3556 = vpop.permute.xlu0 %3555
    %3557 = vrot.lane.b32.xlu0 %v3034, 64
    %v3558 = vpop.permute.xlu0 %3557
    %3559 = vrot.lane.b32.xlu0 %v3035, 64
    %v3560 = vpop.permute.xlu0 %3559
    %3561 = vrot.lane.b32.xlu0 %v3036, 64
    %v3562 = vpop.permute.xlu0 %3561
    %3563 = vrot.lane.b32.xlu0 %v3037, 64
    %v3564 = vpop.permute.xlu0 %3563
    %3565 = vrot.lane.b32.xlu0 %v3038, 64
    %v3566 = vpop.permute.xlu0 %3565
    %3567 = vrot.lane.b32.xlu0 %v3039, 64
    %v3568 = vpop.permute.xlu0 %3567
    %3569 = vrot.lane.b32.xlu0 %v3040, 64
    %v3570 = vpop.permute.xlu0 %3569
    %3571 = vrot.lane.b32.xlu0 %v3041, 64
    %v3572 = vpop.permute.xlu0 %3571
    %3573 = vrot.lane.b32.xlu0 %v3042, 64
    %v3574 = vpop.permute.xlu0 %3573
    %3575 = vrot.lane.b32.xlu0 %v3043, 64
    %v3576 = vpop.permute.xlu0 %3575
    %3577 = vrot.lane.b32.xlu0 %v3044, 64
    %v3578 = vpop.permute.xlu0 %3577
    %3579 = vrot.lane.b32.xlu0 %v3045, 64
    %v3580 = vpop.permute.xlu0 %3579
    %3581 = vrot.lane.b32.xlu0 %v3046, 64
    %v3582 = vpop.permute.xlu0 %3581
    %3583 = vrot.lane.b32.xlu0 %v3047, 64
    %v3584 = vpop.permute.xlu0 %3583
    %3585 = vrot.lane.b32.xlu0 %v3048, 64
    %v3586 = vpop.permute.xlu0 %3585
    %3587 = vrot.lane.b32.xlu0 %v3049, 64
    %v3588 = vpop.permute.xlu0 %3587
    %3589 = vrot.lane.b32.xlu0 %v3050, 64
    %v3590 = vpop.permute.xlu0 %3589
    %3591 = vrot.lane.b32.xlu0 %v3051, 64
    %v3592 = vpop.permute.xlu0 %3591
    %3593 = vrot.lane.b32.xlu0 %v3052, 64
    %v3594 = vpop.permute.xlu0 %3593
    %3595 = vrot.lane.b32.xlu0 %v3053, 64
    %v3596 = vpop.permute.xlu0 %3595
    %3597 = vrot.lane.b32.xlu0 %v3054, 64
    %v3598 = vpop.permute.xlu0 %3597
    %3599 = vrot.lane.b32.xlu0 %v3055, 64
    %v3600 = vpop.permute.xlu0 %3599
    %3601 = vrot.lane.b32.xlu0 %v3056, 64
    %v3602 = vpop.permute.xlu0 %3601
    %3603 = vrot.lane.b32.xlu0 %v3057, 64
    %v3604 = vpop.permute.xlu0 %3603
    %3605 = vrot.lane.b32.xlu0 %v3058, 64
    %v3606 = vpop.permute.xlu0 %3605
    %3607 = vrot.lane.b32.xlu0 %v3059, 64
    %v3608 = vpop.permute.xlu0 %3607
    %3609 = vrot.lane.b32.xlu0 %v3060, 64
    %v3610 = vpop.permute.xlu0 %3609
    %3611 = vrot.lane.b32.xlu0 %v3061, 64
    %v3612 = vpop.permute.xlu0 %3611
    %3613 = vrot.lane.b32.xlu0 %v3062, 64
    %v3614 = vpop.permute.xlu0 %3613
    %3615 = vrot.lane.b32.xlu0 %v3063, 64
    %v3616 = vpop.permute.xlu0 %3615
    %3617 = vrot.lane.b32.xlu0 %v3064, 64
    %v3618 = vpop.permute.xlu0 %3617
    %3619 = vrot.lane.b32.xlu0 %v3065, 64
    %v3620 = vpop.permute.xlu0 %3619
    %3621 = vrot.lane.b32.xlu0 %v3066, 64
    %v3622 = vpop.permute.xlu0 %3621
    %3623 = vrot.lane.b32.xlu0 %v3067, 64
    %v3624 = vpop.permute.xlu0 %3623
    %3625 = vrot.lane.b32.xlu0 %v3068, 64
    %v3626 = vpop.permute.xlu0 %3625
    %3627 = vrot.lane.b32.xlu0 %v3069, 64
    %v3628 = vpop.permute.xlu0 %3627
    %3629 = vrot.lane.b32.xlu0 %v3070, 64
    %v3630 = vpop.permute.xlu0 %3629
    %3631 = vrot.lane.b32.xlu0 %v3071, 64
    %v3632 = vpop.permute.xlu0 %3631
    %3633 = vrot.lane.b32.xlu0 %v3072, 64
    %v3634 = vpop.permute.xlu0 %3633
    %3635 = vrot.lane.b32.xlu0 %v3073, 64
    %v3636 = vpop.permute.xlu0 %3635
    %3637 = vrot.lane.b32.xlu0 %v3074, 64
    %v3638 = vpop.permute.xlu0 %3637
    %3639 = vrot.lane.b32.xlu0 %v3075, 64
    %v3640 = vpop.permute.xlu0 %3639
    %3641 = vrot.lane.b32.xlu0 %v3076, 64
    %v3642 = vpop.permute.xlu0 %3641
    %3643 = vrot.lane.b32.xlu0 %v3077, 64
    %v3644 = vpop.permute.xlu0 %3643
    %3645 = vrot.lane.b32.xlu0 %v3078, 64
    %v3646 = vpop.permute.xlu0 %3645
    %3647 = vrot.lane.b32.xlu0 %v3079, 64
    %v3648 = vpop.permute.xlu0 %3647
    %3649 = vrot.lane.b32.xlu0 %v3080, 64
    %v3650 = vpop.permute.xlu0 %3649
    %3651 = vrot.lane.b32.xlu0 %v3081, 64
    %v3652 = vpop.permute.xlu0 %3651
    %3653 = vrot.lane.b32.xlu0 %v3082, 64
    %v3654 = vpop.permute.xlu0 %3653
    %3655 = vrot.lane.b32.xlu0 %v3083, 64
    %v3656 = vpop.permute.xlu0 %3655
    %3657 = vrot.lane.b32.xlu0 %v3084, 64
    %v3658 = vpop.permute.xlu0 %3657
    %3659 = vrot.lane.b32.xlu0 %v3085, 64
    %v3660 = vpop.permute.xlu0 %3659
    %3661 = vrot.lane.b32.xlu0 %v3086, 64
    %v3662 = vpop.permute.xlu0 %3661
    %3663 = vrot.lane.b32.xlu0 %v3087, 64
    %v3664 = vpop.permute.xlu0 %3663
    %3665 = vrot.lane.b32.xlu0 %v3088, 64
    %v3666 = vpop.permute.xlu0 %3665
    %3667 = vrot.lane.b32.xlu0 %v3089, 64
    %v3668 = vpop.permute.xlu0 %3667
    %3669 = vrot.lane.b32.xlu0 %v3090, 64
    %v3670 = vpop.permute.xlu0 %3669
    %3671 = vrot.lane.b32.xlu0 %v3091, 64
    %v3672 = vpop.permute.xlu0 %3671
    %3673 = vrot.lane.b32.xlu0 %v3092, 64
    %v3674 = vpop.permute.xlu0 %3673
    %3675 = vrot.lane.b32.xlu0 %v3093, 64
    %v3676 = vpop.permute.xlu0 %3675
    %3677 = vrot.lane.b32.xlu0 %v3094, 64
    %v3678 = vpop.permute.xlu0 %3677
    %3679 = vrot.lane.b32.xlu0 %v3095, 64
    %v3680 = vpop.permute.xlu0 %3679
    %3681 = vrot.lane.b32.xlu0 %v3096, 64
    %v3682 = vpop.permute.xlu0 %3681
    %3683 = vrot.lane.b32.xlu0 %v3097, 64
    %v3684 = vpop.permute.xlu0 %3683
    %3685 = vrot.lane.b32.xlu0 %v3098, 64
    %v3686 = vpop.permute.xlu0 %3685
    %3687 = vrot.lane.b32.xlu0 %v3099, 64
    %v3688 = vpop.permute.xlu0 %3687
    %3689 = vrot.lane.b32.xlu0 %v3100, 64
    %v3690 = vpop.permute.xlu0 %3689
    %3691 = vrot.lane.b32.xlu0 %v3101, 64
    %v3692 = vpop.permute.xlu0 %3691
    %3693 = vrot.lane.b32.xlu0 %v3102, 64
    %v3694 = vpop.permute.xlu0 %3693
    %3695 = vrot.lane.b32.xlu0 %v3103, 64
    %v3696 = vpop.permute.xlu0 %3695
    %3697 = vrot.lane.b32.xlu0 %v3104, 64
    %v3698 = vpop.permute.xlu0 %3697
    %3699 = vrot.lane.b32.xlu0 %v3105, 64
    %v3700 = vpop.permute.xlu0 %3699
    %3701 = vrot.lane.b32.xlu0 %v3106, 64
    %v3702 = vpop.permute.xlu0 %3701
    %3703 = vrot.lane.b32.xlu0 %v3107, 64
    %v3704 = vpop.permute.xlu0 %3703
    %3705 = vrot.lane.b32.xlu0 %v3108, 64
    %v3706 = vpop.permute.xlu0 %3705
    %3707 = vrot.lane.b32.xlu0 %v3109, 64
    %v3708 = vpop.permute.xlu0 %3707
    %3709 = vrot.lane.b32.xlu0 %v3110, 64
    %v3710 = vpop.permute.xlu0 %3709
    %3711 = vrot.lane.b32.xlu0 %v3111, 64
    %v3712 = vpop.permute.xlu0 %3711
    %3713 = vrot.lane.b32.xlu0 %v3112, 64
    %v3714 = vpop.permute.xlu0 %3713
    %3715 = vrot.lane.b32.xlu0 %v3113, 64
    %v3716 = vpop.permute.xlu0 %3715
    %3717 = vrot.lane.b32.xlu0 %v3114, 64
    %v3718 = vpop.permute.xlu0 %3717
    %3719 = vrot.lane.b32.xlu0 %v3115, 64
    %v3720 = vpop.permute.xlu0 %3719
    %3721 = vrot.lane.b32.xlu0 %v3116, 64
    %v3722 = vpop.permute.xlu0 %3721
    %3723 = vrot.lane.b32.xlu0 %v3117, 64
    %v3724 = vpop.permute.xlu0 %3723
    %3725 = vrot.lane.b32.xlu0 %v3118, 64
    %v3726 = vpop.permute.xlu0 %3725
    %3727 = vrot.lane.b32.xlu0 %v3119, 64
    %v3728 = vpop.permute.xlu0 %3727
    %3729 = vrot.lane.b32.xlu0 %v3120, 64
    %v3730 = vpop.permute.xlu0 %3729
    %3731 = vrot.lane.b32.xlu0 %v3121, 64
    %v3732 = vpop.permute.xlu0 %3731
    %3733 = vrot.lane.b32.xlu0 %v3122, 64
    %v3734 = vpop.permute.xlu0 %3733
    %3735 = vrot.lane.b32.xlu0 %v3123, 64
    %v3736 = vpop.permute.xlu0 %3735
    %3737 = vrot.lane.b32.xlu0 %v3124, 64
    %v3738 = vpop.permute.xlu0 %3737
    %3739 = vrot.lane.b32.xlu0 %v3125, 64
    %v3740 = vpop.permute.xlu0 %3739
    %3741 = vrot.lane.b32.xlu0 %v3126, 64
    %v3742 = vpop.permute.xlu0 %3741
    %3743 = vrot.lane.b32.xlu0 %v3127, 64
    %v3744 = vpop.permute.xlu0 %3743
    %3745 = vrot.lane.b32.xlu0 %v3128, 64
    %v3746 = vpop.permute.xlu0 %3745
    %3747 = vrot.lane.b32.xlu0 %v3129, 64
    %v3748 = vpop.permute.xlu0 %3747
    %3749 = vrot.lane.b32.xlu0 %v3130, 64
    %v3750 = vpop.permute.xlu0 %3749
    %3751 = vrot.lane.b32.xlu0 %v3131, 64
    %v3752 = vpop.permute.xlu0 %3751
    %3753 = vrot.lane.b32.xlu0 %v3132, 64
    %v3754 = vpop.permute.xlu0 %3753
    %3755 = vrot.lane.b32.xlu0 %v3133, 64
    %v3756 = vpop.permute.xlu0 %3755
    %3757 = vrot.lane.b32.xlu0 %v3134, 64
    %v3758 = vpop.permute.xlu0 %3757
    %3759 = vrot.lane.b32.xlu0 %v3135, 64
    %v3760 = vpop.permute.xlu0 %3759
    %3761 = vrot.lane.b32.xlu0 %v3136, 64
    %v3762 = vpop.permute.xlu0 %3761
    %3763 = vrot.lane.b32.xlu0 %v3137, 64
    %v3764 = vpop.permute.xlu0 %3763
    %3765 = vrot.lane.b32.xlu0 %v3138, 64
    %v3766 = vpop.permute.xlu0 %3765
    %3767 = vrot.lane.b32.xlu0 %v3139, 64
    %v3768 = vpop.permute.xlu0 %3767
    %3769 = vrot.lane.b32.xlu0 %v3140, 64
    %v3770 = vpop.permute.xlu0 %3769
    %3771 = vrot.lane.b32.xlu0 %v3141, 64
    %v3772 = vpop.permute.xlu0 %3771
    %3773 = vrot.lane.b32.xlu0 %v3142, 64
    %v3774 = vpop.permute.xlu0 %3773
    %3775 = vrot.lane.b32.xlu0 %v3143, 64
    %v3776 = vpop.permute.xlu0 %3775
    %3777 = vrot.lane.b32.xlu0 %v3144, 64
    %v3778 = vpop.permute.xlu0 %3777
    %3779 = vrot.lane.b32.xlu0 %v3145, 64
    %v3780 = vpop.permute.xlu0 %3779
    %3781 = vrot.lane.b32.xlu0 %v3146, 64
    %v3782 = vpop.permute.xlu0 %3781
    %3783 = vrot.lane.b32.xlu0 %v3147, 64
    %v3784 = vpop.permute.xlu0 %3783
    %3785 = vrot.lane.b32.xlu0 %v3148, 64
    %v3786 = vpop.permute.xlu0 %3785
    %3787 = vrot.lane.b32.xlu0 %v3149, 64
    %v3788 = vpop.permute.xlu0 %3787
    %3789 = vrot.lane.b32.xlu0 %v3150, 64
    %v3790 = vpop.permute.xlu0 %3789
    %3791 = vrot.lane.b32.xlu0 %v3151, 64
    %v3792 = vpop.permute.xlu0 %3791
    %3793 = vrot.lane.b32.xlu0 %v3152, 64
    %v3794 = vpop.permute.xlu0 %3793
    %3795 = vrot.lane.b32.xlu0 %v3153, 64
    %v3796 = vpop.permute.xlu0 %3795
    %3797 = vrot.lane.b32.xlu0 %v3154, 64
    %v3798 = vpop.permute.xlu0 %3797
    %3799 = vrot.lane.b32.xlu0 %v3155, 64
    %v3800 = vpop.permute.xlu0 %3799
    %3801 = vrot.lane.b32.xlu0 %v3156, 64
    %v3802 = vpop.permute.xlu0 %3801
    %3803 = vrot.lane.b32.xlu0 %v3157, 64
    %v3804 = vpop.permute.xlu0 %3803
    %3805 = vrot.lane.b32.xlu0 %v3158, 64
    %v3806 = vpop.permute.xlu0 %3805
    %3807 = vrot.lane.b32.xlu0 %v3159, 64
    %v3808 = vpop.permute.xlu0 %3807
    %3809 = vrot.lane.b32.xlu0 %v3160, 64
    %v3810 = vpop.permute.xlu0 %3809
    %3811 = vrot.lane.b32.xlu0 %v3161, 64
    %v3812 = vpop.permute.xlu0 %3811
    %3813 = vrot.lane.b32.xlu0 %v3162, 64
    %v3814 = vpop.permute.xlu0 %3813
    %3815 = vrot.lane.b32.xlu0 %v3163, 64
    %v3816 = vpop.permute.xlu0 %3815
    %3817 = vrot.lane.b32.xlu0 %v3164, 64
    %v3818 = vpop.permute.xlu0 %3817
    %3819 = vrot.lane.b32.xlu0 %v3165, 64
    %v3820 = vpop.permute.xlu0 %3819
    %3821 = vrot.lane.b32.xlu0 %v3166, 64
    %v3822 = vpop.permute.xlu0 %3821
    %3823 = vrot.lane.b32.xlu0 %v3167, 64
    %v3824 = vpop.permute.xlu0 %3823
    %3825 = vrot.lane.b32.xlu0 %v3168, 64
    %v3826 = vpop.permute.xlu0 %3825
    %3827 = vrot.lane.b32.xlu0 %v3169, 64
    %v3828 = vpop.permute.xlu0 %3827
    %3829 = vrot.lane.b32.xlu0 %v3170, 64
    %v3830 = vpop.permute.xlu0 %3829
    %3831 = vrot.lane.b32.xlu0 %v3171, 64
    %v3832 = vpop.permute.xlu0 %3831
    %3833 = vrot.lane.b32.xlu0 %v3172, 64
    %v3834 = vpop.permute.xlu0 %3833
    %3835 = vrot.lane.b32.xlu0 %v3173, 64
    %v3836 = vpop.permute.xlu0 %3835
    %3837 = vrot.lane.b32.xlu0 %v3174, 64
    %v3838 = vpop.permute.xlu0 %3837
    %3839 = vrot.lane.b32.xlu0 %v3175, 64
    %v3840 = vpop.permute.xlu0 %3839
    %3841 = vrot.lane.b32.xlu0 %v3176, 64
    %v3842 = vpop.permute.xlu0 %3841
    %3843 = vrot.lane.b32.xlu0 %v3177, 64
    %v3844 = vpop.permute.xlu0 %3843
    %3845 = vrot.lane.b32.xlu0 %v3178, 64
    %v3846 = vpop.permute.xlu0 %3845
    %3847 = vrot.lane.b32.xlu0 %v3179, 64
    %v3848 = vpop.permute.xlu0 %3847
    %3849 = vrot.lane.b32.xlu0 %v3180, 64
    %v3850 = vpop.permute.xlu0 %3849
    %3851 = vrot.lane.b32.xlu0 %v3181, 64
    %v3852 = vpop.permute.xlu0 %3851
    %3853 = vrot.lane.b32.xlu0 %v3182, 64
    %v3854 = vpop.permute.xlu0 %3853
    %3855 = vrot.lane.b32.xlu0 %v3183, 64
    %v3856 = vpop.permute.xlu0 %3855
    %3857 = vrot.lane.b32.xlu0 %v3184, 64
    %v3858 = vpop.permute.xlu0 %3857
    %3859 = vrot.lane.b32.xlu0 %v3185, 64
    %v3860 = vpop.permute.xlu0 %3859
    %3861 = vrot.lane.b32.xlu0 %v3186, 64
    %v3862 = vpop.permute.xlu0 %3861
    %3863 = vrot.lane.b32.xlu0 %v3187, 64
    %v3864 = vpop.permute.xlu0 %3863
    %3865 = vrot.lane.b32.xlu0 %v3188, 64
    %v3866 = vpop.permute.xlu0 %3865
    %3867 = vrot.lane.b32.xlu0 %v3189, 64
    %v3868 = vpop.permute.xlu0 %3867
    %3869 = vrot.lane.b32.xlu0 %v3190, 64
    %v3870 = vpop.permute.xlu0 %3869
    %3871 = vrot.lane.b32.xlu0 %v3191, 64
    %v3872 = vpop.permute.xlu0 %3871
    %3873 = vrot.lane.b32.xlu0 %v3192, 64
    %v3874 = vpop.permute.xlu0 %3873
    %3875 = vrot.lane.b32.xlu0 %v3193, 64
    %v3876 = vpop.permute.xlu0 %3875
    %3877 = vrot.lane.b32.xlu0 %v3194, 64
    %v3878 = vpop.permute.xlu0 %3877
    %3879 = vrot.lane.b32.xlu0 %v3195, 64
    %v3880 = vpop.permute.xlu0 %3879
    %3881 = vrot.lane.b32.xlu0 %v3196, 64
    %v3882 = vpop.permute.xlu0 %3881
    %3883 = vrot.lane.b32.xlu0 %v3197, 64
    %v3884 = vpop.permute.xlu0 %3883
    %3885 = vrot.lane.b32.xlu0 %v3198, 64
    %v3886 = vpop.permute.xlu0 %3885
    %3887 = vrot.lane.b32.xlu0 %v3199, 64
    %v3888 = vpop.permute.xlu0 %3887
    %3889 = vrot.lane.b32.xlu0 %v3200, 64
    %v3890 = vpop.permute.xlu0 %3889
    %3891 = vrot.lane.b32.xlu0 %v3201, 64
    %v3892 = vpop.permute.xlu0 %3891
    %3893 = vrot.lane.b32.xlu0 %v3202, 64
    %v3894 = vpop.permute.xlu0 %3893
    %3895 = vrot.lane.b32.xlu0 %v3203, 64
    %v3896 = vpop.permute.xlu0 %3895
    %3897 = vrot.lane.b32.xlu0 %v3204, 64
    %v3898 = vpop.permute.xlu0 %3897
    %3899 = vrot.lane.b32.xlu0 %v3205, 64
    %v3900 = vpop.permute.xlu0 %3899
    %3901 = vrot.lane.b32.xlu0 %v3206, 64
    %v3902 = vpop.permute.xlu0 %3901
    %3903 = vrot.lane.b32.xlu0 %v3207, 64
    %v3904 = vpop.permute.xlu0 %3903
    %3905 = vrot.lane.b32.xlu0 %v3208, 64
    %v3906 = vpop.permute.xlu0 %3905
    %3907 = vrot.lane.b32.xlu0 %v3209, 64
    %v3908 = vpop.permute.xlu0 %3907
    %3909 = vrot.lane.b32.xlu0 %v3210, 64
    %v3910 = vpop.permute.xlu0 %3909
    %3911 = vrot.lane.b32.xlu0 %v3211, 64
    %v3912 = vpop.permute.xlu0 %3911
    %3913 = vrot.lane.b32.xlu0 %v3212, 64
    %v3914 = vpop.permute.xlu0 %3913
    %3915 = vrot.lane.b32.xlu0 %v3213, 64
    %v3916 = vpop.permute.xlu0 %3915
    %3917 = vrot.lane.b32.xlu0 %v3214, 64
    %v3918 = vpop.permute.xlu0 %3917
    %3919 = vrot.lane.b32.xlu0 %v3215, 64
    %v3920 = vpop.permute.xlu0 %3919
    %3921 = vrot.lane.b32.xlu0 %v3216, 64
    %v3922 = vpop.permute.xlu0 %3921
    %3923 = vrot.lane.b32.xlu0 %v3217, 64
    %v3924 = vpop.permute.xlu0 %3923
    %3925 = vrot.lane.b32.xlu0 %v3218, 64
    %v3926 = vpop.permute.xlu0 %3925
    %3927 = vrot.lane.b32.xlu0 %v3219, 64
    %v3928 = vpop.permute.xlu0 %3927
    %3929 = vrot.lane.b32.xlu0 %v3220, 64
    %v3930 = vpop.permute.xlu0 %3929
    %3931 = vrot.lane.b32.xlu0 %v3221, 64
    %v3932 = vpop.permute.xlu0 %3931
    %3933 = vrot.lane.b32.xlu0 %v3222, 64
    %v3934 = vpop.permute.xlu0 %3933
    %3935 = vrot.lane.b32.xlu0 %v3223, 64
    %v3936 = vpop.permute.xlu0 %3935
    %3937 = vrot.lane.b32.xlu0 %v3224, 64
    %v3938 = vpop.permute.xlu0 %3937
    %3939 = vrot.lane.b32.xlu0 %v3225, 64
    %v3940 = vpop.permute.xlu0 %3939
    %3941 = vrot.lane.b32.xlu0 %v3226, 64
    %v3942 = vpop.permute.xlu0 %3941
    %3943 = vrot.lane.b32.xlu0 %v3227, 64
    %v3944 = vpop.permute.xlu0 %3943
    %3945 = vrot.lane.b32.xlu0 %v3228, 64
    %v3946 = vpop.permute.xlu0 %3945
    %3947 = vrot.lane.b32.xlu0 %v3229, 64
    %v3948 = vpop.permute.xlu0 %3947
    %3949 = vrot.lane.b32.xlu0 %v3230, 64
    %v3950 = vpop.permute.xlu0 %3949
    %3951 = vrot.lane.b32.xlu0 %v3231, 64
    %v3952 = vpop.permute.xlu0 %3951
    %3953 = vrot.lane.b32.xlu0 %v3232, 64
    %v3954 = vpop.permute.xlu0 %3953
    %3955 = vrot.lane.b32.xlu0 %v3233, 64
    %v3956 = vpop.permute.xlu0 %3955
    %3957 = vrot.lane.b32.xlu0 %v3234, 64
    %v3958 = vpop.permute.xlu0 %3957
    %3959 = vrot.lane.b32.xlu0 %v3235, 64
    %v3960 = vpop.permute.xlu0 %3959
    %3961 = vrot.lane.b32.xlu0 %v3236, 64
    %v3962 = vpop.permute.xlu0 %3961
    %3963 = vrot.lane.b32.xlu0 %v3237, 64
    %v3964 = vpop.permute.xlu0 %3963
    %3965 = vrot.lane.b32.xlu0 %v3238, 64
    %v3966 = vpop.permute.xlu0 %3965
    %3967 = vrot.lane.b32.xlu0 %v3239, 64
    %v3968 = vpop.permute.xlu0 %3967
    %3969 = vrot.lane.b32.xlu0 %v3240, 64
    %v3970 = vpop.permute.xlu0 %3969
    %3971 = vrot.lane.b32.xlu0 %v3241, 64
    %v3972 = vpop.permute.xlu0 %3971
    %3973 = vrot.lane.b32.xlu0 %v3242, 64
    %v3974 = vpop.permute.xlu0 %3973
    %3975 = vrot.lane.b32.xlu0 %v3243, 64
    %v3976 = vpop.permute.xlu0 %3975
    %3977 = vrot.lane.b32.xlu0 %v3244, 64
    %v3978 = vpop.permute.xlu0 %3977
    %3979 = vrot.lane.b32.xlu0 %v3245, 64
    %v3980 = vpop.permute.xlu0 %3979
    %3981 = vrot.lane.b32.xlu0 %v3246, 64
    %v3982 = vpop.permute.xlu0 %3981
    %3983 = vrot.lane.b32.xlu0 %v3247, 64
    %v3984 = vpop.permute.xlu0 %3983
    %3985 = vrot.lane.b32.xlu0 %v3248, 64
    %v3986 = vpop.permute.xlu0 %3985
    %3987 = vrot.lane.b32.xlu0 %v3249, 64
    %v3988 = vpop.permute.xlu0 %3987
    %3989 = vrot.lane.b32.xlu0 %v3250, 64
    %v3990 = vpop.permute.xlu0 %3989
    %3991 = vrot.lane.b32.xlu0 %v3251, 64
    %v3992 = vpop.permute.xlu0 %3991
    %3993 = vrot.lane.b32.xlu0 %v3252, 64
    %v3994 = vpop.permute.xlu0 %3993
    %3995 = vrot.lane.b32.xlu0 %v3253, 64
    %v3996 = vpop.permute.xlu0 %3995
    %3997 = vrot.lane.b32.xlu0 %v3254, 64
    %v3998 = vpop.permute.xlu0 %3997
    %3999 = vrot.lane.b32.xlu0 %v3255, 64
    %v4000 = vpop.permute.xlu0 %3999
    %4001 = vrot.lane.b32.xlu0 %v3256, 64
    %v4002 = vpop.permute.xlu0 %4001
    %4003 = vrot.lane.b32.xlu0 %v3257, 64
    %v4004 = vpop.permute.xlu0 %4003
    %4005 = vrot.lane.b32.xlu0 %v3258, 64
    %v4006 = vpop.permute.xlu0 %4005
    %4007 = vrot.lane.b32.xlu0 %v3259, 64
    %v4008 = vpop.permute.xlu0 %4007
    %4009 = vrot.lane.b32.xlu0 %v3260, 64
    %v4010 = vpop.permute.xlu0 %4009
    %4011 = vrot.lane.b32.xlu0 %v3261, 64
    %v4012 = vpop.permute.xlu0 %4011
    %4013 = vrot.lane.b32.xlu0 %v3262, 64
    %v4014 = vpop.permute.xlu0 %4013
    %4015 = vrot.lane.b32.xlu0 %v3263, 64
    %v4016 = vpop.permute.xlu0 %4015
    %4017 = vrot.lane.b32.xlu0 %v3264, 64
    %v4018 = vpop.permute.xlu0 %4017
    %4019 = vrot.lane.b32.xlu0 %v3265, 64
    %v4020 = vpop.permute.xlu0 %4019
    %4021 = vrot.lane.b32.xlu0 %v3266, 64
    %v4022 = vpop.permute.xlu0 %4021
    %4023 = vrot.lane.b32.xlu0 %v3267, 64
    %v4024 = vpop.permute.xlu0 %4023
    %4025 = vrot.lane.b32.xlu0 %v3268, 64
    %v4026 = vpop.permute.xlu0 %4025
    %4027 = vrot.lane.b32.xlu0 %v3269, 64
    %v4028 = vpop.permute.xlu0 %4027
    %4029 = vrot.lane.b32.xlu0 %v3270, 64
    %v4030 = vpop.permute.xlu0 %4029
    %4031 = vrot.lane.b32.xlu0 %v3271, 64
    %v4032 = vpop.permute.xlu0 %4031
    %4033 = vrot.lane.b32.xlu0 %v3272, 64
    %v4034 = vpop.permute.xlu0 %4033
    %4035 = vrot.lane.b32.xlu0 %v3273, 64
    %v4036 = vpop.permute.xlu0 %4035
    %4037 = vrot.lane.b32.xlu0 %v3274, 64
    %v4038 = vpop.permute.xlu0 %4037
    %4039 = vrot.lane.b32.xlu0 %v3275, 64
    %v4040 = vpop.permute.xlu0 %4039
    %4041 = vrot.lane.b32.xlu0 %v3276, 64
    %v4042 = vpop.permute.xlu0 %4041
    %4043 = vrot.lane.b32.xlu0 %v3277, 64
    %v4044 = vpop.permute.xlu0 %4043
    %4045 = vrot.lane.b32.xlu0 %v3278, 64
    %v4046 = vpop.permute.xlu0 %4045
    %v4303 = vadd.f32 %v3023, %v3536
    %v4304 = vadd.f32 %v3024, %v3538
    %v4305 = vadd.f32 %v3025, %v3540
    %v4306 = vadd.f32 %v3026, %v3542
    %v4307 = vadd.f32 %v3027, %v3544
    %v4308 = vadd.f32 %v3028, %v3546
    %v4309 = vadd.f32 %v3029, %v3548
    %v4310 = vadd.f32 %v3030, %v3550
    %v4311 = vadd.f32 %v3031, %v3552
    %v4312 = vadd.f32 %v3032, %v3554
    %v4313 = vadd.f32 %v3033, %v3556
    %v4314 = vadd.f32 %v3034, %v3558
    %v4315 = vadd.f32 %v3035, %v3560
    %v4316 = vadd.f32 %v3036, %v3562
    %v4317 = vadd.f32 %v3037, %v3564
    %v4318 = vadd.f32 %v3038, %v3566
    %v4319 = vadd.f32 %v3039, %v3568
    %v4320 = vadd.f32 %v3040, %v3570
    %v4321 = vadd.f32 %v3041, %v3572
    %v4322 = vadd.f32 %v3042, %v3574
    %v4323 = vadd.f32 %v3043, %v3576
    %v4324 = vadd.f32 %v3044, %v3578
    %v4325 = vadd.f32 %v3045, %v3580
    %v4326 = vadd.f32 %v3046, %v3582
    %v4327 = vadd.f32 %v3047, %v3584
    %v4328 = vadd.f32 %v3048, %v3586
    %v4329 = vadd.f32 %v3049, %v3588
    %v4330 = vadd.f32 %v3050, %v3590
    %v4331 = vadd.f32 %v3051, %v3592
    %v4332 = vadd.f32 %v3052, %v3594
    %v4333 = vadd.f32 %v3053, %v3596
    %v4334 = vadd.f32 %v3054, %v3598
    %v4335 = vadd.f32 %v3055, %v3600
    %v4336 = vadd.f32 %v3056, %v3602
    %v4337 = vadd.f32 %v3057, %v3604
    %v4338 = vadd.f32 %v3058, %v3606
    %v4339 = vadd.f32 %v3059, %v3608
    %v4340 = vadd.f32 %v3060, %v3610
    %v4341 = vadd.f32 %v3061, %v3612
    %v4342 = vadd.f32 %v3062, %v3614
    %v4343 = vadd.f32 %v3063, %v3616
    %v4344 = vadd.f32 %v3064, %v3618
    %v4345 = vadd.f32 %v3065, %v3620
    %v4346 = vadd.f32 %v3066, %v3622
    %v4347 = vadd.f32 %v3067, %v3624
    %v4348 = vadd.f32 %v3068, %v3626
    %v4349 = vadd.f32 %v3069, %v3628
    %v4350 = vadd.f32 %v3070, %v3630
    %v4351 = vadd.f32 %v3071, %v3632
    %v4352 = vadd.f32 %v3072, %v3634
    %v4353 = vadd.f32 %v3073, %v3636
    %v4354 = vadd.f32 %v3074, %v3638
    %v4355 = vadd.f32 %v3075, %v3640
    %v4356 = vadd.f32 %v3076, %v3642
    %v4357 = vadd.f32 %v3077, %v3644
    %v4358 = vadd.f32 %v3078, %v3646
    %v4359 = vadd.f32 %v3079, %v3648
    %v4360 = vadd.f32 %v3080, %v3650
    %v4361 = vadd.f32 %v3081, %v3652
    %v4362 = vadd.f32 %v3082, %v3654
    %v4363 = vadd.f32 %v3083, %v3656
    %v4364 = vadd.f32 %v3084, %v3658
    %v4365 = vadd.f32 %v3085, %v3660
    %v4366 = vadd.f32 %v3086, %v3662
    %v4367 = vadd.f32 %v3087, %v3664
    %v4368 = vadd.f32 %v3088, %v3666
    %v4369 = vadd.f32 %v3089, %v3668
    %v4370 = vadd.f32 %v3090, %v3670
    %v4371 = vadd.f32 %v3091, %v3672
    %v4372 = vadd.f32 %v3092, %v3674
    %v4373 = vadd.f32 %v3093, %v3676
    %v4374 = vadd.f32 %v3094, %v3678
    %v4375 = vadd.f32 %v3095, %v3680
    %v4376 = vadd.f32 %v3096, %v3682
    %v4377 = vadd.f32 %v3097, %v3684
    %v4378 = vadd.f32 %v3098, %v3686
    %v4379 = vadd.f32 %v3099, %v3688
    %v4380 = vadd.f32 %v3100, %v3690
    %v4381 = vadd.f32 %v3101, %v3692
    %v4382 = vadd.f32 %v3102, %v3694
    %v4383 = vadd.f32 %v3103, %v3696
    %v4384 = vadd.f32 %v3104, %v3698
    %v4385 = vadd.f32 %v3105, %v3700
    %v4386 = vadd.f32 %v3106, %v3702
    %v4387 = vadd.f32 %v3107, %v3704
    %v4388 = vadd.f32 %v3108, %v3706
    %v4389 = vadd.f32 %v3109, %v3708
    %v4390 = vadd.f32 %v3110, %v3710
    %v4391 = vadd.f32 %v3111, %v3712
    %v4392 = vadd.f32 %v3112, %v3714
    %v4393 = vadd.f32 %v3113, %v3716
    %v4394 = vadd.f32 %v3114, %v3718
    %v4395 = vadd.f32 %v3115, %v3720
    %v4396 = vadd.f32 %v3116, %v3722
    %v4397 = vadd.f32 %v3117, %v3724
    %v4398 = vadd.f32 %v3118, %v3726
    %v4399 = vadd.f32 %v3119, %v3728
    %v4400 = vadd.f32 %v3120, %v3730
    %v4401 = vadd.f32 %v3121, %v3732
    %v4402 = vadd.f32 %v3122, %v3734
    %v4403 = vadd.f32 %v3123, %v3736
    %v4404 = vadd.f32 %v3124, %v3738
    %v4405 = vadd.f32 %v3125, %v3740
    %v4406 = vadd.f32 %v3126, %v3742
    %v4407 = vadd.f32 %v3127, %v3744
    %v4408 = vadd.f32 %v3128, %v3746
    %v4409 = vadd.f32 %v3129, %v3748
    %v4410 = vadd.f32 %v3130, %v3750
    %v4411 = vadd.f32 %v3131, %v3752
    %v4412 = vadd.f32 %v3132, %v3754
    %v4413 = vadd.f32 %v3133, %v3756
    %v4414 = vadd.f32 %v3134, %v3758
    %v4415 = vadd.f32 %v3135, %v3760
    %v4416 = vadd.f32 %v3136, %v3762
    %v4417 = vadd.f32 %v3137, %v3764
    %v4418 = vadd.f32 %v3138, %v3766
    %v4419 = vadd.f32 %v3139, %v3768
    %v4420 = vadd.f32 %v3140, %v3770
    %v4421 = vadd.f32 %v3141, %v3772
    %v4422 = vadd.f32 %v3142, %v3774
    %v4423 = vadd.f32 %v3143, %v3776
    %v4424 = vadd.f32 %v3144, %v3778
    %v4425 = vadd.f32 %v3145, %v3780
    %v4426 = vadd.f32 %v3146, %v3782
    %v4427 = vadd.f32 %v3147, %v3784
    %v4428 = vadd.f32 %v3148, %v3786
    %v4429 = vadd.f32 %v3149, %v3788
    %v4430 = vadd.f32 %v3150, %v3790
    %v4431 = vadd.f32 %v3151, %v3792
    %v4432 = vadd.f32 %v3152, %v3794
    %v4433 = vadd.f32 %v3153, %v3796
    %v4434 = vadd.f32 %v3154, %v3798
    %v4435 = vadd.f32 %v3155, %v3800
    %v4436 = vadd.f32 %v3156, %v3802
    %v4437 = vadd.f32 %v3157, %v3804
    %v4438 = vadd.f32 %v3158, %v3806
    %v4439 = vadd.f32 %v3159, %v3808
    %v4440 = vadd.f32 %v3160, %v3810
    %v4441 = vadd.f32 %v3161, %v3812
    %v4442 = vadd.f32 %v3162, %v3814
    %v4443 = vadd.f32 %v3163, %v3816
    %v4444 = vadd.f32 %v3164, %v3818
    %v4445 = vadd.f32 %v3165, %v3820
    %v4446 = vadd.f32 %v3166, %v3822
    %v4447 = vadd.f32 %v3167, %v3824
    %v4448 = vadd.f32 %v3168, %v3826
    %v4449 = vadd.f32 %v3169, %v3828
    %v4450 = vadd.f32 %v3170, %v3830
    %v4451 = vadd.f32 %v3171, %v3832
    %v4452 = vadd.f32 %v3172, %v3834
    %v4453 = vadd.f32 %v3173, %v3836
    %v4454 = vadd.f32 %v3174, %v3838
    %v4455 = vadd.f32 %v3175, %v3840
    %v4456 = vadd.f32 %v3176, %v3842
    %v4457 = vadd.f32 %v3177, %v3844
    %v4458 = vadd.f32 %v3178, %v3846
    %v4459 = vadd.f32 %v3179, %v3848
    %v4460 = vadd.f32 %v3180, %v3850
    %v4461 = vadd.f32 %v3181, %v3852
    %v4462 = vadd.f32 %v3182, %v3854
    %v4463 = vadd.f32 %v3183, %v3856
    %v4464 = vadd.f32 %v3184, %v3858
    %v4465 = vadd.f32 %v3185, %v3860
    %v4466 = vadd.f32 %v3186, %v3862
    %v4467 = vadd.f32 %v3187, %v3864
    %v4468 = vadd.f32 %v3188, %v3866
    %v4469 = vadd.f32 %v3189, %v3868
    %v4470 = vadd.f32 %v3190, %v3870
    %v4471 = vadd.f32 %v3191, %v3872
    %v4472 = vadd.f32 %v3192, %v3874
    %v4473 = vadd.f32 %v3193, %v3876
    %v4474 = vadd.f32 %v3194, %v3878
    %v4475 = vadd.f32 %v3195, %v3880
    %v4476 = vadd.f32 %v3196, %v3882
    %v4477 = vadd.f32 %v3197, %v3884
    %v4478 = vadd.f32 %v3198, %v3886
    %v4479 = vadd.f32 %v3199, %v3888
    %v4480 = vadd.f32 %v3200, %v3890
    %v4481 = vadd.f32 %v3201, %v3892
    %v4482 = vadd.f32 %v3202, %v3894
    %v4483 = vadd.f32 %v3203, %v3896
    %v4484 = vadd.f32 %v3204, %v3898
    %v4485 = vadd.f32 %v3205, %v3900
    %v4486 = vadd.f32 %v3206, %v3902
    %v4487 = vadd.f32 %v3207, %v3904
    %v4488 = vadd.f32 %v3208, %v3906
    %v4489 = vadd.f32 %v3209, %v3908
    %v4490 = vadd.f32 %v3210, %v3910
    %v4491 = vadd.f32 %v3211, %v3912
    %v4492 = vadd.f32 %v3212, %v3914
    %v4493 = vadd.f32 %v3213, %v3916
    %v4494 = vadd.f32 %v3214, %v3918
    %v4495 = vadd.f32 %v3215, %v3920
    %v4496 = vadd.f32 %v3216, %v3922
    %v4497 = vadd.f32 %v3217, %v3924
    %v4498 = vadd.f32 %v3218, %v3926
    %v4499 = vadd.f32 %v3219, %v3928
    %v4500 = vadd.f32 %v3220, %v3930
    %v4501 = vadd.f32 %v3221, %v3932
    %v4502 = vadd.f32 %v3222, %v3934
    %v4503 = vadd.f32 %v3223, %v3936
    %v4504 = vadd.f32 %v3224, %v3938
    %v4505 = vadd.f32 %v3225, %v3940
    %v4506 = vadd.f32 %v3226, %v3942
    %v4507 = vadd.f32 %v3227, %v3944
    %v4508 = vadd.f32 %v3228, %v3946
    %v4509 = vadd.f32 %v3229, %v3948
    %v4510 = vadd.f32 %v3230, %v3950
    %v4511 = vadd.f32 %v3231, %v3952
    %v4512 = vadd.f32 %v3232, %v3954
    %v4513 = vadd.f32 %v3233, %v3956
    %v4514 = vadd.f32 %v3234, %v3958
    %v4515 = vadd.f32 %v3235, %v3960
    %v4516 = vadd.f32 %v3236, %v3962
    %v4517 = vadd.f32 %v3237, %v3964
    %v4518 = vadd.f32 %v3238, %v3966
    %v4519 = vadd.f32 %v3239, %v3968
    %v4520 = vadd.f32 %v3240, %v3970
    %v4521 = vadd.f32 %v3241, %v3972
    %v4522 = vadd.f32 %v3242, %v3974
    %v4523 = vadd.f32 %v3243, %v3976
    %v4524 = vadd.f32 %v3244, %v3978
    %v4525 = vadd.f32 %v3245, %v3980
    %v4526 = vadd.f32 %v3246, %v3982
    %v4527 = vadd.f32 %v3247, %v3984
    %v4528 = vadd.f32 %v3248, %v3986
    %v4529 = vadd.f32 %v3249, %v3988
    %v4530 = vadd.f32 %v3250, %v3990
    %v4531 = vadd.f32 %v3251, %v3992
    %v4532 = vadd.f32 %v3252, %v3994
    %v4533 = vadd.f32 %v3253, %v3996
    %v4534 = vadd.f32 %v3254, %v3998
    %v4535 = vadd.f32 %v3255, %v4000
    %v4536 = vadd.f32 %v3256, %v4002
    %v4537 = vadd.f32 %v3257, %v4004
    %v4538 = vadd.f32 %v3258, %v4006
    %v4539 = vadd.f32 %v3259, %v4008
    %v4540 = vadd.f32 %v3260, %v4010
    %v4541 = vadd.f32 %v3261, %v4012
    %v4542 = vadd.f32 %v3262, %v4014
    %v4543 = vadd.f32 %v3263, %v4016
    %v4544 = vadd.f32 %v3264, %v4018
    %v4545 = vadd.f32 %v3265, %v4020
    %v4546 = vadd.f32 %v3266, %v4022
    %v4547 = vadd.f32 %v3267, %v4024
    %v4548 = vadd.f32 %v3268, %v4026
    %v4549 = vadd.f32 %v3269, %v4028
    %v4550 = vadd.f32 %v3270, %v4030
    %v4551 = vadd.f32 %v3271, %v4032
    %v4552 = vadd.f32 %v3272, %v4034
    %v4553 = vadd.f32 %v3273, %v4036
    %v4554 = vadd.f32 %v3274, %v4038
    %v4555 = vadd.f32 %v3275, %v4040
    %v4556 = vadd.f32 %v3276, %v4042
    %v4557 = vadd.f32 %v3277, %v4044
    %v4558 = vadd.f32 %v3278, %v4046
    %v4559 = vrsqrt.pop %v4303
    %v4560 = vmul.f32 %v4303, %v4559
    %vm4561 = vcmp.eq.f32.partialorder %v4303, inf
    %v4562 = vsel %vm4561, %v4303, %v4560
    %vm4563 = vcmp.eq.f32.partialorder %v4303, 0.0
    %v4564 = vand.u32 %v4303, 2147483648
    %v4565 = vsel %vm4563, %v4564, %v4562
    %v4566 = vrsqrt.pop %v4304
    %v4567 = vmul.f32 %v4304, %v4566
    %vm4568 = vcmp.eq.f32.partialorder %v4304, inf
    %v4569 = vsel %vm4568, %v4304, %v4567
    %vm4570 = vcmp.eq.f32.partialorder %v4304, 0.0
    %v4571 = vand.u32 %v4304, 2147483648
    %v4572 = vsel %vm4570, %v4571, %v4569
    %v4573 = vrsqrt.pop %v4305
    %v4574 = vmul.f32 %v4305, %v4573
    %vm4575 = vcmp.eq.f32.partialorder %v4305, inf
    %v4576 = vsel %vm4575, %v4305, %v4574
    %vm4577 = vcmp.eq.f32.partialorder %v4305, 0.0
    %v4578 = vand.u32 %v4305, 2147483648
    %v4579 = vsel %vm4577, %v4578, %v4576
    %v4580 = vrsqrt.pop %v4306
    %v4581 = vmul.f32 %v4306, %v4580
    %vm4582 = vcmp.eq.f32.partialorder %v4306, inf
    %v4583 = vsel %vm4582, %v4306, %v4581
    %vm4584 = vcmp.eq.f32.partialorder %v4306, 0.0
    %v4585 = vand.u32 %v4306, 2147483648
    %v4586 = vsel %vm4584, %v4585, %v4583
    %v4587 = vrsqrt.pop %v4307
    %v4588 = vmul.f32 %v4307, %v4587
    %vm4589 = vcmp.eq.f32.partialorder %v4307, inf
    %v4590 = vsel %vm4589, %v4307, %v4588
    %vm4591 = vcmp.eq.f32.partialorder %v4307, 0.0
    %v4592 = vand.u32 %v4307, 2147483648
    %v4593 = vsel %vm4591, %v4592, %v4590
    %v4594 = vrsqrt.pop %v4308
    %v4595 = vmul.f32 %v4308, %v4594
    %vm4596 = vcmp.eq.f32.partialorder %v4308, inf
    %v4597 = vsel %vm4596, %v4308, %v4595
    %vm4598 = vcmp.eq.f32.partialorder %v4308, 0.0
    %v4599 = vand.u32 %v4308, 2147483648
    %v4600 = vsel %vm4598, %v4599, %v4597
    %v4601 = vrsqrt.pop %v4309
    %v4602 = vmul.f32 %v4309, %v4601
    %vm4603 = vcmp.eq.f32.partialorder %v4309, inf
    %v4604 = vsel %vm4603, %v4309, %v4602
    %vm4605 = vcmp.eq.f32.partialorder %v4309, 0.0
    %v4606 = vand.u32 %v4309, 2147483648
    %v4607 = vsel %vm4605, %v4606, %v4604
    %v4608 = vrsqrt.pop %v4310
    %v4609 = vmul.f32 %v4310, %v4608
    %vm4610 = vcmp.eq.f32.partialorder %v4310, inf
    %v4611 = vsel %vm4610, %v4310, %v4609
    %vm4612 = vcmp.eq.f32.partialorder %v4310, 0.0
    %v4613 = vand.u32 %v4310, 2147483648
    %v4614 = vsel %vm4612, %v4613, %v4611
    %v4615 = vrsqrt.pop %v4311
    %v4616 = vmul.f32 %v4311, %v4615
    %vm4617 = vcmp.eq.f32.partialorder %v4311, inf
    %v4618 = vsel %vm4617, %v4311, %v4616
    %vm4619 = vcmp.eq.f32.partialorder %v4311, 0.0
    %v4620 = vand.u32 %v4311, 2147483648
    %v4621 = vsel %vm4619, %v4620, %v4618
    %v4622 = vrsqrt.pop %v4312
    %v4623 = vmul.f32 %v4312, %v4622
    %vm4624 = vcmp.eq.f32.partialorder %v4312, inf
    %v4625 = vsel %vm4624, %v4312, %v4623
    %vm4626 = vcmp.eq.f32.partialorder %v4312, 0.0
    %v4627 = vand.u32 %v4312, 2147483648
    %v4628 = vsel %vm4626, %v4627, %v4625
    %v4629 = vrsqrt.pop %v4313
    %v4630 = vmul.f32 %v4313, %v4629
    %vm4631 = vcmp.eq.f32.partialorder %v4313, inf
    %v4632 = vsel %vm4631, %v4313, %v4630
    %vm4633 = vcmp.eq.f32.partialorder %v4313, 0.0
    %v4634 = vand.u32 %v4313, 2147483648
    %v4635 = vsel %vm4633, %v4634, %v4632
    %v4636 = vrsqrt.pop %v4314
    %v4637 = vmul.f32 %v4314, %v4636
    %vm4638 = vcmp.eq.f32.partialorder %v4314, inf
    %v4639 = vsel %vm4638, %v4314, %v4637
    %vm4640 = vcmp.eq.f32.partialorder %v4314, 0.0
    %v4641 = vand.u32 %v4314, 2147483648
    %v4642 = vsel %vm4640, %v4641, %v4639
    %v4643 = vrsqrt.pop %v4315
    %v4644 = vmul.f32 %v4315, %v4643
    %vm4645 = vcmp.eq.f32.partialorder %v4315, inf
    %v4646 = vsel %vm4645, %v4315, %v4644
    %vm4647 = vcmp.eq.f32.partialorder %v4315, 0.0
    %v4648 = vand.u32 %v4315, 2147483648
    %v4649 = vsel %vm4647, %v4648, %v4646
    %v4650 = vrsqrt.pop %v4316
    %v4651 = vmul.f32 %v4316, %v4650
    %vm4652 = vcmp.eq.f32.partialorder %v4316, inf
    %v4653 = vsel %vm4652, %v4316, %v4651
    %vm4654 = vcmp.eq.f32.partialorder %v4316, 0.0
    %v4655 = vand.u32 %v4316, 2147483648
    %v4656 = vsel %vm4654, %v4655, %v4653
    %v4657 = vrsqrt.pop %v4317
    %v4658 = vmul.f32 %v4317, %v4657
    %vm4659 = vcmp.eq.f32.partialorder %v4317, inf
    %v4660 = vsel %vm4659, %v4317, %v4658
    %vm4661 = vcmp.eq.f32.partialorder %v4317, 0.0
    %v4662 = vand.u32 %v4317, 2147483648
    %v4663 = vsel %vm4661, %v4662, %v4660
    %v4664 = vrsqrt.pop %v4318
    %v4665 = vmul.f32 %v4318, %v4664
    %vm4666 = vcmp.eq.f32.partialorder %v4318, inf
    %v4667 = vsel %vm4666, %v4318, %v4665
    %vm4668 = vcmp.eq.f32.partialorder %v4318, 0.0
    %v4669 = vand.u32 %v4318, 2147483648
    %v4670 = vsel %vm4668, %v4669, %v4667
    %v4671 = vrsqrt.pop %v4319
    %v4672 = vmul.f32 %v4319, %v4671
    %vm4673 = vcmp.eq.f32.partialorder %v4319, inf
    %v4674 = vsel %vm4673, %v4319, %v4672
    %vm4675 = vcmp.eq.f32.partialorder %v4319, 0.0
    %v4676 = vand.u32 %v4319, 2147483648
    %v4677 = vsel %vm4675, %v4676, %v4674
    %v4678 = vrsqrt.pop %v4320
    %v4679 = vmul.f32 %v4320, %v4678
    %vm4680 = vcmp.eq.f32.partialorder %v4320, inf
    %v4681 = vsel %vm4680, %v4320, %v4679
    %vm4682 = vcmp.eq.f32.partialorder %v4320, 0.0
    %v4683 = vand.u32 %v4320, 2147483648
    %v4684 = vsel %vm4682, %v4683, %v4681
    %v4685 = vrsqrt.pop %v4321
    %v4686 = vmul.f32 %v4321, %v4685
    %vm4687 = vcmp.eq.f32.partialorder %v4321, inf
    %v4688 = vsel %vm4687, %v4321, %v4686
    %vm4689 = vcmp.eq.f32.partialorder %v4321, 0.0
    %v4690 = vand.u32 %v4321, 2147483648
    %v4691 = vsel %vm4689, %v4690, %v4688
    %v4692 = vrsqrt.pop %v4322
    %v4693 = vmul.f32 %v4322, %v4692
    %vm4694 = vcmp.eq.f32.partialorder %v4322, inf
    %v4695 = vsel %vm4694, %v4322, %v4693
    %vm4696 = vcmp.eq.f32.partialorder %v4322, 0.0
    %v4697 = vand.u32 %v4322, 2147483648
    %v4698 = vsel %vm4696, %v4697, %v4695
    %v4699 = vrsqrt.pop %v4323
    %v4700 = vmul.f32 %v4323, %v4699
    %vm4701 = vcmp.eq.f32.partialorder %v4323, inf
    %v4702 = vsel %vm4701, %v4323, %v4700
    %vm4703 = vcmp.eq.f32.partialorder %v4323, 0.0
    %v4704 = vand.u32 %v4323, 2147483648
    %v4705 = vsel %vm4703, %v4704, %v4702
    %v4706 = vrsqrt.pop %v4324
    %v4707 = vmul.f32 %v4324, %v4706
    %vm4708 = vcmp.eq.f32.partialorder %v4324, inf
    %v4709 = vsel %vm4708, %v4324, %v4707
    %vm4710 = vcmp.eq.f32.partialorder %v4324, 0.0
    %v4711 = vand.u32 %v4324, 2147483648
    %v4712 = vsel %vm4710, %v4711, %v4709
    %v4713 = vrsqrt.pop %v4325
    %v4714 = vmul.f32 %v4325, %v4713
    %vm4715 = vcmp.eq.f32.partialorder %v4325, inf
    %v4716 = vsel %vm4715, %v4325, %v4714
    %vm4717 = vcmp.eq.f32.partialorder %v4325, 0.0
    %v4718 = vand.u32 %v4325, 2147483648
    %v4719 = vsel %vm4717, %v4718, %v4716
    %v4720 = vrsqrt.pop %v4326
    %v4721 = vmul.f32 %v4326, %v4720
    %vm4722 = vcmp.eq.f32.partialorder %v4326, inf
    %v4723 = vsel %vm4722, %v4326, %v4721
    %vm4724 = vcmp.eq.f32.partialorder %v4326, 0.0
    %v4725 = vand.u32 %v4326, 2147483648
    %v4726 = vsel %vm4724, %v4725, %v4723
    %v4727 = vrsqrt.pop %v4327
    %v4728 = vmul.f32 %v4327, %v4727
    %vm4729 = vcmp.eq.f32.partialorder %v4327, inf
    %v4730 = vsel %vm4729, %v4327, %v4728
    %vm4731 = vcmp.eq.f32.partialorder %v4327, 0.0
    %v4732 = vand.u32 %v4327, 2147483648
    %v4733 = vsel %vm4731, %v4732, %v4730
    %v4734 = vrsqrt.pop %v4328
    %v4735 = vmul.f32 %v4328, %v4734
    %vm4736 = vcmp.eq.f32.partialorder %v4328, inf
    %v4737 = vsel %vm4736, %v4328, %v4735
    %vm4738 = vcmp.eq.f32.partialorder %v4328, 0.0
    %v4739 = vand.u32 %v4328, 2147483648
    %v4740 = vsel %vm4738, %v4739, %v4737
    %v4741 = vrsqrt.pop %v4329
    %v4742 = vmul.f32 %v4329, %v4741
    %vm4743 = vcmp.eq.f32.partialorder %v4329, inf
    %v4744 = vsel %vm4743, %v4329, %v4742
    %vm4745 = vcmp.eq.f32.partialorder %v4329, 0.0
    %v4746 = vand.u32 %v4329, 2147483648
    %v4747 = vsel %vm4745, %v4746, %v4744
    %v4748 = vrsqrt.pop %v4330
    %v4749 = vmul.f32 %v4330, %v4748
    %vm4750 = vcmp.eq.f32.partialorder %v4330, inf
    %v4751 = vsel %vm4750, %v4330, %v4749
    %vm4752 = vcmp.eq.f32.partialorder %v4330, 0.0
    %v4753 = vand.u32 %v4330, 2147483648
    %v4754 = vsel %vm4752, %v4753, %v4751
    %v4755 = vrsqrt.pop %v4331
    %v4756 = vmul.f32 %v4331, %v4755
    %vm4757 = vcmp.eq.f32.partialorder %v4331, inf
    %v4758 = vsel %vm4757, %v4331, %v4756
    %vm4759 = vcmp.eq.f32.partialorder %v4331, 0.0
    %v4760 = vand.u32 %v4331, 2147483648
    %v4761 = vsel %vm4759, %v4760, %v4758
    %v4762 = vrsqrt.pop %v4332
    %v4763 = vmul.f32 %v4332, %v4762
    %vm4764 = vcmp.eq.f32.partialorder %v4332, inf
    %v4765 = vsel %vm4764, %v4332, %v4763
    %vm4766 = vcmp.eq.f32.partialorder %v4332, 0.0
    %v4767 = vand.u32 %v4332, 2147483648
    %v4768 = vsel %vm4766, %v4767, %v4765
    %v4769 = vrsqrt.pop %v4333
    %v4770 = vmul.f32 %v4333, %v4769
    %vm4771 = vcmp.eq.f32.partialorder %v4333, inf
    %v4772 = vsel %vm4771, %v4333, %v4770
    %vm4773 = vcmp.eq.f32.partialorder %v4333, 0.0
    %v4774 = vand.u32 %v4333, 2147483648
    %v4775 = vsel %vm4773, %v4774, %v4772
    %v4776 = vrsqrt.pop %v4334
    %v4777 = vmul.f32 %v4334, %v4776
    %vm4778 = vcmp.eq.f32.partialorder %v4334, inf
    %v4779 = vsel %vm4778, %v4334, %v4777
    %vm4780 = vcmp.eq.f32.partialorder %v4334, 0.0
    %v4781 = vand.u32 %v4334, 2147483648
    %v4782 = vsel %vm4780, %v4781, %v4779
    %v4783 = vrsqrt.pop %v4335
    %v4784 = vmul.f32 %v4335, %v4783
    %vm4785 = vcmp.eq.f32.partialorder %v4335, inf
    %v4786 = vsel %vm4785, %v4335, %v4784
    %vm4787 = vcmp.eq.f32.partialorder %v4335, 0.0
    %v4788 = vand.u32 %v4335, 2147483648
    %v4789 = vsel %vm4787, %v4788, %v4786
    %v4790 = vrsqrt.pop %v4336
    %v4791 = vmul.f32 %v4336, %v4790
    %vm4792 = vcmp.eq.f32.partialorder %v4336, inf
    %v4793 = vsel %vm4792, %v4336, %v4791
    %vm4794 = vcmp.eq.f32.partialorder %v4336, 0.0
    %v4795 = vand.u32 %v4336, 2147483648
    %v4796 = vsel %vm4794, %v4795, %v4793
    %v4797 = vrsqrt.pop %v4337
    %v4798 = vmul.f32 %v4337, %v4797
    %vm4799 = vcmp.eq.f32.partialorder %v4337, inf
    %v4800 = vsel %vm4799, %v4337, %v4798
    %vm4801 = vcmp.eq.f32.partialorder %v4337, 0.0
    %v4802 = vand.u32 %v4337, 2147483648
    %v4803 = vsel %vm4801, %v4802, %v4800
    %v4804 = vrsqrt.pop %v4338
    %v4805 = vmul.f32 %v4338, %v4804
    %vm4806 = vcmp.eq.f32.partialorder %v4338, inf
    %v4807 = vsel %vm4806, %v4338, %v4805
    %vm4808 = vcmp.eq.f32.partialorder %v4338, 0.0
    %v4809 = vand.u32 %v4338, 2147483648
    %v4810 = vsel %vm4808, %v4809, %v4807
    %v4811 = vrsqrt.pop %v4339
    %v4812 = vmul.f32 %v4339, %v4811
    %vm4813 = vcmp.eq.f32.partialorder %v4339, inf
    %v4814 = vsel %vm4813, %v4339, %v4812
    %vm4815 = vcmp.eq.f32.partialorder %v4339, 0.0
    %v4816 = vand.u32 %v4339, 2147483648
    %v4817 = vsel %vm4815, %v4816, %v4814
    %v4818 = vrsqrt.pop %v4340
    %v4819 = vmul.f32 %v4340, %v4818
    %vm4820 = vcmp.eq.f32.partialorder %v4340, inf
    %v4821 = vsel %vm4820, %v4340, %v4819
    %vm4822 = vcmp.eq.f32.partialorder %v4340, 0.0
    %v4823 = vand.u32 %v4340, 2147483648
    %v4824 = vsel %vm4822, %v4823, %v4821
    %v4825 = vrsqrt.pop %v4341
    %v4826 = vmul.f32 %v4341, %v4825
    %vm4827 = vcmp.eq.f32.partialorder %v4341, inf
    %v4828 = vsel %vm4827, %v4341, %v4826
    %vm4829 = vcmp.eq.f32.partialorder %v4341, 0.0
    %v4830 = vand.u32 %v4341, 2147483648
    %v4831 = vsel %vm4829, %v4830, %v4828
    %v4832 = vrsqrt.pop %v4342
    %v4833 = vmul.f32 %v4342, %v4832
    %vm4834 = vcmp.eq.f32.partialorder %v4342, inf
    %v4835 = vsel %vm4834, %v4342, %v4833
    %vm4836 = vcmp.eq.f32.partialorder %v4342, 0.0
    %v4837 = vand.u32 %v4342, 2147483648
    %v4838 = vsel %vm4836, %v4837, %v4835
    %v4839 = vrsqrt.pop %v4343
    %v4840 = vmul.f32 %v4343, %v4839
    %vm4841 = vcmp.eq.f32.partialorder %v4343, inf
    %v4842 = vsel %vm4841, %v4343, %v4840
    %vm4843 = vcmp.eq.f32.partialorder %v4343, 0.0
    %v4844 = vand.u32 %v4343, 2147483648
    %v4845 = vsel %vm4843, %v4844, %v4842
    %v4846 = vrsqrt.pop %v4344
    %v4847 = vmul.f32 %v4344, %v4846
    %vm4848 = vcmp.eq.f32.partialorder %v4344, inf
    %v4849 = vsel %vm4848, %v4344, %v4847
    %vm4850 = vcmp.eq.f32.partialorder %v4344, 0.0
    %v4851 = vand.u32 %v4344, 2147483648
    %v4852 = vsel %vm4850, %v4851, %v4849
    %v4853 = vrsqrt.pop %v4345
    %v4854 = vmul.f32 %v4345, %v4853
    %vm4855 = vcmp.eq.f32.partialorder %v4345, inf
    %v4856 = vsel %vm4855, %v4345, %v4854
    %vm4857 = vcmp.eq.f32.partialorder %v4345, 0.0
    %v4858 = vand.u32 %v4345, 2147483648
    %v4859 = vsel %vm4857, %v4858, %v4856
    %v4860 = vrsqrt.pop %v4346
    %v4861 = vmul.f32 %v4346, %v4860
    %vm4862 = vcmp.eq.f32.partialorder %v4346, inf
    %v4863 = vsel %vm4862, %v4346, %v4861
    %vm4864 = vcmp.eq.f32.partialorder %v4346, 0.0
    %v4865 = vand.u32 %v4346, 2147483648
    %v4866 = vsel %vm4864, %v4865, %v4863
    %v4867 = vrsqrt.pop %v4347
    %v4868 = vmul.f32 %v4347, %v4867
    %vm4869 = vcmp.eq.f32.partialorder %v4347, inf
    %v4870 = vsel %vm4869, %v4347, %v4868
    %vm4871 = vcmp.eq.f32.partialorder %v4347, 0.0
    %v4872 = vand.u32 %v4347, 2147483648
    %v4873 = vsel %vm4871, %v4872, %v4870
    %v4874 = vrsqrt.pop %v4348
    %v4875 = vmul.f32 %v4348, %v4874
    %vm4876 = vcmp.eq.f32.partialorder %v4348, inf
    %v4877 = vsel %vm4876, %v4348, %v4875
    %vm4878 = vcmp.eq.f32.partialorder %v4348, 0.0
    %v4879 = vand.u32 %v4348, 2147483648
    %v4880 = vsel %vm4878, %v4879, %v4877
    %v4881 = vrsqrt.pop %v4349
    %v4882 = vmul.f32 %v4349, %v4881
    %vm4883 = vcmp.eq.f32.partialorder %v4349, inf
    %v4884 = vsel %vm4883, %v4349, %v4882
    %vm4885 = vcmp.eq.f32.partialorder %v4349, 0.0
    %v4886 = vand.u32 %v4349, 2147483648
    %v4887 = vsel %vm4885, %v4886, %v4884
    %v4888 = vrsqrt.pop %v4350
    %v4889 = vmul.f32 %v4350, %v4888
    %vm4890 = vcmp.eq.f32.partialorder %v4350, inf
    %v4891 = vsel %vm4890, %v4350, %v4889
    %vm4892 = vcmp.eq.f32.partialorder %v4350, 0.0
    %v4893 = vand.u32 %v4350, 2147483648
    %v4894 = vsel %vm4892, %v4893, %v4891
    %v4895 = vrsqrt.pop %v4351
    %v4896 = vmul.f32 %v4351, %v4895
    %vm4897 = vcmp.eq.f32.partialorder %v4351, inf
    %v4898 = vsel %vm4897, %v4351, %v4896
    %vm4899 = vcmp.eq.f32.partialorder %v4351, 0.0
    %v4900 = vand.u32 %v4351, 2147483648
    %v4901 = vsel %vm4899, %v4900, %v4898
    %v4902 = vrsqrt.pop %v4352
    %v4903 = vmul.f32 %v4352, %v4902
    %vm4904 = vcmp.eq.f32.partialorder %v4352, inf
    %v4905 = vsel %vm4904, %v4352, %v4903
    %vm4906 = vcmp.eq.f32.partialorder %v4352, 0.0
    %v4907 = vand.u32 %v4352, 2147483648
    %v4908 = vsel %vm4906, %v4907, %v4905
    %v4909 = vrsqrt.pop %v4353
    %v4910 = vmul.f32 %v4353, %v4909
    %vm4911 = vcmp.eq.f32.partialorder %v4353, inf
    %v4912 = vsel %vm4911, %v4353, %v4910
    %vm4913 = vcmp.eq.f32.partialorder %v4353, 0.0
    %v4914 = vand.u32 %v4353, 2147483648
    %v4915 = vsel %vm4913, %v4914, %v4912
    %v4916 = vrsqrt.pop %v4354
    %v4917 = vmul.f32 %v4354, %v4916
    %vm4918 = vcmp.eq.f32.partialorder %v4354, inf
    %v4919 = vsel %vm4918, %v4354, %v4917
    %vm4920 = vcmp.eq.f32.partialorder %v4354, 0.0
    %v4921 = vand.u32 %v4354, 2147483648
    %v4922 = vsel %vm4920, %v4921, %v4919
    %v4923 = vrsqrt.pop %v4355
    %v4924 = vmul.f32 %v4355, %v4923
    %vm4925 = vcmp.eq.f32.partialorder %v4355, inf
    %v4926 = vsel %vm4925, %v4355, %v4924
    %vm4927 = vcmp.eq.f32.partialorder %v4355, 0.0
    %v4928 = vand.u32 %v4355, 2147483648
    %v4929 = vsel %vm4927, %v4928, %v4926
    %v4930 = vrsqrt.pop %v4356
    %v4931 = vmul.f32 %v4356, %v4930
    %vm4932 = vcmp.eq.f32.partialorder %v4356, inf
    %v4933 = vsel %vm4932, %v4356, %v4931
    %vm4934 = vcmp.eq.f32.partialorder %v4356, 0.0
    %v4935 = vand.u32 %v4356, 2147483648
    %v4936 = vsel %vm4934, %v4935, %v4933
    %v4937 = vrsqrt.pop %v4357
    %v4938 = vmul.f32 %v4357, %v4937
    %vm4939 = vcmp.eq.f32.partialorder %v4357, inf
    %v4940 = vsel %vm4939, %v4357, %v4938
    %vm4941 = vcmp.eq.f32.partialorder %v4357, 0.0
    %v4942 = vand.u32 %v4357, 2147483648
    %v4943 = vsel %vm4941, %v4942, %v4940
    %v4944 = vrsqrt.pop %v4358
    %v4945 = vmul.f32 %v4358, %v4944
    %vm4946 = vcmp.eq.f32.partialorder %v4358, inf
    %v4947 = vsel %vm4946, %v4358, %v4945
    %vm4948 = vcmp.eq.f32.partialorder %v4358, 0.0
    %v4949 = vand.u32 %v4358, 2147483648
    %v4950 = vsel %vm4948, %v4949, %v4947
    %v4951 = vrsqrt.pop %v4359
    %v4952 = vmul.f32 %v4359, %v4951
    %vm4953 = vcmp.eq.f32.partialorder %v4359, inf
    %v4954 = vsel %vm4953, %v4359, %v4952
    %vm4955 = vcmp.eq.f32.partialorder %v4359, 0.0
    %v4956 = vand.u32 %v4359, 2147483648
    %v4957 = vsel %vm4955, %v4956, %v4954
    %v4958 = vrsqrt.pop %v4360
    %v4959 = vmul.f32 %v4360, %v4958
    %vm4960 = vcmp.eq.f32.partialorder %v4360, inf
    %v4961 = vsel %vm4960, %v4360, %v4959
    %vm4962 = vcmp.eq.f32.partialorder %v4360, 0.0
    %v4963 = vand.u32 %v4360, 2147483648
    %v4964 = vsel %vm4962, %v4963, %v4961
    %v4965 = vrsqrt.pop %v4361
    %v4966 = vmul.f32 %v4361, %v4965
    %vm4967 = vcmp.eq.f32.partialorder %v4361, inf
    %v4968 = vsel %vm4967, %v4361, %v4966
    %vm4969 = vcmp.eq.f32.partialorder %v4361, 0.0
    %v4970 = vand.u32 %v4361, 2147483648
    %v4971 = vsel %vm4969, %v4970, %v4968
    %v4972 = vrsqrt.pop %v4362
    %v4973 = vmul.f32 %v4362, %v4972
    %vm4974 = vcmp.eq.f32.partialorder %v4362, inf
    %v4975 = vsel %vm4974, %v4362, %v4973
    %vm4976 = vcmp.eq.f32.partialorder %v4362, 0.0
    %v4977 = vand.u32 %v4362, 2147483648
    %v4978 = vsel %vm4976, %v4977, %v4975
    %v4979 = vrsqrt.pop %v4363
    %v4980 = vmul.f32 %v4363, %v4979
    %vm4981 = vcmp.eq.f32.partialorder %v4363, inf
    %v4982 = vsel %vm4981, %v4363, %v4980
    %vm4983 = vcmp.eq.f32.partialorder %v4363, 0.0
    %v4984 = vand.u32 %v4363, 2147483648
    %v4985 = vsel %vm4983, %v4984, %v4982
    %v4986 = vrsqrt.pop %v4364
    %v4987 = vmul.f32 %v4364, %v4986
    %vm4988 = vcmp.eq.f32.partialorder %v4364, inf
    %v4989 = vsel %vm4988, %v4364, %v4987
    %vm4990 = vcmp.eq.f32.partialorder %v4364, 0.0
    %v4991 = vand.u32 %v4364, 2147483648
    %v4992 = vsel %vm4990, %v4991, %v4989
    %v4993 = vrsqrt.pop %v4365
    %v4994 = vmul.f32 %v4365, %v4993
    %vm4995 = vcmp.eq.f32.partialorder %v4365, inf
    %v4996 = vsel %vm4995, %v4365, %v4994
    %vm4997 = vcmp.eq.f32.partialorder %v4365, 0.0
    %v4998 = vand.u32 %v4365, 2147483648
    %v4999 = vsel %vm4997, %v4998, %v4996
    %v5000 = vrsqrt.pop %v4366
    %v5001 = vmul.f32 %v4366, %v5000
    %vm5002 = vcmp.eq.f32.partialorder %v4366, inf
    %v5003 = vsel %vm5002, %v4366, %v5001
    %vm5004 = vcmp.eq.f32.partialorder %v4366, 0.0
    %v5005 = vand.u32 %v4366, 2147483648
    %v5006 = vsel %vm5004, %v5005, %v5003
    %v5007 = vrsqrt.pop %v4367
    %v5008 = vmul.f32 %v4367, %v5007
    %vm5009 = vcmp.eq.f32.partialorder %v4367, inf
    %v5010 = vsel %vm5009, %v4367, %v5008
    %vm5011 = vcmp.eq.f32.partialorder %v4367, 0.0
    %v5012 = vand.u32 %v4367, 2147483648
    %v5013 = vsel %vm5011, %v5012, %v5010
    %v5014 = vrsqrt.pop %v4368
    %v5015 = vmul.f32 %v4368, %v5014
    %vm5016 = vcmp.eq.f32.partialorder %v4368, inf
    %v5017 = vsel %vm5016, %v4368, %v5015
    %vm5018 = vcmp.eq.f32.partialorder %v4368, 0.0
    %v5019 = vand.u32 %v4368, 2147483648
    %v5020 = vsel %vm5018, %v5019, %v5017
    %v5021 = vrsqrt.pop %v4369
    %v5022 = vmul.f32 %v4369, %v5021
    %vm5023 = vcmp.eq.f32.partialorder %v4369, inf
    %v5024 = vsel %vm5023, %v4369, %v5022
    %vm5025 = vcmp.eq.f32.partialorder %v4369, 0.0
    %v5026 = vand.u32 %v4369, 2147483648
    %v5027 = vsel %vm5025, %v5026, %v5024
    %v5028 = vrsqrt.pop %v4370
    %v5029 = vmul.f32 %v4370, %v5028
    %vm5030 = vcmp.eq.f32.partialorder %v4370, inf
    %v5031 = vsel %vm5030, %v4370, %v5029
    %vm5032 = vcmp.eq.f32.partialorder %v4370, 0.0
    %v5033 = vand.u32 %v4370, 2147483648
    %v5034 = vsel %vm5032, %v5033, %v5031
    %v5035 = vrsqrt.pop %v4371
    %v5036 = vmul.f32 %v4371, %v5035
    %vm5037 = vcmp.eq.f32.partialorder %v4371, inf
    %v5038 = vsel %vm5037, %v4371, %v5036
    %vm5039 = vcmp.eq.f32.partialorder %v4371, 0.0
    %v5040 = vand.u32 %v4371, 2147483648
    %v5041 = vsel %vm5039, %v5040, %v5038
    %v5042 = vrsqrt.pop %v4372
    %v5043 = vmul.f32 %v4372, %v5042
    %vm5044 = vcmp.eq.f32.partialorder %v4372, inf
    %v5045 = vsel %vm5044, %v4372, %v5043
    %vm5046 = vcmp.eq.f32.partialorder %v4372, 0.0
    %v5047 = vand.u32 %v4372, 2147483648
    %v5048 = vsel %vm5046, %v5047, %v5045
    %v5049 = vrsqrt.pop %v4373
    %v5050 = vmul.f32 %v4373, %v5049
    %vm5051 = vcmp.eq.f32.partialorder %v4373, inf
    %v5052 = vsel %vm5051, %v4373, %v5050
    %vm5053 = vcmp.eq.f32.partialorder %v4373, 0.0
    %v5054 = vand.u32 %v4373, 2147483648
    %v5055 = vsel %vm5053, %v5054, %v5052
    %v5056 = vrsqrt.pop %v4374
    %v5057 = vmul.f32 %v4374, %v5056
    %vm5058 = vcmp.eq.f32.partialorder %v4374, inf
    %v5059 = vsel %vm5058, %v4374, %v5057
    %vm5060 = vcmp.eq.f32.partialorder %v4374, 0.0
    %v5061 = vand.u32 %v4374, 2147483648
    %v5062 = vsel %vm5060, %v5061, %v5059
    %v5063 = vrsqrt.pop %v4375
    %v5064 = vmul.f32 %v4375, %v5063
    %vm5065 = vcmp.eq.f32.partialorder %v4375, inf
    %v5066 = vsel %vm5065, %v4375, %v5064
    %vm5067 = vcmp.eq.f32.partialorder %v4375, 0.0
    %v5068 = vand.u32 %v4375, 2147483648
    %v5069 = vsel %vm5067, %v5068, %v5066
    %v5070 = vrsqrt.pop %v4376
    %v5071 = vmul.f32 %v4376, %v5070
    %vm5072 = vcmp.eq.f32.partialorder %v4376, inf
    %v5073 = vsel %vm5072, %v4376, %v5071
    %vm5074 = vcmp.eq.f32.partialorder %v4376, 0.0
    %v5075 = vand.u32 %v4376, 2147483648
    %v5076 = vsel %vm5074, %v5075, %v5073
    %v5077 = vrsqrt.pop %v4377
    %v5078 = vmul.f32 %v4377, %v5077
    %vm5079 = vcmp.eq.f32.partialorder %v4377, inf
    %v5080 = vsel %vm5079, %v4377, %v5078
    %vm5081 = vcmp.eq.f32.partialorder %v4377, 0.0
    %v5082 = vand.u32 %v4377, 2147483648
    %v5083 = vsel %vm5081, %v5082, %v5080
    %v5084 = vrsqrt.pop %v4378
    %v5085 = vmul.f32 %v4378, %v5084
    %vm5086 = vcmp.eq.f32.partialorder %v4378, inf
    %v5087 = vsel %vm5086, %v4378, %v5085
    %vm5088 = vcmp.eq.f32.partialorder %v4378, 0.0
    %v5089 = vand.u32 %v4378, 2147483648
    %v5090 = vsel %vm5088, %v5089, %v5087
    %v5091 = vrsqrt.pop %v4379
    %v5092 = vmul.f32 %v4379, %v5091
    %vm5093 = vcmp.eq.f32.partialorder %v4379, inf
    %v5094 = vsel %vm5093, %v4379, %v5092
    %vm5095 = vcmp.eq.f32.partialorder %v4379, 0.0
    %v5096 = vand.u32 %v4379, 2147483648
    %v5097 = vsel %vm5095, %v5096, %v5094
    %v5098 = vrsqrt.pop %v4380
    %v5099 = vmul.f32 %v4380, %v5098
    %vm5100 = vcmp.eq.f32.partialorder %v4380, inf
    %v5101 = vsel %vm5100, %v4380, %v5099
    %vm5102 = vcmp.eq.f32.partialorder %v4380, 0.0
    %v5103 = vand.u32 %v4380, 2147483648
    %v5104 = vsel %vm5102, %v5103, %v5101
    %v5105 = vrsqrt.pop %v4381
    %v5106 = vmul.f32 %v4381, %v5105
    %vm5107 = vcmp.eq.f32.partialorder %v4381, inf
    %v5108 = vsel %vm5107, %v4381, %v5106
    %vm5109 = vcmp.eq.f32.partialorder %v4381, 0.0
    %v5110 = vand.u32 %v4381, 2147483648
    %v5111 = vsel %vm5109, %v5110, %v5108
    %v5112 = vrsqrt.pop %v4382
    %v5113 = vmul.f32 %v4382, %v5112
    %vm5114 = vcmp.eq.f32.partialorder %v4382, inf
    %v5115 = vsel %vm5114, %v4382, %v5113
    %vm5116 = vcmp.eq.f32.partialorder %v4382, 0.0
    %v5117 = vand.u32 %v4382, 2147483648
    %v5118 = vsel %vm5116, %v5117, %v5115
    %v5119 = vrsqrt.pop %v4383
    %v5120 = vmul.f32 %v4383, %v5119
    %vm5121 = vcmp.eq.f32.partialorder %v4383, inf
    %v5122 = vsel %vm5121, %v4383, %v5120
    %vm5123 = vcmp.eq.f32.partialorder %v4383, 0.0
    %v5124 = vand.u32 %v4383, 2147483648
    %v5125 = vsel %vm5123, %v5124, %v5122
    %v5126 = vrsqrt.pop %v4384
    %v5127 = vmul.f32 %v4384, %v5126
    %vm5128 = vcmp.eq.f32.partialorder %v4384, inf
    %v5129 = vsel %vm5128, %v4384, %v5127
    %vm5130 = vcmp.eq.f32.partialorder %v4384, 0.0
    %v5131 = vand.u32 %v4384, 2147483648
    %v5132 = vsel %vm5130, %v5131, %v5129
    %v5133 = vrsqrt.pop %v4385
    %v5134 = vmul.f32 %v4385, %v5133
    %vm5135 = vcmp.eq.f32.partialorder %v4385, inf
    %v5136 = vsel %vm5135, %v4385, %v5134
    %vm5137 = vcmp.eq.f32.partialorder %v4385, 0.0
    %v5138 = vand.u32 %v4385, 2147483648
    %v5139 = vsel %vm5137, %v5138, %v5136
    %v5140 = vrsqrt.pop %v4386
    %v5141 = vmul.f32 %v4386, %v5140
    %vm5142 = vcmp.eq.f32.partialorder %v4386, inf
    %v5143 = vsel %vm5142, %v4386, %v5141
    %vm5144 = vcmp.eq.f32.partialorder %v4386, 0.0
    %v5145 = vand.u32 %v4386, 2147483648
    %v5146 = vsel %vm5144, %v5145, %v5143
    %v5147 = vrsqrt.pop %v4387
    %v5148 = vmul.f32 %v4387, %v5147
    %vm5149 = vcmp.eq.f32.partialorder %v4387, inf
    %v5150 = vsel %vm5149, %v4387, %v5148
    %vm5151 = vcmp.eq.f32.partialorder %v4387, 0.0
    %v5152 = vand.u32 %v4387, 2147483648
    %v5153 = vsel %vm5151, %v5152, %v5150
    %v5154 = vrsqrt.pop %v4388
    %v5155 = vmul.f32 %v4388, %v5154
    %vm5156 = vcmp.eq.f32.partialorder %v4388, inf
    %v5157 = vsel %vm5156, %v4388, %v5155
    %vm5158 = vcmp.eq.f32.partialorder %v4388, 0.0
    %v5159 = vand.u32 %v4388, 2147483648
    %v5160 = vsel %vm5158, %v5159, %v5157
    %v5161 = vrsqrt.pop %v4389
    %v5162 = vmul.f32 %v4389, %v5161
    %vm5163 = vcmp.eq.f32.partialorder %v4389, inf
    %v5164 = vsel %vm5163, %v4389, %v5162
    %vm5165 = vcmp.eq.f32.partialorder %v4389, 0.0
    %v5166 = vand.u32 %v4389, 2147483648
    %v5167 = vsel %vm5165, %v5166, %v5164
    %v5168 = vrsqrt.pop %v4390
    %v5169 = vmul.f32 %v4390, %v5168
    %vm5170 = vcmp.eq.f32.partialorder %v4390, inf
    %v5171 = vsel %vm5170, %v4390, %v5169
    %vm5172 = vcmp.eq.f32.partialorder %v4390, 0.0
    %v5173 = vand.u32 %v4390, 2147483648
    %v5174 = vsel %vm5172, %v5173, %v5171
    %v5175 = vrsqrt.pop %v4391
    %v5176 = vmul.f32 %v4391, %v5175
    %vm5177 = vcmp.eq.f32.partialorder %v4391, inf
    %v5178 = vsel %vm5177, %v4391, %v5176
    %vm5179 = vcmp.eq.f32.partialorder %v4391, 0.0
    %v5180 = vand.u32 %v4391, 2147483648
    %v5181 = vsel %vm5179, %v5180, %v5178
    %v5182 = vrsqrt.pop %v4392
    %v5183 = vmul.f32 %v4392, %v5182
    %vm5184 = vcmp.eq.f32.partialorder %v4392, inf
    %v5185 = vsel %vm5184, %v4392, %v5183
    %vm5186 = vcmp.eq.f32.partialorder %v4392, 0.0
    %v5187 = vand.u32 %v4392, 2147483648
    %v5188 = vsel %vm5186, %v5187, %v5185
    %v5189 = vrsqrt.pop %v4393
    %v5190 = vmul.f32 %v4393, %v5189
    %vm5191 = vcmp.eq.f32.partialorder %v4393, inf
    %v5192 = vsel %vm5191, %v4393, %v5190
    %vm5193 = vcmp.eq.f32.partialorder %v4393, 0.0
    %v5194 = vand.u32 %v4393, 2147483648
    %v5195 = vsel %vm5193, %v5194, %v5192
    %v5196 = vrsqrt.pop %v4394
    %v5197 = vmul.f32 %v4394, %v5196
    %vm5198 = vcmp.eq.f32.partialorder %v4394, inf
    %v5199 = vsel %vm5198, %v4394, %v5197
    %vm5200 = vcmp.eq.f32.partialorder %v4394, 0.0
    %v5201 = vand.u32 %v4394, 2147483648
    %v5202 = vsel %vm5200, %v5201, %v5199
    %v5203 = vrsqrt.pop %v4395
    %v5204 = vmul.f32 %v4395, %v5203
    %vm5205 = vcmp.eq.f32.partialorder %v4395, inf
    %v5206 = vsel %vm5205, %v4395, %v5204
    %vm5207 = vcmp.eq.f32.partialorder %v4395, 0.0
    %v5208 = vand.u32 %v4395, 2147483648
    %v5209 = vsel %vm5207, %v5208, %v5206
    %v5210 = vrsqrt.pop %v4396
    %v5211 = vmul.f32 %v4396, %v5210
    %vm5212 = vcmp.eq.f32.partialorder %v4396, inf
    %v5213 = vsel %vm5212, %v4396, %v5211
    %vm5214 = vcmp.eq.f32.partialorder %v4396, 0.0
    %v5215 = vand.u32 %v4396, 2147483648
    %v5216 = vsel %vm5214, %v5215, %v5213
    %v5217 = vrsqrt.pop %v4397
    %v5218 = vmul.f32 %v4397, %v5217
    %vm5219 = vcmp.eq.f32.partialorder %v4397, inf
    %v5220 = vsel %vm5219, %v4397, %v5218
    %vm5221 = vcmp.eq.f32.partialorder %v4397, 0.0
    %v5222 = vand.u32 %v4397, 2147483648
    %v5223 = vsel %vm5221, %v5222, %v5220
    %v5224 = vrsqrt.pop %v4398
    %v5225 = vmul.f32 %v4398, %v5224
    %vm5226 = vcmp.eq.f32.partialorder %v4398, inf
    %v5227 = vsel %vm5226, %v4398, %v5225
    %vm5228 = vcmp.eq.f32.partialorder %v4398, 0.0
    %v5229 = vand.u32 %v4398, 2147483648
    %v5230 = vsel %vm5228, %v5229, %v5227
    %v5231 = vrsqrt.pop %v4399
    %v5232 = vmul.f32 %v4399, %v5231
    %vm5233 = vcmp.eq.f32.partialorder %v4399, inf
    %v5234 = vsel %vm5233, %v4399, %v5232
    %vm5235 = vcmp.eq.f32.partialorder %v4399, 0.0
    %v5236 = vand.u32 %v4399, 2147483648
    %v5237 = vsel %vm5235, %v5236, %v5234
    %v5238 = vrsqrt.pop %v4400
    %v5239 = vmul.f32 %v4400, %v5238
    %vm5240 = vcmp.eq.f32.partialorder %v4400, inf
    %v5241 = vsel %vm5240, %v4400, %v5239
    %vm5242 = vcmp.eq.f32.partialorder %v4400, 0.0
    %v5243 = vand.u32 %v4400, 2147483648
    %v5244 = vsel %vm5242, %v5243, %v5241
    %v5245 = vrsqrt.pop %v4401
    %v5246 = vmul.f32 %v4401, %v5245
    %vm5247 = vcmp.eq.f32.partialorder %v4401, inf
    %v5248 = vsel %vm5247, %v4401, %v5246
    %vm5249 = vcmp.eq.f32.partialorder %v4401, 0.0
    %v5250 = vand.u32 %v4401, 2147483648
    %v5251 = vsel %vm5249, %v5250, %v5248
    %v5252 = vrsqrt.pop %v4402
    %v5253 = vmul.f32 %v4402, %v5252
    %vm5254 = vcmp.eq.f32.partialorder %v4402, inf
    %v5255 = vsel %vm5254, %v4402, %v5253
    %vm5256 = vcmp.eq.f32.partialorder %v4402, 0.0
    %v5257 = vand.u32 %v4402, 2147483648
    %v5258 = vsel %vm5256, %v5257, %v5255
    %v5259 = vrsqrt.pop %v4403
    %v5260 = vmul.f32 %v4403, %v5259
    %vm5261 = vcmp.eq.f32.partialorder %v4403, inf
    %v5262 = vsel %vm5261, %v4403, %v5260
    %vm5263 = vcmp.eq.f32.partialorder %v4403, 0.0
    %v5264 = vand.u32 %v4403, 2147483648
    %v5265 = vsel %vm5263, %v5264, %v5262
    %v5266 = vrsqrt.pop %v4404
    %v5267 = vmul.f32 %v4404, %v5266
    %vm5268 = vcmp.eq.f32.partialorder %v4404, inf
    %v5269 = vsel %vm5268, %v4404, %v5267
    %vm5270 = vcmp.eq.f32.partialorder %v4404, 0.0
    %v5271 = vand.u32 %v4404, 2147483648
    %v5272 = vsel %vm5270, %v5271, %v5269
    %v5273 = vrsqrt.pop %v4405
    %v5274 = vmul.f32 %v4405, %v5273
    %vm5275 = vcmp.eq.f32.partialorder %v4405, inf
    %v5276 = vsel %vm5275, %v4405, %v5274
    %vm5277 = vcmp.eq.f32.partialorder %v4405, 0.0
    %v5278 = vand.u32 %v4405, 2147483648
    %v5279 = vsel %vm5277, %v5278, %v5276
    %v5280 = vrsqrt.pop %v4406
    %v5281 = vmul.f32 %v4406, %v5280
    %vm5282 = vcmp.eq.f32.partialorder %v4406, inf
    %v5283 = vsel %vm5282, %v4406, %v5281
    %vm5284 = vcmp.eq.f32.partialorder %v4406, 0.0
    %v5285 = vand.u32 %v4406, 2147483648
    %v5286 = vsel %vm5284, %v5285, %v5283
    %v5287 = vrsqrt.pop %v4407
    %v5288 = vmul.f32 %v4407, %v5287
    %vm5289 = vcmp.eq.f32.partialorder %v4407, inf
    %v5290 = vsel %vm5289, %v4407, %v5288
    %vm5291 = vcmp.eq.f32.partialorder %v4407, 0.0
    %v5292 = vand.u32 %v4407, 2147483648
    %v5293 = vsel %vm5291, %v5292, %v5290
    %v5294 = vrsqrt.pop %v4408
    %v5295 = vmul.f32 %v4408, %v5294
    %vm5296 = vcmp.eq.f32.partialorder %v4408, inf
    %v5297 = vsel %vm5296, %v4408, %v5295
    %vm5298 = vcmp.eq.f32.partialorder %v4408, 0.0
    %v5299 = vand.u32 %v4408, 2147483648
    %v5300 = vsel %vm5298, %v5299, %v5297
    %v5301 = vrsqrt.pop %v4409
    %v5302 = vmul.f32 %v4409, %v5301
    %vm5303 = vcmp.eq.f32.partialorder %v4409, inf
    %v5304 = vsel %vm5303, %v4409, %v5302
    %vm5305 = vcmp.eq.f32.partialorder %v4409, 0.0
    %v5306 = vand.u32 %v4409, 2147483648
    %v5307 = vsel %vm5305, %v5306, %v5304
    %v5308 = vrsqrt.pop %v4410
    %v5309 = vmul.f32 %v4410, %v5308
    %vm5310 = vcmp.eq.f32.partialorder %v4410, inf
    %v5311 = vsel %vm5310, %v4410, %v5309
    %vm5312 = vcmp.eq.f32.partialorder %v4410, 0.0
    %v5313 = vand.u32 %v4410, 2147483648
    %v5314 = vsel %vm5312, %v5313, %v5311
    %v5315 = vrsqrt.pop %v4411
    %v5316 = vmul.f32 %v4411, %v5315
    %vm5317 = vcmp.eq.f32.partialorder %v4411, inf
    %v5318 = vsel %vm5317, %v4411, %v5316
    %vm5319 = vcmp.eq.f32.partialorder %v4411, 0.0
    %v5320 = vand.u32 %v4411, 2147483648
    %v5321 = vsel %vm5319, %v5320, %v5318
    %v5322 = vrsqrt.pop %v4412
    %v5323 = vmul.f32 %v4412, %v5322
    %vm5324 = vcmp.eq.f32.partialorder %v4412, inf
    %v5325 = vsel %vm5324, %v4412, %v5323
    %vm5326 = vcmp.eq.f32.partialorder %v4412, 0.0
    %v5327 = vand.u32 %v4412, 2147483648
    %v5328 = vsel %vm5326, %v5327, %v5325
    %v5329 = vrsqrt.pop %v4413
    %v5330 = vmul.f32 %v4413, %v5329
    %vm5331 = vcmp.eq.f32.partialorder %v4413, inf
    %v5332 = vsel %vm5331, %v4413, %v5330
    %vm5333 = vcmp.eq.f32.partialorder %v4413, 0.0
    %v5334 = vand.u32 %v4413, 2147483648
    %v5335 = vsel %vm5333, %v5334, %v5332
    %v5336 = vrsqrt.pop %v4414
    %v5337 = vmul.f32 %v4414, %v5336
    %vm5338 = vcmp.eq.f32.partialorder %v4414, inf
    %v5339 = vsel %vm5338, %v4414, %v5337
    %vm5340 = vcmp.eq.f32.partialorder %v4414, 0.0
    %v5341 = vand.u32 %v4414, 2147483648
    %v5342 = vsel %vm5340, %v5341, %v5339
    %v5343 = vrsqrt.pop %v4415
    %v5344 = vmul.f32 %v4415, %v5343
    %vm5345 = vcmp.eq.f32.partialorder %v4415, inf
    %v5346 = vsel %vm5345, %v4415, %v5344
    %vm5347 = vcmp.eq.f32.partialorder %v4415, 0.0
    %v5348 = vand.u32 %v4415, 2147483648
    %v5349 = vsel %vm5347, %v5348, %v5346
    %v5350 = vrsqrt.pop %v4416
    %v5351 = vmul.f32 %v4416, %v5350
    %vm5352 = vcmp.eq.f32.partialorder %v4416, inf
    %v5353 = vsel %vm5352, %v4416, %v5351
    %vm5354 = vcmp.eq.f32.partialorder %v4416, 0.0
    %v5355 = vand.u32 %v4416, 2147483648
    %v5356 = vsel %vm5354, %v5355, %v5353
    %v5357 = vrsqrt.pop %v4417
    %v5358 = vmul.f32 %v4417, %v5357
    %vm5359 = vcmp.eq.f32.partialorder %v4417, inf
    %v5360 = vsel %vm5359, %v4417, %v5358
    %vm5361 = vcmp.eq.f32.partialorder %v4417, 0.0
    %v5362 = vand.u32 %v4417, 2147483648
    %v5363 = vsel %vm5361, %v5362, %v5360
    %v5364 = vrsqrt.pop %v4418
    %v5365 = vmul.f32 %v4418, %v5364
    %vm5366 = vcmp.eq.f32.partialorder %v4418, inf
    %v5367 = vsel %vm5366, %v4418, %v5365
    %vm5368 = vcmp.eq.f32.partialorder %v4418, 0.0
    %v5369 = vand.u32 %v4418, 2147483648
    %v5370 = vsel %vm5368, %v5369, %v5367
    %v5371 = vrsqrt.pop %v4419
    %v5372 = vmul.f32 %v4419, %v5371
    %vm5373 = vcmp.eq.f32.partialorder %v4419, inf
    %v5374 = vsel %vm5373, %v4419, %v5372
    %vm5375 = vcmp.eq.f32.partialorder %v4419, 0.0
    %v5376 = vand.u32 %v4419, 2147483648
    %v5377 = vsel %vm5375, %v5376, %v5374
    %v5378 = vrsqrt.pop %v4420
    %v5379 = vmul.f32 %v4420, %v5378
    %vm5380 = vcmp.eq.f32.partialorder %v4420, inf
    %v5381 = vsel %vm5380, %v4420, %v5379
    %vm5382 = vcmp.eq.f32.partialorder %v4420, 0.0
    %v5383 = vand.u32 %v4420, 2147483648
    %v5384 = vsel %vm5382, %v5383, %v5381
    %v5385 = vrsqrt.pop %v4421
    %v5386 = vmul.f32 %v4421, %v5385
    %vm5387 = vcmp.eq.f32.partialorder %v4421, inf
    %v5388 = vsel %vm5387, %v4421, %v5386
    %vm5389 = vcmp.eq.f32.partialorder %v4421, 0.0
    %v5390 = vand.u32 %v4421, 2147483648
    %v5391 = vsel %vm5389, %v5390, %v5388
    %v5392 = vrsqrt.pop %v4422
    %v5393 = vmul.f32 %v4422, %v5392
    %vm5394 = vcmp.eq.f32.partialorder %v4422, inf
    %v5395 = vsel %vm5394, %v4422, %v5393
    %vm5396 = vcmp.eq.f32.partialorder %v4422, 0.0
    %v5397 = vand.u32 %v4422, 2147483648
    %v5398 = vsel %vm5396, %v5397, %v5395
    %v5399 = vrsqrt.pop %v4423
    %v5400 = vmul.f32 %v4423, %v5399
    %vm5401 = vcmp.eq.f32.partialorder %v4423, inf
    %v5402 = vsel %vm5401, %v4423, %v5400
    %vm5403 = vcmp.eq.f32.partialorder %v4423, 0.0
    %v5404 = vand.u32 %v4423, 2147483648
    %v5405 = vsel %vm5403, %v5404, %v5402
    %v5406 = vrsqrt.pop %v4424
    %v5407 = vmul.f32 %v4424, %v5406
    %vm5408 = vcmp.eq.f32.partialorder %v4424, inf
    %v5409 = vsel %vm5408, %v4424, %v5407
    %vm5410 = vcmp.eq.f32.partialorder %v4424, 0.0
    %v5411 = vand.u32 %v4424, 2147483648
    %v5412 = vsel %vm5410, %v5411, %v5409
    %v5413 = vrsqrt.pop %v4425
    %v5414 = vmul.f32 %v4425, %v5413
    %vm5415 = vcmp.eq.f32.partialorder %v4425, inf
    %v5416 = vsel %vm5415, %v4425, %v5414
    %vm5417 = vcmp.eq.f32.partialorder %v4425, 0.0
    %v5418 = vand.u32 %v4425, 2147483648
    %v5419 = vsel %vm5417, %v5418, %v5416
    %v5420 = vrsqrt.pop %v4426
    %v5421 = vmul.f32 %v4426, %v5420
    %vm5422 = vcmp.eq.f32.partialorder %v4426, inf
    %v5423 = vsel %vm5422, %v4426, %v5421
    %vm5424 = vcmp.eq.f32.partialorder %v4426, 0.0
    %v5425 = vand.u32 %v4426, 2147483648
    %v5426 = vsel %vm5424, %v5425, %v5423
    %v5427 = vrsqrt.pop %v4427
    %v5428 = vmul.f32 %v4427, %v5427
    %vm5429 = vcmp.eq.f32.partialorder %v4427, inf
    %v5430 = vsel %vm5429, %v4427, %v5428
    %vm5431 = vcmp.eq.f32.partialorder %v4427, 0.0
    %v5432 = vand.u32 %v4427, 2147483648
    %v5433 = vsel %vm5431, %v5432, %v5430
    %v5434 = vrsqrt.pop %v4428
    %v5435 = vmul.f32 %v4428, %v5434
    %vm5436 = vcmp.eq.f32.partialorder %v4428, inf
    %v5437 = vsel %vm5436, %v4428, %v5435
    %vm5438 = vcmp.eq.f32.partialorder %v4428, 0.0
    %v5439 = vand.u32 %v4428, 2147483648
    %v5440 = vsel %vm5438, %v5439, %v5437
    %v5441 = vrsqrt.pop %v4429
    %v5442 = vmul.f32 %v4429, %v5441
    %vm5443 = vcmp.eq.f32.partialorder %v4429, inf
    %v5444 = vsel %vm5443, %v4429, %v5442
    %vm5445 = vcmp.eq.f32.partialorder %v4429, 0.0
    %v5446 = vand.u32 %v4429, 2147483648
    %v5447 = vsel %vm5445, %v5446, %v5444
    %v5448 = vrsqrt.pop %v4430
    %v5449 = vmul.f32 %v4430, %v5448
    %vm5450 = vcmp.eq.f32.partialorder %v4430, inf
    %v5451 = vsel %vm5450, %v4430, %v5449
    %vm5452 = vcmp.eq.f32.partialorder %v4430, 0.0
    %v5453 = vand.u32 %v4430, 2147483648
    %v5454 = vsel %vm5452, %v5453, %v5451
    %v5455 = vrsqrt.pop %v4431
    %v5456 = vmul.f32 %v4431, %v5455
    %vm5457 = vcmp.eq.f32.partialorder %v4431, inf
    %v5458 = vsel %vm5457, %v4431, %v5456
    %vm5459 = vcmp.eq.f32.partialorder %v4431, 0.0
    %v5460 = vand.u32 %v4431, 2147483648
    %v5461 = vsel %vm5459, %v5460, %v5458
    %v5462 = vrsqrt.pop %v4432
    %v5463 = vmul.f32 %v4432, %v5462
    %vm5464 = vcmp.eq.f32.partialorder %v4432, inf
    %v5465 = vsel %vm5464, %v4432, %v5463
    %vm5466 = vcmp.eq.f32.partialorder %v4432, 0.0
    %v5467 = vand.u32 %v4432, 2147483648
    %v5468 = vsel %vm5466, %v5467, %v5465
    %v5469 = vrsqrt.pop %v4433
    %v5470 = vmul.f32 %v4433, %v5469
    %vm5471 = vcmp.eq.f32.partialorder %v4433, inf
    %v5472 = vsel %vm5471, %v4433, %v5470
    %vm5473 = vcmp.eq.f32.partialorder %v4433, 0.0
    %v5474 = vand.u32 %v4433, 2147483648
    %v5475 = vsel %vm5473, %v5474, %v5472
    %v5476 = vrsqrt.pop %v4434
    %v5477 = vmul.f32 %v4434, %v5476
    %vm5478 = vcmp.eq.f32.partialorder %v4434, inf
    %v5479 = vsel %vm5478, %v4434, %v5477
    %vm5480 = vcmp.eq.f32.partialorder %v4434, 0.0
    %v5481 = vand.u32 %v4434, 2147483648
    %v5482 = vsel %vm5480, %v5481, %v5479
    %v5483 = vrsqrt.pop %v4435
    %v5484 = vmul.f32 %v4435, %v5483
    %vm5485 = vcmp.eq.f32.partialorder %v4435, inf
    %v5486 = vsel %vm5485, %v4435, %v5484
    %vm5487 = vcmp.eq.f32.partialorder %v4435, 0.0
    %v5488 = vand.u32 %v4435, 2147483648
    %v5489 = vsel %vm5487, %v5488, %v5486
    %v5490 = vrsqrt.pop %v4436
    %v5491 = vmul.f32 %v4436, %v5490
    %vm5492 = vcmp.eq.f32.partialorder %v4436, inf
    %v5493 = vsel %vm5492, %v4436, %v5491
    %vm5494 = vcmp.eq.f32.partialorder %v4436, 0.0
    %v5495 = vand.u32 %v4436, 2147483648
    %v5496 = vsel %vm5494, %v5495, %v5493
    %v5497 = vrsqrt.pop %v4437
    %v5498 = vmul.f32 %v4437, %v5497
    %vm5499 = vcmp.eq.f32.partialorder %v4437, inf
    %v5500 = vsel %vm5499, %v4437, %v5498
    %vm5501 = vcmp.eq.f32.partialorder %v4437, 0.0
    %v5502 = vand.u32 %v4437, 2147483648
    %v5503 = vsel %vm5501, %v5502, %v5500
    %v5504 = vrsqrt.pop %v4438
    %v5505 = vmul.f32 %v4438, %v5504
    %vm5506 = vcmp.eq.f32.partialorder %v4438, inf
    %v5507 = vsel %vm5506, %v4438, %v5505
    %vm5508 = vcmp.eq.f32.partialorder %v4438, 0.0
    %v5509 = vand.u32 %v4438, 2147483648
    %v5510 = vsel %vm5508, %v5509, %v5507
    %v5511 = vrsqrt.pop %v4439
    %v5512 = vmul.f32 %v4439, %v5511
    %vm5513 = vcmp.eq.f32.partialorder %v4439, inf
    %v5514 = vsel %vm5513, %v4439, %v5512
    %vm5515 = vcmp.eq.f32.partialorder %v4439, 0.0
    %v5516 = vand.u32 %v4439, 2147483648
    %v5517 = vsel %vm5515, %v5516, %v5514
    %v5518 = vrsqrt.pop %v4440
    %v5519 = vmul.f32 %v4440, %v5518
    %vm5520 = vcmp.eq.f32.partialorder %v4440, inf
    %v5521 = vsel %vm5520, %v4440, %v5519
    %vm5522 = vcmp.eq.f32.partialorder %v4440, 0.0
    %v5523 = vand.u32 %v4440, 2147483648
    %v5524 = vsel %vm5522, %v5523, %v5521
    %v5525 = vrsqrt.pop %v4441
    %v5526 = vmul.f32 %v4441, %v5525
    %vm5527 = vcmp.eq.f32.partialorder %v4441, inf
    %v5528 = vsel %vm5527, %v4441, %v5526
    %vm5529 = vcmp.eq.f32.partialorder %v4441, 0.0
    %v5530 = vand.u32 %v4441, 2147483648
    %v5531 = vsel %vm5529, %v5530, %v5528
    %v5532 = vrsqrt.pop %v4442
    %v5533 = vmul.f32 %v4442, %v5532
    %vm5534 = vcmp.eq.f32.partialorder %v4442, inf
    %v5535 = vsel %vm5534, %v4442, %v5533
    %vm5536 = vcmp.eq.f32.partialorder %v4442, 0.0
    %v5537 = vand.u32 %v4442, 2147483648
    %v5538 = vsel %vm5536, %v5537, %v5535
    %v5539 = vrsqrt.pop %v4443
    %v5540 = vmul.f32 %v4443, %v5539
    %vm5541 = vcmp.eq.f32.partialorder %v4443, inf
    %v5542 = vsel %vm5541, %v4443, %v5540
    %vm5543 = vcmp.eq.f32.partialorder %v4443, 0.0
    %v5544 = vand.u32 %v4443, 2147483648
    %v5545 = vsel %vm5543, %v5544, %v5542
    %v5546 = vrsqrt.pop %v4444
    %v5547 = vmul.f32 %v4444, %v5546
    %vm5548 = vcmp.eq.f32.partialorder %v4444, inf
    %v5549 = vsel %vm5548, %v4444, %v5547
    %vm5550 = vcmp.eq.f32.partialorder %v4444, 0.0
    %v5551 = vand.u32 %v4444, 2147483648
    %v5552 = vsel %vm5550, %v5551, %v5549
    %v5553 = vrsqrt.pop %v4445
    %v5554 = vmul.f32 %v4445, %v5553
    %vm5555 = vcmp.eq.f32.partialorder %v4445, inf
    %v5556 = vsel %vm5555, %v4445, %v5554
    %vm5557 = vcmp.eq.f32.partialorder %v4445, 0.0
    %v5558 = vand.u32 %v4445, 2147483648
    %v5559 = vsel %vm5557, %v5558, %v5556
    %v5560 = vrsqrt.pop %v4446
    %v5561 = vmul.f32 %v4446, %v5560
    %vm5562 = vcmp.eq.f32.partialorder %v4446, inf
    %v5563 = vsel %vm5562, %v4446, %v5561
    %vm5564 = vcmp.eq.f32.partialorder %v4446, 0.0
    %v5565 = vand.u32 %v4446, 2147483648
    %v5566 = vsel %vm5564, %v5565, %v5563
    %v5567 = vrsqrt.pop %v4447
    %v5568 = vmul.f32 %v4447, %v5567
    %vm5569 = vcmp.eq.f32.partialorder %v4447, inf
    %v5570 = vsel %vm5569, %v4447, %v5568
    %vm5571 = vcmp.eq.f32.partialorder %v4447, 0.0
    %v5572 = vand.u32 %v4447, 2147483648
    %v5573 = vsel %vm5571, %v5572, %v5570
    %v5574 = vrsqrt.pop %v4448
    %v5575 = vmul.f32 %v4448, %v5574
    %vm5576 = vcmp.eq.f32.partialorder %v4448, inf
    %v5577 = vsel %vm5576, %v4448, %v5575
    %vm5578 = vcmp.eq.f32.partialorder %v4448, 0.0
    %v5579 = vand.u32 %v4448, 2147483648
    %v5580 = vsel %vm5578, %v5579, %v5577
    %v5581 = vrsqrt.pop %v4449
    %v5582 = vmul.f32 %v4449, %v5581
    %vm5583 = vcmp.eq.f32.partialorder %v4449, inf
    %v5584 = vsel %vm5583, %v4449, %v5582
    %vm5585 = vcmp.eq.f32.partialorder %v4449, 0.0
    %v5586 = vand.u32 %v4449, 2147483648
    %v5587 = vsel %vm5585, %v5586, %v5584
    %v5588 = vrsqrt.pop %v4450
    %v5589 = vmul.f32 %v4450, %v5588
    %vm5590 = vcmp.eq.f32.partialorder %v4450, inf
    %v5591 = vsel %vm5590, %v4450, %v5589
    %vm5592 = vcmp.eq.f32.partialorder %v4450, 0.0
    %v5593 = vand.u32 %v4450, 2147483648
    %v5594 = vsel %vm5592, %v5593, %v5591
    %v5595 = vrsqrt.pop %v4451
    %v5596 = vmul.f32 %v4451, %v5595
    %vm5597 = vcmp.eq.f32.partialorder %v4451, inf
    %v5598 = vsel %vm5597, %v4451, %v5596
    %vm5599 = vcmp.eq.f32.partialorder %v4451, 0.0
    %v5600 = vand.u32 %v4451, 2147483648
    %v5601 = vsel %vm5599, %v5600, %v5598
    %v5602 = vrsqrt.pop %v4452
    %v5603 = vmul.f32 %v4452, %v5602
    %vm5604 = vcmp.eq.f32.partialorder %v4452, inf
    %v5605 = vsel %vm5604, %v4452, %v5603
    %vm5606 = vcmp.eq.f32.partialorder %v4452, 0.0
    %v5607 = vand.u32 %v4452, 2147483648
    %v5608 = vsel %vm5606, %v5607, %v5605
    %v5609 = vrsqrt.pop %v4453
    %v5610 = vmul.f32 %v4453, %v5609
    %vm5611 = vcmp.eq.f32.partialorder %v4453, inf
    %v5612 = vsel %vm5611, %v4453, %v5610
    %vm5613 = vcmp.eq.f32.partialorder %v4453, 0.0
    %v5614 = vand.u32 %v4453, 2147483648
    %v5615 = vsel %vm5613, %v5614, %v5612
    %v5616 = vrsqrt.pop %v4454
    %v5617 = vmul.f32 %v4454, %v5616
    %vm5618 = vcmp.eq.f32.partialorder %v4454, inf
    %v5619 = vsel %vm5618, %v4454, %v5617
    %vm5620 = vcmp.eq.f32.partialorder %v4454, 0.0
    %v5621 = vand.u32 %v4454, 2147483648
    %v5622 = vsel %vm5620, %v5621, %v5619
    %v5623 = vrsqrt.pop %v4455
    %v5624 = vmul.f32 %v4455, %v5623
    %vm5625 = vcmp.eq.f32.partialorder %v4455, inf
    %v5626 = vsel %vm5625, %v4455, %v5624
    %vm5627 = vcmp.eq.f32.partialorder %v4455, 0.0
    %v5628 = vand.u32 %v4455, 2147483648
    %v5629 = vsel %vm5627, %v5628, %v5626
    %v5630 = vrsqrt.pop %v4456
    %v5631 = vmul.f32 %v4456, %v5630
    %vm5632 = vcmp.eq.f32.partialorder %v4456, inf
    %v5633 = vsel %vm5632, %v4456, %v5631
    %vm5634 = vcmp.eq.f32.partialorder %v4456, 0.0
    %v5635 = vand.u32 %v4456, 2147483648
    %v5636 = vsel %vm5634, %v5635, %v5633
    %v5637 = vrsqrt.pop %v4457
    %v5638 = vmul.f32 %v4457, %v5637
    %vm5639 = vcmp.eq.f32.partialorder %v4457, inf
    %v5640 = vsel %vm5639, %v4457, %v5638
    %vm5641 = vcmp.eq.f32.partialorder %v4457, 0.0
    %v5642 = vand.u32 %v4457, 2147483648
    %v5643 = vsel %vm5641, %v5642, %v5640
    %v5644 = vrsqrt.pop %v4458
    %v5645 = vmul.f32 %v4458, %v5644
    %vm5646 = vcmp.eq.f32.partialorder %v4458, inf
    %v5647 = vsel %vm5646, %v4458, %v5645
    %vm5648 = vcmp.eq.f32.partialorder %v4458, 0.0
    %v5649 = vand.u32 %v4458, 2147483648
    %v5650 = vsel %vm5648, %v5649, %v5647
    %v5651 = vrsqrt.pop %v4459
    %v5652 = vmul.f32 %v4459, %v5651
    %vm5653 = vcmp.eq.f32.partialorder %v4459, inf
    %v5654 = vsel %vm5653, %v4459, %v5652
    %vm5655 = vcmp.eq.f32.partialorder %v4459, 0.0
    %v5656 = vand.u32 %v4459, 2147483648
    %v5657 = vsel %vm5655, %v5656, %v5654
    %v5658 = vrsqrt.pop %v4460
    %v5659 = vmul.f32 %v4460, %v5658
    %vm5660 = vcmp.eq.f32.partialorder %v4460, inf
    %v5661 = vsel %vm5660, %v4460, %v5659
    %vm5662 = vcmp.eq.f32.partialorder %v4460, 0.0
    %v5663 = vand.u32 %v4460, 2147483648
    %v5664 = vsel %vm5662, %v5663, %v5661
    %v5665 = vrsqrt.pop %v4461
    %v5666 = vmul.f32 %v4461, %v5665
    %vm5667 = vcmp.eq.f32.partialorder %v4461, inf
    %v5668 = vsel %vm5667, %v4461, %v5666
    %vm5669 = vcmp.eq.f32.partialorder %v4461, 0.0
    %v5670 = vand.u32 %v4461, 2147483648
    %v5671 = vsel %vm5669, %v5670, %v5668
    %v5672 = vrsqrt.pop %v4462
    %v5673 = vmul.f32 %v4462, %v5672
    %vm5674 = vcmp.eq.f32.partialorder %v4462, inf
    %v5675 = vsel %vm5674, %v4462, %v5673
    %vm5676 = vcmp.eq.f32.partialorder %v4462, 0.0
    %v5677 = vand.u32 %v4462, 2147483648
    %v5678 = vsel %vm5676, %v5677, %v5675
    %v5679 = vrsqrt.pop %v4463
    %v5680 = vmul.f32 %v4463, %v5679
    %vm5681 = vcmp.eq.f32.partialorder %v4463, inf
    %v5682 = vsel %vm5681, %v4463, %v5680
    %vm5683 = vcmp.eq.f32.partialorder %v4463, 0.0
    %v5684 = vand.u32 %v4463, 2147483648
    %v5685 = vsel %vm5683, %v5684, %v5682
    %v5686 = vrsqrt.pop %v4464
    %v5687 = vmul.f32 %v4464, %v5686
    %vm5688 = vcmp.eq.f32.partialorder %v4464, inf
    %v5689 = vsel %vm5688, %v4464, %v5687
    %vm5690 = vcmp.eq.f32.partialorder %v4464, 0.0
    %v5691 = vand.u32 %v4464, 2147483648
    %v5692 = vsel %vm5690, %v5691, %v5689
    %v5693 = vrsqrt.pop %v4465
    %v5694 = vmul.f32 %v4465, %v5693
    %vm5695 = vcmp.eq.f32.partialorder %v4465, inf
    %v5696 = vsel %vm5695, %v4465, %v5694
    %vm5697 = vcmp.eq.f32.partialorder %v4465, 0.0
    %v5698 = vand.u32 %v4465, 2147483648
    %v5699 = vsel %vm5697, %v5698, %v5696
    %v5700 = vrsqrt.pop %v4466
    %v5701 = vmul.f32 %v4466, %v5700
    %vm5702 = vcmp.eq.f32.partialorder %v4466, inf
    %v5703 = vsel %vm5702, %v4466, %v5701
    %vm5704 = vcmp.eq.f32.partialorder %v4466, 0.0
    %v5705 = vand.u32 %v4466, 2147483648
    %v5706 = vsel %vm5704, %v5705, %v5703
    %v5707 = vrsqrt.pop %v4467
    %v5708 = vmul.f32 %v4467, %v5707
    %vm5709 = vcmp.eq.f32.partialorder %v4467, inf
    %v5710 = vsel %vm5709, %v4467, %v5708
    %vm5711 = vcmp.eq.f32.partialorder %v4467, 0.0
    %v5712 = vand.u32 %v4467, 2147483648
    %v5713 = vsel %vm5711, %v5712, %v5710
    %v5714 = vrsqrt.pop %v4468
    %v5715 = vmul.f32 %v4468, %v5714
    %vm5716 = vcmp.eq.f32.partialorder %v4468, inf
    %v5717 = vsel %vm5716, %v4468, %v5715
    %vm5718 = vcmp.eq.f32.partialorder %v4468, 0.0
    %v5719 = vand.u32 %v4468, 2147483648
    %v5720 = vsel %vm5718, %v5719, %v5717
    %v5721 = vrsqrt.pop %v4469
    %v5722 = vmul.f32 %v4469, %v5721
    %vm5723 = vcmp.eq.f32.partialorder %v4469, inf
    %v5724 = vsel %vm5723, %v4469, %v5722
    %vm5725 = vcmp.eq.f32.partialorder %v4469, 0.0
    %v5726 = vand.u32 %v4469, 2147483648
    %v5727 = vsel %vm5725, %v5726, %v5724
    %v5728 = vrsqrt.pop %v4470
    %v5729 = vmul.f32 %v4470, %v5728
    %vm5730 = vcmp.eq.f32.partialorder %v4470, inf
    %v5731 = vsel %vm5730, %v4470, %v5729
    %vm5732 = vcmp.eq.f32.partialorder %v4470, 0.0
    %v5733 = vand.u32 %v4470, 2147483648
    %v5734 = vsel %vm5732, %v5733, %v5731
    %v5735 = vrsqrt.pop %v4471
    %v5736 = vmul.f32 %v4471, %v5735
    %vm5737 = vcmp.eq.f32.partialorder %v4471, inf
    %v5738 = vsel %vm5737, %v4471, %v5736
    %vm5739 = vcmp.eq.f32.partialorder %v4471, 0.0
    %v5740 = vand.u32 %v4471, 2147483648
    %v5741 = vsel %vm5739, %v5740, %v5738
    %v5742 = vrsqrt.pop %v4472
    %v5743 = vmul.f32 %v4472, %v5742
    %vm5744 = vcmp.eq.f32.partialorder %v4472, inf
    %v5745 = vsel %vm5744, %v4472, %v5743
    %vm5746 = vcmp.eq.f32.partialorder %v4472, 0.0
    %v5747 = vand.u32 %v4472, 2147483648
    %v5748 = vsel %vm5746, %v5747, %v5745
    %v5749 = vrsqrt.pop %v4473
    %v5750 = vmul.f32 %v4473, %v5749
    %vm5751 = vcmp.eq.f32.partialorder %v4473, inf
    %v5752 = vsel %vm5751, %v4473, %v5750
    %vm5753 = vcmp.eq.f32.partialorder %v4473, 0.0
    %v5754 = vand.u32 %v4473, 2147483648
    %v5755 = vsel %vm5753, %v5754, %v5752
    %v5756 = vrsqrt.pop %v4474
    %v5757 = vmul.f32 %v4474, %v5756
    %vm5758 = vcmp.eq.f32.partialorder %v4474, inf
    %v5759 = vsel %vm5758, %v4474, %v5757
    %vm5760 = vcmp.eq.f32.partialorder %v4474, 0.0
    %v5761 = vand.u32 %v4474, 2147483648
    %v5762 = vsel %vm5760, %v5761, %v5759
    %v5763 = vrsqrt.pop %v4475
    %v5764 = vmul.f32 %v4475, %v5763
    %vm5765 = vcmp.eq.f32.partialorder %v4475, inf
    %v5766 = vsel %vm5765, %v4475, %v5764
    %vm5767 = vcmp.eq.f32.partialorder %v4475, 0.0
    %v5768 = vand.u32 %v4475, 2147483648
    %v5769 = vsel %vm5767, %v5768, %v5766
    %v5770 = vrsqrt.pop %v4476
    %v5771 = vmul.f32 %v4476, %v5770
    %vm5772 = vcmp.eq.f32.partialorder %v4476, inf
    %v5773 = vsel %vm5772, %v4476, %v5771
    %vm5774 = vcmp.eq.f32.partialorder %v4476, 0.0
    %v5775 = vand.u32 %v4476, 2147483648
    %v5776 = vsel %vm5774, %v5775, %v5773
    %v5777 = vrsqrt.pop %v4477
    %v5778 = vmul.f32 %v4477, %v5777
    %vm5779 = vcmp.eq.f32.partialorder %v4477, inf
    %v5780 = vsel %vm5779, %v4477, %v5778
    %vm5781 = vcmp.eq.f32.partialorder %v4477, 0.0
    %v5782 = vand.u32 %v4477, 2147483648
    %v5783 = vsel %vm5781, %v5782, %v5780
    %v5784 = vrsqrt.pop %v4478
    %v5785 = vmul.f32 %v4478, %v5784
    %vm5786 = vcmp.eq.f32.partialorder %v4478, inf
    %v5787 = vsel %vm5786, %v4478, %v5785
    %vm5788 = vcmp.eq.f32.partialorder %v4478, 0.0
    %v5789 = vand.u32 %v4478, 2147483648
    %v5790 = vsel %vm5788, %v5789, %v5787
    %v5791 = vrsqrt.pop %v4479
    %v5792 = vmul.f32 %v4479, %v5791
    %vm5793 = vcmp.eq.f32.partialorder %v4479, inf
    %v5794 = vsel %vm5793, %v4479, %v5792
    %vm5795 = vcmp.eq.f32.partialorder %v4479, 0.0
    %v5796 = vand.u32 %v4479, 2147483648
    %v5797 = vsel %vm5795, %v5796, %v5794
    %v5798 = vrsqrt.pop %v4480
    %v5799 = vmul.f32 %v4480, %v5798
    %vm5800 = vcmp.eq.f32.partialorder %v4480, inf
    %v5801 = vsel %vm5800, %v4480, %v5799
    %vm5802 = vcmp.eq.f32.partialorder %v4480, 0.0
    %v5803 = vand.u32 %v4480, 2147483648
    %v5804 = vsel %vm5802, %v5803, %v5801
    %v5805 = vrsqrt.pop %v4481
    %v5806 = vmul.f32 %v4481, %v5805
    %vm5807 = vcmp.eq.f32.partialorder %v4481, inf
    %v5808 = vsel %vm5807, %v4481, %v5806
    %vm5809 = vcmp.eq.f32.partialorder %v4481, 0.0
    %v5810 = vand.u32 %v4481, 2147483648
    %v5811 = vsel %vm5809, %v5810, %v5808
    %v5812 = vrsqrt.pop %v4482
    %v5813 = vmul.f32 %v4482, %v5812
    %vm5814 = vcmp.eq.f32.partialorder %v4482, inf
    %v5815 = vsel %vm5814, %v4482, %v5813
    %vm5816 = vcmp.eq.f32.partialorder %v4482, 0.0
    %v5817 = vand.u32 %v4482, 2147483648
    %v5818 = vsel %vm5816, %v5817, %v5815
    %v5819 = vrsqrt.pop %v4483
    %v5820 = vmul.f32 %v4483, %v5819
    %vm5821 = vcmp.eq.f32.partialorder %v4483, inf
    %v5822 = vsel %vm5821, %v4483, %v5820
    %vm5823 = vcmp.eq.f32.partialorder %v4483, 0.0
    %v5824 = vand.u32 %v4483, 2147483648
    %v5825 = vsel %vm5823, %v5824, %v5822
    %v5826 = vrsqrt.pop %v4484
    %v5827 = vmul.f32 %v4484, %v5826
    %vm5828 = vcmp.eq.f32.partialorder %v4484, inf
    %v5829 = vsel %vm5828, %v4484, %v5827
    %vm5830 = vcmp.eq.f32.partialorder %v4484, 0.0
    %v5831 = vand.u32 %v4484, 2147483648
    %v5832 = vsel %vm5830, %v5831, %v5829
    %v5833 = vrsqrt.pop %v4485
    %v5834 = vmul.f32 %v4485, %v5833
    %vm5835 = vcmp.eq.f32.partialorder %v4485, inf
    %v5836 = vsel %vm5835, %v4485, %v5834
    %vm5837 = vcmp.eq.f32.partialorder %v4485, 0.0
    %v5838 = vand.u32 %v4485, 2147483648
    %v5839 = vsel %vm5837, %v5838, %v5836
    %v5840 = vrsqrt.pop %v4486
    %v5841 = vmul.f32 %v4486, %v5840
    %vm5842 = vcmp.eq.f32.partialorder %v4486, inf
    %v5843 = vsel %vm5842, %v4486, %v5841
    %vm5844 = vcmp.eq.f32.partialorder %v4486, 0.0
    %v5845 = vand.u32 %v4486, 2147483648
    %v5846 = vsel %vm5844, %v5845, %v5843
    %v5847 = vrsqrt.pop %v4487
    %v5848 = vmul.f32 %v4487, %v5847
    %vm5849 = vcmp.eq.f32.partialorder %v4487, inf
    %v5850 = vsel %vm5849, %v4487, %v5848
    %vm5851 = vcmp.eq.f32.partialorder %v4487, 0.0
    %v5852 = vand.u32 %v4487, 2147483648
    %v5853 = vsel %vm5851, %v5852, %v5850
    %v5854 = vrsqrt.pop %v4488
    %v5855 = vmul.f32 %v4488, %v5854
    %vm5856 = vcmp.eq.f32.partialorder %v4488, inf
    %v5857 = vsel %vm5856, %v4488, %v5855
    %vm5858 = vcmp.eq.f32.partialorder %v4488, 0.0
    %v5859 = vand.u32 %v4488, 2147483648
    %v5860 = vsel %vm5858, %v5859, %v5857
    %v5861 = vrsqrt.pop %v4489
    %v5862 = vmul.f32 %v4489, %v5861
    %vm5863 = vcmp.eq.f32.partialorder %v4489, inf
    %v5864 = vsel %vm5863, %v4489, %v5862
    %vm5865 = vcmp.eq.f32.partialorder %v4489, 0.0
    %v5866 = vand.u32 %v4489, 2147483648
    %v5867 = vsel %vm5865, %v5866, %v5864
    %v5868 = vrsqrt.pop %v4490
    %v5869 = vmul.f32 %v4490, %v5868
    %vm5870 = vcmp.eq.f32.partialorder %v4490, inf
    %v5871 = vsel %vm5870, %v4490, %v5869
    %vm5872 = vcmp.eq.f32.partialorder %v4490, 0.0
    %v5873 = vand.u32 %v4490, 2147483648
    %v5874 = vsel %vm5872, %v5873, %v5871
    %v5875 = vrsqrt.pop %v4491
    %v5876 = vmul.f32 %v4491, %v5875
    %vm5877 = vcmp.eq.f32.partialorder %v4491, inf
    %v5878 = vsel %vm5877, %v4491, %v5876
    %vm5879 = vcmp.eq.f32.partialorder %v4491, 0.0
    %v5880 = vand.u32 %v4491, 2147483648
    %v5881 = vsel %vm5879, %v5880, %v5878
    %v5882 = vrsqrt.pop %v4492
    %v5883 = vmul.f32 %v4492, %v5882
    %vm5884 = vcmp.eq.f32.partialorder %v4492, inf
    %v5885 = vsel %vm5884, %v4492, %v5883
    %vm5886 = vcmp.eq.f32.partialorder %v4492, 0.0
    %v5887 = vand.u32 %v4492, 2147483648
    %v5888 = vsel %vm5886, %v5887, %v5885
    %v5889 = vrsqrt.pop %v4493
    %v5890 = vmul.f32 %v4493, %v5889
    %vm5891 = vcmp.eq.f32.partialorder %v4493, inf
    %v5892 = vsel %vm5891, %v4493, %v5890
    %vm5893 = vcmp.eq.f32.partialorder %v4493, 0.0
    %v5894 = vand.u32 %v4493, 2147483648
    %v5895 = vsel %vm5893, %v5894, %v5892
    %v5896 = vrsqrt.pop %v4494
    %v5897 = vmul.f32 %v4494, %v5896
    %vm5898 = vcmp.eq.f32.partialorder %v4494, inf
    %v5899 = vsel %vm5898, %v4494, %v5897
    %vm5900 = vcmp.eq.f32.partialorder %v4494, 0.0
    %v5901 = vand.u32 %v4494, 2147483648
    %v5902 = vsel %vm5900, %v5901, %v5899
    %v5903 = vrsqrt.pop %v4495
    %v5904 = vmul.f32 %v4495, %v5903
    %vm5905 = vcmp.eq.f32.partialorder %v4495, inf
    %v5906 = vsel %vm5905, %v4495, %v5904
    %vm5907 = vcmp.eq.f32.partialorder %v4495, 0.0
    %v5908 = vand.u32 %v4495, 2147483648
    %v5909 = vsel %vm5907, %v5908, %v5906
    %v5910 = vrsqrt.pop %v4496
    %v5911 = vmul.f32 %v4496, %v5910
    %vm5912 = vcmp.eq.f32.partialorder %v4496, inf
    %v5913 = vsel %vm5912, %v4496, %v5911
    %vm5914 = vcmp.eq.f32.partialorder %v4496, 0.0
    %v5915 = vand.u32 %v4496, 2147483648
    %v5916 = vsel %vm5914, %v5915, %v5913
    %v5917 = vrsqrt.pop %v4497
    %v5918 = vmul.f32 %v4497, %v5917
    %vm5919 = vcmp.eq.f32.partialorder %v4497, inf
    %v5920 = vsel %vm5919, %v4497, %v5918
    %vm5921 = vcmp.eq.f32.partialorder %v4497, 0.0
    %v5922 = vand.u32 %v4497, 2147483648
    %v5923 = vsel %vm5921, %v5922, %v5920
    %v5924 = vrsqrt.pop %v4498
    %v5925 = vmul.f32 %v4498, %v5924
    %vm5926 = vcmp.eq.f32.partialorder %v4498, inf
    %v5927 = vsel %vm5926, %v4498, %v5925
    %vm5928 = vcmp.eq.f32.partialorder %v4498, 0.0
    %v5929 = vand.u32 %v4498, 2147483648
    %v5930 = vsel %vm5928, %v5929, %v5927
    %v5931 = vrsqrt.pop %v4499
    %v5932 = vmul.f32 %v4499, %v5931
    %vm5933 = vcmp.eq.f32.partialorder %v4499, inf
    %v5934 = vsel %vm5933, %v4499, %v5932
    %vm5935 = vcmp.eq.f32.partialorder %v4499, 0.0
    %v5936 = vand.u32 %v4499, 2147483648
    %v5937 = vsel %vm5935, %v5936, %v5934
    %v5938 = vrsqrt.pop %v4500
    %v5939 = vmul.f32 %v4500, %v5938
    %vm5940 = vcmp.eq.f32.partialorder %v4500, inf
    %v5941 = vsel %vm5940, %v4500, %v5939
    %vm5942 = vcmp.eq.f32.partialorder %v4500, 0.0
    %v5943 = vand.u32 %v4500, 2147483648
    %v5944 = vsel %vm5942, %v5943, %v5941
    %v5945 = vrsqrt.pop %v4501
    %v5946 = vmul.f32 %v4501, %v5945
    %vm5947 = vcmp.eq.f32.partialorder %v4501, inf
    %v5948 = vsel %vm5947, %v4501, %v5946
    %vm5949 = vcmp.eq.f32.partialorder %v4501, 0.0
    %v5950 = vand.u32 %v4501, 2147483648
    %v5951 = vsel %vm5949, %v5950, %v5948
    %v5952 = vrsqrt.pop %v4502
    %v5953 = vmul.f32 %v4502, %v5952
    %vm5954 = vcmp.eq.f32.partialorder %v4502, inf
    %v5955 = vsel %vm5954, %v4502, %v5953
    %vm5956 = vcmp.eq.f32.partialorder %v4502, 0.0
    %v5957 = vand.u32 %v4502, 2147483648
    %v5958 = vsel %vm5956, %v5957, %v5955
    %v5959 = vrsqrt.pop %v4503
    %v5960 = vmul.f32 %v4503, %v5959
    %vm5961 = vcmp.eq.f32.partialorder %v4503, inf
    %v5962 = vsel %vm5961, %v4503, %v5960
    %vm5963 = vcmp.eq.f32.partialorder %v4503, 0.0
    %v5964 = vand.u32 %v4503, 2147483648
    %v5965 = vsel %vm5963, %v5964, %v5962
    %v5966 = vrsqrt.pop %v4504
    %v5967 = vmul.f32 %v4504, %v5966
    %vm5968 = vcmp.eq.f32.partialorder %v4504, inf
    %v5969 = vsel %vm5968, %v4504, %v5967
    %vm5970 = vcmp.eq.f32.partialorder %v4504, 0.0
    %v5971 = vand.u32 %v4504, 2147483648
    %v5972 = vsel %vm5970, %v5971, %v5969
    %v5973 = vrsqrt.pop %v4505
    %v5974 = vmul.f32 %v4505, %v5973
    %vm5975 = vcmp.eq.f32.partialorder %v4505, inf
    %v5976 = vsel %vm5975, %v4505, %v5974
    %vm5977 = vcmp.eq.f32.partialorder %v4505, 0.0
    %v5978 = vand.u32 %v4505, 2147483648
    %v5979 = vsel %vm5977, %v5978, %v5976
    %v5980 = vrsqrt.pop %v4506
    %v5981 = vmul.f32 %v4506, %v5980
    %vm5982 = vcmp.eq.f32.partialorder %v4506, inf
    %v5983 = vsel %vm5982, %v4506, %v5981
    %vm5984 = vcmp.eq.f32.partialorder %v4506, 0.0
    %v5985 = vand.u32 %v4506, 2147483648
    %v5986 = vsel %vm5984, %v5985, %v5983
    %v5987 = vrsqrt.pop %v4507
    %v5988 = vmul.f32 %v4507, %v5987
    %vm5989 = vcmp.eq.f32.partialorder %v4507, inf
    %v5990 = vsel %vm5989, %v4507, %v5988
    %vm5991 = vcmp.eq.f32.partialorder %v4507, 0.0
    %v5992 = vand.u32 %v4507, 2147483648
    %v5993 = vsel %vm5991, %v5992, %v5990
    %v5994 = vrsqrt.pop %v4508
    %v5995 = vmul.f32 %v4508, %v5994
    %vm5996 = vcmp.eq.f32.partialorder %v4508, inf
    %v5997 = vsel %vm5996, %v4508, %v5995
    %vm5998 = vcmp.eq.f32.partialorder %v4508, 0.0
    %v5999 = vand.u32 %v4508, 2147483648
    %v6000 = vsel %vm5998, %v5999, %v5997
    %v6001 = vrsqrt.pop %v4509
    %v6002 = vmul.f32 %v4509, %v6001
    %vm6003 = vcmp.eq.f32.partialorder %v4509, inf
    %v6004 = vsel %vm6003, %v4509, %v6002
    %vm6005 = vcmp.eq.f32.partialorder %v4509, 0.0
    %v6006 = vand.u32 %v4509, 2147483648
    %v6007 = vsel %vm6005, %v6006, %v6004
    %v6008 = vrsqrt.pop %v4510
    %v6009 = vmul.f32 %v4510, %v6008
    %vm6010 = vcmp.eq.f32.partialorder %v4510, inf
    %v6011 = vsel %vm6010, %v4510, %v6009
    %vm6012 = vcmp.eq.f32.partialorder %v4510, 0.0
    %v6013 = vand.u32 %v4510, 2147483648
    %v6014 = vsel %vm6012, %v6013, %v6011
    %v6015 = vrsqrt.pop %v4511
    %v6016 = vmul.f32 %v4511, %v6015
    %vm6017 = vcmp.eq.f32.partialorder %v4511, inf
    %v6018 = vsel %vm6017, %v4511, %v6016
    %vm6019 = vcmp.eq.f32.partialorder %v4511, 0.0
    %v6020 = vand.u32 %v4511, 2147483648
    %v6021 = vsel %vm6019, %v6020, %v6018
    %v6022 = vrsqrt.pop %v4512
    %v6023 = vmul.f32 %v4512, %v6022
    %vm6024 = vcmp.eq.f32.partialorder %v4512, inf
    %v6025 = vsel %vm6024, %v4512, %v6023
    %vm6026 = vcmp.eq.f32.partialorder %v4512, 0.0
    %v6027 = vand.u32 %v4512, 2147483648
    %v6028 = vsel %vm6026, %v6027, %v6025
    %v6029 = vrsqrt.pop %v4513
    %v6030 = vmul.f32 %v4513, %v6029
    %vm6031 = vcmp.eq.f32.partialorder %v4513, inf
    %v6032 = vsel %vm6031, %v4513, %v6030
    %vm6033 = vcmp.eq.f32.partialorder %v4513, 0.0
    %v6034 = vand.u32 %v4513, 2147483648
    %v6035 = vsel %vm6033, %v6034, %v6032
    %v6036 = vrsqrt.pop %v4514
    %v6037 = vmul.f32 %v4514, %v6036
    %vm6038 = vcmp.eq.f32.partialorder %v4514, inf
    %v6039 = vsel %vm6038, %v4514, %v6037
    %vm6040 = vcmp.eq.f32.partialorder %v4514, 0.0
    %v6041 = vand.u32 %v4514, 2147483648
    %v6042 = vsel %vm6040, %v6041, %v6039
    %v6043 = vrsqrt.pop %v4515
    %v6044 = vmul.f32 %v4515, %v6043
    %vm6045 = vcmp.eq.f32.partialorder %v4515, inf
    %v6046 = vsel %vm6045, %v4515, %v6044
    %vm6047 = vcmp.eq.f32.partialorder %v4515, 0.0
    %v6048 = vand.u32 %v4515, 2147483648
    %v6049 = vsel %vm6047, %v6048, %v6046
    %v6050 = vrsqrt.pop %v4516
    %v6051 = vmul.f32 %v4516, %v6050
    %vm6052 = vcmp.eq.f32.partialorder %v4516, inf
    %v6053 = vsel %vm6052, %v4516, %v6051
    %vm6054 = vcmp.eq.f32.partialorder %v4516, 0.0
    %v6055 = vand.u32 %v4516, 2147483648
    %v6056 = vsel %vm6054, %v6055, %v6053
    %v6057 = vrsqrt.pop %v4517
    %v6058 = vmul.f32 %v4517, %v6057
    %vm6059 = vcmp.eq.f32.partialorder %v4517, inf
    %v6060 = vsel %vm6059, %v4517, %v6058
    %vm6061 = vcmp.eq.f32.partialorder %v4517, 0.0
    %v6062 = vand.u32 %v4517, 2147483648
    %v6063 = vsel %vm6061, %v6062, %v6060
    %v6064 = vrsqrt.pop %v4518
    %v6065 = vmul.f32 %v4518, %v6064
    %vm6066 = vcmp.eq.f32.partialorder %v4518, inf
    %v6067 = vsel %vm6066, %v4518, %v6065
    %vm6068 = vcmp.eq.f32.partialorder %v4518, 0.0
    %v6069 = vand.u32 %v4518, 2147483648
    %v6070 = vsel %vm6068, %v6069, %v6067
    %v6071 = vrsqrt.pop %v4519
    %v6072 = vmul.f32 %v4519, %v6071
    %vm6073 = vcmp.eq.f32.partialorder %v4519, inf
    %v6074 = vsel %vm6073, %v4519, %v6072
    %vm6075 = vcmp.eq.f32.partialorder %v4519, 0.0
    %v6076 = vand.u32 %v4519, 2147483648
    %v6077 = vsel %vm6075, %v6076, %v6074
    %v6078 = vrsqrt.pop %v4520
    %v6079 = vmul.f32 %v4520, %v6078
    %vm6080 = vcmp.eq.f32.partialorder %v4520, inf
    %v6081 = vsel %vm6080, %v4520, %v6079
    %vm6082 = vcmp.eq.f32.partialorder %v4520, 0.0
    %v6083 = vand.u32 %v4520, 2147483648
    %v6084 = vsel %vm6082, %v6083, %v6081
    %v6085 = vrsqrt.pop %v4521
    %v6086 = vmul.f32 %v4521, %v6085
    %vm6087 = vcmp.eq.f32.partialorder %v4521, inf
    %v6088 = vsel %vm6087, %v4521, %v6086
    %vm6089 = vcmp.eq.f32.partialorder %v4521, 0.0
    %v6090 = vand.u32 %v4521, 2147483648
    %v6091 = vsel %vm6089, %v6090, %v6088
    %v6092 = vrsqrt.pop %v4522
    %v6093 = vmul.f32 %v4522, %v6092
    %vm6094 = vcmp.eq.f32.partialorder %v4522, inf
    %v6095 = vsel %vm6094, %v4522, %v6093
    %vm6096 = vcmp.eq.f32.partialorder %v4522, 0.0
    %v6097 = vand.u32 %v4522, 2147483648
    %v6098 = vsel %vm6096, %v6097, %v6095
    %v6099 = vrsqrt.pop %v4523
    %v6100 = vmul.f32 %v4523, %v6099
    %vm6101 = vcmp.eq.f32.partialorder %v4523, inf
    %v6102 = vsel %vm6101, %v4523, %v6100
    %vm6103 = vcmp.eq.f32.partialorder %v4523, 0.0
    %v6104 = vand.u32 %v4523, 2147483648
    %v6105 = vsel %vm6103, %v6104, %v6102
    %v6106 = vrsqrt.pop %v4524
    %v6107 = vmul.f32 %v4524, %v6106
    %vm6108 = vcmp.eq.f32.partialorder %v4524, inf
    %v6109 = vsel %vm6108, %v4524, %v6107
    %vm6110 = vcmp.eq.f32.partialorder %v4524, 0.0
    %v6111 = vand.u32 %v4524, 2147483648
    %v6112 = vsel %vm6110, %v6111, %v6109
    %v6113 = vrsqrt.pop %v4525
    %v6114 = vmul.f32 %v4525, %v6113
    %vm6115 = vcmp.eq.f32.partialorder %v4525, inf
    %v6116 = vsel %vm6115, %v4525, %v6114
    %vm6117 = vcmp.eq.f32.partialorder %v4525, 0.0
    %v6118 = vand.u32 %v4525, 2147483648
    %v6119 = vsel %vm6117, %v6118, %v6116
    %v6120 = vrsqrt.pop %v4526
    %v6121 = vmul.f32 %v4526, %v6120
    %vm6122 = vcmp.eq.f32.partialorder %v4526, inf
    %v6123 = vsel %vm6122, %v4526, %v6121
    %vm6124 = vcmp.eq.f32.partialorder %v4526, 0.0
    %v6125 = vand.u32 %v4526, 2147483648
    %v6126 = vsel %vm6124, %v6125, %v6123
    %v6127 = vrsqrt.pop %v4527
    %v6128 = vmul.f32 %v4527, %v6127
    %vm6129 = vcmp.eq.f32.partialorder %v4527, inf
    %v6130 = vsel %vm6129, %v4527, %v6128
    %vm6131 = vcmp.eq.f32.partialorder %v4527, 0.0
    %v6132 = vand.u32 %v4527, 2147483648
    %v6133 = vsel %vm6131, %v6132, %v6130
    %v6134 = vrsqrt.pop %v4528
    %v6135 = vmul.f32 %v4528, %v6134
    %vm6136 = vcmp.eq.f32.partialorder %v4528, inf
    %v6137 = vsel %vm6136, %v4528, %v6135
    %vm6138 = vcmp.eq.f32.partialorder %v4528, 0.0
    %v6139 = vand.u32 %v4528, 2147483648
    %v6140 = vsel %vm6138, %v6139, %v6137
    %v6141 = vrsqrt.pop %v4529
    %v6142 = vmul.f32 %v4529, %v6141
    %vm6143 = vcmp.eq.f32.partialorder %v4529, inf
    %v6144 = vsel %vm6143, %v4529, %v6142
    %vm6145 = vcmp.eq.f32.partialorder %v4529, 0.0
    %v6146 = vand.u32 %v4529, 2147483648
    %v6147 = vsel %vm6145, %v6146, %v6144
    %v6148 = vrsqrt.pop %v4530
    %v6149 = vmul.f32 %v4530, %v6148
    %vm6150 = vcmp.eq.f32.partialorder %v4530, inf
    %v6151 = vsel %vm6150, %v4530, %v6149
    %vm6152 = vcmp.eq.f32.partialorder %v4530, 0.0
    %v6153 = vand.u32 %v4530, 2147483648
    %v6154 = vsel %vm6152, %v6153, %v6151
    %v6155 = vrsqrt.pop %v4531
    %v6156 = vmul.f32 %v4531, %v6155
    %vm6157 = vcmp.eq.f32.partialorder %v4531, inf
    %v6158 = vsel %vm6157, %v4531, %v6156
    %vm6159 = vcmp.eq.f32.partialorder %v4531, 0.0
    %v6160 = vand.u32 %v4531, 2147483648
    %v6161 = vsel %vm6159, %v6160, %v6158
    %v6162 = vrsqrt.pop %v4532
    %v6163 = vmul.f32 %v4532, %v6162
    %vm6164 = vcmp.eq.f32.partialorder %v4532, inf
    %v6165 = vsel %vm6164, %v4532, %v6163
    %vm6166 = vcmp.eq.f32.partialorder %v4532, 0.0
    %v6167 = vand.u32 %v4532, 2147483648
    %v6168 = vsel %vm6166, %v6167, %v6165
    %v6169 = vrsqrt.pop %v4533
    %v6170 = vmul.f32 %v4533, %v6169
    %vm6171 = vcmp.eq.f32.partialorder %v4533, inf
    %v6172 = vsel %vm6171, %v4533, %v6170
    %vm6173 = vcmp.eq.f32.partialorder %v4533, 0.0
    %v6174 = vand.u32 %v4533, 2147483648
    %v6175 = vsel %vm6173, %v6174, %v6172
    %v6176 = vrsqrt.pop %v4534
    %v6177 = vmul.f32 %v4534, %v6176
    %vm6178 = vcmp.eq.f32.partialorder %v4534, inf
    %v6179 = vsel %vm6178, %v4534, %v6177
    %vm6180 = vcmp.eq.f32.partialorder %v4534, 0.0
    %v6181 = vand.u32 %v4534, 2147483648
    %v6182 = vsel %vm6180, %v6181, %v6179
    %v6183 = vrsqrt.pop %v4535
    %v6184 = vmul.f32 %v4535, %v6183
    %vm6185 = vcmp.eq.f32.partialorder %v4535, inf
    %v6186 = vsel %vm6185, %v4535, %v6184
    %vm6187 = vcmp.eq.f32.partialorder %v4535, 0.0
    %v6188 = vand.u32 %v4535, 2147483648
    %v6189 = vsel %vm6187, %v6188, %v6186
    %v6190 = vrsqrt.pop %v4536
    %v6191 = vmul.f32 %v4536, %v6190
    %vm6192 = vcmp.eq.f32.partialorder %v4536, inf
    %v6193 = vsel %vm6192, %v4536, %v6191
    %vm6194 = vcmp.eq.f32.partialorder %v4536, 0.0
    %v6195 = vand.u32 %v4536, 2147483648
    %v6196 = vsel %vm6194, %v6195, %v6193
    %v6197 = vrsqrt.pop %v4537
    %v6198 = vmul.f32 %v4537, %v6197
    %vm6199 = vcmp.eq.f32.partialorder %v4537, inf
    %v6200 = vsel %vm6199, %v4537, %v6198
    %vm6201 = vcmp.eq.f32.partialorder %v4537, 0.0
    %v6202 = vand.u32 %v4537, 2147483648
    %v6203 = vsel %vm6201, %v6202, %v6200
    %v6204 = vrsqrt.pop %v4538
    %v6205 = vmul.f32 %v4538, %v6204
    %vm6206 = vcmp.eq.f32.partialorder %v4538, inf
    %v6207 = vsel %vm6206, %v4538, %v6205
    %vm6208 = vcmp.eq.f32.partialorder %v4538, 0.0
    %v6209 = vand.u32 %v4538, 2147483648
    %v6210 = vsel %vm6208, %v6209, %v6207
    %v6211 = vrsqrt.pop %v4539
    %v6212 = vmul.f32 %v4539, %v6211
    %vm6213 = vcmp.eq.f32.partialorder %v4539, inf
    %v6214 = vsel %vm6213, %v4539, %v6212
    %vm6215 = vcmp.eq.f32.partialorder %v4539, 0.0
    %v6216 = vand.u32 %v4539, 2147483648
    %v6217 = vsel %vm6215, %v6216, %v6214
    %v6218 = vrsqrt.pop %v4540
    %v6219 = vmul.f32 %v4540, %v6218
    %vm6220 = vcmp.eq.f32.partialorder %v4540, inf
    %v6221 = vsel %vm6220, %v4540, %v6219
    %vm6222 = vcmp.eq.f32.partialorder %v4540, 0.0
    %v6223 = vand.u32 %v4540, 2147483648
    %v6224 = vsel %vm6222, %v6223, %v6221
    %v6225 = vrsqrt.pop %v4541
    %v6226 = vmul.f32 %v4541, %v6225
    %vm6227 = vcmp.eq.f32.partialorder %v4541, inf
    %v6228 = vsel %vm6227, %v4541, %v6226
    %vm6229 = vcmp.eq.f32.partialorder %v4541, 0.0
    %v6230 = vand.u32 %v4541, 2147483648
    %v6231 = vsel %vm6229, %v6230, %v6228
    %v6232 = vrsqrt.pop %v4542
    %v6233 = vmul.f32 %v4542, %v6232
    %vm6234 = vcmp.eq.f32.partialorder %v4542, inf
    %v6235 = vsel %vm6234, %v4542, %v6233
    %vm6236 = vcmp.eq.f32.partialorder %v4542, 0.0
    %v6237 = vand.u32 %v4542, 2147483648
    %v6238 = vsel %vm6236, %v6237, %v6235
    %v6239 = vrsqrt.pop %v4543
    %v6240 = vmul.f32 %v4543, %v6239
    %vm6241 = vcmp.eq.f32.partialorder %v4543, inf
    %v6242 = vsel %vm6241, %v4543, %v6240
    %vm6243 = vcmp.eq.f32.partialorder %v4543, 0.0
    %v6244 = vand.u32 %v4543, 2147483648
    %v6245 = vsel %vm6243, %v6244, %v6242
    %v6246 = vrsqrt.pop %v4544
    %v6247 = vmul.f32 %v4544, %v6246
    %vm6248 = vcmp.eq.f32.partialorder %v4544, inf
    %v6249 = vsel %vm6248, %v4544, %v6247
    %vm6250 = vcmp.eq.f32.partialorder %v4544, 0.0
    %v6251 = vand.u32 %v4544, 2147483648
    %v6252 = vsel %vm6250, %v6251, %v6249
    %v6253 = vrsqrt.pop %v4545
    %v6254 = vmul.f32 %v4545, %v6253
    %vm6255 = vcmp.eq.f32.partialorder %v4545, inf
    %v6256 = vsel %vm6255, %v4545, %v6254
    %vm6257 = vcmp.eq.f32.partialorder %v4545, 0.0
    %v6258 = vand.u32 %v4545, 2147483648
    %v6259 = vsel %vm6257, %v6258, %v6256
    %v6260 = vrsqrt.pop %v4546
    %v6261 = vmul.f32 %v4546, %v6260
    %vm6262 = vcmp.eq.f32.partialorder %v4546, inf
    %v6263 = vsel %vm6262, %v4546, %v6261
    %vm6264 = vcmp.eq.f32.partialorder %v4546, 0.0
    %v6265 = vand.u32 %v4546, 2147483648
    %v6266 = vsel %vm6264, %v6265, %v6263
    %v6267 = vrsqrt.pop %v4547
    %v6268 = vmul.f32 %v4547, %v6267
    %vm6269 = vcmp.eq.f32.partialorder %v4547, inf
    %v6270 = vsel %vm6269, %v4547, %v6268
    %vm6271 = vcmp.eq.f32.partialorder %v4547, 0.0
    %v6272 = vand.u32 %v4547, 2147483648
    %v6273 = vsel %vm6271, %v6272, %v6270
    %v6274 = vrsqrt.pop %v4548
    %v6275 = vmul.f32 %v4548, %v6274
    %vm6276 = vcmp.eq.f32.partialorder %v4548, inf
    %v6277 = vsel %vm6276, %v4548, %v6275
    %vm6278 = vcmp.eq.f32.partialorder %v4548, 0.0
    %v6279 = vand.u32 %v4548, 2147483648
    %v6280 = vsel %vm6278, %v6279, %v6277
    %v6281 = vrsqrt.pop %v4549
    %v6282 = vmul.f32 %v4549, %v6281
    %vm6283 = vcmp.eq.f32.partialorder %v4549, inf
    %v6284 = vsel %vm6283, %v4549, %v6282
    %vm6285 = vcmp.eq.f32.partialorder %v4549, 0.0
    %v6286 = vand.u32 %v4549, 2147483648
    %v6287 = vsel %vm6285, %v6286, %v6284
    %v6288 = vrsqrt.pop %v4550
    %v6289 = vmul.f32 %v4550, %v6288
    %vm6290 = vcmp.eq.f32.partialorder %v4550, inf
    %v6291 = vsel %vm6290, %v4550, %v6289
    %vm6292 = vcmp.eq.f32.partialorder %v4550, 0.0
    %v6293 = vand.u32 %v4550, 2147483648
    %v6294 = vsel %vm6292, %v6293, %v6291
    %v6295 = vrsqrt.pop %v4551
    %v6296 = vmul.f32 %v4551, %v6295
    %vm6297 = vcmp.eq.f32.partialorder %v4551, inf
    %v6298 = vsel %vm6297, %v4551, %v6296
    %vm6299 = vcmp.eq.f32.partialorder %v4551, 0.0
    %v6300 = vand.u32 %v4551, 2147483648
    %v6301 = vsel %vm6299, %v6300, %v6298
    %v6302 = vrsqrt.pop %v4552
    %v6303 = vmul.f32 %v4552, %v6302
    %vm6304 = vcmp.eq.f32.partialorder %v4552, inf
    %v6305 = vsel %vm6304, %v4552, %v6303
    %vm6306 = vcmp.eq.f32.partialorder %v4552, 0.0
    %v6307 = vand.u32 %v4552, 2147483648
    %v6308 = vsel %vm6306, %v6307, %v6305
    %v6309 = vrsqrt.pop %v4553
    %v6310 = vmul.f32 %v4553, %v6309
    %vm6311 = vcmp.eq.f32.partialorder %v4553, inf
    %v6312 = vsel %vm6311, %v4553, %v6310
    %vm6313 = vcmp.eq.f32.partialorder %v4553, 0.0
    %v6314 = vand.u32 %v4553, 2147483648
    %v6315 = vsel %vm6313, %v6314, %v6312
    %v6316 = vrsqrt.pop %v4554
    %v6317 = vmul.f32 %v4554, %v6316
    %vm6318 = vcmp.eq.f32.partialorder %v4554, inf
    %v6319 = vsel %vm6318, %v4554, %v6317
    %vm6320 = vcmp.eq.f32.partialorder %v4554, 0.0
    %v6321 = vand.u32 %v4554, 2147483648
    %v6322 = vsel %vm6320, %v6321, %v6319
    %v6323 = vrsqrt.pop %v4555
    %v6324 = vmul.f32 %v4555, %v6323
    %vm6325 = vcmp.eq.f32.partialorder %v4555, inf
    %v6326 = vsel %vm6325, %v4555, %v6324
    %vm6327 = vcmp.eq.f32.partialorder %v4555, 0.0
    %v6328 = vand.u32 %v4555, 2147483648
    %v6329 = vsel %vm6327, %v6328, %v6326
    %v6330 = vrsqrt.pop %v4556
    %v6331 = vmul.f32 %v4556, %v6330
    %vm6332 = vcmp.eq.f32.partialorder %v4556, inf
    %v6333 = vsel %vm6332, %v4556, %v6331
    %vm6334 = vcmp.eq.f32.partialorder %v4556, 0.0
    %v6335 = vand.u32 %v4556, 2147483648
    %v6336 = vsel %vm6334, %v6335, %v6333
    %v6337 = vrsqrt.pop %v4557
    %v6338 = vmul.f32 %v4557, %v6337
    %vm6339 = vcmp.eq.f32.partialorder %v4557, inf
    %v6340 = vsel %vm6339, %v4557, %v6338
    %vm6341 = vcmp.eq.f32.partialorder %v4557, 0.0
    %v6342 = vand.u32 %v4557, 2147483648
    %v6343 = vsel %vm6341, %v6342, %v6340
    %v6344 = vrsqrt.pop %v4558
    %v6345 = vmul.f32 %v4558, %v6344
    %vm6346 = vcmp.eq.f32.partialorder %v4558, inf
    %v6347 = vsel %vm6346, %v4558, %v6345
    %vm6348 = vcmp.eq.f32.partialorder %v4558, 0.0
    %v6349 = vand.u32 %v4558, 2147483648
    %v6350 = vsel %vm6348, %v6349, %v6347
    %v6351 = vpack.c.bf16 %v4572, %v4565
    %v6352 = vpack.c.bf16 %v4586, %v4579
    %v6353 = vpack.c.bf16 %v4600, %v4593
    %v6354 = vpack.c.bf16 %v4614, %v4607
    %v6355 = vpack.c.bf16 %v4628, %v4621
    %v6356 = vpack.c.bf16 %v4642, %v4635
    %v6357 = vpack.c.bf16 %v4656, %v4649
    %v6358 = vpack.c.bf16 %v4670, %v4663
    %v6359 = vpack.c.bf16 %v4684, %v4677
    %v6360 = vpack.c.bf16 %v4698, %v4691
    %v6361 = vpack.c.bf16 %v4712, %v4705
    %v6362 = vpack.c.bf16 %v4726, %v4719
    %v6363 = vpack.c.bf16 %v4740, %v4733
    %v6364 = vpack.c.bf16 %v4754, %v4747
    %v6365 = vpack.c.bf16 %v4768, %v4761
    %v6366 = vpack.c.bf16 %v4782, %v4775
    %v6367 = vpack.c.bf16 %v4796, %v4789
    %v6368 = vpack.c.bf16 %v4810, %v4803
    %v6369 = vpack.c.bf16 %v4824, %v4817
    %v6370 = vpack.c.bf16 %v4838, %v4831
    %v6371 = vpack.c.bf16 %v4852, %v4845
    %v6372 = vpack.c.bf16 %v4866, %v4859
    %v6373 = vpack.c.bf16 %v4880, %v4873
    %v6374 = vpack.c.bf16 %v4894, %v4887
    %v6375 = vpack.c.bf16 %v4908, %v4901
    %v6376 = vpack.c.bf16 %v4922, %v4915
    %v6377 = vpack.c.bf16 %v4936, %v4929
    %v6378 = vpack.c.bf16 %v4950, %v4943
    %v6379 = vpack.c.bf16 %v4964, %v4957
    %v6380 = vpack.c.bf16 %v4978, %v4971
    %v6381 = vpack.c.bf16 %v4992, %v4985
    %v6382 = vpack.c.bf16 %v5006, %v4999
    %v6383 = vpack.c.bf16 %v5020, %v5013
    %v6384 = vpack.c.bf16 %v5034, %v5027
    %v6385 = vpack.c.bf16 %v5048, %v5041
    %v6386 = vpack.c.bf16 %v5062, %v5055
    %v6387 = vpack.c.bf16 %v5076, %v5069
    %v6388 = vpack.c.bf16 %v5090, %v5083
    %v6389 = vpack.c.bf16 %v5104, %v5097
    %v6390 = vpack.c.bf16 %v5118, %v5111
    %v6391 = vpack.c.bf16 %v5132, %v5125
    %v6392 = vpack.c.bf16 %v5146, %v5139
    %v6393 = vpack.c.bf16 %v5160, %v5153
    %v6394 = vpack.c.bf16 %v5174, %v5167
    %v6395 = vpack.c.bf16 %v5188, %v5181
    %v6396 = vpack.c.bf16 %v5202, %v5195
    %v6397 = vpack.c.bf16 %v5216, %v5209
    %v6398 = vpack.c.bf16 %v5230, %v5223
    %v6399 = vpack.c.bf16 %v5244, %v5237
    %v6400 = vpack.c.bf16 %v5258, %v5251
    %v6401 = vpack.c.bf16 %v5272, %v5265
    %v6402 = vpack.c.bf16 %v5286, %v5279
    %v6403 = vpack.c.bf16 %v5300, %v5293
    %v6404 = vpack.c.bf16 %v5314, %v5307
    %v6405 = vpack.c.bf16 %v5328, %v5321
    %v6406 = vpack.c.bf16 %v5342, %v5335
    %v6407 = vpack.c.bf16 %v5356, %v5349
    %v6408 = vpack.c.bf16 %v5370, %v5363
    %v6409 = vpack.c.bf16 %v5384, %v5377
    %v6410 = vpack.c.bf16 %v5398, %v5391
    %v6411 = vpack.c.bf16 %v5412, %v5405
    %v6412 = vpack.c.bf16 %v5426, %v5419
    %v6413 = vpack.c.bf16 %v5440, %v5433
    %v6414 = vpack.c.bf16 %v5454, %v5447
    %v6415 = vpack.c.bf16 %v5468, %v5461
    %v6416 = vpack.c.bf16 %v5482, %v5475
    %v6417 = vpack.c.bf16 %v5496, %v5489
    %v6418 = vpack.c.bf16 %v5510, %v5503
    %v6419 = vpack.c.bf16 %v5524, %v5517
    %v6420 = vpack.c.bf16 %v5538, %v5531
    %v6421 = vpack.c.bf16 %v5552, %v5545
    %v6422 = vpack.c.bf16 %v5566, %v5559
    %v6423 = vpack.c.bf16 %v5580, %v5573
    %v6424 = vpack.c.bf16 %v5594, %v5587
    %v6425 = vpack.c.bf16 %v5608, %v5601
    %v6426 = vpack.c.bf16 %v5622, %v5615
    %v6427 = vpack.c.bf16 %v5636, %v5629
    %v6428 = vpack.c.bf16 %v5650, %v5643
    %v6429 = vpack.c.bf16 %v5664, %v5657
    %v6430 = vpack.c.bf16 %v5678, %v5671
    %v6431 = vpack.c.bf16 %v5692, %v5685
    %v6432 = vpack.c.bf16 %v5706, %v5699
    %v6433 = vpack.c.bf16 %v5720, %v5713
    %v6434 = vpack.c.bf16 %v5734, %v5727
    %v6435 = vpack.c.bf16 %v5748, %v5741
    %v6436 = vpack.c.bf16 %v5762, %v5755
    %v6437 = vpack.c.bf16 %v5776, %v5769
    %v6438 = vpack.c.bf16 %v5790, %v5783
    %v6439 = vpack.c.bf16 %v5804, %v5797
    %v6440 = vpack.c.bf16 %v5818, %v5811
    %v6441 = vpack.c.bf16 %v5832, %v5825
    %v6442 = vpack.c.bf16 %v5846, %v5839
    %v6443 = vpack.c.bf16 %v5860, %v5853
    %v6444 = vpack.c.bf16 %v5874, %v5867
    %v6445 = vpack.c.bf16 %v5888, %v5881
    %v6446 = vpack.c.bf16 %v5902, %v5895
    %v6447 = vpack.c.bf16 %v5916, %v5909
    %v6448 = vpack.c.bf16 %v5930, %v5923
    %v6449 = vpack.c.bf16 %v5944, %v5937
    %v6450 = vpack.c.bf16 %v5958, %v5951
    %v6451 = vpack.c.bf16 %v5972, %v5965
    %v6452 = vpack.c.bf16 %v5986, %v5979
    %v6453 = vpack.c.bf16 %v6000, %v5993
    %v6454 = vpack.c.bf16 %v6014, %v6007
    %v6455 = vpack.c.bf16 %v6028, %v6021
    %v6456 = vpack.c.bf16 %v6042, %v6035
    %v6457 = vpack.c.bf16 %v6056, %v6049
    %v6458 = vpack.c.bf16 %v6070, %v6063
    %v6459 = vpack.c.bf16 %v6084, %v6077
    %v6460 = vpack.c.bf16 %v6098, %v6091
    %v6461 = vpack.c.bf16 %v6112, %v6105
    %v6462 = vpack.c.bf16 %v6126, %v6119
    %v6463 = vpack.c.bf16 %v6140, %v6133
    %v6464 = vpack.c.bf16 %v6154, %v6147
    %v6465 = vpack.c.bf16 %v6168, %v6161
    %v6466 = vpack.c.bf16 %v6182, %v6175
    %v6467 = vpack.c.bf16 %v6196, %v6189
    %v6468 = vpack.c.bf16 %v6210, %v6203
    %v6469 = vpack.c.bf16 %v6224, %v6217
    %v6470 = vpack.c.bf16 %v6238, %v6231
    %v6471 = vpack.c.bf16 %v6252, %v6245
    %v6472 = vpack.c.bf16 %v6266, %v6259
    %v6473 = vpack.c.bf16 %v6280, %v6273
    %v6474 = vpack.c.bf16 %v6294, %v6287
    %v6475 = vpack.c.bf16 %v6308, %v6301
    %v6476 = vpack.c.bf16 %v6322, %v6315
    %v6477 = vpack.c.bf16 %v6336, %v6329
    %v6478 = vpack.c.bf16 %v6350, %v6343
    %v6479 = vld [vmem:[%s2] sm:$0xf]
    %v6480 = vld [vmem:[%s2 + $0x4] sm:$0xf]
    %v6481 = vld [vmem:[%s2 + $0x8] sm:$0xf]
    %v6482 = vld [vmem:[%s2 + $0xc] sm:$0xf]
    %v6483 = vld [vmem:[%s2 + $0x10] sm:$0xf]
    %v6484 = vld [vmem:[%s2 + $0x14] sm:$0xf]
    %v6485 = vld [vmem:[%s2 + $0x18] sm:$0xf]
    %v6486 = vld [vmem:[%s2 + $0x1c] sm:$0xf]
    %v6495 = vunpack.c.l.b16 %v6479
    %v6496 = vunpack.c.l.b16 %v6480
    %v6497 = vunpack.c.l.b16 %v6481
    %v6498 = vunpack.c.l.b16 %v6482
    %v6499 = vunpack.c.l.b16 %v6483
    %v6500 = vunpack.c.l.b16 %v6484
    %v6501 = vunpack.c.l.b16 %v6485
    %v6502 = vunpack.c.l.b16 %v6486
    %v6503 = vpack.c.b16 %v6496, %v6495
    %v6504 = vpack.c.b16 %v6498, %v6497
    %v6505 = vpack.c.b16 %v6500, %v6499
    %v6506 = vpack.c.b16 %v6502, %v6501
    %v6512 = vsel %vm1709, %v6351, 0
    %v6515 = vsel %vm1709, %v6352, 0
    %v6518 = vsel %vm1709, %v6353, 0
    %v6521 = vsel %vm1709, %v6354, 0
    %v6524 = vsel %vm1709, %v6355, 0
    %v6527 = vsel %vm1709, %v6356, 0
    %v6530 = vsel %vm1709, %v6357, 0
    %v6533 = vsel %vm1709, %v6358, 0
    %v6536 = vsel %vm1709, %v6359, 0
    %v6539 = vsel %vm1709, %v6360, 0
    %v6542 = vsel %vm1709, %v6361, 0
    %v6545 = vsel %vm1709, %v6362, 0
    %v6548 = vsel %vm1709, %v6363, 0
    %v6551 = vsel %vm1709, %v6364, 0
    %v6554 = vsel %vm1709, %v6365, 0
    %v6557 = vsel %vm1709, %v6366, 0
    %v6560 = vsel %vm1709, %v6367, 0
    %v6563 = vsel %vm1709, %v6368, 0
    %v6566 = vsel %vm1709, %v6369, 0
    %v6569 = vsel %vm1709, %v6370, 0
    %v6572 = vsel %vm1709, %v6371, 0
    %v6575 = vsel %vm1709, %v6372, 0
    %v6578 = vsel %vm1709, %v6373, 0
    %v6581 = vsel %vm1709, %v6374, 0
    %v6584 = vsel %vm1709, %v6375, 0
    %v6587 = vsel %vm1709, %v6376, 0
    %v6590 = vsel %vm1709, %v6377, 0
    %v6593 = vsel %vm1709, %v6378, 0
    %v6596 = vsel %vm1709, %v6379, 0
    %v6599 = vsel %vm1709, %v6380, 0
    %v6602 = vsel %vm1709, %v6381, 0
    %v6605 = vsel %vm1709, %v6382, 0
    %v6608 = vsel %vm1709, %v6383, 0
    %v6611 = vsel %vm1709, %v6384, 0
    %v6614 = vsel %vm1709, %v6385, 0
    %v6617 = vsel %vm1709, %v6386, 0
    %v6620 = vsel %vm1709, %v6387, 0
    %v6623 = vsel %vm1709, %v6388, 0
    %v6626 = vsel %vm1709, %v6389, 0
    %v6629 = vsel %vm1709, %v6390, 0
    %v6632 = vsel %vm1709, %v6391, 0
    %v6635 = vsel %vm1709, %v6392, 0
    %v6638 = vsel %vm1709, %v6393, 0
    %v6641 = vsel %vm1709, %v6394, 0
    %v6644 = vsel %vm1709, %v6395, 0
    %v6647 = vsel %vm1709, %v6396, 0
    %v6650 = vsel %vm1709, %v6397, 0
    %v6653 = vsel %vm1709, %v6398, 0
    %v6656 = vsel %vm1709, %v6399, 0
    %v6659 = vsel %vm1709, %v6400, 0
    %v6662 = vsel %vm1709, %v6401, 0
    %v6665 = vsel %vm1709, %v6402, 0
    %v6668 = vsel %vm1709, %v6403, 0
    %v6671 = vsel %vm1709, %v6404, 0
    %v6674 = vsel %vm1709, %v6405, 0
    %v6677 = vsel %vm1709, %v6406, 0
    %v6680 = vsel %vm1709, %v6407, 0
    %v6683 = vsel %vm1709, %v6408, 0
    %v6686 = vsel %vm1709, %v6409, 0
    %v6689 = vsel %vm1709, %v6410, 0
    %v6692 = vsel %vm1709, %v6411, 0
    %v6695 = vsel %vm1709, %v6412, 0
    %v6698 = vsel %vm1709, %v6413, 0
    %v6701 = vsel %vm1709, %v6414, 0
    %v6704 = vsel %vm1709, %v6415, 0
    %v6707 = vsel %vm1709, %v6416, 0
    %v6710 = vsel %vm1709, %v6417, 0
    %v6713 = vsel %vm1709, %v6418, 0
    %v6716 = vsel %vm1709, %v6419, 0
    %v6719 = vsel %vm1709, %v6420, 0
    %v6722 = vsel %vm1709, %v6421, 0
    %v6725 = vsel %vm1709, %v6422, 0
    %v6728 = vsel %vm1709, %v6423, 0
    %v6731 = vsel %vm1709, %v6424, 0
    %v6734 = vsel %vm1709, %v6425, 0
    %v6737 = vsel %vm1709, %v6426, 0
    %v6740 = vsel %vm1709, %v6427, 0
    %v6743 = vsel %vm1709, %v6428, 0
    %v6746 = vsel %vm1709, %v6429, 0
    %v6749 = vsel %vm1709, %v6430, 0
    %v6752 = vsel %vm1709, %v6431, 0
    %v6755 = vsel %vm1709, %v6432, 0
    %v6758 = vsel %vm1709, %v6433, 0
    %v6761 = vsel %vm1709, %v6434, 0
    %v6764 = vsel %vm1709, %v6435, 0
    %v6767 = vsel %vm1709, %v6436, 0
    %v6770 = vsel %vm1709, %v6437, 0
    %v6773 = vsel %vm1709, %v6438, 0
    %v6776 = vsel %vm1709, %v6439, 0
    %v6779 = vsel %vm1709, %v6440, 0
    %v6782 = vsel %vm1709, %v6441, 0
    %v6785 = vsel %vm1709, %v6442, 0
    %v6788 = vsel %vm1709, %v6443, 0
    %v6791 = vsel %vm1709, %v6444, 0
    %v6794 = vsel %vm1709, %v6445, 0
    %v6797 = vsel %vm1709, %v6446, 0
    %v6800 = vsel %vm1709, %v6447, 0
    %v6803 = vsel %vm1709, %v6448, 0
    %v6806 = vsel %vm1709, %v6449, 0
    %v6809 = vsel %vm1709, %v6450, 0
    %v6812 = vsel %vm1709, %v6451, 0
    %v6815 = vsel %vm1709, %v6452, 0
    %v6818 = vsel %vm1709, %v6453, 0
    %v6821 = vsel %vm1709, %v6454, 0
    %v6824 = vsel %vm1709, %v6455, 0
    %v6827 = vsel %vm1709, %v6456, 0
    %v6830 = vsel %vm1709, %v6457, 0
    %v6833 = vsel %vm1709, %v6458, 0
    %v6836 = vsel %vm1709, %v6459, 0
    %v6839 = vsel %vm1709, %v6460, 0
    %v6842 = vsel %vm1709, %v6461, 0
    %v6845 = vsel %vm1709, %v6462, 0
    %v6848 = vsel %vm1709, %v6463, 0
    %v6851 = vsel %vm1709, %v6464, 0
    %v6854 = vsel %vm1709, %v6465, 0
    %v6857 = vsel %vm1709, %v6466, 0
    %v6860 = vsel %vm1709, %v6467, 0
    %v6863 = vsel %vm1709, %v6468, 0
    %v6866 = vsel %vm1709, %v6469, 0
    %v6869 = vsel %vm1709, %v6470, 0
    %v6872 = vsel %vm1709, %v6471, 0
    %v6875 = vsel %vm1709, %v6472, 0
    %v6878 = vsel %vm1709, %v6473, 0
    %v6881 = vsel %vm1709, %v6474, 0
    %v6884 = vsel %vm1709, %v6475, 0
    %v6887 = vsel %vm1709, %v6476, 0
    %v6890 = vsel %vm1709, %v6477, 0
    %v6893 = vsel %vm1709, %v6478, 0
    %6895 = vmatprep.subr.bf16.mxu0 0
    %6896 = vmatpush1.bf16.msra.mxu0 0
    %6897 = vmatprep.subr.bf16.mxu0 0
    %6898 = vmatpush1.bf16.msra.mxu0 0
    %6899 = vmatprep.subr.bf16.mxu0 0
    %6900 = vmatpush1.bf16.msra.mxu0 0
    %6901 = vmatprep.subr.bf16.mxu0 0
    %6902 = vmatpush1.bf16.msra.mxu0 0
    %6903 = vmatprep.subr.bf16.mxu0 0
    %6904 = vmatpush1.bf16.msra.mxu0 %v6506
    %6905 = vmatprep.subr.bf16.mxu0 0
    %6906 = vmatpush1.bf16.msra.mxu0 %v6505
    %6907 = vmatprep.subr.bf16.mxu0 0
    %6908 = vmatpush1.bf16.msra.mxu0 %v6504
    %6909 = vmatprep.subr.bf16.mxu0 0
    %6910 = vmatpush1.bf16.msra.mxu0 %v6503
    %6911 = vmatprep.subr.bf16.mxu0 0
    %6912 = vmatpush2.bf16.msra.mxu0 0
    %6913 = vmatprep.subr.bf16.mxu0 0
    %6914 = vmatpush2.bf16.msra.mxu0 0
    %6915 = vmatprep.subr.bf16.mxu0 0
    %6916 = vmatpush2.bf16.msra.mxu0 0
    %6917 = vmatprep.subr.bf16.mxu0 0
    %6918 = vmatpush2.bf16.msra.mxu0 0
    %6919 = vmatprep.subr.bf16.mxu0 0
    %6920 = vmatpush2.bf16.msra.mxu0 0
    %6921 = vmatprep.subr.bf16.mxu0 0
    %6922 = vmatpush2.bf16.msra.mxu0 0
    %6923 = vmatprep.subr.bf16.mxu0 0
    %6924 = vmatpush2.bf16.msra.mxu0 0
    %6925 = vmatprep.subr.bf16.mxu0 0
    %6926 = vmatpush2.bf16.msra.mxu0 0
    %6927 = vmatprep.mubr.bf16.mxu0 0
    %6928 = vmatmul.mubr.bf16.gmra.mxu0 %v6512
    %v6929 = vpop.f32.mrf.mxu0
    %v6930 = vadd.f32 0.001, %v6929
    %v6931 = vpop.f32.mrf.mxu0
    %v6932 = vpop.f32.mrf.mxu0
    %v6933 = vadd.f32 0.001, %v6932
    %v6934 = vpop.f32.mrf.mxu0
    %6935 = vmatprep.mubr.bf16.mxu0 0
    %6936 = vmatmul.mubr.bf16.gmra.mxu0 %v6515
    %v6937 = vpop.f32.mrf.mxu0
    %v6938 = vadd.f32 0.001, %v6937
    %v6939 = vpop.f32.mrf.mxu0
    %v6940 = vpop.f32.mrf.mxu0
    %v6941 = vadd.f32 0.001, %v6940
    %v6942 = vpop.f32.mrf.mxu0
    %6943 = vmatprep.mubr.bf16.mxu0 0
    %6944 = vmatmul.mubr.bf16.gmra.mxu0 %v6518
    %v6945 = vpop.f32.mrf.mxu0
    %v6946 = vadd.f32 0.001, %v6945
    %v6947 = vpop.f32.mrf.mxu0
    %v6948 = vpop.f32.mrf.mxu0
    %v6949 = vadd.f32 0.001, %v6948
    %v6950 = vpop.f32.mrf.mxu0
    %6951 = vmatprep.mubr.bf16.mxu0 0
    %6952 = vmatmul.mubr.bf16.gmra.mxu0 %v6521
    %v6953 = vpop.f32.mrf.mxu0
    %v6954 = vadd.f32 0.001, %v6953
    %v6955 = vpop.f32.mrf.mxu0
    %v6956 = vpop.f32.mrf.mxu0
    %v6957 = vadd.f32 0.001, %v6956
    %v6958 = vpop.f32.mrf.mxu0
    %6959 = vmatprep.mubr.bf16.mxu0 0
    %6960 = vmatmul.mubr.bf16.gmra.mxu0 %v6524
    %v6961 = vpop.f32.mrf.mxu0
    %v6962 = vadd.f32 0.001, %v6961
    %v6963 = vpop.f32.mrf.mxu0
    %v6964 = vpop.f32.mrf.mxu0
    %v6965 = vadd.f32 0.001, %v6964
    %v6966 = vpop.f32.mrf.mxu0
    %6967 = vmatprep.mubr.bf16.mxu0 0
    %6968 = vmatmul.mubr.bf16.gmra.mxu0 %v6527
    %v6969 = vpop.f32.mrf.mxu0
    %v6970 = vadd.f32 0.001, %v6969
    %v6971 = vpop.f32.mrf.mxu0
    %v6972 = vpop.f32.mrf.mxu0
    %v6973 = vadd.f32 0.001, %v6972
    %v6974 = vpop.f32.mrf.mxu0
    %6975 = vmatprep.mubr.bf16.mxu0 0
    %6976 = vmatmul.mubr.bf16.gmra.mxu0 %v6530
    %v6977 = vpop.f32.mrf.mxu0
    %v6978 = vadd.f32 0.001, %v6977
    %v6979 = vpop.f32.mrf.mxu0
    %v6980 = vpop.f32.mrf.mxu0
    %v6981 = vadd.f32 0.001, %v6980
    %v6982 = vpop.f32.mrf.mxu0
    %6983 = vmatprep.mubr.bf16.mxu0 0
    %6984 = vmatmul.mubr.bf16.gmra.mxu0 %v6533
    %v6985 = vpop.f32.mrf.mxu0
    %v6986 = vadd.f32 0.001, %v6985
    %v6987 = vpop.f32.mrf.mxu0
    %v6988 = vpop.f32.mrf.mxu0
    %v6989 = vadd.f32 0.001, %v6988
    %v6990 = vpop.f32.mrf.mxu0
    %6991 = vmatprep.mubr.bf16.mxu0 0
    %6992 = vmatmul.mubr.bf16.gmra.mxu0 %v6536
    %v6993 = vpop.f32.mrf.mxu0
    %v6994 = vadd.f32 0.001, %v6993
    %v6995 = vpop.f32.mrf.mxu0
    %v6996 = vpop.f32.mrf.mxu0
    %v6997 = vadd.f32 0.001, %v6996
    %v6998 = vpop.f32.mrf.mxu0
    %6999 = vmatprep.mubr.bf16.mxu0 0
    %7000 = vmatmul.mubr.bf16.gmra.mxu0 %v6539
    %v7001 = vpop.f32.mrf.mxu0
    %v7002 = vadd.f32 0.001, %v7001
    %v7003 = vpop.f32.mrf.mxu0
    %v7004 = vpop.f32.mrf.mxu0
    %v7005 = vadd.f32 0.001, %v7004
    %v7006 = vpop.f32.mrf.mxu0
    %7007 = vmatprep.mubr.bf16.mxu0 0
    %7008 = vmatmul.mubr.bf16.gmra.mxu0 %v6542
    %v7009 = vpop.f32.mrf.mxu0
    %v7010 = vadd.f32 0.001, %v7009
    %v7011 = vpop.f32.mrf.mxu0
    %v7012 = vpop.f32.mrf.mxu0
    %v7013 = vadd.f32 0.001, %v7012
    %v7014 = vpop.f32.mrf.mxu0
    %7015 = vmatprep.mubr.bf16.mxu0 0
    %7016 = vmatmul.mubr.bf16.gmra.mxu0 %v6545
    %v7017 = vpop.f32.mrf.mxu0
    %v7018 = vadd.f32 0.001, %v7017
    %v7019 = vpop.f32.mrf.mxu0
    %v7020 = vpop.f32.mrf.mxu0
    %v7021 = vadd.f32 0.001, %v7020
    %v7022 = vpop.f32.mrf.mxu0
    %7023 = vmatprep.mubr.bf16.mxu0 0
    %7024 = vmatmul.mubr.bf16.gmra.mxu0 %v6548
    %v7025 = vpop.f32.mrf.mxu0
    %v7026 = vadd.f32 0.001, %v7025
    %v7027 = vpop.f32.mrf.mxu0
    %v7028 = vpop.f32.mrf.mxu0
    %v7029 = vadd.f32 0.001, %v7028
    %v7030 = vpop.f32.mrf.mxu0
    %7031 = vmatprep.mubr.bf16.mxu0 0
    %7032 = vmatmul.mubr.bf16.gmra.mxu0 %v6551
    %v7033 = vpop.f32.mrf.mxu0
    %v7034 = vadd.f32 0.001, %v7033
    %v7035 = vpop.f32.mrf.mxu0
    %v7036 = vpop.f32.mrf.mxu0
    %v7037 = vadd.f32 0.001, %v7036
    %v7038 = vpop.f32.mrf.mxu0
    %7039 = vmatprep.mubr.bf16.mxu0 0
    %7040 = vmatmul.mubr.bf16.gmra.mxu0 %v6554
    %v7041 = vpop.f32.mrf.mxu0
    %v7042 = vadd.f32 0.001, %v7041
    %v7043 = vpop.f32.mrf.mxu0
    %v7044 = vpop.f32.mrf.mxu0
    %v7045 = vadd.f32 0.001, %v7044
    %v7046 = vpop.f32.mrf.mxu0
    %7047 = vmatprep.mubr.bf16.mxu0 0
    %7048 = vmatmul.mubr.bf16.gmra.mxu0 %v6557
    %v7049 = vpop.f32.mrf.mxu0
    %v7050 = vadd.f32 0.001, %v7049
    %v7051 = vpop.f32.mrf.mxu0
    %v7052 = vpop.f32.mrf.mxu0
    %v7053 = vadd.f32 0.001, %v7052
    %v7054 = vpop.f32.mrf.mxu0
    %7055 = vmatprep.mubr.bf16.mxu0 0
    %7056 = vmatmul.mubr.bf16.gmra.mxu0 %v6560
    %v7057 = vpop.f32.mrf.mxu0
    %v7058 = vadd.f32 0.001, %v7057
    %v7059 = vpop.f32.mrf.mxu0
    %v7060 = vpop.f32.mrf.mxu0
    %v7061 = vadd.f32 0.001, %v7060
    %v7062 = vpop.f32.mrf.mxu0
    %7063 = vmatprep.mubr.bf16.mxu0 0
    %7064 = vmatmul.mubr.bf16.gmra.mxu0 %v6563
    %v7065 = vpop.f32.mrf.mxu0
    %v7066 = vadd.f32 0.001, %v7065
    %v7067 = vpop.f32.mrf.mxu0
    %v7068 = vpop.f32.mrf.mxu0
    %v7069 = vadd.f32 0.001, %v7068
    %v7070 = vpop.f32.mrf.mxu0
    %7071 = vmatprep.mubr.bf16.mxu0 0
    %7072 = vmatmul.mubr.bf16.gmra.mxu0 %v6566
    %v7073 = vpop.f32.mrf.mxu0
    %v7074 = vadd.f32 0.001, %v7073
    %v7075 = vpop.f32.mrf.mxu0
    %v7076 = vpop.f32.mrf.mxu0
    %v7077 = vadd.f32 0.001, %v7076
    %v7078 = vpop.f32.mrf.mxu0
    %7079 = vmatprep.mubr.bf16.mxu0 0
    %7080 = vmatmul.mubr.bf16.gmra.mxu0 %v6569
    %v7081 = vpop.f32.mrf.mxu0
    %v7082 = vadd.f32 0.001, %v7081
    %v7083 = vpop.f32.mrf.mxu0
    %v7084 = vpop.f32.mrf.mxu0
    %v7085 = vadd.f32 0.001, %v7084
    %v7086 = vpop.f32.mrf.mxu0
    %7087 = vmatprep.mubr.bf16.mxu0 0
    %7088 = vmatmul.mubr.bf16.gmra.mxu0 %v6572
    %v7089 = vpop.f32.mrf.mxu0
    %v7090 = vadd.f32 0.001, %v7089
    %v7091 = vpop.f32.mrf.mxu0
    %v7092 = vpop.f32.mrf.mxu0
    %v7093 = vadd.f32 0.001, %v7092
    %v7094 = vpop.f32.mrf.mxu0
    %7095 = vmatprep.mubr.bf16.mxu0 0
    %7096 = vmatmul.mubr.bf16.gmra.mxu0 %v6575
    %v7097 = vpop.f32.mrf.mxu0
    %v7098 = vadd.f32 0.001, %v7097
    %v7099 = vpop.f32.mrf.mxu0
    %v7100 = vpop.f32.mrf.mxu0
    %v7101 = vadd.f32 0.001, %v7100
    %v7102 = vpop.f32.mrf.mxu0
    %7103 = vmatprep.mubr.bf16.mxu0 0
    %7104 = vmatmul.mubr.bf16.gmra.mxu0 %v6578
    %v7105 = vpop.f32.mrf.mxu0
    %v7106 = vadd.f32 0.001, %v7105
    %v7107 = vpop.f32.mrf.mxu0
    %v7108 = vpop.f32.mrf.mxu0
    %v7109 = vadd.f32 0.001, %v7108
    %v7110 = vpop.f32.mrf.mxu0
    %7111 = vmatprep.mubr.bf16.mxu0 0
    %7112 = vmatmul.mubr.bf16.gmra.mxu0 %v6581
    %v7113 = vpop.f32.mrf.mxu0
    %v7114 = vadd.f32 0.001, %v7113
    %v7115 = vpop.f32.mrf.mxu0
    %v7116 = vpop.f32.mrf.mxu0
    %v7117 = vadd.f32 0.001, %v7116
    %v7118 = vpop.f32.mrf.mxu0
    %7119 = vmatprep.mubr.bf16.mxu0 0
    %7120 = vmatmul.mubr.bf16.gmra.mxu0 %v6584
    %v7121 = vpop.f32.mrf.mxu0
    %v7122 = vadd.f32 0.001, %v7121
    %v7123 = vpop.f32.mrf.mxu0
    %v7124 = vpop.f32.mrf.mxu0
    %v7125 = vadd.f32 0.001, %v7124
    %v7126 = vpop.f32.mrf.mxu0
    %7127 = vmatprep.mubr.bf16.mxu0 0
    %7128 = vmatmul.mubr.bf16.gmra.mxu0 %v6587
    %v7129 = vpop.f32.mrf.mxu0
    %v7130 = vadd.f32 0.001, %v7129
    %v7131 = vpop.f32.mrf.mxu0
    %v7132 = vpop.f32.mrf.mxu0
    %v7133 = vadd.f32 0.001, %v7132
    %v7134 = vpop.f32.mrf.mxu0
    %7135 = vmatprep.mubr.bf16.mxu0 0
    %7136 = vmatmul.mubr.bf16.gmra.mxu0 %v6590
    %v7137 = vpop.f32.mrf.mxu0
    %v7138 = vadd.f32 0.001, %v7137
    %v7139 = vpop.f32.mrf.mxu0
    %v7140 = vpop.f32.mrf.mxu0
    %v7141 = vadd.f32 0.001, %v7140
    %v7142 = vpop.f32.mrf.mxu0
    %7143 = vmatprep.mubr.bf16.mxu0 0
    %7144 = vmatmul.mubr.bf16.gmra.mxu0 %v6593
    %v7145 = vpop.f32.mrf.mxu0
    %v7146 = vadd.f32 0.001, %v7145
    %v7147 = vpop.f32.mrf.mxu0
    %v7148 = vpop.f32.mrf.mxu0
    %v7149 = vadd.f32 0.001, %v7148
    %v7150 = vpop.f32.mrf.mxu0
    %7151 = vmatprep.mubr.bf16.mxu0 0
    %7152 = vmatmul.mubr.bf16.gmra.mxu0 %v6596
    %v7153 = vpop.f32.mrf.mxu0
    %v7154 = vadd.f32 0.001, %v7153
    %v7155 = vpop.f32.mrf.mxu0
    %v7156 = vpop.f32.mrf.mxu0
    %v7157 = vadd.f32 0.001, %v7156
    %v7158 = vpop.f32.mrf.mxu0
    %7159 = vmatprep.mubr.bf16.mxu0 0
    %7160 = vmatmul.mubr.bf16.gmra.mxu0 %v6599
    %v7161 = vpop.f32.mrf.mxu0
    %v7162 = vadd.f32 0.001, %v7161
    %v7163 = vpop.f32.mrf.mxu0
    %v7164 = vpop.f32.mrf.mxu0
    %v7165 = vadd.f32 0.001, %v7164
    %v7166 = vpop.f32.mrf.mxu0
    %7167 = vmatprep.mubr.bf16.mxu0 0
    %7168 = vmatmul.mubr.bf16.gmra.mxu0 %v6602
    %v7169 = vpop.f32.mrf.mxu0
    %v7170 = vadd.f32 0.001, %v7169
    %v7171 = vpop.f32.mrf.mxu0
    %v7172 = vpop.f32.mrf.mxu0
    %v7173 = vadd.f32 0.001, %v7172
    %v7174 = vpop.f32.mrf.mxu0
    %7175 = vmatprep.mubr.bf16.mxu0 0
    %7176 = vmatmul.mubr.bf16.gmra.mxu0 %v6605
    %v7177 = vpop.f32.mrf.mxu0
    %v7178 = vadd.f32 0.001, %v7177
    %v7179 = vpop.f32.mrf.mxu0
    %v7180 = vpop.f32.mrf.mxu0
    %v7181 = vadd.f32 0.001, %v7180
    %v7182 = vpop.f32.mrf.mxu0
    %7183 = vmatprep.mubr.bf16.mxu0 0
    %7184 = vmatmul.mubr.bf16.gmra.mxu0 %v6608
    %v7185 = vpop.f32.mrf.mxu0
    %v7186 = vadd.f32 0.001, %v7185
    %v7187 = vpop.f32.mrf.mxu0
    %v7188 = vpop.f32.mrf.mxu0
    %v7189 = vadd.f32 0.001, %v7188
    %v7190 = vpop.f32.mrf.mxu0
    %7191 = vmatprep.mubr.bf16.mxu0 0
    %7192 = vmatmul.mubr.bf16.gmra.mxu0 %v6611
    %v7193 = vpop.f32.mrf.mxu0
    %v7194 = vadd.f32 0.001, %v7193
    %v7195 = vpop.f32.mrf.mxu0
    %v7196 = vpop.f32.mrf.mxu0
    %v7197 = vadd.f32 0.001, %v7196
    %v7198 = vpop.f32.mrf.mxu0
    %7199 = vmatprep.mubr.bf16.mxu0 0
    %7200 = vmatmul.mubr.bf16.gmra.mxu0 %v6614
    %v7201 = vpop.f32.mrf.mxu0
    %v7202 = vadd.f32 0.001, %v7201
    %v7203 = vpop.f32.mrf.mxu0
    %v7204 = vpop.f32.mrf.mxu0
    %v7205 = vadd.f32 0.001, %v7204
    %v7206 = vpop.f32.mrf.mxu0
    %7207 = vmatprep.mubr.bf16.mxu0 0
    %7208 = vmatmul.mubr.bf16.gmra.mxu0 %v6617
    %v7209 = vpop.f32.mrf.mxu0
    %v7210 = vadd.f32 0.001, %v7209
    %v7211 = vpop.f32.mrf.mxu0
    %v7212 = vpop.f32.mrf.mxu0
    %v7213 = vadd.f32 0.001, %v7212
    %v7214 = vpop.f32.mrf.mxu0
    %7215 = vmatprep.mubr.bf16.mxu0 0
    %7216 = vmatmul.mubr.bf16.gmra.mxu0 %v6620
    %v7217 = vpop.f32.mrf.mxu0
    %v7218 = vadd.f32 0.001, %v7217
    %v7219 = vpop.f32.mrf.mxu0
    %v7220 = vpop.f32.mrf.mxu0
    %v7221 = vadd.f32 0.001, %v7220
    %v7222 = vpop.f32.mrf.mxu0
    %7223 = vmatprep.mubr.bf16.mxu0 0
    %7224 = vmatmul.mubr.bf16.gmra.mxu0 %v6623
    %v7225 = vpop.f32.mrf.mxu0
    %v7226 = vadd.f32 0.001, %v7225
    %v7227 = vpop.f32.mrf.mxu0
    %v7228 = vpop.f32.mrf.mxu0
    %v7229 = vadd.f32 0.001, %v7228
    %v7230 = vpop.f32.mrf.mxu0
    %7231 = vmatprep.mubr.bf16.mxu0 0
    %7232 = vmatmul.mubr.bf16.gmra.mxu0 %v6626
    %v7233 = vpop.f32.mrf.mxu0
    %v7234 = vadd.f32 0.001, %v7233
    %v7235 = vpop.f32.mrf.mxu0
    %v7236 = vpop.f32.mrf.mxu0
    %v7237 = vadd.f32 0.001, %v7236
    %v7238 = vpop.f32.mrf.mxu0
    %7239 = vmatprep.mubr.bf16.mxu0 0
    %7240 = vmatmul.mubr.bf16.gmra.mxu0 %v6629
    %v7241 = vpop.f32.mrf.mxu0
    %v7242 = vadd.f32 0.001, %v7241
    %v7243 = vpop.f32.mrf.mxu0
    %v7244 = vpop.f32.mrf.mxu0
    %v7245 = vadd.f32 0.001, %v7244
    %v7246 = vpop.f32.mrf.mxu0
    %7247 = vmatprep.mubr.bf16.mxu0 0
    %7248 = vmatmul.mubr.bf16.gmra.mxu0 %v6632
    %v7249 = vpop.f32.mrf.mxu0
    %v7250 = vadd.f32 0.001, %v7249
    %v7251 = vpop.f32.mrf.mxu0
    %v7252 = vpop.f32.mrf.mxu0
    %v7253 = vadd.f32 0.001, %v7252
    %v7254 = vpop.f32.mrf.mxu0
    %7255 = vmatprep.mubr.bf16.mxu0 0
    %7256 = vmatmul.mubr.bf16.gmra.mxu0 %v6635
    %v7257 = vpop.f32.mrf.mxu0
    %v7258 = vadd.f32 0.001, %v7257
    %v7259 = vpop.f32.mrf.mxu0
    %v7260 = vpop.f32.mrf.mxu0
    %v7261 = vadd.f32 0.001, %v7260
    %v7262 = vpop.f32.mrf.mxu0
    %7263 = vmatprep.mubr.bf16.mxu0 0
    %7264 = vmatmul.mubr.bf16.gmra.mxu0 %v6638
    %v7265 = vpop.f32.mrf.mxu0
    %v7266 = vadd.f32 0.001, %v7265
    %v7267 = vpop.f32.mrf.mxu0
    %v7268 = vpop.f32.mrf.mxu0
    %v7269 = vadd.f32 0.001, %v7268
    %v7270 = vpop.f32.mrf.mxu0
    %7271 = vmatprep.mubr.bf16.mxu0 0
    %7272 = vmatmul.mubr.bf16.gmra.mxu0 %v6641
    %v7273 = vpop.f32.mrf.mxu0
    %v7274 = vadd.f32 0.001, %v7273
    %v7275 = vpop.f32.mrf.mxu0
    %v7276 = vpop.f32.mrf.mxu0
    %v7277 = vadd.f32 0.001, %v7276
    %v7278 = vpop.f32.mrf.mxu0
    %7279 = vmatprep.mubr.bf16.mxu0 0
    %7280 = vmatmul.mubr.bf16.gmra.mxu0 %v6644
    %v7281 = vpop.f32.mrf.mxu0
    %v7282 = vadd.f32 0.001, %v7281
    %v7283 = vpop.f32.mrf.mxu0
    %v7284 = vpop.f32.mrf.mxu0
    %v7285 = vadd.f32 0.001, %v7284
    %v7286 = vpop.f32.mrf.mxu0
    %7287 = vmatprep.mubr.bf16.mxu0 0
    %7288 = vmatmul.mubr.bf16.gmra.mxu0 %v6647
    %v7289 = vpop.f32.mrf.mxu0
    %v7290 = vadd.f32 0.001, %v7289
    %v7291 = vpop.f32.mrf.mxu0
    %v7292 = vpop.f32.mrf.mxu0
    %v7293 = vadd.f32 0.001, %v7292
    %v7294 = vpop.f32.mrf.mxu0
    %7295 = vmatprep.mubr.bf16.mxu0 0
    %7296 = vmatmul.mubr.bf16.gmra.mxu0 %v6650
    %v7297 = vpop.f32.mrf.mxu0
    %v7298 = vadd.f32 0.001, %v7297
    %v7299 = vpop.f32.mrf.mxu0
    %v7300 = vpop.f32.mrf.mxu0
    %v7301 = vadd.f32 0.001, %v7300
    %v7302 = vpop.f32.mrf.mxu0
    %7303 = vmatprep.mubr.bf16.mxu0 0
    %7304 = vmatmul.mubr.bf16.gmra.mxu0 %v6653
    %v7305 = vpop.f32.mrf.mxu0
    %v7306 = vadd.f32 0.001, %v7305
    %v7307 = vpop.f32.mrf.mxu0
    %v7308 = vpop.f32.mrf.mxu0
    %v7309 = vadd.f32 0.001, %v7308
    %v7310 = vpop.f32.mrf.mxu0
    %7311 = vmatprep.mubr.bf16.mxu0 0
    %7312 = vmatmul.mubr.bf16.gmra.mxu0 %v6656
    %v7313 = vpop.f32.mrf.mxu0
    %v7314 = vadd.f32 0.001, %v7313
    %v7315 = vpop.f32.mrf.mxu0
    %v7316 = vpop.f32.mrf.mxu0
    %v7317 = vadd.f32 0.001, %v7316
    %v7318 = vpop.f32.mrf.mxu0
    %7319 = vmatprep.mubr.bf16.mxu0 0
    %7320 = vmatmul.mubr.bf16.gmra.mxu0 %v6659
    %v7321 = vpop.f32.mrf.mxu0
    %v7322 = vadd.f32 0.001, %v7321
    %v7323 = vpop.f32.mrf.mxu0
    %v7324 = vpop.f32.mrf.mxu0
    %v7325 = vadd.f32 0.001, %v7324
    %v7326 = vpop.f32.mrf.mxu0
    %7327 = vmatprep.mubr.bf16.mxu0 0
    %7328 = vmatmul.mubr.bf16.gmra.mxu0 %v6662
    %v7329 = vpop.f32.mrf.mxu0
    %v7330 = vadd.f32 0.001, %v7329
    %v7331 = vpop.f32.mrf.mxu0
    %v7332 = vpop.f32.mrf.mxu0
    %v7333 = vadd.f32 0.001, %v7332
    %v7334 = vpop.f32.mrf.mxu0
    %7335 = vmatprep.mubr.bf16.mxu0 0
    %7336 = vmatmul.mubr.bf16.gmra.mxu0 %v6665
    %v7337 = vpop.f32.mrf.mxu0
    %v7338 = vadd.f32 0.001, %v7337
    %v7339 = vpop.f32.mrf.mxu0
    %v7340 = vpop.f32.mrf.mxu0
    %v7341 = vadd.f32 0.001, %v7340
    %v7342 = vpop.f32.mrf.mxu0
    %7343 = vmatprep.mubr.bf16.mxu0 0
    %7344 = vmatmul.mubr.bf16.gmra.mxu0 %v6668
    %v7345 = vpop.f32.mrf.mxu0
    %v7346 = vadd.f32 0.001, %v7345
    %v7347 = vpop.f32.mrf.mxu0
    %v7348 = vpop.f32.mrf.mxu0
    %v7349 = vadd.f32 0.001, %v7348
    %v7350 = vpop.f32.mrf.mxu0
    %7351 = vmatprep.mubr.bf16.mxu0 0
    %7352 = vmatmul.mubr.bf16.gmra.mxu0 %v6671
    %v7353 = vpop.f32.mrf.mxu0
    %v7354 = vadd.f32 0.001, %v7353
    %v7355 = vpop.f32.mrf.mxu0
    %v7356 = vpop.f32.mrf.mxu0
    %v7357 = vadd.f32 0.001, %v7356
    %v7358 = vpop.f32.mrf.mxu0
    %7359 = vmatprep.mubr.bf16.mxu0 0
    %7360 = vmatmul.mubr.bf16.gmra.mxu0 %v6674
    %v7361 = vpop.f32.mrf.mxu0
    %v7362 = vadd.f32 0.001, %v7361
    %v7363 = vpop.f32.mrf.mxu0
    %v7364 = vpop.f32.mrf.mxu0
    %v7365 = vadd.f32 0.001, %v7364
    %v7366 = vpop.f32.mrf.mxu0
    %7367 = vmatprep.mubr.bf16.mxu0 0
    %7368 = vmatmul.mubr.bf16.gmra.mxu0 %v6677
    %v7369 = vpop.f32.mrf.mxu0
    %v7370 = vadd.f32 0.001, %v7369
    %v7371 = vpop.f32.mrf.mxu0
    %v7372 = vpop.f32.mrf.mxu0
    %v7373 = vadd.f32 0.001, %v7372
    %v7374 = vpop.f32.mrf.mxu0
    %7375 = vmatprep.mubr.bf16.mxu0 0
    %7376 = vmatmul.mubr.bf16.gmra.mxu0 %v6680
    %v7377 = vpop.f32.mrf.mxu0
    %v7378 = vadd.f32 0.001, %v7377
    %v7379 = vpop.f32.mrf.mxu0
    %v7380 = vpop.f32.mrf.mxu0
    %v7381 = vadd.f32 0.001, %v7380
    %v7382 = vpop.f32.mrf.mxu0
    %7383 = vmatprep.mubr.bf16.mxu0 0
    %7384 = vmatmul.mubr.bf16.gmra.mxu0 %v6683
    %v7385 = vpop.f32.mrf.mxu0
    %v7386 = vadd.f32 0.001, %v7385
    %v7387 = vpop.f32.mrf.mxu0
    %v7388 = vpop.f32.mrf.mxu0
    %v7389 = vadd.f32 0.001, %v7388
    %v7390 = vpop.f32.mrf.mxu0
    %7391 = vmatprep.mubr.bf16.mxu0 0
    %7392 = vmatmul.mubr.bf16.gmra.mxu0 %v6686
    %v7393 = vpop.f32.mrf.mxu0
    %v7394 = vadd.f32 0.001, %v7393
    %v7395 = vpop.f32.mrf.mxu0
    %v7396 = vpop.f32.mrf.mxu0
    %v7397 = vadd.f32 0.001, %v7396
    %v7398 = vpop.f32.mrf.mxu0
    %7399 = vmatprep.mubr.bf16.mxu0 0
    %7400 = vmatmul.mubr.bf16.gmra.mxu0 %v6689
    %v7401 = vpop.f32.mrf.mxu0
    %v7402 = vadd.f32 0.001, %v7401
    %v7403 = vpop.f32.mrf.mxu0
    %v7404 = vpop.f32.mrf.mxu0
    %v7405 = vadd.f32 0.001, %v7404
    %v7406 = vpop.f32.mrf.mxu0
    %7407 = vmatprep.mubr.bf16.mxu0 0
    %7408 = vmatmul.mubr.bf16.gmra.mxu0 %v6692
    %v7409 = vpop.f32.mrf.mxu0
    %v7410 = vadd.f32 0.001, %v7409
    %v7411 = vpop.f32.mrf.mxu0
    %v7412 = vpop.f32.mrf.mxu0
    %v7413 = vadd.f32 0.001, %v7412
    %v7414 = vpop.f32.mrf.mxu0
    %7415 = vmatprep.mubr.bf16.mxu0 0
    %7416 = vmatmul.mubr.bf16.gmra.mxu0 %v6695
    %v7417 = vpop.f32.mrf.mxu0
    %v7418 = vadd.f32 0.001, %v7417
    %v7419 = vpop.f32.mrf.mxu0
    %v7420 = vpop.f32.mrf.mxu0
    %v7421 = vadd.f32 0.001, %v7420
    %v7422 = vpop.f32.mrf.mxu0
    %7423 = vmatprep.mubr.bf16.mxu0 0
    %7424 = vmatmul.mubr.bf16.gmra.mxu0 %v6698
    %v7425 = vpop.f32.mrf.mxu0
    %v7426 = vadd.f32 0.001, %v7425
    %v7427 = vpop.f32.mrf.mxu0
    %v7428 = vpop.f32.mrf.mxu0
    %v7429 = vadd.f32 0.001, %v7428
    %v7430 = vpop.f32.mrf.mxu0
    %7431 = vmatprep.mubr.bf16.mxu0 0
    %7432 = vmatmul.mubr.bf16.gmra.mxu0 %v6701
    %v7433 = vpop.f32.mrf.mxu0
    %v7434 = vadd.f32 0.001, %v7433
    %v7435 = vpop.f32.mrf.mxu0
    %v7436 = vpop.f32.mrf.mxu0
    %v7437 = vadd.f32 0.001, %v7436
    %v7438 = vpop.f32.mrf.mxu0
    %7439 = vmatprep.mubr.bf16.mxu0 0
    %7440 = vmatmul.mubr.bf16.gmra.mxu0 %v6704
    %v7441 = vpop.f32.mrf.mxu0
    %v7442 = vadd.f32 0.001, %v7441
    %v7443 = vpop.f32.mrf.mxu0
    %v7444 = vpop.f32.mrf.mxu0
    %v7445 = vadd.f32 0.001, %v7444
    %v7446 = vpop.f32.mrf.mxu0
    %7447 = vmatprep.mubr.bf16.mxu0 0
    %7448 = vmatmul.mubr.bf16.gmra.mxu0 %v6707
    %v7449 = vpop.f32.mrf.mxu0
    %v7450 = vadd.f32 0.001, %v7449
    %v7451 = vpop.f32.mrf.mxu0
    %v7452 = vpop.f32.mrf.mxu0
    %v7453 = vadd.f32 0.001, %v7452
    %v7454 = vpop.f32.mrf.mxu0
    %7455 = vmatprep.mubr.bf16.mxu0 0
    %7456 = vmatmul.mubr.bf16.gmra.mxu0 %v6710
    %v7457 = vpop.f32.mrf.mxu0
    %v7458 = vadd.f32 0.001, %v7457
    %v7459 = vpop.f32.mrf.mxu0
    %v7460 = vpop.f32.mrf.mxu0
    %v7461 = vadd.f32 0.001, %v7460
    %v7462 = vpop.f32.mrf.mxu0
    %7463 = vmatprep.mubr.bf16.mxu0 0
    %7464 = vmatmul.mubr.bf16.gmra.mxu0 %v6713
    %v7465 = vpop.f32.mrf.mxu0
    %v7466 = vadd.f32 0.001, %v7465
    %v7467 = vpop.f32.mrf.mxu0
    %v7468 = vpop.f32.mrf.mxu0
    %v7469 = vadd.f32 0.001, %v7468
    %v7470 = vpop.f32.mrf.mxu0
    %7471 = vmatprep.mubr.bf16.mxu0 0
    %7472 = vmatmul.mubr.bf16.gmra.mxu0 %v6716
    %v7473 = vpop.f32.mrf.mxu0
    %v7474 = vadd.f32 0.001, %v7473
    %v7475 = vpop.f32.mrf.mxu0
    %v7476 = vpop.f32.mrf.mxu0
    %v7477 = vadd.f32 0.001, %v7476
    %v7478 = vpop.f32.mrf.mxu0
    %7479 = vmatprep.mubr.bf16.mxu0 0
    %7480 = vmatmul.mubr.bf16.gmra.mxu0 %v6719
    %v7481 = vpop.f32.mrf.mxu0
    %v7482 = vadd.f32 0.001, %v7481
    %v7483 = vpop.f32.mrf.mxu0
    %v7484 = vpop.f32.mrf.mxu0
    %v7485 = vadd.f32 0.001, %v7484
    %v7486 = vpop.f32.mrf.mxu0
    %7487 = vmatprep.mubr.bf16.mxu0 0
    %7488 = vmatmul.mubr.bf16.gmra.mxu0 %v6722
    %v7489 = vpop.f32.mrf.mxu0
    %v7490 = vadd.f32 0.001, %v7489
    %v7491 = vpop.f32.mrf.mxu0
    %v7492 = vpop.f32.mrf.mxu0
    %v7493 = vadd.f32 0.001, %v7492
    %v7494 = vpop.f32.mrf.mxu0
    %7495 = vmatprep.mubr.bf16.mxu0 0
    %7496 = vmatmul.mubr.bf16.gmra.mxu0 %v6725
    %v7497 = vpop.f32.mrf.mxu0
    %v7498 = vadd.f32 0.001, %v7497
    %v7499 = vpop.f32.mrf.mxu0
    %v7500 = vpop.f32.mrf.mxu0
    %v7501 = vadd.f32 0.001, %v7500
    %v7502 = vpop.f32.mrf.mxu0
    %7503 = vmatprep.mubr.bf16.mxu0 0
    %7504 = vmatmul.mubr.bf16.gmra.mxu0 %v6728
    %v7505 = vpop.f32.mrf.mxu0
    %v7506 = vadd.f32 0.001, %v7505
    %v7507 = vpop.f32.mrf.mxu0
    %v7508 = vpop.f32.mrf.mxu0
    %v7509 = vadd.f32 0.001, %v7508
    %v7510 = vpop.f32.mrf.mxu0
    %7511 = vmatprep.mubr.bf16.mxu0 0
    %7512 = vmatmul.mubr.bf16.gmra.mxu0 %v6731
    %v7513 = vpop.f32.mrf.mxu0
    %v7514 = vadd.f32 0.001, %v7513
    %v7515 = vpop.f32.mrf.mxu0
    %v7516 = vpop.f32.mrf.mxu0
    %v7517 = vadd.f32 0.001, %v7516
    %v7518 = vpop.f32.mrf.mxu0
    %7519 = vmatprep.mubr.bf16.mxu0 0
    %7520 = vmatmul.mubr.bf16.gmra.mxu0 %v6734
    %v7521 = vpop.f32.mrf.mxu0
    %v7522 = vadd.f32 0.001, %v7521
    %v7523 = vpop.f32.mrf.mxu0
    %v7524 = vpop.f32.mrf.mxu0
    %v7525 = vadd.f32 0.001, %v7524
    %v7526 = vpop.f32.mrf.mxu0
    %7527 = vmatprep.mubr.bf16.mxu0 0
    %7528 = vmatmul.mubr.bf16.gmra.mxu0 %v6737
    %v7529 = vpop.f32.mrf.mxu0
    %v7530 = vadd.f32 0.001, %v7529
    %v7531 = vpop.f32.mrf.mxu0
    %v7532 = vpop.f32.mrf.mxu0
    %v7533 = vadd.f32 0.001, %v7532
    %v7534 = vpop.f32.mrf.mxu0
    %7535 = vmatprep.mubr.bf16.mxu0 0
    %7536 = vmatmul.mubr.bf16.gmra.mxu0 %v6740
    %v7537 = vpop.f32.mrf.mxu0
    %v7538 = vadd.f32 0.001, %v7537
    %v7539 = vpop.f32.mrf.mxu0
    %v7540 = vpop.f32.mrf.mxu0
    %v7541 = vadd.f32 0.001, %v7540
    %v7542 = vpop.f32.mrf.mxu0
    %7543 = vmatprep.mubr.bf16.mxu0 0
    %7544 = vmatmul.mubr.bf16.gmra.mxu0 %v6743
    %v7545 = vpop.f32.mrf.mxu0
    %v7546 = vadd.f32 0.001, %v7545
    %v7547 = vpop.f32.mrf.mxu0
    %v7548 = vpop.f32.mrf.mxu0
    %v7549 = vadd.f32 0.001, %v7548
    %v7550 = vpop.f32.mrf.mxu0
    %7551 = vmatprep.mubr.bf16.mxu0 0
    %7552 = vmatmul.mubr.bf16.gmra.mxu0 %v6746
    %v7553 = vpop.f32.mrf.mxu0
    %v7554 = vadd.f32 0.001, %v7553
    %v7555 = vpop.f32.mrf.mxu0
    %v7556 = vpop.f32.mrf.mxu0
    %v7557 = vadd.f32 0.001, %v7556
    %v7558 = vpop.f32.mrf.mxu0
    %7559 = vmatprep.mubr.bf16.mxu0 0
    %7560 = vmatmul.mubr.bf16.gmra.mxu0 %v6749
    %v7561 = vpop.f32.mrf.mxu0
    %v7562 = vadd.f32 0.001, %v7561
    %v7563 = vpop.f32.mrf.mxu0
    %v7564 = vpop.f32.mrf.mxu0
    %v7565 = vadd.f32 0.001, %v7564
    %v7566 = vpop.f32.mrf.mxu0
    %7567 = vmatprep.mubr.bf16.mxu0 0
    %7568 = vmatmul.mubr.bf16.gmra.mxu0 %v6752
    %v7569 = vpop.f32.mrf.mxu0
    %v7570 = vadd.f32 0.001, %v7569
    %v7571 = vpop.f32.mrf.mxu0
    %v7572 = vpop.f32.mrf.mxu0
    %v7573 = vadd.f32 0.001, %v7572
    %v7574 = vpop.f32.mrf.mxu0
    %7575 = vmatprep.mubr.bf16.mxu0 0
    %7576 = vmatmul.mubr.bf16.gmra.mxu0 %v6755
    %v7577 = vpop.f32.mrf.mxu0
    %v7578 = vadd.f32 0.001, %v7577
    %v7579 = vpop.f32.mrf.mxu0
    %v7580 = vpop.f32.mrf.mxu0
    %v7581 = vadd.f32 0.001, %v7580
    %v7582 = vpop.f32.mrf.mxu0
    %7583 = vmatprep.mubr.bf16.mxu0 0
    %7584 = vmatmul.mubr.bf16.gmra.mxu0 %v6758
    %v7585 = vpop.f32.mrf.mxu0
    %v7586 = vadd.f32 0.001, %v7585
    %v7587 = vpop.f32.mrf.mxu0
    %v7588 = vpop.f32.mrf.mxu0
    %v7589 = vadd.f32 0.001, %v7588
    %v7590 = vpop.f32.mrf.mxu0
    %7591 = vmatprep.mubr.bf16.mxu0 0
    %7592 = vmatmul.mubr.bf16.gmra.mxu0 %v6761
    %v7593 = vpop.f32.mrf.mxu0
    %v7594 = vadd.f32 0.001, %v7593
    %v7595 = vpop.f32.mrf.mxu0
    %v7596 = vpop.f32.mrf.mxu0
    %v7597 = vadd.f32 0.001, %v7596
    %v7598 = vpop.f32.mrf.mxu0
    %7599 = vmatprep.mubr.bf16.mxu0 0
    %7600 = vmatmul.mubr.bf16.gmra.mxu0 %v6764
    %v7601 = vpop.f32.mrf.mxu0
    %v7602 = vadd.f32 0.001, %v7601
    %v7603 = vpop.f32.mrf.mxu0
    %v7604 = vpop.f32.mrf.mxu0
    %v7605 = vadd.f32 0.001, %v7604
    %v7606 = vpop.f32.mrf.mxu0
    %7607 = vmatprep.mubr.bf16.mxu0 0
    %7608 = vmatmul.mubr.bf16.gmra.mxu0 %v6767
    %v7609 = vpop.f32.mrf.mxu0
    %v7610 = vadd.f32 0.001, %v7609
    %v7611 = vpop.f32.mrf.mxu0
    %v7612 = vpop.f32.mrf.mxu0
    %v7613 = vadd.f32 0.001, %v7612
    %v7614 = vpop.f32.mrf.mxu0
    %7615 = vmatprep.mubr.bf16.mxu0 0
    %7616 = vmatmul.mubr.bf16.gmra.mxu0 %v6770
    %v7617 = vpop.f32.mrf.mxu0
    %v7618 = vadd.f32 0.001, %v7617
    %v7619 = vpop.f32.mrf.mxu0
    %v7620 = vpop.f32.mrf.mxu0
    %v7621 = vadd.f32 0.001, %v7620
    %v7622 = vpop.f32.mrf.mxu0
    %7623 = vmatprep.mubr.bf16.mxu0 0
    %7624 = vmatmul.mubr.bf16.gmra.mxu0 %v6773
    %v7625 = vpop.f32.mrf.mxu0
    %v7626 = vadd.f32 0.001, %v7625
    %v7627 = vpop.f32.mrf.mxu0
    %v7628 = vpop.f32.mrf.mxu0
    %v7629 = vadd.f32 0.001, %v7628
    %v7630 = vpop.f32.mrf.mxu0
    %7631 = vmatprep.mubr.bf16.mxu0 0
    %7632 = vmatmul.mubr.bf16.gmra.mxu0 %v6776
    %v7633 = vpop.f32.mrf.mxu0
    %v7634 = vadd.f32 0.001, %v7633
    %v7635 = vpop.f32.mrf.mxu0
    %v7636 = vpop.f32.mrf.mxu0
    %v7637 = vadd.f32 0.001, %v7636
    %v7638 = vpop.f32.mrf.mxu0
    %7639 = vmatprep.mubr.bf16.mxu0 0
    %7640 = vmatmul.mubr.bf16.gmra.mxu0 %v6779
    %v7641 = vpop.f32.mrf.mxu0
    %v7642 = vadd.f32 0.001, %v7641
    %v7643 = vpop.f32.mrf.mxu0
    %v7644 = vpop.f32.mrf.mxu0
    %v7645 = vadd.f32 0.001, %v7644
    %v7646 = vpop.f32.mrf.mxu0
    %7647 = vmatprep.mubr.bf16.mxu0 0
    %7648 = vmatmul.mubr.bf16.gmra.mxu0 %v6782
    %v7649 = vpop.f32.mrf.mxu0
    %v7650 = vadd.f32 0.001, %v7649
    %v7651 = vpop.f32.mrf.mxu0
    %v7652 = vpop.f32.mrf.mxu0
    %v7653 = vadd.f32 0.001, %v7652
    %v7654 = vpop.f32.mrf.mxu0
    %7655 = vmatprep.mubr.bf16.mxu0 0
    %7656 = vmatmul.mubr.bf16.gmra.mxu0 %v6785
    %v7657 = vpop.f32.mrf.mxu0
    %v7658 = vadd.f32 0.001, %v7657
    %v7659 = vpop.f32.mrf.mxu0
    %v7660 = vpop.f32.mrf.mxu0
    %v7661 = vadd.f32 0.001, %v7660
    %v7662 = vpop.f32.mrf.mxu0
    %7663 = vmatprep.mubr.bf16.mxu0 0
    %7664 = vmatmul.mubr.bf16.gmra.mxu0 %v6788
    %v7665 = vpop.f32.mrf.mxu0
    %v7666 = vadd.f32 0.001, %v7665
    %v7667 = vpop.f32.mrf.mxu0
    %v7668 = vpop.f32.mrf.mxu0
    %v7669 = vadd.f32 0.001, %v7668
    %v7670 = vpop.f32.mrf.mxu0
    %7671 = vmatprep.mubr.bf16.mxu0 0
    %7672 = vmatmul.mubr.bf16.gmra.mxu0 %v6791
    %v7673 = vpop.f32.mrf.mxu0
    %v7674 = vadd.f32 0.001, %v7673
    %v7675 = vpop.f32.mrf.mxu0
    %v7676 = vpop.f32.mrf.mxu0
    %v7677 = vadd.f32 0.001, %v7676
    %v7678 = vpop.f32.mrf.mxu0
    %7679 = vmatprep.mubr.bf16.mxu0 0
    %7680 = vmatmul.mubr.bf16.gmra.mxu0 %v6794
    %v7681 = vpop.f32.mrf.mxu0
    %v7682 = vadd.f32 0.001, %v7681
    %v7683 = vpop.f32.mrf.mxu0
    %v7684 = vpop.f32.mrf.mxu0
    %v7685 = vadd.f32 0.001, %v7684
    %v7686 = vpop.f32.mrf.mxu0
    %7687 = vmatprep.mubr.bf16.mxu0 0
    %7688 = vmatmul.mubr.bf16.gmra.mxu0 %v6797
    %v7689 = vpop.f32.mrf.mxu0
    %v7690 = vadd.f32 0.001, %v7689
    %v7691 = vpop.f32.mrf.mxu0
    %v7692 = vpop.f32.mrf.mxu0
    %v7693 = vadd.f32 0.001, %v7692
    %v7694 = vpop.f32.mrf.mxu0
    %7695 = vmatprep.mubr.bf16.mxu0 0
    %7696 = vmatmul.mubr.bf16.gmra.mxu0 %v6800
    %v7697 = vpop.f32.mrf.mxu0
    %v7698 = vadd.f32 0.001, %v7697
    %v7699 = vpop.f32.mrf.mxu0
    %v7700 = vpop.f32.mrf.mxu0
    %v7701 = vadd.f32 0.001, %v7700
    %v7702 = vpop.f32.mrf.mxu0
    %7703 = vmatprep.mubr.bf16.mxu0 0
    %7704 = vmatmul.mubr.bf16.gmra.mxu0 %v6803
    %v7705 = vpop.f32.mrf.mxu0
    %v7706 = vadd.f32 0.001, %v7705
    %v7707 = vpop.f32.mrf.mxu0
    %v7708 = vpop.f32.mrf.mxu0
    %v7709 = vadd.f32 0.001, %v7708
    %v7710 = vpop.f32.mrf.mxu0
    %7711 = vmatprep.mubr.bf16.mxu0 0
    %7712 = vmatmul.mubr.bf16.gmra.mxu0 %v6806
    %v7713 = vpop.f32.mrf.mxu0
    %v7714 = vadd.f32 0.001, %v7713
    %v7715 = vpop.f32.mrf.mxu0
    %v7716 = vpop.f32.mrf.mxu0
    %v7717 = vadd.f32 0.001, %v7716
    %v7718 = vpop.f32.mrf.mxu0
    %7719 = vmatprep.mubr.bf16.mxu0 0
    %7720 = vmatmul.mubr.bf16.gmra.mxu0 %v6809
    %v7721 = vpop.f32.mrf.mxu0
    %v7722 = vadd.f32 0.001, %v7721
    %v7723 = vpop.f32.mrf.mxu0
    %v7724 = vpop.f32.mrf.mxu0
    %v7725 = vadd.f32 0.001, %v7724
    %v7726 = vpop.f32.mrf.mxu0
    %7727 = vmatprep.mubr.bf16.mxu0 0
    %7728 = vmatmul.mubr.bf16.gmra.mxu0 %v6812
    %v7729 = vpop.f32.mrf.mxu0
    %v7730 = vadd.f32 0.001, %v7729
    %v7731 = vpop.f32.mrf.mxu0
    %v7732 = vpop.f32.mrf.mxu0
    %v7733 = vadd.f32 0.001, %v7732
    %v7734 = vpop.f32.mrf.mxu0
    %7735 = vmatprep.mubr.bf16.mxu0 0
    %7736 = vmatmul.mubr.bf16.gmra.mxu0 %v6815
    %v7737 = vpop.f32.mrf.mxu0
    %v7738 = vadd.f32 0.001, %v7737
    %v7739 = vpop.f32.mrf.mxu0
    %v7740 = vpop.f32.mrf.mxu0
    %v7741 = vadd.f32 0.001, %v7740
    %v7742 = vpop.f32.mrf.mxu0
    %7743 = vmatprep.mubr.bf16.mxu0 0
    %7744 = vmatmul.mubr.bf16.gmra.mxu0 %v6818
    %v7745 = vpop.f32.mrf.mxu0
    %v7746 = vadd.f32 0.001, %v7745
    %v7747 = vpop.f32.mrf.mxu0
    %v7748 = vpop.f32.mrf.mxu0
    %v7749 = vadd.f32 0.001, %v7748
    %v7750 = vpop.f32.mrf.mxu0
    %7751 = vmatprep.mubr.bf16.mxu0 0
    %7752 = vmatmul.mubr.bf16.gmra.mxu0 %v6821
    %v7753 = vpop.f32.mrf.mxu0
    %v7754 = vadd.f32 0.001, %v7753
    %v7755 = vpop.f32.mrf.mxu0
    %v7756 = vpop.f32.mrf.mxu0
    %v7757 = vadd.f32 0.001, %v7756
    %v7758 = vpop.f32.mrf.mxu0
    %7759 = vmatprep.mubr.bf16.mxu0 0
    %7760 = vmatmul.mubr.bf16.gmra.mxu0 %v6824
    %v7761 = vpop.f32.mrf.mxu0
    %v7762 = vadd.f32 0.001, %v7761
    %v7763 = vpop.f32.mrf.mxu0
    %v7764 = vpop.f32.mrf.mxu0
    %v7765 = vadd.f32 0.001, %v7764
    %v7766 = vpop.f32.mrf.mxu0
    %7767 = vmatprep.mubr.bf16.mxu0 0
    %7768 = vmatmul.mubr.bf16.gmra.mxu0 %v6827
    %v7769 = vpop.f32.mrf.mxu0
    %v7770 = vadd.f32 0.001, %v7769
    %v7771 = vpop.f32.mrf.mxu0
    %v7772 = vpop.f32.mrf.mxu0
    %v7773 = vadd.f32 0.001, %v7772
    %v7774 = vpop.f32.mrf.mxu0
    %7775 = vmatprep.mubr.bf16.mxu0 0
    %7776 = vmatmul.mubr.bf16.gmra.mxu0 %v6830
    %v7777 = vpop.f32.mrf.mxu0
    %v7778 = vadd.f32 0.001, %v7777
    %v7779 = vpop.f32.mrf.mxu0
    %v7780 = vpop.f32.mrf.mxu0
    %v7781 = vadd.f32 0.001, %v7780
    %v7782 = vpop.f32.mrf.mxu0
    %7783 = vmatprep.mubr.bf16.mxu0 0
    %7784 = vmatmul.mubr.bf16.gmra.mxu0 %v6833
    %v7785 = vpop.f32.mrf.mxu0
    %v7786 = vadd.f32 0.001, %v7785
    %v7787 = vpop.f32.mrf.mxu0
    %v7788 = vpop.f32.mrf.mxu0
    %v7789 = vadd.f32 0.001, %v7788
    %v7790 = vpop.f32.mrf.mxu0
    %7791 = vmatprep.mubr.bf16.mxu0 0
    %7792 = vmatmul.mubr.bf16.gmra.mxu0 %v6836
    %v7793 = vpop.f32.mrf.mxu0
    %v7794 = vadd.f32 0.001, %v7793
    %v7795 = vpop.f32.mrf.mxu0
    %v7796 = vpop.f32.mrf.mxu0
    %v7797 = vadd.f32 0.001, %v7796
    %v7798 = vpop.f32.mrf.mxu0
    %7799 = vmatprep.mubr.bf16.mxu0 0
    %7800 = vmatmul.mubr.bf16.gmra.mxu0 %v6839
    %v7801 = vpop.f32.mrf.mxu0
    %v7802 = vadd.f32 0.001, %v7801
    %v7803 = vpop.f32.mrf.mxu0
    %v7804 = vpop.f32.mrf.mxu0
    %v7805 = vadd.f32 0.001, %v7804
    %v7806 = vpop.f32.mrf.mxu0
    %7807 = vmatprep.mubr.bf16.mxu0 0
    %7808 = vmatmul.mubr.bf16.gmra.mxu0 %v6842
    %v7809 = vpop.f32.mrf.mxu0
    %v7810 = vadd.f32 0.001, %v7809
    %v7811 = vpop.f32.mrf.mxu0
    %v7812 = vpop.f32.mrf.mxu0
    %v7813 = vadd.f32 0.001, %v7812
    %v7814 = vpop.f32.mrf.mxu0
    %7815 = vmatprep.mubr.bf16.mxu0 0
    %7816 = vmatmul.mubr.bf16.gmra.mxu0 %v6845
    %v7817 = vpop.f32.mrf.mxu0
    %v7818 = vadd.f32 0.001, %v7817
    %v7819 = vpop.f32.mrf.mxu0
    %v7820 = vpop.f32.mrf.mxu0
    %v7821 = vadd.f32 0.001, %v7820
    %v7822 = vpop.f32.mrf.mxu0
    %7823 = vmatprep.mubr.bf16.mxu0 0
    %7824 = vmatmul.mubr.bf16.gmra.mxu0 %v6848
    %v7825 = vpop.f32.mrf.mxu0
    %v7826 = vadd.f32 0.001, %v7825
    %v7827 = vpop.f32.mrf.mxu0
    %v7828 = vpop.f32.mrf.mxu0
    %v7829 = vadd.f32 0.001, %v7828
    %v7830 = vpop.f32.mrf.mxu0
    %7831 = vmatprep.mubr.bf16.mxu0 0
    %7832 = vmatmul.mubr.bf16.gmra.mxu0 %v6851
    %v7833 = vpop.f32.mrf.mxu0
    %v7834 = vadd.f32 0.001, %v7833
    %v7835 = vpop.f32.mrf.mxu0
    %v7836 = vpop.f32.mrf.mxu0
    %v7837 = vadd.f32 0.001, %v7836
    %v7838 = vpop.f32.mrf.mxu0
    %7839 = vmatprep.mubr.bf16.mxu0 0
    %7840 = vmatmul.mubr.bf16.gmra.mxu0 %v6854
    %v7841 = vpop.f32.mrf.mxu0
    %v7842 = vadd.f32 0.001, %v7841
    %v7843 = vpop.f32.mrf.mxu0
    %v7844 = vpop.f32.mrf.mxu0
    %v7845 = vadd.f32 0.001, %v7844
    %v7846 = vpop.f32.mrf.mxu0
    %7847 = vmatprep.mubr.bf16.mxu0 0
    %7848 = vmatmul.mubr.bf16.gmra.mxu0 %v6857
    %v7849 = vpop.f32.mrf.mxu0
    %v7850 = vadd.f32 0.001, %v7849
    %v7851 = vpop.f32.mrf.mxu0
    %v7852 = vpop.f32.mrf.mxu0
    %v7853 = vadd.f32 0.001, %v7852
    %v7854 = vpop.f32.mrf.mxu0
    %7855 = vmatprep.mubr.bf16.mxu0 0
    %7856 = vmatmul.mubr.bf16.gmra.mxu0 %v6860
    %v7857 = vpop.f32.mrf.mxu0
    %v7858 = vadd.f32 0.001, %v7857
    %v7859 = vpop.f32.mrf.mxu0
    %v7860 = vpop.f32.mrf.mxu0
    %v7861 = vadd.f32 0.001, %v7860
    %v7862 = vpop.f32.mrf.mxu0
    %7863 = vmatprep.mubr.bf16.mxu0 0
    %7864 = vmatmul.mubr.bf16.gmra.mxu0 %v6863
    %v7865 = vpop.f32.mrf.mxu0
    %v7866 = vadd.f32 0.001, %v7865
    %v7867 = vpop.f32.mrf.mxu0
    %v7868 = vpop.f32.mrf.mxu0
    %v7869 = vadd.f32 0.001, %v7868
    %v7870 = vpop.f32.mrf.mxu0
    %7871 = vmatprep.mubr.bf16.mxu0 0
    %7872 = vmatmul.mubr.bf16.gmra.mxu0 %v6866
    %v7873 = vpop.f32.mrf.mxu0
    %v7874 = vadd.f32 0.001, %v7873
    %v7875 = vpop.f32.mrf.mxu0
    %v7876 = vpop.f32.mrf.mxu0
    %v7877 = vadd.f32 0.001, %v7876
    %v7878 = vpop.f32.mrf.mxu0
    %7879 = vmatprep.mubr.bf16.mxu0 0
    %7880 = vmatmul.mubr.bf16.gmra.mxu0 %v6869
    %v7881 = vpop.f32.mrf.mxu0
    %v7882 = vadd.f32 0.001, %v7881
    %v7883 = vpop.f32.mrf.mxu0
    %v7884 = vpop.f32.mrf.mxu0
    %v7885 = vadd.f32 0.001, %v7884
    %v7886 = vpop.f32.mrf.mxu0
    %7887 = vmatprep.mubr.bf16.mxu0 0
    %7888 = vmatmul.mubr.bf16.gmra.mxu0 %v6872
    %v7889 = vpop.f32.mrf.mxu0
    %v7890 = vadd.f32 0.001, %v7889
    %v7891 = vpop.f32.mrf.mxu0
    %v7892 = vpop.f32.mrf.mxu0
    %v7893 = vadd.f32 0.001, %v7892
    %v7894 = vpop.f32.mrf.mxu0
    %7895 = vmatprep.mubr.bf16.mxu0 0
    %7896 = vmatmul.mubr.bf16.gmra.mxu0 %v6875
    %v7897 = vpop.f32.mrf.mxu0
    %v7898 = vadd.f32 0.001, %v7897
    %v7899 = vpop.f32.mrf.mxu0
    %v7900 = vpop.f32.mrf.mxu0
    %v7901 = vadd.f32 0.001, %v7900
    %v7902 = vpop.f32.mrf.mxu0
    %7903 = vmatprep.mubr.bf16.mxu0 0
    %7904 = vmatmul.mubr.bf16.gmra.mxu0 %v6878
    %v7905 = vpop.f32.mrf.mxu0
    %v7906 = vadd.f32 0.001, %v7905
    %v7907 = vpop.f32.mrf.mxu0
    %v7908 = vpop.f32.mrf.mxu0
    %v7909 = vadd.f32 0.001, %v7908
    %v7910 = vpop.f32.mrf.mxu0
    %7911 = vmatprep.mubr.bf16.mxu0 0
    %7912 = vmatmul.mubr.bf16.gmra.mxu0 %v6881
    %v7913 = vpop.f32.mrf.mxu0
    %v7914 = vadd.f32 0.001, %v7913
    %v7915 = vpop.f32.mrf.mxu0
    %v7916 = vpop.f32.mrf.mxu0
    %v7917 = vadd.f32 0.001, %v7916
    %v7918 = vpop.f32.mrf.mxu0
    %7919 = vmatprep.mubr.bf16.mxu0 0
    %7920 = vmatmul.mubr.bf16.gmra.mxu0 %v6884
    %v7921 = vpop.f32.mrf.mxu0
    %v7922 = vadd.f32 0.001, %v7921
    %v7923 = vpop.f32.mrf.mxu0
    %v7924 = vpop.f32.mrf.mxu0
    %v7925 = vadd.f32 0.001, %v7924
    %v7926 = vpop.f32.mrf.mxu0
    %7927 = vmatprep.mubr.bf16.mxu0 0
    %7928 = vmatmul.mubr.bf16.gmra.mxu0 %v6887
    %v7929 = vpop.f32.mrf.mxu0
    %v7930 = vadd.f32 0.001, %v7929
    %v7931 = vpop.f32.mrf.mxu0
    %v7932 = vpop.f32.mrf.mxu0
    %v7933 = vadd.f32 0.001, %v7932
    %v7934 = vpop.f32.mrf.mxu0
    %7935 = vmatprep.mubr.bf16.mxu0 0
    %7936 = vmatmul.mubr.bf16.gmra.mxu0 %v6890
    %v7937 = vpop.f32.mrf.mxu0
    %v7938 = vadd.f32 0.001, %v7937
    %v7939 = vpop.f32.mrf.mxu0
    %v7940 = vpop.f32.mrf.mxu0
    %v7941 = vadd.f32 0.001, %v7940
    %v7942 = vpop.f32.mrf.mxu0
    %7943 = vmatprep.mubr.bf16.mxu0 0
    %7944 = vmatmul.mubr.bf16.gmra.mxu0 %v6893
    %v7945 = vpop.f32.mrf.mxu0
    %v7946 = vadd.f32 0.001, %v7945
    %v7947 = vpop.f32.mrf.mxu0
    %v7948 = vpop.f32.mrf.mxu0
    %v7949 = vadd.f32 0.001, %v7948
    %v7950 = vpop.f32.mrf.mxu0
    %7951 = vdwg.mxu0
    %v7952 = vlog2.pop %v6930
    %v7953 = vmul.f32 %v7952, 0.6931472
    %v7954 = vlog2.pop %v6933
    %v7955 = vmul.f32 %v7954, 0.6931472
    %v7956 = vlog2.pop %v6938
    %v7957 = vmul.f32 %v7956, 0.6931472
    %v7958 = vlog2.pop %v6941
    %v7959 = vmul.f32 %v7958, 0.6931472
    %v7960 = vlog2.pop %v6946
    %v7961 = vmul.f32 %v7960, 0.6931472
    %v7962 = vlog2.pop %v6949
    %v7963 = vmul.f32 %v7962, 0.6931472
    %v7964 = vlog2.pop %v6954
    %v7965 = vmul.f32 %v7964, 0.6931472
    %v7966 = vlog2.pop %v6957
    %v7967 = vmul.f32 %v7966, 0.6931472
    %v7968 = vlog2.pop %v6962
    %v7969 = vmul.f32 %v7968, 0.6931472
    %v7970 = vlog2.pop %v6965
    %v7971 = vmul.f32 %v7970, 0.6931472
    %v7972 = vlog2.pop %v6970
    %v7973 = vmul.f32 %v7972, 0.6931472
    %v7974 = vlog2.pop %v6973
    %v7975 = vmul.f32 %v7974, 0.6931472
    %v7976 = vlog2.pop %v6978
    %v7977 = vmul.f32 %v7976, 0.6931472
    %v7978 = vlog2.pop %v6981
    %v7979 = vmul.f32 %v7978, 0.6931472
    %v7980 = vlog2.pop %v6986
    %v7981 = vmul.f32 %v7980, 0.6931472
    %v7982 = vlog2.pop %v6989
    %v7983 = vmul.f32 %v7982, 0.6931472
    %v7984 = vlog2.pop %v6994
    %v7985 = vmul.f32 %v7984, 0.6931472
    %v7986 = vlog2.pop %v6997
    %v7987 = vmul.f32 %v7986, 0.6931472
    %v7988 = vlog2.pop %v7002
    %v7989 = vmul.f32 %v7988, 0.6931472
    %v7990 = vlog2.pop %v7005
    %v7991 = vmul.f32 %v7990, 0.6931472
    %v7992 = vlog2.pop %v7010
    %v7993 = vmul.f32 %v7992, 0.6931472
    %v7994 = vlog2.pop %v7013
    %v7995 = vmul.f32 %v7994, 0.6931472
    %v7996 = vlog2.pop %v7018
    %v7997 = vmul.f32 %v7996, 0.6931472
    %v7998 = vlog2.pop %v7021
    %v7999 = vmul.f32 %v7998, 0.6931472
    %v8000 = vlog2.pop %v7026
    %v8001 = vmul.f32 %v8000, 0.6931472
    %v8002 = vlog2.pop %v7029
    %v8003 = vmul.f32 %v8002, 0.6931472
    %v8004 = vlog2.pop %v7034
    %v8005 = vmul.f32 %v8004, 0.6931472
    %v8006 = vlog2.pop %v7037
    %v8007 = vmul.f32 %v8006, 0.6931472
    %v8008 = vlog2.pop %v7042
    %v8009 = vmul.f32 %v8008, 0.6931472
    %v8010 = vlog2.pop %v7045
    %v8011 = vmul.f32 %v8010, 0.6931472
    %v8012 = vlog2.pop %v7050
    %v8013 = vmul.f32 %v8012, 0.6931472
    %v8014 = vlog2.pop %v7053
    %v8015 = vmul.f32 %v8014, 0.6931472
    %v8016 = vlog2.pop %v7058
    %v8017 = vmul.f32 %v8016, 0.6931472
    %v8018 = vlog2.pop %v7061
    %v8019 = vmul.f32 %v8018, 0.6931472
    %v8020 = vlog2.pop %v7066
    %v8021 = vmul.f32 %v8020, 0.6931472
    %v8022 = vlog2.pop %v7069
    %v8023 = vmul.f32 %v8022, 0.6931472
    %v8024 = vlog2.pop %v7074
    %v8025 = vmul.f32 %v8024, 0.6931472
    %v8026 = vlog2.pop %v7077
    %v8027 = vmul.f32 %v8026, 0.6931472
    %v8028 = vlog2.pop %v7082
    %v8029 = vmul.f32 %v8028, 0.6931472
    %v8030 = vlog2.pop %v7085
    %v8031 = vmul.f32 %v8030, 0.6931472
    %v8032 = vlog2.pop %v7090
    %v8033 = vmul.f32 %v8032, 0.6931472
    %v8034 = vlog2.pop %v7093
    %v8035 = vmul.f32 %v8034, 0.6931472
    %v8036 = vlog2.pop %v7098
    %v8037 = vmul.f32 %v8036, 0.6931472
    %v8038 = vlog2.pop %v7101
    %v8039 = vmul.f32 %v8038, 0.6931472
    %v8040 = vlog2.pop %v7106
    %v8041 = vmul.f32 %v8040, 0.6931472
    %v8042 = vlog2.pop %v7109
    %v8043 = vmul.f32 %v8042, 0.6931472
    %v8044 = vlog2.pop %v7114
    %v8045 = vmul.f32 %v8044, 0.6931472
    %v8046 = vlog2.pop %v7117
    %v8047 = vmul.f32 %v8046, 0.6931472
    %v8048 = vlog2.pop %v7122
    %v8049 = vmul.f32 %v8048, 0.6931472
    %v8050 = vlog2.pop %v7125
    %v8051 = vmul.f32 %v8050, 0.6931472
    %v8052 = vlog2.pop %v7130
    %v8053 = vmul.f32 %v8052, 0.6931472
    %v8054 = vlog2.pop %v7133
    %v8055 = vmul.f32 %v8054, 0.6931472
    %v8056 = vlog2.pop %v7138
    %v8057 = vmul.f32 %v8056, 0.6931472
    %v8058 = vlog2.pop %v7141
    %v8059 = vmul.f32 %v8058, 0.6931472
    %v8060 = vlog2.pop %v7146
    %v8061 = vmul.f32 %v8060, 0.6931472
    %v8062 = vlog2.pop %v7149
    %v8063 = vmul.f32 %v8062, 0.6931472
    %v8064 = vlog2.pop %v7154
    %v8065 = vmul.f32 %v8064, 0.6931472
    %v8066 = vlog2.pop %v7157
    %v8067 = vmul.f32 %v8066, 0.6931472
    %v8068 = vlog2.pop %v7162
    %v8069 = vmul.f32 %v8068, 0.6931472
    %v8070 = vlog2.pop %v7165
    %v8071 = vmul.f32 %v8070, 0.6931472
    %v8072 = vlog2.pop %v7170
    %v8073 = vmul.f32 %v8072, 0.6931472
    %v8074 = vlog2.pop %v7173
    %v8075 = vmul.f32 %v8074, 0.6931472
    %v8076 = vlog2.pop %v7178
    %v8077 = vmul.f32 %v8076, 0.6931472
    %v8078 = vlog2.pop %v7181
    %v8079 = vmul.f32 %v8078, 0.6931472
    %v8080 = vlog2.pop %v7186
    %v8081 = vmul.f32 %v8080, 0.6931472
    %v8082 = vlog2.pop %v7189
    %v8083 = vmul.f32 %v8082, 0.6931472
    %v8084 = vlog2.pop %v7194
    %v8085 = vmul.f32 %v8084, 0.6931472
    %v8086 = vlog2.pop %v7197
    %v8087 = vmul.f32 %v8086, 0.6931472
    %v8088 = vlog2.pop %v7202
    %v8089 = vmul.f32 %v8088, 0.6931472
    %v8090 = vlog2.pop %v7205
    %v8091 = vmul.f32 %v8090, 0.6931472
    %v8092 = vlog2.pop %v7210
    %v8093 = vmul.f32 %v8092, 0.6931472
    %v8094 = vlog2.pop %v7213
    %v8095 = vmul.f32 %v8094, 0.6931472
    %v8096 = vlog2.pop %v7218
    %v8097 = vmul.f32 %v8096, 0.6931472
    %v8098 = vlog2.pop %v7221
    %v8099 = vmul.f32 %v8098, 0.6931472
    %v8100 = vlog2.pop %v7226
    %v8101 = vmul.f32 %v8100, 0.6931472
    %v8102 = vlog2.pop %v7229
    %v8103 = vmul.f32 %v8102, 0.6931472
    %v8104 = vlog2.pop %v7234
    %v8105 = vmul.f32 %v8104, 0.6931472
    %v8106 = vlog2.pop %v7237
    %v8107 = vmul.f32 %v8106, 0.6931472
    %v8108 = vlog2.pop %v7242
    %v8109 = vmul.f32 %v8108, 0.6931472
    %v8110 = vlog2.pop %v7245
    %v8111 = vmul.f32 %v8110, 0.6931472
    %v8112 = vlog2.pop %v7250
    %v8113 = vmul.f32 %v8112, 0.6931472
    %v8114 = vlog2.pop %v7253
    %v8115 = vmul.f32 %v8114, 0.6931472
    %v8116 = vlog2.pop %v7258
    %v8117 = vmul.f32 %v8116, 0.6931472
    %v8118 = vlog2.pop %v7261
    %v8119 = vmul.f32 %v8118, 0.6931472
    %v8120 = vlog2.pop %v7266
    %v8121 = vmul.f32 %v8120, 0.6931472
    %v8122 = vlog2.pop %v7269
    %v8123 = vmul.f32 %v8122, 0.6931472
    %v8124 = vlog2.pop %v7274
    %v8125 = vmul.f32 %v8124, 0.6931472
    %v8126 = vlog2.pop %v7277
    %v8127 = vmul.f32 %v8126, 0.6931472
    %v8128 = vlog2.pop %v7282
    %v8129 = vmul.f32 %v8128, 0.6931472
    %v8130 = vlog2.pop %v7285
    %v8131 = vmul.f32 %v8130, 0.6931472
    %v8132 = vlog2.pop %v7290
    %v8133 = vmul.f32 %v8132, 0.6931472
    %v8134 = vlog2.pop %v7293
    %v8135 = vmul.f32 %v8134, 0.6931472
    %v8136 = vlog2.pop %v7298
    %v8137 = vmul.f32 %v8136, 0.6931472
    %v8138 = vlog2.pop %v7301
    %v8139 = vmul.f32 %v8138, 0.6931472
    %v8140 = vlog2.pop %v7306
    %v8141 = vmul.f32 %v8140, 0.6931472
    %v8142 = vlog2.pop %v7309
    %v8143 = vmul.f32 %v8142, 0.6931472
    %v8144 = vlog2.pop %v7314
    %v8145 = vmul.f32 %v8144, 0.6931472
    %v8146 = vlog2.pop %v7317
    %v8147 = vmul.f32 %v8146, 0.6931472
    %v8148 = vlog2.pop %v7322
    %v8149 = vmul.f32 %v8148, 0.6931472
    %v8150 = vlog2.pop %v7325
    %v8151 = vmul.f32 %v8150, 0.6931472
    %v8152 = vlog2.pop %v7330
    %v8153 = vmul.f32 %v8152, 0.6931472
    %v8154 = vlog2.pop %v7333
    %v8155 = vmul.f32 %v8154, 0.6931472
    %v8156 = vlog2.pop %v7338
    %v8157 = vmul.f32 %v8156, 0.6931472
    %v8158 = vlog2.pop %v7341
    %v8159 = vmul.f32 %v8158, 0.6931472
    %v8160 = vlog2.pop %v7346
    %v8161 = vmul.f32 %v8160, 0.6931472
    %v8162 = vlog2.pop %v7349
    %v8163 = vmul.f32 %v8162, 0.6931472
    %v8164 = vlog2.pop %v7354
    %v8165 = vmul.f32 %v8164, 0.6931472
    %v8166 = vlog2.pop %v7357
    %v8167 = vmul.f32 %v8166, 0.6931472
    %v8168 = vlog2.pop %v7362
    %v8169 = vmul.f32 %v8168, 0.6931472
    %v8170 = vlog2.pop %v7365
    %v8171 = vmul.f32 %v8170, 0.6931472
    %v8172 = vlog2.pop %v7370
    %v8173 = vmul.f32 %v8172, 0.6931472
    %v8174 = vlog2.pop %v7373
    %v8175 = vmul.f32 %v8174, 0.6931472
    %v8176 = vlog2.pop %v7378
    %v8177 = vmul.f32 %v8176, 0.6931472
    %v8178 = vlog2.pop %v7381
    %v8179 = vmul.f32 %v8178, 0.6931472
    %v8180 = vlog2.pop %v7386
    %v8181 = vmul.f32 %v8180, 0.6931472
    %v8182 = vlog2.pop %v7389
    %v8183 = vmul.f32 %v8182, 0.6931472
    %v8184 = vlog2.pop %v7394
    %v8185 = vmul.f32 %v8184, 0.6931472
    %v8186 = vlog2.pop %v7397
    %v8187 = vmul.f32 %v8186, 0.6931472
    %v8188 = vlog2.pop %v7402
    %v8189 = vmul.f32 %v8188, 0.6931472
    %v8190 = vlog2.pop %v7405
    %v8191 = vmul.f32 %v8190, 0.6931472
    %v8192 = vlog2.pop %v7410
    %v8193 = vmul.f32 %v8192, 0.6931472
    %v8194 = vlog2.pop %v7413
    %v8195 = vmul.f32 %v8194, 0.6931472
    %v8196 = vlog2.pop %v7418
    %v8197 = vmul.f32 %v8196, 0.6931472
    %v8198 = vlog2.pop %v7421
    %v8199 = vmul.f32 %v8198, 0.6931472
    %v8200 = vlog2.pop %v7426
    %v8201 = vmul.f32 %v8200, 0.6931472
    %v8202 = vlog2.pop %v7429
    %v8203 = vmul.f32 %v8202, 0.6931472
    %v8204 = vlog2.pop %v7434
    %v8205 = vmul.f32 %v8204, 0.6931472
    %v8206 = vlog2.pop %v7437
    %v8207 = vmul.f32 %v8206, 0.6931472
    %v8208 = vlog2.pop %v7442
    %v8209 = vmul.f32 %v8208, 0.6931472
    %v8210 = vlog2.pop %v7445
    %v8211 = vmul.f32 %v8210, 0.6931472
    %v8212 = vlog2.pop %v7450
    %v8213 = vmul.f32 %v8212, 0.6931472
    %v8214 = vlog2.pop %v7453
    %v8215 = vmul.f32 %v8214, 0.6931472
    %v8216 = vlog2.pop %v7458
    %v8217 = vmul.f32 %v8216, 0.6931472
    %v8218 = vlog2.pop %v7461
    %v8219 = vmul.f32 %v8218, 0.6931472
    %v8220 = vlog2.pop %v7466
    %v8221 = vmul.f32 %v8220, 0.6931472
    %v8222 = vlog2.pop %v7469
    %v8223 = vmul.f32 %v8222, 0.6931472
    %v8224 = vlog2.pop %v7474
    %v8225 = vmul.f32 %v8224, 0.6931472
    %v8226 = vlog2.pop %v7477
    %v8227 = vmul.f32 %v8226, 0.6931472
    %v8228 = vlog2.pop %v7482
    %v8229 = vmul.f32 %v8228, 0.6931472
    %v8230 = vlog2.pop %v7485
    %v8231 = vmul.f32 %v8230, 0.6931472
    %v8232 = vlog2.pop %v7490
    %v8233 = vmul.f32 %v8232, 0.6931472
    %v8234 = vlog2.pop %v7493
    %v8235 = vmul.f32 %v8234, 0.6931472
    %v8236 = vlog2.pop %v7498
    %v8237 = vmul.f32 %v8236, 0.6931472
    %v8238 = vlog2.pop %v7501
    %v8239 = vmul.f32 %v8238, 0.6931472
    %v8240 = vlog2.pop %v7506
    %v8241 = vmul.f32 %v8240, 0.6931472
    %v8242 = vlog2.pop %v7509
    %v8243 = vmul.f32 %v8242, 0.6931472
    %v8244 = vlog2.pop %v7514
    %v8245 = vmul.f32 %v8244, 0.6931472
    %v8246 = vlog2.pop %v7517
    %v8247 = vmul.f32 %v8246, 0.6931472
    %v8248 = vlog2.pop %v7522
    %v8249 = vmul.f32 %v8248, 0.6931472
    %v8250 = vlog2.pop %v7525
    %v8251 = vmul.f32 %v8250, 0.6931472
    %v8252 = vlog2.pop %v7530
    %v8253 = vmul.f32 %v8252, 0.6931472
    %v8254 = vlog2.pop %v7533
    %v8255 = vmul.f32 %v8254, 0.6931472
    %v8256 = vlog2.pop %v7538
    %v8257 = vmul.f32 %v8256, 0.6931472
    %v8258 = vlog2.pop %v7541
    %v8259 = vmul.f32 %v8258, 0.6931472
    %v8260 = vlog2.pop %v7546
    %v8261 = vmul.f32 %v8260, 0.6931472
    %v8262 = vlog2.pop %v7549
    %v8263 = vmul.f32 %v8262, 0.6931472
    %v8264 = vlog2.pop %v7554
    %v8265 = vmul.f32 %v8264, 0.6931472
    %v8266 = vlog2.pop %v7557
    %v8267 = vmul.f32 %v8266, 0.6931472
    %v8268 = vlog2.pop %v7562
    %v8269 = vmul.f32 %v8268, 0.6931472
    %v8270 = vlog2.pop %v7565
    %v8271 = vmul.f32 %v8270, 0.6931472
    %v8272 = vlog2.pop %v7570
    %v8273 = vmul.f32 %v8272, 0.6931472
    %v8274 = vlog2.pop %v7573
    %v8275 = vmul.f32 %v8274, 0.6931472
    %v8276 = vlog2.pop %v7578
    %v8277 = vmul.f32 %v8276, 0.6931472
    %v8278 = vlog2.pop %v7581
    %v8279 = vmul.f32 %v8278, 0.6931472
    %v8280 = vlog2.pop %v7586
    %v8281 = vmul.f32 %v8280, 0.6931472
    %v8282 = vlog2.pop %v7589
    %v8283 = vmul.f32 %v8282, 0.6931472
    %v8284 = vlog2.pop %v7594
    %v8285 = vmul.f32 %v8284, 0.6931472
    %v8286 = vlog2.pop %v7597
    %v8287 = vmul.f32 %v8286, 0.6931472
    %v8288 = vlog2.pop %v7602
    %v8289 = vmul.f32 %v8288, 0.6931472
    %v8290 = vlog2.pop %v7605
    %v8291 = vmul.f32 %v8290, 0.6931472
    %v8292 = vlog2.pop %v7610
    %v8293 = vmul.f32 %v8292, 0.6931472
    %v8294 = vlog2.pop %v7613
    %v8295 = vmul.f32 %v8294, 0.6931472
    %v8296 = vlog2.pop %v7618
    %v8297 = vmul.f32 %v8296, 0.6931472
    %v8298 = vlog2.pop %v7621
    %v8299 = vmul.f32 %v8298, 0.6931472
    %v8300 = vlog2.pop %v7626
    %v8301 = vmul.f32 %v8300, 0.6931472
    %v8302 = vlog2.pop %v7629
    %v8303 = vmul.f32 %v8302, 0.6931472
    %v8304 = vlog2.pop %v7634
    %v8305 = vmul.f32 %v8304, 0.6931472
    %v8306 = vlog2.pop %v7637
    %v8307 = vmul.f32 %v8306, 0.6931472
    %v8308 = vlog2.pop %v7642
    %v8309 = vmul.f32 %v8308, 0.6931472
    %v8310 = vlog2.pop %v7645
    %v8311 = vmul.f32 %v8310, 0.6931472
    %v8312 = vlog2.pop %v7650
    %v8313 = vmul.f32 %v8312, 0.6931472
    %v8314 = vlog2.pop %v7653
    %v8315 = vmul.f32 %v8314, 0.6931472
    %v8316 = vlog2.pop %v7658
    %v8317 = vmul.f32 %v8316, 0.6931472
    %v8318 = vlog2.pop %v7661
    %v8319 = vmul.f32 %v8318, 0.6931472
    %v8320 = vlog2.pop %v7666
    %v8321 = vmul.f32 %v8320, 0.6931472
    %v8322 = vlog2.pop %v7669
    %v8323 = vmul.f32 %v8322, 0.6931472
    %v8324 = vlog2.pop %v7674
    %v8325 = vmul.f32 %v8324, 0.6931472
    %v8326 = vlog2.pop %v7677
    %v8327 = vmul.f32 %v8326, 0.6931472
    %v8328 = vlog2.pop %v7682
    %v8329 = vmul.f32 %v8328, 0.6931472
    %v8330 = vlog2.pop %v7685
    %v8331 = vmul.f32 %v8330, 0.6931472
    %v8332 = vlog2.pop %v7690
    %v8333 = vmul.f32 %v8332, 0.6931472
    %v8334 = vlog2.pop %v7693
    %v8335 = vmul.f32 %v8334, 0.6931472
    %v8336 = vlog2.pop %v7698
    %v8337 = vmul.f32 %v8336, 0.6931472
    %v8338 = vlog2.pop %v7701
    %v8339 = vmul.f32 %v8338, 0.6931472
    %v8340 = vlog2.pop %v7706
    %v8341 = vmul.f32 %v8340, 0.6931472
    %v8342 = vlog2.pop %v7709
    %v8343 = vmul.f32 %v8342, 0.6931472
    %v8344 = vlog2.pop %v7714
    %v8345 = vmul.f32 %v8344, 0.6931472
    %v8346 = vlog2.pop %v7717
    %v8347 = vmul.f32 %v8346, 0.6931472
    %v8348 = vlog2.pop %v7722
    %v8349 = vmul.f32 %v8348, 0.6931472
    %v8350 = vlog2.pop %v7725
    %v8351 = vmul.f32 %v8350, 0.6931472
    %v8352 = vlog2.pop %v7730
    %v8353 = vmul.f32 %v8352, 0.6931472
    %v8354 = vlog2.pop %v7733
    %v8355 = vmul.f32 %v8354, 0.6931472
    %v8356 = vlog2.pop %v7738
    %v8357 = vmul.f32 %v8356, 0.6931472
    %v8358 = vlog2.pop %v7741
    %v8359 = vmul.f32 %v8358, 0.6931472
    %v8360 = vlog2.pop %v7746
    %v8361 = vmul.f32 %v8360, 0.6931472
    %v8362 = vlog2.pop %v7749
    %v8363 = vmul.f32 %v8362, 0.6931472
    %v8364 = vlog2.pop %v7754
    %v8365 = vmul.f32 %v8364, 0.6931472
    %v8366 = vlog2.pop %v7757
    %v8367 = vmul.f32 %v8366, 0.6931472
    %v8368 = vlog2.pop %v7762
    %v8369 = vmul.f32 %v8368, 0.6931472
    %v8370 = vlog2.pop %v7765
    %v8371 = vmul.f32 %v8370, 0.6931472
    %v8372 = vlog2.pop %v7770
    %v8373 = vmul.f32 %v8372, 0.6931472
    %v8374 = vlog2.pop %v7773
    %v8375 = vmul.f32 %v8374, 0.6931472
    %v8376 = vlog2.pop %v7778
    %v8377 = vmul.f32 %v8376, 0.6931472
    %v8378 = vlog2.pop %v7781
    %v8379 = vmul.f32 %v8378, 0.6931472
    %v8380 = vlog2.pop %v7786
    %v8381 = vmul.f32 %v8380, 0.6931472
    %v8382 = vlog2.pop %v7789
    %v8383 = vmul.f32 %v8382, 0.6931472
    %v8384 = vlog2.pop %v7794
    %v8385 = vmul.f32 %v8384, 0.6931472
    %v8386 = vlog2.pop %v7797
    %v8387 = vmul.f32 %v8386, 0.6931472
    %v8388 = vlog2.pop %v7802
    %v8389 = vmul.f32 %v8388, 0.6931472
    %v8390 = vlog2.pop %v7805
    %v8391 = vmul.f32 %v8390, 0.6931472
    %v8392 = vlog2.pop %v7810
    %v8393 = vmul.f32 %v8392, 0.6931472
    %v8394 = vlog2.pop %v7813
    %v8395 = vmul.f32 %v8394, 0.6931472
    %v8396 = vlog2.pop %v7818
    %v8397 = vmul.f32 %v8396, 0.6931472
    %v8398 = vlog2.pop %v7821
    %v8399 = vmul.f32 %v8398, 0.6931472
    %v8400 = vlog2.pop %v7826
    %v8401 = vmul.f32 %v8400, 0.6931472
    %v8402 = vlog2.pop %v7829
    %v8403 = vmul.f32 %v8402, 0.6931472
    %v8404 = vlog2.pop %v7834
    %v8405 = vmul.f32 %v8404, 0.6931472
    %v8406 = vlog2.pop %v7837
    %v8407 = vmul.f32 %v8406, 0.6931472
    %v8408 = vlog2.pop %v7842
    %v8409 = vmul.f32 %v8408, 0.6931472
    %v8410 = vlog2.pop %v7845
    %v8411 = vmul.f32 %v8410, 0.6931472
    %v8412 = vlog2.pop %v7850
    %v8413 = vmul.f32 %v8412, 0.6931472
    %v8414 = vlog2.pop %v7853
    %v8415 = vmul.f32 %v8414, 0.6931472
    %v8416 = vlog2.pop %v7858
    %v8417 = vmul.f32 %v8416, 0.6931472
    %v8418 = vlog2.pop %v7861
    %v8419 = vmul.f32 %v8418, 0.6931472
    %v8420 = vlog2.pop %v7866
    %v8421 = vmul.f32 %v8420, 0.6931472
    %v8422 = vlog2.pop %v7869
    %v8423 = vmul.f32 %v8422, 0.6931472
    %v8424 = vlog2.pop %v7874
    %v8425 = vmul.f32 %v8424, 0.6931472
    %v8426 = vlog2.pop %v7877
    %v8427 = vmul.f32 %v8426, 0.6931472
    %v8428 = vlog2.pop %v7882
    %v8429 = vmul.f32 %v8428, 0.6931472
    %v8430 = vlog2.pop %v7885
    %v8431 = vmul.f32 %v8430, 0.6931472
    %v8432 = vlog2.pop %v7890
    %v8433 = vmul.f32 %v8432, 0.6931472
    %v8434 = vlog2.pop %v7893
    %v8435 = vmul.f32 %v8434, 0.6931472
    %v8436 = vlog2.pop %v7898
    %v8437 = vmul.f32 %v8436, 0.6931472
    %v8438 = vlog2.pop %v7901
    %v8439 = vmul.f32 %v8438, 0.6931472
    %v8440 = vlog2.pop %v7906
    %v8441 = vmul.f32 %v8440, 0.6931472
    %v8442 = vlog2.pop %v7909
    %v8443 = vmul.f32 %v8442, 0.6931472
    %v8444 = vlog2.pop %v7914
    %v8445 = vmul.f32 %v8444, 0.6931472
    %v8446 = vlog2.pop %v7917
    %v8447 = vmul.f32 %v8446, 0.6931472
    %v8448 = vlog2.pop %v7922
    %v8449 = vmul.f32 %v8448, 0.6931472
    %v8450 = vlog2.pop %v7925
    %v8451 = vmul.f32 %v8450, 0.6931472
    %v8452 = vlog2.pop %v7930
    %v8453 = vmul.f32 %v8452, 0.6931472
    %v8454 = vlog2.pop %v7933
    %v8455 = vmul.f32 %v8454, 0.6931472
    %v8456 = vlog2.pop %v7938
    %v8457 = vmul.f32 %v8456, 0.6931472
    %v8458 = vlog2.pop %v7941
    %v8459 = vmul.f32 %v8458, 0.6931472
    %v8460 = vlog2.pop %v7946
    %v8461 = vmul.f32 %v8460, 0.6931472
    %v8462 = vlog2.pop %v7949
    %v8463 = vmul.f32 %v8462, 0.6931472
    %8496 = vrot.lane.b32.xlu0 %v8017, 16
    %v8497 = vpop.permute.xlu0 %8496
    %8498 = vrot.lane.b32.xlu0 %v8019, 16
    %v8499 = vpop.permute.xlu0 %8498
    %8500 = vrot.lane.b32.xlu0 %v8021, 16
    %v8501 = vpop.permute.xlu0 %8500
    %8502 = vrot.lane.b32.xlu0 %v8023, 16
    %v8503 = vpop.permute.xlu0 %8502
    %8504 = vrot.lane.b32.xlu0 %v8025, 16
    %v8505 = vpop.permute.xlu0 %8504
    %8506 = vrot.lane.b32.xlu0 %v8027, 16
    %v8507 = vpop.permute.xlu0 %8506
    %8508 = vrot.lane.b32.xlu0 %v8029, 16
    %v8509 = vpop.permute.xlu0 %8508
    %8510 = vrot.lane.b32.xlu0 %v8031, 16
    %v8511 = vpop.permute.xlu0 %8510
    %8512 = vrot.lane.b32.xlu0 %v8033, 16
    %v8513 = vpop.permute.xlu0 %8512
    %8514 = vrot.lane.b32.xlu0 %v8035, 16
    %v8515 = vpop.permute.xlu0 %8514
    %8516 = vrot.lane.b32.xlu0 %v8037, 16
    %v8517 = vpop.permute.xlu0 %8516
    %8518 = vrot.lane.b32.xlu0 %v8039, 16
    %v8519 = vpop.permute.xlu0 %8518
    %8520 = vrot.lane.b32.xlu0 %v8041, 16
    %v8521 = vpop.permute.xlu0 %8520
    %8522 = vrot.lane.b32.xlu0 %v8043, 16
    %v8523 = vpop.permute.xlu0 %8522
    %8524 = vrot.lane.b32.xlu0 %v8045, 16
    %v8525 = vpop.permute.xlu0 %8524
    %8526 = vrot.lane.b32.xlu0 %v8047, 16
    %v8527 = vpop.permute.xlu0 %8526
    %8528 = vrot.lane.b32.xlu0 %v8049, 16
    %v8529 = vpop.permute.xlu0 %8528
    %8530 = vrot.lane.b32.xlu0 %v8051, 16
    %v8531 = vpop.permute.xlu0 %8530
    %8532 = vrot.lane.b32.xlu0 %v8053, 16
    %v8533 = vpop.permute.xlu0 %8532
    %8534 = vrot.lane.b32.xlu0 %v8055, 16
    %v8535 = vpop.permute.xlu0 %8534
    %8536 = vrot.lane.b32.xlu0 %v8057, 16
    %v8537 = vpop.permute.xlu0 %8536
    %8538 = vrot.lane.b32.xlu0 %v8059, 16
    %v8539 = vpop.permute.xlu0 %8538
    %8540 = vrot.lane.b32.xlu0 %v8061, 16
    %v8541 = vpop.permute.xlu0 %8540
    %8542 = vrot.lane.b32.xlu0 %v8063, 16
    %v8543 = vpop.permute.xlu0 %8542
    %8544 = vrot.lane.b32.xlu0 %v8065, 16
    %v8545 = vpop.permute.xlu0 %8544
    %8546 = vrot.lane.b32.xlu0 %v8067, 16
    %v8547 = vpop.permute.xlu0 %8546
    %8548 = vrot.lane.b32.xlu0 %v8069, 16
    %v8549 = vpop.permute.xlu0 %8548
    %8550 = vrot.lane.b32.xlu0 %v8071, 16
    %v8551 = vpop.permute.xlu0 %8550
    %8552 = vrot.lane.b32.xlu0 %v8073, 16
    %v8553 = vpop.permute.xlu0 %8552
    %8554 = vrot.lane.b32.xlu0 %v8075, 16
    %v8555 = vpop.permute.xlu0 %8554
    %8556 = vrot.lane.b32.xlu0 %v8077, 16
    %v8557 = vpop.permute.xlu0 %8556
    %8558 = vrot.lane.b32.xlu0 %v8079, 16
    %v8559 = vpop.permute.xlu0 %8558
    %8624 = vrot.lane.b32.xlu0 %v8081, 32
    %v8625 = vpop.permute.xlu0 %8624
    %8626 = vrot.lane.b32.xlu0 %v8083, 32
    %v8627 = vpop.permute.xlu0 %8626
    %8628 = vrot.lane.b32.xlu0 %v8085, 32
    %v8629 = vpop.permute.xlu0 %8628
    %8630 = vrot.lane.b32.xlu0 %v8087, 32
    %v8631 = vpop.permute.xlu0 %8630
    %8632 = vrot.lane.b32.xlu0 %v8089, 32
    %v8633 = vpop.permute.xlu0 %8632
    %8634 = vrot.lane.b32.xlu0 %v8091, 32
    %v8635 = vpop.permute.xlu0 %8634
    %8636 = vrot.lane.b32.xlu0 %v8093, 32
    %v8637 = vpop.permute.xlu0 %8636
    %8638 = vrot.lane.b32.xlu0 %v8095, 32
    %v8639 = vpop.permute.xlu0 %8638
    %8640 = vrot.lane.b32.xlu0 %v8097, 32
    %v8641 = vpop.permute.xlu0 %8640
    %8642 = vrot.lane.b32.xlu0 %v8099, 32
    %v8643 = vpop.permute.xlu0 %8642
    %8644 = vrot.lane.b32.xlu0 %v8101, 32
    %v8645 = vpop.permute.xlu0 %8644
    %8646 = vrot.lane.b32.xlu0 %v8103, 32
    %v8647 = vpop.permute.xlu0 %8646
    %8648 = vrot.lane.b32.xlu0 %v8105, 32
    %v8649 = vpop.permute.xlu0 %8648
    %8650 = vrot.lane.b32.xlu0 %v8107, 32
    %v8651 = vpop.permute.xlu0 %8650
    %8652 = vrot.lane.b32.xlu0 %v8109, 32
    %v8653 = vpop.permute.xlu0 %8652
    %8654 = vrot.lane.b32.xlu0 %v8111, 32
    %v8655 = vpop.permute.xlu0 %8654
    %8656 = vrot.lane.b32.xlu0 %v8113, 32
    %v8657 = vpop.permute.xlu0 %8656
    %8658 = vrot.lane.b32.xlu0 %v8115, 32
    %v8659 = vpop.permute.xlu0 %8658
    %8660 = vrot.lane.b32.xlu0 %v8117, 32
    %v8661 = vpop.permute.xlu0 %8660
    %8662 = vrot.lane.b32.xlu0 %v8119, 32
    %v8663 = vpop.permute.xlu0 %8662
    %8664 = vrot.lane.b32.xlu0 %v8121, 32
    %v8665 = vpop.permute.xlu0 %8664
    %8666 = vrot.lane.b32.xlu0 %v8123, 32
    %v8667 = vpop.permute.xlu0 %8666
    %8668 = vrot.lane.b32.xlu0 %v8125, 32
    %v8669 = vpop.permute.xlu0 %8668
    %8670 = vrot.lane.b32.xlu0 %v8127, 32
    %v8671 = vpop.permute.xlu0 %8670
    %8672 = vrot.lane.b32.xlu0 %v8129, 32
    %v8673 = vpop.permute.xlu0 %8672
    %8674 = vrot.lane.b32.xlu0 %v8131, 32
    %v8675 = vpop.permute.xlu0 %8674
    %8676 = vrot.lane.b32.xlu0 %v8133, 32
    %v8677 = vpop.permute.xlu0 %8676
    %8678 = vrot.lane.b32.xlu0 %v8135, 32
    %v8679 = vpop.permute.xlu0 %8678
    %8680 = vrot.lane.b32.xlu0 %v8137, 32
    %v8681 = vpop.permute.xlu0 %8680
    %8682 = vrot.lane.b32.xlu0 %v8139, 32
    %v8683 = vpop.permute.xlu0 %8682
    %8684 = vrot.lane.b32.xlu0 %v8141, 32
    %v8685 = vpop.permute.xlu0 %8684
    %8686 = vrot.lane.b32.xlu0 %v8143, 32
    %v8687 = vpop.permute.xlu0 %8686
    %8752 = vrot.lane.b32.xlu0 %v8145, 48
    %v8753 = vpop.permute.xlu0 %8752
    %8754 = vrot.lane.b32.xlu0 %v8147, 48
    %v8755 = vpop.permute.xlu0 %8754
    %8756 = vrot.lane.b32.xlu0 %v8149, 48
    %v8757 = vpop.permute.xlu0 %8756
    %8758 = vrot.lane.b32.xlu0 %v8151, 48
    %v8759 = vpop.permute.xlu0 %8758
    %8760 = vrot.lane.b32.xlu0 %v8153, 48
    %v8761 = vpop.permute.xlu0 %8760
    %8762 = vrot.lane.b32.xlu0 %v8155, 48
    %v8763 = vpop.permute.xlu0 %8762
    %8764 = vrot.lane.b32.xlu0 %v8157, 48
    %v8765 = vpop.permute.xlu0 %8764
    %8766 = vrot.lane.b32.xlu0 %v8159, 48
    %v8767 = vpop.permute.xlu0 %8766
    %8768 = vrot.lane.b32.xlu0 %v8161, 48
    %v8769 = vpop.permute.xlu0 %8768
    %8770 = vrot.lane.b32.xlu0 %v8163, 48
    %v8771 = vpop.permute.xlu0 %8770
    %8772 = vrot.lane.b32.xlu0 %v8165, 48
    %v8773 = vpop.permute.xlu0 %8772
    %8774 = vrot.lane.b32.xlu0 %v8167, 48
    %v8775 = vpop.permute.xlu0 %8774
    %8776 = vrot.lane.b32.xlu0 %v8169, 48
    %v8777 = vpop.permute.xlu0 %8776
    %8778 = vrot.lane.b32.xlu0 %v8171, 48
    %v8779 = vpop.permute.xlu0 %8778
    %8780 = vrot.lane.b32.xlu0 %v8173, 48
    %v8781 = vpop.permute.xlu0 %8780
    %8782 = vrot.lane.b32.xlu0 %v8175, 48
    %v8783 = vpop.permute.xlu0 %8782
    %8784 = vrot.lane.b32.xlu0 %v8177, 48
    %v8785 = vpop.permute.xlu0 %8784
    %8786 = vrot.lane.b32.xlu0 %v8179, 48
    %v8787 = vpop.permute.xlu0 %8786
    %8788 = vrot.lane.b32.xlu0 %v8181, 48
    %v8789 = vpop.permute.xlu0 %8788
    %8790 = vrot.lane.b32.xlu0 %v8183, 48
    %v8791 = vpop.permute.xlu0 %8790
    %8792 = vrot.lane.b32.xlu0 %v8185, 48
    %v8793 = vpop.permute.xlu0 %8792
    %8794 = vrot.lane.b32.xlu0 %v8187, 48
    %v8795 = vpop.permute.xlu0 %8794
    %8796 = vrot.lane.b32.xlu0 %v8189, 48
    %v8797 = vpop.permute.xlu0 %8796
    %8798 = vrot.lane.b32.xlu0 %v8191, 48
    %v8799 = vpop.permute.xlu0 %8798
    %8800 = vrot.lane.b32.xlu0 %v8193, 48
    %v8801 = vpop.permute.xlu0 %8800
    %8802 = vrot.lane.b32.xlu0 %v8195, 48
    %v8803 = vpop.permute.xlu0 %8802
    %8804 = vrot.lane.b32.xlu0 %v8197, 48
    %v8805 = vpop.permute.xlu0 %8804
    %8806 = vrot.lane.b32.xlu0 %v8199, 48
    %v8807 = vpop.permute.xlu0 %8806
    %8808 = vrot.lane.b32.xlu0 %v8201, 48
    %v8809 = vpop.permute.xlu0 %8808
    %8810 = vrot.lane.b32.xlu0 %v8203, 48
    %v8811 = vpop.permute.xlu0 %8810
    %8812 = vrot.lane.b32.xlu0 %v8205, 48
    %v8813 = vpop.permute.xlu0 %8812
    %8814 = vrot.lane.b32.xlu0 %v8207, 48
    %v8815 = vpop.permute.xlu0 %8814
    %8880 = vrot.lane.b32.xlu0 %v8209, 64
    %v8881 = vpop.permute.xlu0 %8880
    %8882 = vrot.lane.b32.xlu0 %v8211, 64
    %v8883 = vpop.permute.xlu0 %8882
    %8884 = vrot.lane.b32.xlu0 %v8213, 64
    %v8885 = vpop.permute.xlu0 %8884
    %8886 = vrot.lane.b32.xlu0 %v8215, 64
    %v8887 = vpop.permute.xlu0 %8886
    %8888 = vrot.lane.b32.xlu0 %v8217, 64
    %v8889 = vpop.permute.xlu0 %8888
    %8890 = vrot.lane.b32.xlu0 %v8219, 64
    %v8891 = vpop.permute.xlu0 %8890
    %8892 = vrot.lane.b32.xlu0 %v8221, 64
    %v8893 = vpop.permute.xlu0 %8892
    %8894 = vrot.lane.b32.xlu0 %v8223, 64
    %v8895 = vpop.permute.xlu0 %8894
    %8896 = vrot.lane.b32.xlu0 %v8225, 64
    %v8897 = vpop.permute.xlu0 %8896
    %8898 = vrot.lane.b32.xlu0 %v8227, 64
    %v8899 = vpop.permute.xlu0 %8898
    %8900 = vrot.lane.b32.xlu0 %v8229, 64
    %v8901 = vpop.permute.xlu0 %8900
    %8902 = vrot.lane.b32.xlu0 %v8231, 64
    %v8903 = vpop.permute.xlu0 %8902
    %8904 = vrot.lane.b32.xlu0 %v8233, 64
    %v8905 = vpop.permute.xlu0 %8904
    %8906 = vrot.lane.b32.xlu0 %v8235, 64
    %v8907 = vpop.permute.xlu0 %8906
    %8908 = vrot.lane.b32.xlu0 %v8237, 64
    %v8909 = vpop.permute.xlu0 %8908
    %8910 = vrot.lane.b32.xlu0 %v8239, 64
    %v8911 = vpop.permute.xlu0 %8910
    %8912 = vrot.lane.b32.xlu0 %v8241, 64
    %v8913 = vpop.permute.xlu0 %8912
    %8914 = vrot.lane.b32.xlu0 %v8243, 64
    %v8915 = vpop.permute.xlu0 %8914
    %8916 = vrot.lane.b32.xlu0 %v8245, 64
    %v8917 = vpop.permute.xlu0 %8916
    %8918 = vrot.lane.b32.xlu0 %v8247, 64
    %v8919 = vpop.permute.xlu0 %8918
    %8920 = vrot.lane.b32.xlu0 %v8249, 64
    %v8921 = vpop.permute.xlu0 %8920
    %8922 = vrot.lane.b32.xlu0 %v8251, 64
    %v8923 = vpop.permute.xlu0 %8922
    %8924 = vrot.lane.b32.xlu0 %v8253, 64
    %v8925 = vpop.permute.xlu0 %8924
    %8926 = vrot.lane.b32.xlu0 %v8255, 64
    %v8927 = vpop.permute.xlu0 %8926
    %8928 = vrot.lane.b32.xlu0 %v8257, 64
    %v8929 = vpop.permute.xlu0 %8928
    %8930 = vrot.lane.b32.xlu0 %v8259, 64
    %v8931 = vpop.permute.xlu0 %8930
    %8932 = vrot.lane.b32.xlu0 %v8261, 64
    %v8933 = vpop.permute.xlu0 %8932
    %8934 = vrot.lane.b32.xlu0 %v8263, 64
    %v8935 = vpop.permute.xlu0 %8934
    %8936 = vrot.lane.b32.xlu0 %v8265, 64
    %v8937 = vpop.permute.xlu0 %8936
    %8938 = vrot.lane.b32.xlu0 %v8267, 64
    %v8939 = vpop.permute.xlu0 %8938
    %8940 = vrot.lane.b32.xlu0 %v8269, 64
    %v8941 = vpop.permute.xlu0 %8940
    %8942 = vrot.lane.b32.xlu0 %v8271, 64
    %v8943 = vpop.permute.xlu0 %8942
    %9008 = vrot.lane.b32.xlu0 %v8273, 80
    %v9009 = vpop.permute.xlu0 %9008
    %9010 = vrot.lane.b32.xlu0 %v8275, 80
    %v9011 = vpop.permute.xlu0 %9010
    %9012 = vrot.lane.b32.xlu0 %v8277, 80
    %v9013 = vpop.permute.xlu0 %9012
    %9014 = vrot.lane.b32.xlu0 %v8279, 80
    %v9015 = vpop.permute.xlu0 %9014
    %9016 = vrot.lane.b32.xlu0 %v8281, 80
    %v9017 = vpop.permute.xlu0 %9016
    %9018 = vrot.lane.b32.xlu0 %v8283, 80
    %v9019 = vpop.permute.xlu0 %9018
    %9020 = vrot.lane.b32.xlu0 %v8285, 80
    %v9021 = vpop.permute.xlu0 %9020
    %9022 = vrot.lane.b32.xlu0 %v8287, 80
    %v9023 = vpop.permute.xlu0 %9022
    %9024 = vrot.lane.b32.xlu0 %v8289, 80
    %v9025 = vpop.permute.xlu0 %9024
    %9026 = vrot.lane.b32.xlu0 %v8291, 80
    %v9027 = vpop.permute.xlu0 %9026
    %9028 = vrot.lane.b32.xlu0 %v8293, 80
    %v9029 = vpop.permute.xlu0 %9028
    %9030 = vrot.lane.b32.xlu0 %v8295, 80
    %v9031 = vpop.permute.xlu0 %9030
    %9032 = vrot.lane.b32.xlu0 %v8297, 80
    %v9033 = vpop.permute.xlu0 %9032
    %9034 = vrot.lane.b32.xlu0 %v8299, 80
    %v9035 = vpop.permute.xlu0 %9034
    %9036 = vrot.lane.b32.xlu0 %v8301, 80
    %v9037 = vpop.permute.xlu0 %9036
    %9038 = vrot.lane.b32.xlu0 %v8303, 80
    %v9039 = vpop.permute.xlu0 %9038
    %9040 = vrot.lane.b32.xlu0 %v8305, 80
    %v9041 = vpop.permute.xlu0 %9040
    %9042 = vrot.lane.b32.xlu0 %v8307, 80
    %v9043 = vpop.permute.xlu0 %9042
    %9044 = vrot.lane.b32.xlu0 %v8309, 80
    %v9045 = vpop.permute.xlu0 %9044
    %9046 = vrot.lane.b32.xlu0 %v8311, 80
    %v9047 = vpop.permute.xlu0 %9046
    %9048 = vrot.lane.b32.xlu0 %v8313, 80
    %v9049 = vpop.permute.xlu0 %9048
    %9050 = vrot.lane.b32.xlu0 %v8315, 80
    %v9051 = vpop.permute.xlu0 %9050
    %9052 = vrot.lane.b32.xlu0 %v8317, 80
    %v9053 = vpop.permute.xlu0 %9052
    %9054 = vrot.lane.b32.xlu0 %v8319, 80
    %v9055 = vpop.permute.xlu0 %9054
    %9056 = vrot.lane.b32.xlu0 %v8321, 80
    %v9057 = vpop.permute.xlu0 %9056
    %9058 = vrot.lane.b32.xlu0 %v8323, 80
    %v9059 = vpop.permute.xlu0 %9058
    %9060 = vrot.lane.b32.xlu0 %v8325, 80
    %v9061 = vpop.permute.xlu0 %9060
    %9062 = vrot.lane.b32.xlu0 %v8327, 80
    %v9063 = vpop.permute.xlu0 %9062
    %9064 = vrot.lane.b32.xlu0 %v8329, 80
    %v9065 = vpop.permute.xlu0 %9064
    %9066 = vrot.lane.b32.xlu0 %v8331, 80
    %v9067 = vpop.permute.xlu0 %9066
    %9068 = vrot.lane.b32.xlu0 %v8333, 80
    %v9069 = vpop.permute.xlu0 %9068
    %9070 = vrot.lane.b32.xlu0 %v8335, 80
    %v9071 = vpop.permute.xlu0 %9070
    %9136 = vrot.lane.b32.xlu0 %v8337, 96
    %v9137 = vpop.permute.xlu0 %9136
    %9138 = vrot.lane.b32.xlu0 %v8339, 96
    %v9139 = vpop.permute.xlu0 %9138
    %9140 = vrot.lane.b32.xlu0 %v8341, 96
    %v9141 = vpop.permute.xlu0 %9140
    %9142 = vrot.lane.b32.xlu0 %v8343, 96
    %v9143 = vpop.permute.xlu0 %9142
    %9144 = vrot.lane.b32.xlu0 %v8345, 96
    %v9145 = vpop.permute.xlu0 %9144
    %9146 = vrot.lane.b32.xlu0 %v8347, 96
    %v9147 = vpop.permute.xlu0 %9146
    %9148 = vrot.lane.b32.xlu0 %v8349, 96
    %v9149 = vpop.permute.xlu0 %9148
    %9150 = vrot.lane.b32.xlu0 %v8351, 96
    %v9151 = vpop.permute.xlu0 %9150
    %9152 = vrot.lane.b32.xlu0 %v8353, 96
    %v9153 = vpop.permute.xlu0 %9152
    %9154 = vrot.lane.b32.xlu0 %v8355, 96
    %v9155 = vpop.permute.xlu0 %9154
    %9156 = vrot.lane.b32.xlu0 %v8357, 96
    %v9157 = vpop.permute.xlu0 %9156
    %9158 = vrot.lane.b32.xlu0 %v8359, 96
    %v9159 = vpop.permute.xlu0 %9158
    %9160 = vrot.lane.b32.xlu0 %v8361, 96
    %v9161 = vpop.permute.xlu0 %9160
    %9162 = vrot.lane.b32.xlu0 %v8363, 96
    %v9163 = vpop.permute.xlu0 %9162
    %9164 = vrot.lane.b32.xlu0 %v8365, 96
    %v9165 = vpop.permute.xlu0 %9164
    %9166 = vrot.lane.b32.xlu0 %v8367, 96
    %v9167 = vpop.permute.xlu0 %9166
    %9168 = vrot.lane.b32.xlu0 %v8369, 96
    %v9169 = vpop.permute.xlu0 %9168
    %9170 = vrot.lane.b32.xlu0 %v8371, 96
    %v9171 = vpop.permute.xlu0 %9170
    %9172 = vrot.lane.b32.xlu0 %v8373, 96
    %v9173 = vpop.permute.xlu0 %9172
    %9174 = vrot.lane.b32.xlu0 %v8375, 96
    %v9175 = vpop.permute.xlu0 %9174
    %9176 = vrot.lane.b32.xlu0 %v8377, 96
    %v9177 = vpop.permute.xlu0 %9176
    %9178 = vrot.lane.b32.xlu0 %v8379, 96
    %v9179 = vpop.permute.xlu0 %9178
    %9180 = vrot.lane.b32.xlu0 %v8381, 96
    %v9181 = vpop.permute.xlu0 %9180
    %9182 = vrot.lane.b32.xlu0 %v8383, 96
    %v9183 = vpop.permute.xlu0 %9182
    %9184 = vrot.lane.b32.xlu0 %v8385, 96
    %v9185 = vpop.permute.xlu0 %9184
    %9186 = vrot.lane.b32.xlu0 %v8387, 96
    %v9187 = vpop.permute.xlu0 %9186
    %9188 = vrot.lane.b32.xlu0 %v8389, 96
    %v9189 = vpop.permute.xlu0 %9188
    %9190 = vrot.lane.b32.xlu0 %v8391, 96
    %v9191 = vpop.permute.xlu0 %9190
    %9192 = vrot.lane.b32.xlu0 %v8393, 96
    %v9193 = vpop.permute.xlu0 %9192
    %9194 = vrot.lane.b32.xlu0 %v8395, 96
    %v9195 = vpop.permute.xlu0 %9194
    %9196 = vrot.lane.b32.xlu0 %v8397, 96
    %v9197 = vpop.permute.xlu0 %9196
    %9198 = vrot.lane.b32.xlu0 %v8399, 96
    %v9199 = vpop.permute.xlu0 %9198
    %9264 = vrot.lane.b32.xlu0 %v8401, 112
    %v9265 = vpop.permute.xlu0 %9264
    %9266 = vrot.lane.b32.xlu0 %v8403, 112
    %v9267 = vpop.permute.xlu0 %9266
    %9268 = vrot.lane.b32.xlu0 %v8405, 112
    %v9269 = vpop.permute.xlu0 %9268
    %9270 = vrot.lane.b32.xlu0 %v8407, 112
    %v9271 = vpop.permute.xlu0 %9270
    %9272 = vrot.lane.b32.xlu0 %v8409, 112
    %v9273 = vpop.permute.xlu0 %9272
    %9274 = vrot.lane.b32.xlu0 %v8411, 112
    %v9275 = vpop.permute.xlu0 %9274
    %9276 = vrot.lane.b32.xlu0 %v8413, 112
    %v9277 = vpop.permute.xlu0 %9276
    %9278 = vrot.lane.b32.xlu0 %v8415, 112
    %v9279 = vpop.permute.xlu0 %9278
    %9280 = vrot.lane.b32.xlu0 %v8417, 112
    %v9281 = vpop.permute.xlu0 %9280
    %9282 = vrot.lane.b32.xlu0 %v8419, 112
    %v9283 = vpop.permute.xlu0 %9282
    %9284 = vrot.lane.b32.xlu0 %v8421, 112
    %v9285 = vpop.permute.xlu0 %9284
    %9286 = vrot.lane.b32.xlu0 %v8423, 112
    %v9287 = vpop.permute.xlu0 %9286
    %9288 = vrot.lane.b32.xlu0 %v8425, 112
    %v9289 = vpop.permute.xlu0 %9288
    %9290 = vrot.lane.b32.xlu0 %v8427, 112
    %v9291 = vpop.permute.xlu0 %9290
    %9292 = vrot.lane.b32.xlu0 %v8429, 112
    %v9293 = vpop.permute.xlu0 %9292
    %9294 = vrot.lane.b32.xlu0 %v8431, 112
    %v9295 = vpop.permute.xlu0 %9294
    %9296 = vrot.lane.b32.xlu0 %v8433, 112
    %v9297 = vpop.permute.xlu0 %9296
    %9298 = vrot.lane.b32.xlu0 %v8435, 112
    %v9299 = vpop.permute.xlu0 %9298
    %9300 = vrot.lane.b32.xlu0 %v8437, 112
    %v9301 = vpop.permute.xlu0 %9300
    %9302 = vrot.lane.b32.xlu0 %v8439, 112
    %v9303 = vpop.permute.xlu0 %9302
    %9304 = vrot.lane.b32.xlu0 %v8441, 112
    %v9305 = vpop.permute.xlu0 %9304
    %9306 = vrot.lane.b32.xlu0 %v8443, 112
    %v9307 = vpop.permute.xlu0 %9306
    %9308 = vrot.lane.b32.xlu0 %v8445, 112
    %v9309 = vpop.permute.xlu0 %9308
    %9310 = vrot.lane.b32.xlu0 %v8447, 112
    %v9311 = vpop.permute.xlu0 %9310
    %9312 = vrot.lane.b32.xlu0 %v8449, 112
    %v9313 = vpop.permute.xlu0 %9312
    %9314 = vrot.lane.b32.xlu0 %v8451, 112
    %v9315 = vpop.permute.xlu0 %9314
    %9316 = vrot.lane.b32.xlu0 %v8453, 112
    %v9317 = vpop.permute.xlu0 %9316
    %9318 = vrot.lane.b32.xlu0 %v8455, 112
    %v9319 = vpop.permute.xlu0 %9318
    %9320 = vrot.lane.b32.xlu0 %v8457, 112
    %v9321 = vpop.permute.xlu0 %9320
    %9322 = vrot.lane.b32.xlu0 %v8459, 112
    %v9323 = vpop.permute.xlu0 %9322
    %9324 = vrot.lane.b32.xlu0 %v8461, 112
    %v9325 = vpop.permute.xlu0 %9324
    %9326 = vrot.lane.b32.xlu0 %v8463, 112
    %v9327 = vpop.permute.xlu0 %9326
    %vm9360 = vcmask 130048
    %v9361 = vsel %vm9360, %v7953, %v8497
    %v9362 = vsel %vm9360, %v7955, %v8499
    %v9363 = vsel %vm9360, %v7957, %v8501
    %v9364 = vsel %vm9360, %v7959, %v8503
    %v9365 = vsel %vm9360, %v7961, %v8505
    %v9366 = vsel %vm9360, %v7963, %v8507
    %v9367 = vsel %vm9360, %v7965, %v8509
    %v9368 = vsel %vm9360, %v7967, %v8511
    %v9369 = vsel %vm9360, %v7969, %v8513
    %v9370 = vsel %vm9360, %v7971, %v8515
    %v9371 = vsel %vm9360, %v7973, %v8517
    %v9372 = vsel %vm9360, %v7975, %v8519
    %v9373 = vsel %vm9360, %v7977, %v8521
    %v9374 = vsel %vm9360, %v7979, %v8523
    %v9375 = vsel %vm9360, %v7981, %v8525
    %v9376 = vsel %vm9360, %v7983, %v8527
    %v9377 = vsel %vm9360, %v7985, %v8529
    %v9378 = vsel %vm9360, %v7987, %v8531
    %v9379 = vsel %vm9360, %v7989, %v8533
    %v9380 = vsel %vm9360, %v7991, %v8535
    %v9381 = vsel %vm9360, %v7993, %v8537
    %v9382 = vsel %vm9360, %v7995, %v8539
    %v9383 = vsel %vm9360, %v7997, %v8541
    %v9384 = vsel %vm9360, %v7999, %v8543
    %v9385 = vsel %vm9360, %v8001, %v8545
    %v9386 = vsel %vm9360, %v8003, %v8547
    %v9387 = vsel %vm9360, %v8005, %v8549
    %v9388 = vsel %vm9360, %v8007, %v8551
    %v9389 = vsel %vm9360, %v8009, %v8553
    %v9390 = vsel %vm9360, %v8011, %v8555
    %v9391 = vsel %vm9360, %v8013, %v8557
    %v9392 = vsel %vm9360, %v8015, %v8559
    %v9393 = vsel %vm1292, %v9361, %v8625
    %v9394 = vsel %vm1292, %v9362, %v8627
    %v9395 = vsel %vm1292, %v9363, %v8629
    %v9396 = vsel %vm1292, %v9364, %v8631
    %v9397 = vsel %vm1292, %v9365, %v8633
    %v9398 = vsel %vm1292, %v9366, %v8635
    %v9399 = vsel %vm1292, %v9367, %v8637
    %v9400 = vsel %vm1292, %v9368, %v8639
    %v9401 = vsel %vm1292, %v9369, %v8641
    %v9402 = vsel %vm1292, %v9370, %v8643
    %v9403 = vsel %vm1292, %v9371, %v8645
    %v9404 = vsel %vm1292, %v9372, %v8647
    %v9405 = vsel %vm1292, %v9373, %v8649
    %v9406 = vsel %vm1292, %v9374, %v8651
    %v9407 = vsel %vm1292, %v9375, %v8653
    %v9408 = vsel %vm1292, %v9376, %v8655
    %v9409 = vsel %vm1292, %v9377, %v8657
    %v9410 = vsel %vm1292, %v9378, %v8659
    %v9411 = vsel %vm1292, %v9379, %v8661
    %v9412 = vsel %vm1292, %v9380, %v8663
    %v9413 = vsel %vm1292, %v9381, %v8665
    %v9414 = vsel %vm1292, %v9382, %v8667
    %v9415 = vsel %vm1292, %v9383, %v8669
    %v9416 = vsel %vm1292, %v9384, %v8671
    %v9417 = vsel %vm1292, %v9385, %v8673
    %v9418 = vsel %vm1292, %v9386, %v8675
    %v9419 = vsel %vm1292, %v9387, %v8677
    %v9420 = vsel %vm1292, %v9388, %v8679
    %v9421 = vsel %vm1292, %v9389, %v8681
    %v9422 = vsel %vm1292, %v9390, %v8683
    %v9423 = vsel %vm1292, %v9391, %v8685
    %v9424 = vsel %vm1292, %v9392, %v8687
    %vm9425 = vcmask 392192
    %v9426 = vsel %vm9425, %v9393, %v8753
    %v9427 = vsel %vm9425, %v9394, %v8755
    %v9428 = vsel %vm9425, %v9395, %v8757
    %v9429 = vsel %vm9425, %v9396, %v8759
    %v9430 = vsel %vm9425, %v9397, %v8761
    %v9431 = vsel %vm9425, %v9398, %v8763
    %v9432 = vsel %vm9425, %v9399, %v8765
    %v9433 = vsel %vm9425, %v9400, %v8767
    %v9434 = vsel %vm9425, %v9401, %v8769
    %v9435 = vsel %vm9425, %v9402, %v8771
    %v9436 = vsel %vm9425, %v9403, %v8773
    %v9437 = vsel %vm9425, %v9404, %v8775
    %v9438 = vsel %vm9425, %v9405, %v8777
    %v9439 = vsel %vm9425, %v9406, %v8779
    %v9440 = vsel %vm9425, %v9407, %v8781
    %v9441 = vsel %vm9425, %v9408, %v8783
    %v9442 = vsel %vm9425, %v9409, %v8785
    %v9443 = vsel %vm9425, %v9410, %v8787
    %v9444 = vsel %vm9425, %v9411, %v8789
    %v9445 = vsel %vm9425, %v9412, %v8791
    %v9446 = vsel %vm9425, %v9413, %v8793
    %v9447 = vsel %vm9425, %v9414, %v8795
    %v9448 = vsel %vm9425, %v9415, %v8797
    %v9449 = vsel %vm9425, %v9416, %v8799
    %v9450 = vsel %vm9425, %v9417, %v8801
    %v9451 = vsel %vm9425, %v9418, %v8803
    %v9452 = vsel %vm9425, %v9419, %v8805
    %v9453 = vsel %vm9425, %v9420, %v8807
    %v9454 = vsel %vm9425, %v9421, %v8809
    %v9455 = vsel %vm9425, %v9422, %v8811
    %v9456 = vsel %vm9425, %v9423, %v8813
    %v9457 = vsel %vm9425, %v9424, %v8815
    %v9458 = vsel %vm1709, %v9426, %v8881
    %v9459 = vsel %vm1709, %v9427, %v8883
    %v9460 = vsel %vm1709, %v9428, %v8885
    %v9461 = vsel %vm1709, %v9429, %v8887
    %v9462 = vsel %vm1709, %v9430, %v8889
    %v9463 = vsel %vm1709, %v9431, %v8891
    %v9464 = vsel %vm1709, %v9432, %v8893
    %v9465 = vsel %vm1709, %v9433, %v8895
    %v9466 = vsel %vm1709, %v9434, %v8897
    %v9467 = vsel %vm1709, %v9435, %v8899
    %v9468 = vsel %vm1709, %v9436, %v8901
    %v9469 = vsel %vm1709, %v9437, %v8903
    %v9470 = vsel %vm1709, %v9438, %v8905
    %v9471 = vsel %vm1709, %v9439, %v8907
    %v9472 = vsel %vm1709, %v9440, %v8909
    %v9473 = vsel %vm1709, %v9441, %v8911
    %v9474 = vsel %vm1709, %v9442, %v8913
    %v9475 = vsel %vm1709, %v9443, %v8915
    %v9476 = vsel %vm1709, %v9444, %v8917
    %v9477 = vsel %vm1709, %v9445, %v8919
    %v9478 = vsel %vm1709, %v9446, %v8921
    %v9479 = vsel %vm1709, %v9447, %v8923
    %v9480 = vsel %vm1709, %v9448, %v8925
    %v9481 = vsel %vm1709, %v9449, %v8927
    %v9482 = vsel %vm1709, %v9450, %v8929
    %v9483 = vsel %vm1709, %v9451, %v8931
    %v9484 = vsel %vm1709, %v9452, %v8933
    %v9485 = vsel %vm1709, %v9453, %v8935
    %v9486 = vsel %vm1709, %v9454, %v8937
    %v9487 = vsel %vm1709, %v9455, %v8939
    %v9488 = vsel %vm1709, %v9456, %v8941
    %v9489 = vsel %vm1709, %v9457, %v8943
    %vm9490 = vcmask 654336
    %v9491 = vsel %vm9490, %v9458, %v9009
    %v9492 = vsel %vm9490, %v9459, %v9011
    %v9493 = vsel %vm9490, %v9460, %v9013
    %v9494 = vsel %vm9490, %v9461, %v9015
    %v9495 = vsel %vm9490, %v9462, %v9017
    %v9496 = vsel %vm9490, %v9463, %v9019
    %v9497 = vsel %vm9490, %v9464, %v9021
    %v9498 = vsel %vm9490, %v9465, %v9023
    %v9499 = vsel %vm9490, %v9466, %v9025
    %v9500 = vsel %vm9490, %v9467, %v9027
    %v9501 = vsel %vm9490, %v9468, %v9029
    %v9502 = vsel %vm9490, %v9469, %v9031
    %v9503 = vsel %vm9490, %v9470, %v9033
    %v9504 = vsel %vm9490, %v9471, %v9035
    %v9505 = vsel %vm9490, %v9472, %v9037
    %v9506 = vsel %vm9490, %v9473, %v9039
    %v9507 = vsel %vm9490, %v9474, %v9041
    %v9508 = vsel %vm9490, %v9475, %v9043
    %v9509 = vsel %vm9490, %v9476, %v9045
    %v9510 = vsel %vm9490, %v9477, %v9047
    %v9511 = vsel %vm9490, %v9478, %v9049
    %v9512 = vsel %vm9490, %v9479, %v9051
    %v9513 = vsel %vm9490, %v9480, %v9053
    %v9514 = vsel %vm9490, %v9481, %v9055
    %v9515 = vsel %vm9490, %v9482, %v9057
    %v9516 = vsel %vm9490, %v9483, %v9059
    %v9517 = vsel %vm9490, %v9484, %v9061
    %v9518 = vsel %vm9490, %v9485, %v9063
    %v9519 = vsel %vm9490, %v9486, %v9065
    %v9520 = vsel %vm9490, %v9487, %v9067
    %v9521 = vsel %vm9490, %v9488, %v9069
    %v9522 = vsel %vm9490, %v9489, %v9071
    %vm9523 = vcmask 785408
    %v9524 = vsel %vm9523, %v9491, %v9137
    %v9525 = vsel %vm9523, %v9492, %v9139
    %v9526 = vsel %vm9523, %v9493, %v9141
    %v9527 = vsel %vm9523, %v9494, %v9143
    %v9528 = vsel %vm9523, %v9495, %v9145
    %v9529 = vsel %vm9523, %v9496, %v9147
    %v9530 = vsel %vm9523, %v9497, %v9149
    %v9531 = vsel %vm9523, %v9498, %v9151
    %v9532 = vsel %vm9523, %v9499, %v9153
    %v9533 = vsel %vm9523, %v9500, %v9155
    %v9534 = vsel %vm9523, %v9501, %v9157
    %v9535 = vsel %vm9523, %v9502, %v9159
    %v9536 = vsel %vm9523, %v9503, %v9161
    %v9537 = vsel %vm9523, %v9504, %v9163
    %v9538 = vsel %vm9523, %v9505, %v9165
    %v9539 = vsel %vm9523, %v9506, %v9167
    %v9540 = vsel %vm9523, %v9507, %v9169
    %v9541 = vsel %vm9523, %v9508, %v9171
    %v9542 = vsel %vm9523, %v9509, %v9173
    %v9543 = vsel %vm9523, %v9510, %v9175
    %v9544 = vsel %vm9523, %v9511, %v9177
    %v9545 = vsel %vm9523, %v9512, %v9179
    %v9546 = vsel %vm9523, %v9513, %v9181
    %v9547 = vsel %vm9523, %v9514, %v9183
    %v9548 = vsel %vm9523, %v9515, %v9185
    %v9549 = vsel %vm9523, %v9516, %v9187
    %v9550 = vsel %vm9523, %v9517, %v9189
    %v9551 = vsel %vm9523, %v9518, %v9191
    %v9552 = vsel %vm9523, %v9519, %v9193
    %v9553 = vsel %vm9523, %v9520, %v9195
    %v9554 = vsel %vm9523, %v9521, %v9197
    %v9555 = vsel %vm9523, %v9522, %v9199
    %vm9556 = vcmask 916480
    %v9557 = vsel %vm9556, %v9524, %v9265
    %v9558 = vsel %vm9556, %v9525, %v9267
    %v9559 = vsel %vm9556, %v9526, %v9269
    %v9560 = vsel %vm9556, %v9527, %v9271
    %v9561 = vsel %vm9556, %v9528, %v9273
    %v9562 = vsel %vm9556, %v9529, %v9275
    %v9563 = vsel %vm9556, %v9530, %v9277
    %v9564 = vsel %vm9556, %v9531, %v9279
    %v9565 = vsel %vm9556, %v9532, %v9281
    %v9566 = vsel %vm9556, %v9533, %v9283
    %v9567 = vsel %vm9556, %v9534, %v9285
    %v9568 = vsel %vm9556, %v9535, %v9287
    %v9569 = vsel %vm9556, %v9536, %v9289
    %v9570 = vsel %vm9556, %v9537, %v9291
    %v9571 = vsel %vm9556, %v9538, %v9293
    %v9572 = vsel %vm9556, %v9539, %v9295
    %v9573 = vsel %vm9556, %v9540, %v9297
    %v9574 = vsel %vm9556, %v9541, %v9299
    %v9575 = vsel %vm9556, %v9542, %v9301
    %v9576 = vsel %vm9556, %v9543, %v9303
    %v9577 = vsel %vm9556, %v9544, %v9305
    %v9578 = vsel %vm9556, %v9545, %v9307
    %v9579 = vsel %vm9556, %v9546, %v9309
    %v9580 = vsel %vm9556, %v9547, %v9311
    %v9581 = vsel %vm9556, %v9548, %v9313
    %v9582 = vsel %vm9556, %v9549, %v9315
    %v9583 = vsel %vm9556, %v9550, %v9317
    %v9584 = vsel %vm9556, %v9551, %v9319
    %v9585 = vsel %vm9556, %v9552, %v9321
    %v9586 = vsel %vm9556, %v9553, %v9323
    %v9587 = vsel %vm9556, %v9554, %v9325
    %v9588 = vsel %vm9556, %v9555, %v9327
    %v9589 = vpack.c.bf16 %v9558, %v9557
    %v9590 = vpack.c.bf16 %v9560, %v9559
    %v9591 = vpack.c.bf16 %v9562, %v9561
    %v9592 = vpack.c.bf16 %v9564, %v9563
    %v9593 = vpack.c.bf16 %v9566, %v9565
    %v9594 = vpack.c.bf16 %v9568, %v9567
    %v9595 = vpack.c.bf16 %v9570, %v9569
    %v9596 = vpack.c.bf16 %v9572, %v9571
    %v9597 = vpack.c.bf16 %v9574, %v9573
    %v9598 = vpack.c.bf16 %v9576, %v9575
    %v9599 = vpack.c.bf16 %v9578, %v9577
    %v9600 = vpack.c.bf16 %v9580, %v9579
    %v9601 = vpack.c.bf16 %v9582, %v9581
    %v9602 = vpack.c.bf16 %v9584, %v9583
    %v9603 = vpack.c.bf16 %v9586, %v9585
    %v9604 = vpack.c.bf16 %v9588, %v9587
    %v9605 = vld [vmem:[%s3] sm:$0xf]
    %v9606 = vld [vmem:[%s3 + $0x4] sm:$0xf]
    %v9607 = vld [vmem:[%s3 + $0x8] sm:$0xf]
    %v9608 = vld [vmem:[%s3 + $0xc] sm:$0xf]
    %v9609 = vld [vmem:[%s3 + $0x10] sm:$0xf]
    %v9610 = vld [vmem:[%s3 + $0x14] sm:$0xf]
    %v9611 = vld [vmem:[%s3 + $0x18] sm:$0xf]
    %v9612 = vld [vmem:[%s3 + $0x1c] sm:$0xf]
    %v9613 = vld [vmem:[%s3 + $0x20] sm:$0xf]
    %v9614 = vld [vmem:[%s3 + $0x24] sm:$0xf]
    %v9615 = vld [vmem:[%s3 + $0x28] sm:$0xf]
    %v9616 = vld [vmem:[%s3 + $0x2c] sm:$0xf]
    %v9617 = vld [vmem:[%s3 + $0x30] sm:$0xf]
    %v9618 = vld [vmem:[%s3 + $0x34] sm:$0xf]
    %v9619 = vld [vmem:[%s3 + $0x38] sm:$0xf]
    %v9620 = vld [vmem:[%s3 + $0x3c] sm:$0xf]
    %v9621 = vld [vmem:[%s4] sm:$0x1]
    %v9623 = vlaneseq
    %v9624 = vshrl.u32 %v9623, 7
    %v9625 = vsub.s32 0, %v9624
    %v9626 = vrot.slane %v9621, %v9625
    %v9644 = vunpack.c.l.b16 %v9605
    %v9645 = vunpack.c.l.b16 %v9606
    %v9646 = vunpack.c.l.b16 %v9607
    %v9647 = vunpack.c.l.b16 %v9608
    %v9648 = vunpack.c.l.b16 %v9609
    %v9649 = vunpack.c.l.b16 %v9610
    %v9650 = vunpack.c.l.b16 %v9611
    %v9651 = vunpack.c.l.b16 %v9612
    %v9652 = vunpack.c.l.b16 %v9613
    %v9653 = vunpack.c.l.b16 %v9614
    %v9654 = vunpack.c.l.b16 %v9615
    %v9655 = vunpack.c.l.b16 %v9616
    %v9656 = vunpack.c.l.b16 %v9617
    %v9657 = vunpack.c.l.b16 %v9618
    %v9658 = vunpack.c.l.b16 %v9619
    %v9659 = vunpack.c.l.b16 %v9620
    %v9660 = vpack.c.b16 %v9645, %v9644
    %v9661 = vpack.c.b16 %v9647, %v9646
    %v9662 = vpack.c.b16 %v9649, %v9648
    %v9663 = vpack.c.b16 %v9651, %v9650
    %v9664 = vpack.c.b16 %v9653, %v9652
    %v9665 = vpack.c.b16 %v9655, %v9654
    %v9666 = vpack.c.b16 %v9657, %v9656
    %v9667 = vpack.c.b16 %v9659, %v9658
    %9676 = vmatprep.subr.bf16.mxu0 0
    %9677 = vmatpush1.bf16.msra.mxu0 %v9667
    %9678 = vmatprep.subr.bf16.mxu0 0
    %9679 = vmatpush1.bf16.msra.mxu0 %v9666
    %9680 = vmatprep.subr.bf16.mxu0 0
    %9681 = vmatpush1.bf16.msra.mxu0 %v9665
    %9682 = vmatprep.subr.bf16.mxu0 0
    %9683 = vmatpush1.bf16.msra.mxu0 %v9664
    %9684 = vmatprep.subr.bf16.mxu0 0
    %9685 = vmatpush1.bf16.msra.mxu0 %v9663
    %9686 = vmatprep.subr.bf16.mxu0 0
    %9687 = vmatpush1.bf16.msra.mxu0 %v9662
    %9688 = vmatprep.subr.bf16.mxu0 0
    %9689 = vmatpush1.bf16.msra.mxu0 %v9661
    %9690 = vmatprep.subr.bf16.mxu0 0
    %9691 = vmatpush1.bf16.msra.mxu0 %v9660
    %9692 = vmatprep.subr.bf16.mxu0 0
    %9693 = vmatpush2.bf16.msra.mxu0 0
    %9694 = vmatprep.subr.bf16.mxu0 0
    %9695 = vmatpush2.bf16.msra.mxu0 0
    %9696 = vmatprep.subr.bf16.mxu0 0
    %9697 = vmatpush2.bf16.msra.mxu0 0
    %9698 = vmatprep.subr.bf16.mxu0 0
    %9699 = vmatpush2.bf16.msra.mxu0 0
    %9700 = vmatprep.subr.bf16.mxu0 0
    %9701 = vmatpush2.bf16.msra.mxu0 0
    %9702 = vmatprep.subr.bf16.mxu0 0
    %9703 = vmatpush2.bf16.msra.mxu0 0
    %9704 = vmatprep.subr.bf16.mxu0 0
    %9705 = vmatpush2.bf16.msra.mxu0 0
    %9706 = vmatprep.subr.bf16.mxu0 0
    %9707 = vmatpush2.bf16.msra.mxu0 0
    %9708 = vmatprep.mubr.bf16.mxu0 0
    %9709 = vmatmul.mubr.bf16.gmra.mxu0 %v9589
    %v9710 = vpop.f32.mrf.mxu0
    %v9711 = vadd.f32 %v9626, %v9710
    %v9712 = vpop.f32.mrf.mxu0
    %v9713 = vpop.f32.mrf.mxu0
    %v9714 = vadd.f32 %v9626, %v9713
    %v9715 = vpop.f32.mrf.mxu0
    %9716 = vmatprep.mubr.bf16.mxu0 0
    %9717 = vmatmul.mubr.bf16.gmra.mxu0 %v9590
    %v9718 = vpop.f32.mrf.mxu0
    %v9719 = vadd.f32 %v9626, %v9718
    %v9720 = vpop.f32.mrf.mxu0
    %v9721 = vpop.f32.mrf.mxu0
    %v9722 = vadd.f32 %v9626, %v9721
    %v9723 = vpop.f32.mrf.mxu0
    %9724 = vmatprep.mubr.bf16.mxu0 0
    %9725 = vmatmul.mubr.bf16.gmra.mxu0 %v9591
    %v9726 = vpop.f32.mrf.mxu0
    %v9727 = vadd.f32 %v9626, %v9726
    %v9728 = vpop.f32.mrf.mxu0
    %v9729 = vpop.f32.mrf.mxu0
    %v9730 = vadd.f32 %v9626, %v9729
    %v9731 = vpop.f32.mrf.mxu0
    %9732 = vmatprep.mubr.bf16.mxu0 0
    %9733 = vmatmul.mubr.bf16.gmra.mxu0 %v9592
    %v9734 = vpop.f32.mrf.mxu0
    %v9735 = vadd.f32 %v9626, %v9734
    %v9736 = vpop.f32.mrf.mxu0
    %v9737 = vpop.f32.mrf.mxu0
    %v9738 = vadd.f32 %v9626, %v9737
    %v9739 = vpop.f32.mrf.mxu0
    %9740 = vmatprep.mubr.bf16.mxu0 0
    %9741 = vmatmul.mubr.bf16.gmra.mxu0 %v9593
    %v9742 = vpop.f32.mrf.mxu0
    %v9743 = vadd.f32 %v9626, %v9742
    %v9744 = vpop.f32.mrf.mxu0
    %v9745 = vpop.f32.mrf.mxu0
    %v9746 = vadd.f32 %v9626, %v9745
    %v9747 = vpop.f32.mrf.mxu0
    %9748 = vmatprep.mubr.bf16.mxu0 0
    %9749 = vmatmul.mubr.bf16.gmra.mxu0 %v9594
    %v9750 = vpop.f32.mrf.mxu0
    %v9751 = vadd.f32 %v9626, %v9750
    %v9752 = vpop.f32.mrf.mxu0
    %v9753 = vpop.f32.mrf.mxu0
    %v9754 = vadd.f32 %v9626, %v9753
    %v9755 = vpop.f32.mrf.mxu0
    %9756 = vmatprep.mubr.bf16.mxu0 0
    %9757 = vmatmul.mubr.bf16.gmra.mxu0 %v9595
    %v9758 = vpop.f32.mrf.mxu0
    %v9759 = vadd.f32 %v9626, %v9758
    %v9760 = vpop.f32.mrf.mxu0
    %v9761 = vpop.f32.mrf.mxu0
    %v9762 = vadd.f32 %v9626, %v9761
    %v9763 = vpop.f32.mrf.mxu0
    %9764 = vmatprep.mubr.bf16.mxu0 0
    %9765 = vmatmul.mubr.bf16.gmra.mxu0 %v9596
    %v9766 = vpop.f32.mrf.mxu0
    %v9767 = vadd.f32 %v9626, %v9766
    %v9768 = vpop.f32.mrf.mxu0
    %v9769 = vpop.f32.mrf.mxu0
    %v9770 = vadd.f32 %v9626, %v9769
    %v9771 = vpop.f32.mrf.mxu0
    %9772 = vmatprep.mubr.bf16.mxu0 0
    %9773 = vmatmul.mubr.bf16.gmra.mxu0 %v9597
    %v9774 = vpop.f32.mrf.mxu0
    %v9775 = vadd.f32 %v9626, %v9774
    %v9776 = vpop.f32.mrf.mxu0
    %v9777 = vpop.f32.mrf.mxu0
    %v9778 = vadd.f32 %v9626, %v9777
    %v9779 = vpop.f32.mrf.mxu0
    %9780 = vmatprep.mubr.bf16.mxu0 0
    %9781 = vmatmul.mubr.bf16.gmra.mxu0 %v9598
    %v9782 = vpop.f32.mrf.mxu0
    %v9783 = vadd.f32 %v9626, %v9782
    %v9784 = vpop.f32.mrf.mxu0
    %v9785 = vpop.f32.mrf.mxu0
    %v9786 = vadd.f32 %v9626, %v9785
    %v9787 = vpop.f32.mrf.mxu0
    %9788 = vmatprep.mubr.bf16.mxu0 0
    %9789 = vmatmul.mubr.bf16.gmra.mxu0 %v9599
    %v9790 = vpop.f32.mrf.mxu0
    %v9791 = vadd.f32 %v9626, %v9790
    %v9792 = vpop.f32.mrf.mxu0
    %v9793 = vpop.f32.mrf.mxu0
    %v9794 = vadd.f32 %v9626, %v9793
    %v9795 = vpop.f32.mrf.mxu0
    %9796 = vmatprep.mubr.bf16.mxu0 0
    %9797 = vmatmul.mubr.bf16.gmra.mxu0 %v9600
    %v9798 = vpop.f32.mrf.mxu0
    %v9799 = vadd.f32 %v9626, %v9798
    %v9800 = vpop.f32.mrf.mxu0
    %v9801 = vpop.f32.mrf.mxu0
    %v9802 = vadd.f32 %v9626, %v9801
    %v9803 = vpop.f32.mrf.mxu0
    %9804 = vmatprep.mubr.bf16.mxu0 0
    %9805 = vmatmul.mubr.bf16.gmra.mxu0 %v9601
    %v9806 = vpop.f32.mrf.mxu0
    %v9807 = vadd.f32 %v9626, %v9806
    %v9808 = vpop.f32.mrf.mxu0
    %v9809 = vpop.f32.mrf.mxu0
    %v9810 = vadd.f32 %v9626, %v9809
    %v9811 = vpop.f32.mrf.mxu0
    %9812 = vmatprep.mubr.bf16.mxu0 0
    %9813 = vmatmul.mubr.bf16.gmra.mxu0 %v9602
    %v9814 = vpop.f32.mrf.mxu0
    %v9815 = vadd.f32 %v9626, %v9814
    %v9816 = vpop.f32.mrf.mxu0
    %v9817 = vpop.f32.mrf.mxu0
    %v9818 = vadd.f32 %v9626, %v9817
    %v9819 = vpop.f32.mrf.mxu0
    %9820 = vmatprep.mubr.bf16.mxu0 0
    %9821 = vmatmul.mubr.bf16.gmra.mxu0 %v9603
    %v9822 = vpop.f32.mrf.mxu0
    %v9823 = vadd.f32 %v9626, %v9822
    %v9824 = vpop.f32.mrf.mxu0
    %v9825 = vpop.f32.mrf.mxu0
    %v9826 = vadd.f32 %v9626, %v9825
    %v9827 = vpop.f32.mrf.mxu0
    %9828 = vmatprep.mubr.bf16.mxu0 0
    %9829 = vmatmul.mubr.bf16.gmra.mxu0 %v9604
    %v9830 = vpop.f32.mrf.mxu0
    %v9831 = vadd.f32 %v9626, %v9830
    %v9832 = vpop.f32.mrf.mxu0
    %v9833 = vpop.f32.mrf.mxu0
    %v9834 = vadd.f32 %v9626, %v9833
    %v9835 = vpop.f32.mrf.mxu0
    %9836 = vdwg.mxu0
    %v9837 = vmax.f32 %v9711, 0.0
    %v9838 = vmax.f32 %v9714, 0.0
    %v9839 = vmax.f32 %v9719, 0.0
    %v9840 = vmax.f32 %v9722, 0.0
    %v9841 = vmax.f32 %v9727, 0.0
    %v9842 = vmax.f32 %v9730, 0.0
    %v9843 = vmax.f32 %v9735, 0.0
    %v9844 = vmax.f32 %v9738, 0.0
    %v9845 = vmax.f32 %v9743, 0.0
    %v9846 = vmax.f32 %v9746, 0.0
    %v9847 = vmax.f32 %v9751, 0.0
    %v9848 = vmax.f32 %v9754, 0.0
    %v9849 = vmax.f32 %v9759, 0.0
    %v9850 = vmax.f32 %v9762, 0.0
    %v9851 = vmax.f32 %v9767, 0.0
    %v9852 = vmax.f32 %v9770, 0.0
    %v9853 = vmax.f32 %v9775, 0.0
    %v9854 = vmax.f32 %v9778, 0.0
    %v9855 = vmax.f32 %v9783, 0.0
    %v9856 = vmax.f32 %v9786, 0.0
    %v9857 = vmax.f32 %v9791, 0.0
    %v9858 = vmax.f32 %v9794, 0.0
    %v9859 = vmax.f32 %v9799, 0.0
    %v9860 = vmax.f32 %v9802, 0.0
    %v9861 = vmax.f32 %v9807, 0.0
    %v9862 = vmax.f32 %v9810, 0.0
    %v9863 = vmax.f32 %v9815, 0.0
    %v9864 = vmax.f32 %v9818, 0.0
    %v9865 = vmax.f32 %v9823, 0.0
    %v9866 = vmax.f32 %v9826, 0.0
    %v9867 = vmax.f32 %v9831, 0.0
    %v9868 = vmax.f32 %v9834, 0.0
    %v9869 = vpack.c.bf16 %v9838, %v9837
    %v9870 = vpack.c.bf16 %v9840, %v9839
    %v9871 = vpack.c.bf16 %v9842, %v9841
    %v9872 = vpack.c.bf16 %v9844, %v9843
    %v9873 = vpack.c.bf16 %v9846, %v9845
    %v9874 = vpack.c.bf16 %v9848, %v9847
    %v9875 = vpack.c.bf16 %v9850, %v9849
    %v9876 = vpack.c.bf16 %v9852, %v9851
    %v9877 = vpack.c.bf16 %v9854, %v9853
    %v9878 = vpack.c.bf16 %v9856, %v9855
    %v9879 = vpack.c.bf16 %v9858, %v9857
    %v9880 = vpack.c.bf16 %v9860, %v9859
    %v9881 = vpack.c.bf16 %v9862, %v9861
    %v9882 = vpack.c.bf16 %v9864, %v9863
    %v9883 = vpack.c.bf16 %v9866, %v9865
    %v9884 = vpack.c.bf16 %v9868, %v9867
    %v9885 = vld [vmem:[%s5] sm:$0xf]
    %v9886 = vld [vmem:[%s5 + $0x4] sm:$0xf]
    %v9887 = vld [vmem:[%s5 + $0x8] sm:$0xf]
    %v9888 = vld [vmem:[%s5 + $0xc] sm:$0xf]
    %v9889 = vld [vmem:[%s6] sm:$0x1]
    %v9891 = vlaneseq
    %v9892 = vshrl.u32 %v9891, 7
    %v9893 = vsub.s32 0, %v9892
    %v9894 = vrot.slane %v9889, %v9893
    %v9900 = vunpack.c.l.b16 %v9885
    %v9901 = vunpack.c.l.b16 %v9886
    %v9902 = vunpack.c.l.b16 %v9887
    %v9903 = vunpack.c.l.b16 %v9888
    %v9904 = vpack.c.b16 %v9901, %v9900
    %v9905 = vpack.c.b16 %v9903, %v9902
    %v9909 = vsel %vm1292, %v9869, 0
    %v9912 = vsel %vm1292, %v9870, 0
    %v9915 = vsel %vm1292, %v9871, 0
    %v9918 = vsel %vm1292, %v9872, 0
    %v9921 = vsel %vm1292, %v9873, 0
    %v9924 = vsel %vm1292, %v9874, 0
    %v9927 = vsel %vm1292, %v9875, 0
    %v9930 = vsel %vm1292, %v9876, 0
    %v9933 = vsel %vm1292, %v9877, 0
    %v9936 = vsel %vm1292, %v9878, 0
    %v9939 = vsel %vm1292, %v9879, 0
    %v9942 = vsel %vm1292, %v9880, 0
    %v9945 = vsel %vm1292, %v9881, 0
    %v9948 = vsel %vm1292, %v9882, 0
    %v9951 = vsel %vm1292, %v9883, 0
    %v9954 = vsel %vm1292, %v9884, 0
    %9956 = vmatprep.subr.bf16.mxu0 0
    %9957 = vmatpush1.bf16.msra.mxu0 0
    %9958 = vmatprep.subr.bf16.mxu0 0
    %9959 = vmatpush1.bf16.msra.mxu0 0
    %9960 = vmatprep.subr.bf16.mxu0 0
    %9961 = vmatpush1.bf16.msra.mxu0 0
    %9962 = vmatprep.subr.bf16.mxu0 0
    %9963 = vmatpush1.bf16.msra.mxu0 0
    %9964 = vmatprep.subr.bf16.mxu0 0
    %9965 = vmatpush1.bf16.msra.mxu0 0
    %9966 = vmatprep.subr.bf16.mxu0 0
    %9967 = vmatpush1.bf16.msra.mxu0 0
    %9968 = vmatprep.subr.bf16.mxu0 0
    %9969 = vmatpush1.bf16.msra.mxu0 %v9905
    %9970 = vmatprep.subr.bf16.mxu0 0
    %9971 = vmatpush1.bf16.msra.mxu0 %v9904
    %9972 = vmatprep.subr.bf16.mxu0 0
    %9973 = vmatpush2.bf16.msra.mxu0 0
    %9974 = vmatprep.subr.bf16.mxu0 0
    %9975 = vmatpush2.bf16.msra.mxu0 0
    %9976 = vmatprep.subr.bf16.mxu0 0
    %9977 = vmatpush2.bf16.msra.mxu0 0
    %9978 = vmatprep.subr.bf16.mxu0 0
    %9979 = vmatpush2.bf16.msra.mxu0 0
    %9980 = vmatprep.subr.bf16.mxu0 0
    %9981 = vmatpush2.bf16.msra.mxu0 0
    %9982 = vmatprep.subr.bf16.mxu0 0
    %9983 = vmatpush2.bf16.msra.mxu0 0
    %9984 = vmatprep.subr.bf16.mxu0 0
    %9985 = vmatpush2.bf16.msra.mxu0 0
    %9986 = vmatprep.subr.bf16.mxu0 0
    %9987 = vmatpush2.bf16.msra.mxu0 0
    %9988 = vmatprep.mubr.bf16.mxu0 0
    %9989 = vmatmul.mubr.bf16.gmra.mxu0 %v9909
    %v9990 = vpop.f32.mrf.mxu0
    %v9991 = vadd.f32 %v9894, %v9990
    %v9992 = vpop.f32.mrf.mxu0
    %v9993 = vpop.f32.mrf.mxu0
    %v9994 = vadd.f32 %v9894, %v9993
    %v9995 = vpop.f32.mrf.mxu0
    %9996 = vmatprep.mubr.bf16.mxu0 0
    %9997 = vmatmul.mubr.bf16.gmra.mxu0 %v9912
    %v9998 = vpop.f32.mrf.mxu0
    %v9999 = vadd.f32 %v9894, %v9998
    %v10000 = vpop.f32.mrf.mxu0
    %v10001 = vpop.f32.mrf.mxu0
    %v10002 = vadd.f32 %v9894, %v10001
    %v10003 = vpop.f32.mrf.mxu0
    %10004 = vmatprep.mubr.bf16.mxu0 0
    %10005 = vmatmul.mubr.bf16.gmra.mxu0 %v9915
    %v10006 = vpop.f32.mrf.mxu0
    %v10007 = vadd.f32 %v9894, %v10006
    %v10008 = vpop.f32.mrf.mxu0
    %v10009 = vpop.f32.mrf.mxu0
    %v10010 = vadd.f32 %v9894, %v10009
    %v10011 = vpop.f32.mrf.mxu0
    %10012 = vmatprep.mubr.bf16.mxu0 0
    %10013 = vmatmul.mubr.bf16.gmra.mxu0 %v9918
    %v10014 = vpop.f32.mrf.mxu0
    %v10015 = vadd.f32 %v9894, %v10014
    %v10016 = vpop.f32.mrf.mxu0
    %v10017 = vpop.f32.mrf.mxu0
    %v10018 = vadd.f32 %v9894, %v10017
    %v10019 = vpop.f32.mrf.mxu0
    %10020 = vmatprep.mubr.bf16.mxu0 0
    %10021 = vmatmul.mubr.bf16.gmra.mxu0 %v9921
    %v10022 = vpop.f32.mrf.mxu0
    %v10023 = vadd.f32 %v9894, %v10022
    %v10024 = vpop.f32.mrf.mxu0
    %v10025 = vpop.f32.mrf.mxu0
    %v10026 = vadd.f32 %v9894, %v10025
    %v10027 = vpop.f32.mrf.mxu0
    %10028 = vmatprep.mubr.bf16.mxu0 0
    %10029 = vmatmul.mubr.bf16.gmra.mxu0 %v9924
    %v10030 = vpop.f32.mrf.mxu0
    %v10031 = vadd.f32 %v9894, %v10030
    %v10032 = vpop.f32.mrf.mxu0
    %v10033 = vpop.f32.mrf.mxu0
    %v10034 = vadd.f32 %v9894, %v10033
    %v10035 = vpop.f32.mrf.mxu0
    %10036 = vmatprep.mubr.bf16.mxu0 0
    %10037 = vmatmul.mubr.bf16.gmra.mxu0 %v9927
    %v10038 = vpop.f32.mrf.mxu0
    %v10039 = vadd.f32 %v9894, %v10038
    %v10040 = vpop.f32.mrf.mxu0
    %v10041 = vpop.f32.mrf.mxu0
    %v10042 = vadd.f32 %v9894, %v10041
    %v10043 = vpop.f32.mrf.mxu0
    %10044 = vmatprep.mubr.bf16.mxu0 0
    %10045 = vmatmul.mubr.bf16.gmra.mxu0 %v9930
    %v10046 = vpop.f32.mrf.mxu0
    %v10047 = vadd.f32 %v9894, %v10046
    %v10048 = vpop.f32.mrf.mxu0
    %v10049 = vpop.f32.mrf.mxu0
    %v10050 = vadd.f32 %v9894, %v10049
    %v10051 = vpop.f32.mrf.mxu0
    %10052 = vmatprep.mubr.bf16.mxu0 0
    %10053 = vmatmul.mubr.bf16.gmra.mxu0 %v9933
    %v10054 = vpop.f32.mrf.mxu0
    %v10055 = vadd.f32 %v9894, %v10054
    %v10056 = vpop.f32.mrf.mxu0
    %v10057 = vpop.f32.mrf.mxu0
    %v10058 = vadd.f32 %v9894, %v10057
    %v10059 = vpop.f32.mrf.mxu0
    %10060 = vmatprep.mubr.bf16.mxu0 0
    %10061 = vmatmul.mubr.bf16.gmra.mxu0 %v9936
    %v10062 = vpop.f32.mrf.mxu0
    %v10063 = vadd.f32 %v9894, %v10062
    %v10064 = vpop.f32.mrf.mxu0
    %v10065 = vpop.f32.mrf.mxu0
    %v10066 = vadd.f32 %v9894, %v10065
    %v10067 = vpop.f32.mrf.mxu0
    %10068 = vmatprep.mubr.bf16.mxu0 0
    %10069 = vmatmul.mubr.bf16.gmra.mxu0 %v9939
    %v10070 = vpop.f32.mrf.mxu0
    %v10071 = vadd.f32 %v9894, %v10070
    %v10072 = vpop.f32.mrf.mxu0
    %v10073 = vpop.f32.mrf.mxu0
    %v10074 = vadd.f32 %v9894, %v10073
    %v10075 = vpop.f32.mrf.mxu0
    %10076 = vmatprep.mubr.bf16.mxu0 0
    %10077 = vmatmul.mubr.bf16.gmra.mxu0 %v9942
    %v10078 = vpop.f32.mrf.mxu0
    %v10079 = vadd.f32 %v9894, %v10078
    %v10080 = vpop.f32.mrf.mxu0
    %v10081 = vpop.f32.mrf.mxu0
    %v10082 = vadd.f32 %v9894, %v10081
    %v10083 = vpop.f32.mrf.mxu0
    %10084 = vmatprep.mubr.bf16.mxu0 0
    %10085 = vmatmul.mubr.bf16.gmra.mxu0 %v9945
    %v10086 = vpop.f32.mrf.mxu0
    %v10087 = vadd.f32 %v9894, %v10086
    %v10088 = vpop.f32.mrf.mxu0
    %v10089 = vpop.f32.mrf.mxu0
    %v10090 = vadd.f32 %v9894, %v10089
    %v10091 = vpop.f32.mrf.mxu0
    %10092 = vmatprep.mubr.bf16.mxu0 0
    %10093 = vmatmul.mubr.bf16.gmra.mxu0 %v9948
    %v10094 = vpop.f32.mrf.mxu0
    %v10095 = vadd.f32 %v9894, %v10094
    %v10096 = vpop.f32.mrf.mxu0
    %v10097 = vpop.f32.mrf.mxu0
    %v10098 = vadd.f32 %v9894, %v10097
    %v10099 = vpop.f32.mrf.mxu0
    %10100 = vmatprep.mubr.bf16.mxu0 0
    %10101 = vmatmul.mubr.bf16.gmra.mxu0 %v9951
    %v10102 = vpop.f32.mrf.mxu0
    %v10103 = vadd.f32 %v9894, %v10102
    %v10104 = vpop.f32.mrf.mxu0
    %v10105 = vpop.f32.mrf.mxu0
    %v10106 = vadd.f32 %v9894, %v10105
    %v10107 = vpop.f32.mrf.mxu0
    %10108 = vmatprep.mubr.bf16.mxu0 0
    %10109 = vmatmul.mubr.bf16.gmra.mxu0 %v9954
    %v10110 = vpop.f32.mrf.mxu0
    %v10111 = vadd.f32 %v9894, %v10110
    %v10112 = vpop.f32.mrf.mxu0
    %v10113 = vpop.f32.mrf.mxu0
    %v10114 = vadd.f32 %v9894, %v10113
    %v10115 = vpop.f32.mrf.mxu0
    %10116 = vdwg.mxu0
    %v10117 = vxor.u32 %v9991, 2147483648
    %v10118 = vxor.u32 %v9994, 2147483648
    %v10119 = vxor.u32 %v9999, 2147483648
    %v10120 = vxor.u32 %v10002, 2147483648
    %v10121 = vxor.u32 %v10007, 2147483648
    %v10122 = vxor.u32 %v10010, 2147483648
    %v10123 = vxor.u32 %v10015, 2147483648
    %v10124 = vxor.u32 %v10018, 2147483648
    %v10125 = vxor.u32 %v10023, 2147483648
    %v10126 = vxor.u32 %v10026, 2147483648
    %v10127 = vxor.u32 %v10031, 2147483648
    %v10128 = vxor.u32 %v10034, 2147483648
    %v10129 = vxor.u32 %v10039, 2147483648
    %v10130 = vxor.u32 %v10042, 2147483648
    %v10131 = vxor.u32 %v10047, 2147483648
    %v10132 = vxor.u32 %v10050, 2147483648
    %v10133 = vxor.u32 %v10055, 2147483648
    %v10134 = vxor.u32 %v10058, 2147483648
    %v10135 = vxor.u32 %v10063, 2147483648
    %v10136 = vxor.u32 %v10066, 2147483648
    %v10137 = vxor.u32 %v10071, 2147483648
    %v10138 = vxor.u32 %v10074, 2147483648
    %v10139 = vxor.u32 %v10079, 2147483648
    %v10140 = vxor.u32 %v10082, 2147483648
    %v10141 = vxor.u32 %v10087, 2147483648
    %v10142 = vxor.u32 %v10090, 2147483648
    %v10143 = vxor.u32 %v10095, 2147483648
    %v10144 = vxor.u32 %v10098, 2147483648
    %v10145 = vxor.u32 %v10103, 2147483648
    %v10146 = vxor.u32 %v10106, 2147483648
    %v10147 = vxor.u32 %v10111, 2147483648
    %v10148 = vxor.u32 %v10114, 2147483648
    %v10149 = vmul.f32 %v10117, 1.442695
    %v10150 = vpow.pop %v10149
    %v10151 = vmul.f32 %v10118, 1.442695
    %v10152 = vpow.pop %v10151
    %v10153 = vmul.f32 %v10119, 1.442695
    %v10154 = vpow.pop %v10153
    %v10155 = vmul.f32 %v10120, 1.442695
    %v10156 = vpow.pop %v10155
    %v10157 = vmul.f32 %v10121, 1.442695
    %v10158 = vpow.pop %v10157
    %v10159 = vmul.f32 %v10122, 1.442695
    %v10160 = vpow.pop %v10159
    %v10161 = vmul.f32 %v10123, 1.442695
    %v10162 = vpow.pop %v10161
    %v10163 = vmul.f32 %v10124, 1.442695
    %v10164 = vpow.pop %v10163
    %v10165 = vmul.f32 %v10125, 1.442695
    %v10166 = vpow.pop %v10165
    %v10167 = vmul.f32 %v10126, 1.442695
    %v10168 = vpow.pop %v10167
    %v10169 = vmul.f32 %v10127, 1.442695
    %v10170 = vpow.pop %v10169
    %v10171 = vmul.f32 %v10128, 1.442695
    %v10172 = vpow.pop %v10171
    %v10173 = vmul.f32 %v10129, 1.442695
    %v10174 = vpow.pop %v10173
    %v10175 = vmul.f32 %v10130, 1.442695
    %v10176 = vpow.pop %v10175
    %v10177 = vmul.f32 %v10131, 1.442695
    %v10178 = vpow.pop %v10177
    %v10179 = vmul.f32 %v10132, 1.442695
    %v10180 = vpow.pop %v10179
    %v10181 = vmul.f32 %v10133, 1.442695
    %v10182 = vpow.pop %v10181
    %v10183 = vmul.f32 %v10134, 1.442695
    %v10184 = vpow.pop %v10183
    %v10185 = vmul.f32 %v10135, 1.442695
    %v10186 = vpow.pop %v10185
    %v10187 = vmul.f32 %v10136, 1.442695
    %v10188 = vpow.pop %v10187
    %v10189 = vmul.f32 %v10137, 1.442695
    %v10190 = vpow.pop %v10189
    %v10191 = vmul.f32 %v10138, 1.442695
    %v10192 = vpow.pop %v10191
    %v10193 = vmul.f32 %v10139, 1.442695
    %v10194 = vpow.pop %v10193
    %v10195 = vmul.f32 %v10140, 1.442695
    %v10196 = vpow.pop %v10195
    %v10197 = vmul.f32 %v10141, 1.442695
    %v10198 = vpow.pop %v10197
    %v10199 = vmul.f32 %v10142, 1.442695
    %v10200 = vpow.pop %v10199
    %v10201 = vmul.f32 %v10143, 1.442695
    %v10202 = vpow.pop %v10201
    %v10203 = vmul.f32 %v10144, 1.442695
    %v10204 = vpow.pop %v10203
    %v10205 = vmul.f32 %v10145, 1.442695
    %v10206 = vpow.pop %v10205
    %v10207 = vmul.f32 %v10146, 1.442695
    %v10208 = vpow.pop %v10207
    %v10209 = vmul.f32 %v10147, 1.442695
    %v10210 = vpow.pop %v10209
    %v10211 = vmul.f32 %v10148, 1.442695
    %v10212 = vpow.pop %v10211
    %v10213 = vadd.f32 %v10150, 1.0
    %v10214 = vadd.f32 %v10152, 1.0
    %v10215 = vadd.f32 %v10154, 1.0
    %v10216 = vadd.f32 %v10156, 1.0
    %v10217 = vadd.f32 %v10158, 1.0
    %v10218 = vadd.f32 %v10160, 1.0
    %v10219 = vadd.f32 %v10162, 1.0
    %v10220 = vadd.f32 %v10164, 1.0
    %v10221 = vadd.f32 %v10166, 1.0
    %v10222 = vadd.f32 %v10168, 1.0
    %v10223 = vadd.f32 %v10170, 1.0
    %v10224 = vadd.f32 %v10172, 1.0
    %v10225 = vadd.f32 %v10174, 1.0
    %v10226 = vadd.f32 %v10176, 1.0
    %v10227 = vadd.f32 %v10178, 1.0
    %v10228 = vadd.f32 %v10180, 1.0
    %v10229 = vadd.f32 %v10182, 1.0
    %v10230 = vadd.f32 %v10184, 1.0
    %v10231 = vadd.f32 %v10186, 1.0
    %v10232 = vadd.f32 %v10188, 1.0
    %v10233 = vadd.f32 %v10190, 1.0
    %v10234 = vadd.f32 %v10192, 1.0
    %v10235 = vadd.f32 %v10194, 1.0
    %v10236 = vadd.f32 %v10196, 1.0
    %v10237 = vadd.f32 %v10198, 1.0
    %v10238 = vadd.f32 %v10200, 1.0
    %v10239 = vadd.f32 %v10202, 1.0
    %v10240 = vadd.f32 %v10204, 1.0
    %v10241 = vadd.f32 %v10206, 1.0
    %v10242 = vadd.f32 %v10208, 1.0
    %v10243 = vadd.f32 %v10210, 1.0
    %v10244 = vadd.f32 %v10212, 1.0
    %v10245 = vrcp.pop %v10213
    %v10246 = vmul.f32 1.0, %v10245
    %v10247 = vrcp.pop %v10214
    %v10248 = vmul.f32 1.0, %v10247
    %v10249 = vrcp.pop %v10215
    %v10250 = vmul.f32 1.0, %v10249
    %v10251 = vrcp.pop %v10216
    %v10252 = vmul.f32 1.0, %v10251
    %v10253 = vrcp.pop %v10217
    %v10254 = vmul.f32 1.0, %v10253
    %v10255 = vrcp.pop %v10218
    %v10256 = vmul.f32 1.0, %v10255
    %v10257 = vrcp.pop %v10219
    %v10258 = vmul.f32 1.0, %v10257
    %v10259 = vrcp.pop %v10220
    %v10260 = vmul.f32 1.0, %v10259
    %v10261 = vrcp.pop %v10221
    %v10262 = vmul.f32 1.0, %v10261
    %v10263 = vrcp.pop %v10222
    %v10264 = vmul.f32 1.0, %v10263
    %v10265 = vrcp.pop %v10223
    %v10266 = vmul.f32 1.0, %v10265
    %v10267 = vrcp.pop %v10224
    %v10268 = vmul.f32 1.0, %v10267
    %v10269 = vrcp.pop %v10225
    %v10270 = vmul.f32 1.0, %v10269
    %v10271 = vrcp.pop %v10226
    %v10272 = vmul.f32 1.0, %v10271
    %v10273 = vrcp.pop %v10227
    %v10274 = vmul.f32 1.0, %v10273
    %v10275 = vrcp.pop %v10228
    %v10276 = vmul.f32 1.0, %v10275
    %v10277 = vrcp.pop %v10229
    %v10278 = vmul.f32 1.0, %v10277
    %v10279 = vrcp.pop %v10230
    %v10280 = vmul.f32 1.0, %v10279
    %v10281 = vrcp.pop %v10231
    %v10282 = vmul.f32 1.0, %v10281
    %v10283 = vrcp.pop %v10232
    %v10284 = vmul.f32 1.0, %v10283
    %v10285 = vrcp.pop %v10233
    %v10286 = vmul.f32 1.0, %v10285
    %v10287 = vrcp.pop %v10234
    %v10288 = vmul.f32 1.0, %v10287
    %v10289 = vrcp.pop %v10235
    %v10290 = vmul.f32 1.0, %v10289
    %v10291 = vrcp.pop %v10236
    %v10292 = vmul.f32 1.0, %v10291
    %v10293 = vrcp.pop %v10237
    %v10294 = vmul.f32 1.0, %v10293
    %v10295 = vrcp.pop %v10238
    %v10296 = vmul.f32 1.0, %v10295
    %v10297 = vrcp.pop %v10239
    %v10298 = vmul.f32 1.0, %v10297
    %v10299 = vrcp.pop %v10240
    %v10300 = vmul.f32 1.0, %v10299
    %v10301 = vrcp.pop %v10241
    %v10302 = vmul.f32 1.0, %v10301
    %v10303 = vrcp.pop %v10242
    %v10304 = vmul.f32 1.0, %v10303
    %v10305 = vrcp.pop %v10243
    %v10306 = vmul.f32 1.0, %v10305
    %v10307 = vrcp.pop %v10244
    %v10308 = vmul.f32 1.0, %v10307
    %v10309 = vpack.c.bf16 %v10248, %v10246
    %v10310 = vpack.c.bf16 %v10252, %v10250
    %v10311 = vpack.c.bf16 %v10256, %v10254
    %v10312 = vpack.c.bf16 %v10260, %v10258
    %v10313 = vpack.c.bf16 %v10264, %v10262
    %v10314 = vpack.c.bf16 %v10268, %v10266
    %v10315 = vpack.c.bf16 %v10272, %v10270
    %v10316 = vpack.c.bf16 %v10276, %v10274
    %v10317 = vpack.c.bf16 %v10280, %v10278
    %v10318 = vpack.c.bf16 %v10284, %v10282
    %v10319 = vpack.c.bf16 %v10288, %v10286
    %v10320 = vpack.c.bf16 %v10292, %v10290
    %v10321 = vpack.c.bf16 %v10296, %v10294
    %v10322 = vpack.c.bf16 %v10300, %v10298
    %v10323 = vpack.c.bf16 %v10304, %v10302
    %v10324 = vpack.c.bf16 %v10308, %v10306
    %v10341 = vunpack.c.l.b16 %v10309
    %v10342 = vunpack.c.h.b16 %v10309
    %v10343 = vunpack.c.l.b16 %v10310
    %v10344 = vunpack.c.h.b16 %v10310
    %v10345 = vunpack.c.l.b16 %v10311
    %v10346 = vunpack.c.h.b16 %v10311
    %v10347 = vunpack.c.l.b16 %v10312
    %v10348 = vunpack.c.h.b16 %v10312
    %v10349 = vunpack.c.l.b16 %v10313
    %v10350 = vunpack.c.h.b16 %v10313
    %v10351 = vunpack.c.l.b16 %v10314
    %v10352 = vunpack.c.h.b16 %v10314
    %v10353 = vunpack.c.l.b16 %v10315
    %v10354 = vunpack.c.h.b16 %v10315
    %v10355 = vunpack.c.l.b16 %v10316
    %v10356 = vunpack.c.h.b16 %v10316
    %v10357 = vunpack.c.l.b16 %v10317
    %v10358 = vunpack.c.h.b16 %v10317
    %v10359 = vunpack.c.l.b16 %v10318
    %v10360 = vunpack.c.h.b16 %v10318
    %v10361 = vunpack.c.l.b16 %v10319
    %v10362 = vunpack.c.h.b16 %v10319
    %v10363 = vunpack.c.l.b16 %v10320
    %v10364 = vunpack.c.h.b16 %v10320
    %v10365 = vunpack.c.l.b16 %v10321
    %v10366 = vunpack.c.h.b16 %v10321
    %v10367 = vunpack.c.l.b16 %v10322
    %v10368 = vunpack.c.h.b16 %v10322
    %v10369 = vunpack.c.l.b16 %v10323
    %v10370 = vunpack.c.h.b16 %v10323
    %v10371 = vunpack.c.l.b16 %v10324
    %v10372 = vunpack.c.h.b16 %v10324
    %v10373 = vpack.c.b16 %v10341, %v10341
    %v10374 = vpack.c.b16 %v10342, %v10342
    %v10375 = vpack.c.b16 %v10343, %v10343
    %v10376 = vpack.c.b16 %v10344, %v10344
    %v10377 = vpack.c.b16 %v10345, %v10345
    %v10378 = vpack.c.b16 %v10346, %v10346
    %v10379 = vpack.c.b16 %v10347, %v10347
    %v10380 = vpack.c.b16 %v10348, %v10348
    %v10381 = vpack.c.b16 %v10349, %v10349
    %v10382 = vpack.c.b16 %v10350, %v10350
    %v10383 = vpack.c.b16 %v10351, %v10351
    %v10384 = vpack.c.b16 %v10352, %v10352
    %v10385 = vpack.c.b16 %v10353, %v10353
    %v10386 = vpack.c.b16 %v10354, %v10354
    %v10387 = vpack.c.b16 %v10355, %v10355
    %v10388 = vpack.c.b16 %v10356, %v10356
    %v10389 = vpack.c.b16 %v10357, %v10357
    %v10390 = vpack.c.b16 %v10358, %v10358
    %v10391 = vpack.c.b16 %v10359, %v10359
    %v10392 = vpack.c.b16 %v10360, %v10360
    %v10393 = vpack.c.b16 %v10361, %v10361
    %v10394 = vpack.c.b16 %v10362, %v10362
    %v10395 = vpack.c.b16 %v10363, %v10363
    %v10396 = vpack.c.b16 %v10364, %v10364
    %v10397 = vpack.c.b16 %v10365, %v10365
    %v10398 = vpack.c.b16 %v10366, %v10366
    %v10399 = vpack.c.b16 %v10367, %v10367
    %v10400 = vpack.c.b16 %v10368, %v10368
    %v10401 = vpack.c.b16 %v10369, %v10369
    %v10402 = vpack.c.b16 %v10370, %v10370
    %v10403 = vpack.c.b16 %v10371, %v10371
    %v10404 = vpack.c.b16 %v10372, %v10372
    %10437 = vst [vmem:[#allocation2] sm:$0xf] %v10373
    %10438 = vst [vmem:[#allocation2 + $0x4] sm:$0xf] %v10374
    %10439 = vst [vmem:[#allocation2 + $0x8] sm:$0xf] %v10375
    %10440 = vst [vmem:[#allocation2 + $0xc] sm:$0xf] %v10376
    %10441 = vst [vmem:[#allocation2 + $0x10] sm:$0xf] %v10377
    %10442 = vst [vmem:[#allocation2 + $0x14] sm:$0xf] %v10378
    %10443 = vst [vmem:[#allocation2 + $0x18] sm:$0xf] %v10379
    %10444 = vst [vmem:[#allocation2 + $0x1c] sm:$0xf] %v10380
    %10445 = vst [vmem:[#allocation2 + $0x20] sm:$0xf] %v10381
    %10446 = vst [vmem:[#allocation2 + $0x24] sm:$0xf] %v10382
    %10447 = vst [vmem:[#allocation2 + $0x28] sm:$0xf] %v10383
    %10448 = vst [vmem:[#allocation2 + $0x2c] sm:$0xf] %v10384
    %10449 = vst [vmem:[#allocation2 + $0x30] sm:$0xf] %v10385
    %10450 = vst [vmem:[#allocation2 + $0x34] sm:$0xf] %v10386
    %10451 = vst [vmem:[#allocation2 + $0x38] sm:$0xf] %v10387
    %10452 = vst [vmem:[#allocation2 + $0x3c] sm:$0xf] %v10388
    %10453 = vst [vmem:[#allocation2 + $0x40] sm:$0xf] %v10389
    %10454 = vst [vmem:[#allocation2 + $0x44] sm:$0xf] %v10390
    %10455 = vst [vmem:[#allocation2 + $0x48] sm:$0xf] %v10391
    %10456 = vst [vmem:[#allocation2 + $0x4c] sm:$0xf] %v10392
    %10457 = vst [vmem:[#allocation2 + $0x50] sm:$0xf] %v10393
    %10458 = vst [vmem:[#allocation2 + $0x54] sm:$0xf] %v10394
    %10459 = vst [vmem:[#allocation2 + $0x58] sm:$0xf] %v10395
    %10460 = vst [vmem:[#allocation2 + $0x5c] sm:$0xf] %v10396
    %10461 = vst [vmem:[#allocation2 + $0x60] sm:$0xf] %v10397
    %10462 = vst [vmem:[#allocation2 + $0x64] sm:$0xf] %v10398
    %10463 = vst [vmem:[#allocation2 + $0x68] sm:$0xf] %v10399
    %10464 = vst [vmem:[#allocation2 + $0x6c] sm:$0xf] %v10400
    %10465 = vst [vmem:[#allocation2 + $0x70] sm:$0xf] %v10401
    %10466 = vst [vmem:[#allocation2 + $0x74] sm:$0xf] %v10402
    %10467 = vst [vmem:[#allocation2 + $0x78] sm:$0xf] %v10403
    %10468 = vst [vmem:[#allocation2 + $0x7c] sm:$0xf] %v10404
    // Predicated region
    $region30: #{tpu_custom_call.1} parent=1 // pred_check
      _
    $region31: #{tpu_custom_call.1} parent=1 // pred_check_branch
      %10470 = sbr.rel (0) target = $region33
    $region32: #{tpu_custom_call.1} parent=1 // pred_region
      %s10472 = ssub.s32 2048, 2048
      %10473 = vsyncadd [#allocation3], %s10472
      %s10474 = sshll.u32 [#allocation2], 4
      %s10475 = int_to_ptr.vmem [resolvable:$true] %s10474
      %10480 = dma.vmem_to_hbm [thread:$0]  %s10475, 2048, %s7, [#allocation3], 64, 64, 4
    $region33: #{tpu_custom_call.1} parent=1 // pred_fallthru
      _
    // Predicated region
    $region34: #{tpu_custom_call.1} parent=1 // pred_check
      _
    $region35: #{tpu_custom_call.1} parent=1 // pred_check_branch
      %10482 = sbr.rel (0) target = $region37
    $region36: #{tpu_custom_call.1} parent=1 // pred_region
      %10483 = dma.done [#allocation3], 2048
    $region37: #{tpu_custom_call.1} parent=1 // pred_fallthru
      _
    %10484 = vsyncpa [#allocation3], 1

</llo_original>
